<compile_context>
chip_gen: v7x
topology: tpu7x:2x2x1
jax: 0.10.0
libtpu: 0.0.40
codegen_flags: <defaults>
</compile_context>

<pallas_src>
import functools

import jax
import jax.numpy as jnp
from jax.experimental import pallas as pl
from jax.experimental.pallas import tpu as pltpu


# ---------------------------------------------------------------------------
# Kernel
# ---------------------------------------------------------------------------
def imgnet_kernel(alpha_ref,
                  x_ref, wenc_ref, benc_ref,
                  w1_ref, b1_ref, w2_ref, b2_ref,
                  wd_ref, bd_ref,
                  feat_ref, code_ref, dec_ref):
    # ----- CLIP stand-in encoder: feat = x_flat @ W_enc + b_enc --------------
    # x arrives as bf16 when the wrapper could fuse the cast (otherwise f32 and
    # cast here, hidden under MXU time).  f32 accumulation, f32 elementwise.
    x_bf = x_ref[...].astype(jnp.bfloat16)
    feat = jnp.dot(x_bf, wenc_ref[...],
                   preferred_element_type=jnp.float32) + benc_ref[...]
    feat_ref[...] = feat

    # ----- fc_encode: Linear(512,1024) -> ReLU -> Linear(1024, code_len) -----
    h = jnp.dot(feat.astype(jnp.bfloat16), w1_ref[...],
                preferred_element_type=jnp.float32) + b1_ref[...]
    h = jnp.maximum(h, 0.0)
    hid = jnp.dot(h.astype(jnp.bfloat16), w2_ref[...],
                  preferred_element_type=jnp.float32) + b2_ref[...]

    # ----- code = tanh(alpha * hid) ------------------------------------------
    alpha = alpha_ref[0]
    code = jnp.tanh(alpha * hid)
    code_ref[...] = code

    # ----- decoded_t = sigmoid(code @ Wd + bd) -------------------------------
    dec = jnp.dot(code.astype(jnp.bfloat16), wd_ref[...],
                  preferred_element_type=jnp.float32) + bd_ref[...]
    dec_ref[...] = jax.nn.sigmoid(dec)


# ---------------------------------------------------------------------------
# Helpers
# ---------------------------------------------------------------------------
def _round_up(x, m):
    return ((x + m - 1) // m) * m


def _pad2(a, rows, cols):
    return jnp.pad(a, ((0, rows - a.shape[0]), (0, cols - a.shape[1])))


def _pick_tm(batch):
    """Batch-tile size.

    Preference order:
      1. tile divides the (8-aligned) batch exactly  -> no batch-pad pass over x
         and no junk rows computed/DMAed,
      2. >= 2 grid steps                              -> v7x's 2 TensorCores both work,
      3. as large as possible (<= 512)                -> amortize ~0.35 us/step overhead,
         big MXU M, more compute to hide the x DMA under.
    """
    b8 = _round_up(batch, 8)
    best_key, best_tm = None, 8
    for tm in range(8, min(b8, 512) + 1, 8):
        steps = -(-b8 // tm)
        key = (b8 % tm == 0, steps >= 2, tm)
        if best_key is None or key > best_key:
            best_key, best_tm = key, tm
    return best_tm


def prepare_params(params):
    """One-time weight preparation (hoisted out of the per-forward path).

    Pads every feature axis to a multiple of 128 (lane-dense) and casts weights
    to bf16 (MXU-native, halves weight DMA).  Biases stay f32 (VPU math is f32).
    Zero padding is exact: padded rows/cols contribute 0, tanh(0)=0, and padded
    output columns are sliced off.
    """
    wenc, benc, w1, b1, w2, b2, wd, bd = params
    in_dim, feat_dim = wenc.shape
    hidden = w1.shape[1]
    code_len = w2.shape[1]
    txt_len = wd.shape[1]

    in_p = _round_up(in_dim, 128)
    feat_p = _round_up(feat_dim, 128)
    hid_p = _round_up(hidden, 128)
    code_p = _round_up(code_len, 128)
    txt_p = _round_up(txt_len, 128)

    prepared = dict(
        wenc=_pad2(wenc, in_p, feat_p).astype(jnp.bfloat16),
        benc=_pad2(benc, 1, feat_p).astype(jnp.float32),
        w1=_pad2(w1, feat_p, hid_p).astype(jnp.bfloat16),
        b1=_pad2(b1, 1, hid_p).astype(jnp.float32),
        w2=_pad2(w2, hid_p, code_p).astype(jnp.bfloat16),
        b2=_pad2(b2, 1, code_p).astype(jnp.float32),
        wd=_pad2(wd, code_p, txt_p).astype(jnp.bfloat16),
        bd=_pad2(bd, 1, txt_p).astype(jnp.float32),
    )
    dims = (in_dim, feat_dim, code_len, txt_len)
    return prepared, dims


# ---------------------------------------------------------------------------
# Forward
# ---------------------------------------------------------------------------
@functools.partial(jax.jit, static_argnames=("dims",))
def imgnet_forward(x, prepared, alpha, dims):
    in_dim, feat_dim, code_len, txt_len = dims

    B = x.shape[0]
    x_flat = x.reshape(B, -1)                 # NCHW -> [B, C*H*W]
    assert x_flat.shape[1] == in_dim

    in_p, feat_p = prepared["wenc"].shape
    hid_p = prepared["w1"].shape[1]
    code_p = prepared["w2"].shape[1]
    txt_p = prepared["wd"].shape[1]

    tm = _pick_tm(B)
    b_p = _round_up(B, tm)
    grid = (b_p // tm,)

    # Feed x as bf16 when the convert fuses into an already-required pass
    # (batch/lane pad) or the caller already supplies bf16 pixels; otherwise
    # pass f32 straight through (standalone convert costs more HBM than it
    # saves) and let the kernel cast it.
    pad_needed = (b_p != B) or (in_p != in_dim)
    if pad_needed or x_flat.dtype == jnp.bfloat16:
        x_in = _pad2(x_flat.astype(jnp.bfloat16), b_p, in_p)
    else:
        x_in = x_flat.astype(jnp.float32)

    smem_spec = pl.BlockSpec(memory_space=pltpu.MemorySpace.SMEM)

    def resident(shape):
        # Full-array weight block, constant block index -> stays VMEM-resident
        # across batch-grid iterations.  Buffered(1): constant index means the
        # default second buffer is dead space; reclaim it (VMEM headroom for
        # TM=512 inside v7x's 64 MiB).
        return pl.BlockSpec(shape, lambda i: (0, 0),
                            pipeline_mode=pl.Buffered(1))

    def batched(cols):
        return pl.BlockSpec((tm, cols), lambda i: (i, 0))

    flops = 2 * b_p * (in_p * feat_p + feat_p * hid_p
                       + hid_p * code_p + code_p * txt_p)
    transcendentals = b_p * (code_p + txt_p)            # tanh + sigmoid
    bytes_accessed = (
        x_in.size * x_in.dtype.itemsize
        + (prepared["wenc"].size + prepared["w1"].size
           + prepared["w2"].size + prepared["wd"].size) * 2
        + (prepared["benc"].size + prepared["b1"].size
           + prepared["b2"].size + prepared["bd"].size) * 4
        + b_p * (feat_p + code_p + txt_p) * 4
    )

    feat, code, dec = pl.pallas_call(
        imgnet_kernel,
        out_shape=(
            jax.ShapeDtypeStruct((b_p, feat_p), jnp.float32),
            jax.ShapeDtypeStruct((b_p, code_p), jnp.float32),
            jax.ShapeDtypeStruct((b_p, txt_p), jnp.float32),
        ),
        grid_spec=pltpu.PrefetchScalarGridSpec(
            num_scalar_prefetch=0,
            grid=grid,
            in_specs=[
                smem_spec,                               # alpha scalar
                batched(in_p),                           # x tile (pipelined)
                resident(prepared["wenc"].shape), resident(prepared["benc"].shape),
                resident(prepared["w1"].shape), resident(prepared["b1"].shape),
                resident(prepared["w2"].shape), resident(prepared["b2"].shape),
                resident(prepared["wd"].shape), resident(prepared["bd"].shape),
            ],
            out_specs=(
                batched(feat_p),
                batched(code_p),
                batched(txt_p),
            ),
        ),
        compiler_params=pltpu.CompilerParams(
            dimension_semantics=("parallel",),   # batch tiles shard across TCs
            vmem_limit_bytes=48 << 20,           # room for TM=512 double-buffered x
        ),
        cost_estimate=pl.CostEstimate(
            flops=flops,
            transcendentals=transcendentals,
            bytes_accessed=bytes_accessed,
        ),
    )(alpha, x_in,
      prepared["wenc"], prepared["benc"],
      prepared["w1"], prepared["b1"],
      prepared["w2"], prepared["b2"],
      prepared["wd"], prepared["bd"])

    # Strip batch / lane padding.
    return (feat[:B, :feat_dim], code[:B, :code_len], dec[:B, :txt_len])


# ---------------------------------------------------------------------------
# Test scaffolding
# ---------------------------------------------------------------------------
def make_params(key, in_dim, feat_dim, hidden, code_len, txt_feat_len):
    ks = jax.random.split(key, 8)
    scale = lambda fan_in: 1.0 / jnp.sqrt(jnp.float32(fan_in))
    wenc = jax.random.normal(ks[0], (in_dim, feat_dim), jnp.float32) * scale(in_dim)
    benc = jax.random.normal(ks[1], (1, feat_dim), jnp.float32) * 0.01
    w1 = jax.random.normal(ks[2], (feat_dim, hidden), jnp.float32) * scale(feat_dim)
    b1 = jax.random.normal(ks[3], (1, hidden), jnp.float32) * 0.01
    w2 = jax.random.normal(ks[4], (hidden, code_len), jnp.float32) * scale(hidden)
    b2 = jax.random.normal(ks[5], (1, code_len), jnp.float32) * 0.01
    wd = jax.random.normal(ks[6], (code_len, txt_feat_len), jnp.float32) * scale(code_len)
    bd = jax.random.normal(ks[7], (1, txt_feat_len), jnp.float32) * 0.01
    return (wenc, benc, w1, b1, w2, b2, wd, bd)


def reference_forward(x, params, alpha):
    # Same numerics as the kernel: bf16 matmul inputs, f32 accumulation,
    # f32 elementwise.
    wenc, benc, w1, b1, w2, b2, wd, bd = params
    bf = jnp.bfloat16
    f32 = jnp.float32
    x_flat = x.reshape(x.shape[0], -1).astype(f32)
    feat = jnp.dot(x_flat.astype(bf), wenc.astype(bf),
                   preferred_element_type=f32) + benc
    h = jnp.maximum(jnp.dot(feat.astype(bf), w1.astype(bf),
                            preferred_element_type=f32) + b1, 0.0)
    hid = jnp.dot(h.astype(bf), w2.astype(bf),
                  preferred_element_type=f32) + b2
    code = jnp.tanh(alpha[0] * hid)
    dec = jax.nn.sigmoid(jnp.dot(code.astype(bf), wd.astype(bf),
                                 preferred_element_type=f32) + bd)
    return feat, code, dec


if __name__ == "__main__":
    # Small shapes consistent with the module's 512-d CLIP feature interface.
    B, C, H, W = 8, 3, 32, 32
    FEAT_DIM = 512          # CLIP image feature dim
    HIDDEN = 1024           # fc_encode hidden
    CODE_LEN = 64
    TXT_FEAT_LEN = 128

    key = jax.random.PRNGKey(0)
    kx, kp = jax.random.split(key)
    x = jax.random.normal(kx, (B, C, H, W), jnp.float32)      # NCHW
    params = make_params(kp, C * H * W, FEAT_DIM, HIDDEN, CODE_LEN, TXT_FEAT_LEN)
    alpha = jnp.asarray([1.0], jnp.float32)                   # self.alpha = 1.0

    # One-time weight preparation (pad + bf16 cast hoisted out of the hot path).
    prepared, dims = prepare_params(params)

    feat, code, dec = imgnet_forward(x, prepared, alpha, dims)
    jax.block_until_ready((feat, code, dec))

    feat_r, code_r, dec_r = reference_forward(x, params, alpha)
    assert feat.shape == (B, FEAT_DIM)
    assert code.shape == (B, CODE_LEN)
    assert dec.shape == (B, TXT_FEAT_LEN)
    assert jnp.allclose(feat, feat_r, atol=1e-2, rtol=1e-2)
    assert jnp.allclose(code, code_r, atol=1e-2, rtol=1e-2)
    assert jnp.allclose(dec, dec_r, atol=1e-2, rtol=1e-2)

    print("KERNEL_OK")
</pallas_src>

<mosaic_0001>
module attributes {stable_mosaic.version = 11 : i64} {
  func.func @imgnet_kernel(%arg0: i32, %arg1: memref<1xf32, #tpu.memory_space<smem>>, %arg2: memref<8x3072xf32, #tpu.memory_space<vmem>>, %arg3: memref<3072x512xbf16, #tpu.memory_space<vmem>>, %arg4: memref<1x512xf32, #tpu.memory_space<vmem>>, %arg5: memref<512x1024xbf16, #tpu.memory_space<vmem>>, %arg6: memref<1x1024xf32, #tpu.memory_space<vmem>>, %arg7: memref<1024x128xbf16, #tpu.memory_space<vmem>>, %arg8: memref<1x128xf32, #tpu.memory_space<vmem>>, %arg9: memref<128x128xbf16, #tpu.memory_space<vmem>>, %arg10: memref<1x128xf32, #tpu.memory_space<vmem>>, %arg11: memref<8x512xf32, #tpu.memory_space<vmem>>, %arg12: memref<8x128xf32, #tpu.memory_space<vmem>>, %arg13: memref<8x128xf32, #tpu.memory_space<vmem>>) attributes {dimension_semantics = [#tpu.dimension_semantics<parallel>], iteration_bounds = array<i64: 1>, scalar_prefetch = 0 : i64, scratch_operands = 0 : i64, tpu.core_type = #tpu.core_type<tc>, window_params = [{transform_indices = @transform_0, window_bounds = array<i64: 1>}, {transform_indices = @transform_1, window_bounds = array<i64: 8, 3072>}, {pipeline_mode = #tpu.pipeline_mode<synchronous>, transform_indices = @transform_2, window_bounds = array<i64: 3072, 512>}, {pipeline_mode = #tpu.pipeline_mode<synchronous>, transform_indices = @transform_3, window_bounds = array<i64: 1, 512>}, {pipeline_mode = #tpu.pipeline_mode<synchronous>, transform_indices = @transform_4, window_bounds = array<i64: 512, 1024>}, {pipeline_mode = #tpu.pipeline_mode<synchronous>, transform_indices = @transform_5, window_bounds = array<i64: 1, 1024>}, {pipeline_mode = #tpu.pipeline_mode<synchronous>, transform_indices = @transform_6, window_bounds = array<i64: 1024, 128>}, {pipeline_mode = #tpu.pipeline_mode<synchronous>, transform_indices = @transform_7, window_bounds = array<i64: 1, 128>}, {pipeline_mode = #tpu.pipeline_mode<synchronous>, transform_indices = @transform_8, window_bounds = array<i64: 128, 128>}, {pipeline_mode = #tpu.pipeline_mode<synchronous>, transform_indices = @transform_9, window_bounds = array<i64: 1, 128>}, {transform_indices = @transform_10, window_bounds = array<i64: 8, 512>}, {transform_indices = @transform_11, window_bounds = array<i64: 8, 128>}, {transform_indices = @transform_12, window_bounds = array<i64: 8, 128>}]} {
    %c0 = arith.constant 0 : index
    %c0_0 = arith.constant 0 : index
    %0 = vector.load %arg2[%c0, %c0_0] : memref<8x3072xf32, #tpu.memory_space<vmem>>, vector<8x3072xf32>
    %1 = arith.truncf %0 : vector<8x3072xf32> to vector<8x3072xbf16>
    %c0_1 = arith.constant 0 : index
    %c0_2 = arith.constant 0 : index
    %2 = vector.load %arg3[%c0_1, %c0_2] : memref<3072x512xbf16, #tpu.memory_space<vmem>>, vector<3072x512xbf16>
    %cst = arith.constant dense<0.000000e+00> : vector<8x512xf32>
    %3 = tpu.matmul %1, %2, %cst {dimension_numbers = #tpu.dot_dimension_numbers<[1], [0], [0], [1], [0, 0, 1, 1], [], []>} : vector<8x3072xbf16>, vector<3072x512xbf16>, vector<8x512xf32> -> vector<8x512xf32>
    %c0_3 = arith.constant 0 : index
    %c0_4 = arith.constant 0 : index
    %4 = vector.load %arg4[%c0_3, %c0_4] : memref<1x512xf32, #tpu.memory_space<vmem>>, vector<1x512xf32>
    %5 = vector.broadcast %4 : vector<1x512xf32> to vector<8x512xf32>
    %6 = arith.addf %3, %5 : vector<8x512xf32>
    %c0_5 = arith.constant 0 : index
    %c0_6 = arith.constant 0 : index
    %7 = vector.load %arg11[%c0_5, %c0_6] : memref<8x512xf32, #tpu.memory_space<vmem>>, vector<8x512xf32>
    tpu.vector_store %arg11[%c0_5, %c0_6], %6 {strides = array<i32>} : memref<8x512xf32, #tpu.memory_space<vmem>>, vector<8x512xf32>,
    %8 = arith.truncf %6 : vector<8x512xf32> to vector<8x512xbf16>
    %c0_7 = arith.constant 0 : index
    %c0_8 = arith.constant 0 : index
    %9 = vector.load %arg5[%c0_7, %c0_8] : memref<512x1024xbf16, #tpu.memory_space<vmem>>, vector<512x1024xbf16>
    %cst_9 = arith.constant dense<0.000000e+00> : vector<8x1024xf32>
    %10 = tpu.matmul %8, %9, %cst_9 {dimension_numbers = #tpu.dot_dimension_numbers<[1], [0], [0], [1], [0, 0, 1, 1], [], []>} : vector<8x512xbf16>, vector<512x1024xbf16>, vector<8x1024xf32> -> vector<8x1024xf32>
    %c0_10 = arith.constant 0 : index
    %c0_11 = arith.constant 0 : index
    %11 = vector.load %arg6[%c0_10, %c0_11] : memref<1x1024xf32, #tpu.memory_space<vmem>>, vector<1x1024xf32>
    %12 = vector.broadcast %11 : vector<1x1024xf32> to vector<8x1024xf32>
    %13 = arith.addf %10, %12 : vector<8x1024xf32>
    %cst_12 = arith.constant 0.000000e+00 : f32
    %14 = vector.broadcast %cst_12 : f32 to vector<8x1024xf32>
    %15 = arith.maximumf %13, %14 : vector<8x1024xf32>
    %16 = arith.truncf %15 : vector<8x1024xf32> to vector<8x1024xbf16>
    %c0_13 = arith.constant 0 : index
    %c0_14 = arith.constant 0 : index
    %17 = vector.load %arg7[%c0_13, %c0_14] : memref<1024x128xbf16, #tpu.memory_space<vmem>>, vector<1024x128xbf16>
    %cst_15 = arith.constant dense<0.000000e+00> : vector<8x128xf32>
    %18 = tpu.matmul %16, %17, %cst_15 {dimension_numbers = #tpu.dot_dimension_numbers<[1], [0], [0], [1], [0, 0, 1, 1], [], []>} : vector<8x1024xbf16>, vector<1024x128xbf16>, vector<8x128xf32> -> vector<8x128xf32>
    %c0_16 = arith.constant 0 : index
    %c0_17 = arith.constant 0 : index
    %19 = vector.load %arg8[%c0_16, %c0_17] : memref<1x128xf32, #tpu.memory_space<vmem>>, vector<1x128xf32>
    %20 = vector.broadcast %19 : vector<1x128xf32> to vector<8x128xf32>
    %21 = arith.addf %18, %20 : vector<8x128xf32>
    %c0_18 = arith.constant 0 : index
    %22 = memref.load %arg1[%c0_18] : memref<1xf32, #tpu.memory_space<smem>>
    %23 = vector.broadcast %22 : f32 to vector<8x128xf32>
    %24 = arith.mulf %23, %21 : vector<8x128xf32>
    %25 = math.tanh %24 : vector<8x128xf32>
    %c0_19 = arith.constant 0 : index
    %c0_20 = arith.constant 0 : index
    %26 = vector.load %arg12[%c0_19, %c0_20] : memref<8x128xf32, #tpu.memory_space<vmem>>, vector<8x128xf32>
    tpu.vector_store %arg12[%c0_19, %c0_20], %25 {strides = array<i32>} : memref<8x128xf32, #tpu.memory_space<vmem>>, vector<8x128xf32>,
    %27 = arith.truncf %25 : vector<8x128xf32> to vector<8x128xbf16>
    %c0_21 = arith.constant 0 : index
    %c0_22 = arith.constant 0 : index
    %28 = vector.load %arg9[%c0_21, %c0_22] : memref<128x128xbf16, #tpu.memory_space<vmem>>, vector<128x128xbf16>
    %cst_23 = arith.constant dense<0.000000e+00> : vector<8x128xf32>
    %29 = tpu.matmul %27, %28, %cst_23 {dimension_numbers = #tpu.dot_dimension_numbers<[1], [0], [0], [1], [0, 0, 1, 1], [], []>} : vector<8x128xbf16>, vector<128x128xbf16>, vector<8x128xf32> -> vector<8x128xf32>
    %c0_24 = arith.constant 0 : index
    %c0_25 = arith.constant 0 : index
    %30 = vector.load %arg10[%c0_24, %c0_25] : memref<1x128xf32, #tpu.memory_space<vmem>>, vector<1x128xf32>
    %31 = vector.broadcast %30 : vector<1x128xf32> to vector<8x128xf32>
    %32 = arith.addf %29, %31 : vector<8x128xf32>
    %33 = arith.negf %32 : vector<8x128xf32>
    %34 = math.exp %33 : vector<8x128xf32>
    %cst_26 = arith.constant 1.000000e+00 : f32
    %35 = vector.broadcast %cst_26 : f32 to vector<8x128xf32>
    %36 = arith.addf %35, %34 : vector<8x128xf32>
    %37 = arith.divf %35, %36 : vector<8x128xf32>
    %c0_27 = arith.constant 0 : index
    %c0_28 = arith.constant 0 : index
    %38 = vector.load %arg13[%c0_27, %c0_28] : memref<8x128xf32, #tpu.memory_space<vmem>>, vector<8x128xf32>
    tpu.vector_store %arg13[%c0_27, %c0_28], %37 {strides = array<i32>} : memref<8x128xf32, #tpu.memory_space<vmem>>, vector<8x128xf32>,
    return
  }
  func.func @transform_0(%arg0: i32) -> i32 {
    %c0_i32 = arith.constant 0 : i32
    %c0_i32_0 = arith.constant 0 : i32
    return %c0_i32 : i32
  }
  func.func @transform_1(%arg0: i32) -> (i32, i32) {
    %c0_i32 = arith.constant 0 : i32
    %c0_i32_0 = arith.constant 0 : i32
    return %arg0, %c0_i32 : i32, i32
  }
  func.func @transform_2(%arg0: i32) -> (i32, i32) {
    %c0_i32 = arith.constant 0 : i32
    %c0_i32_0 = arith.constant 0 : i32
    %c0_i32_1 = arith.constant 0 : i32
    return %c0_i32, %c0_i32_0 : i32, i32
  }
  func.func @transform_3(%arg0: i32) -> (i32, i32) {
    %c0_i32 = arith.constant 0 : i32
    %c0_i32_0 = arith.constant 0 : i32
    %c0_i32_1 = arith.constant 0 : i32
    return %c0_i32, %c0_i32_0 : i32, i32
  }
  func.func @transform_4(%arg0: i32) -> (i32, i32) {
    %c0_i32 = arith.constant 0 : i32
    %c0_i32_0 = arith.constant 0 : i32
    %c0_i32_1 = arith.constant 0 : i32
    return %c0_i32, %c0_i32_0 : i32, i32
  }
  func.func @transform_5(%arg0: i32) -> (i32, i32) {
    %c0_i32 = arith.constant 0 : i32
    %c0_i32_0 = arith.constant 0 : i32
    %c0_i32_1 = arith.constant 0 : i32
    return %c0_i32, %c0_i32_0 : i32, i32
  }
  func.func @transform_6(%arg0: i32) -> (i32, i32) {
    %c0_i32 = arith.constant 0 : i32
    %c0_i32_0 = arith.constant 0 : i32
    %c0_i32_1 = arith.constant 0 : i32
    return %c0_i32, %c0_i32_0 : i32, i32
  }
  func.func @transform_7(%arg0: i32) -> (i32, i32) {
    %c0_i32 = arith.constant 0 : i32
    %c0_i32_0 = arith.constant 0 : i32
    %c0_i32_1 = arith.constant 0 : i32
    return %c0_i32, %c0_i32_0 : i32, i32
  }
  func.func @transform_8(%arg0: i32) -> (i32, i32) {
    %c0_i32 = arith.constant 0 : i32
    %c0_i32_0 = arith.constant 0 : i32
    %c0_i32_1 = arith.constant 0 : i32
    return %c0_i32, %c0_i32_0 : i32, i32
  }
  func.func @transform_9(%arg0: i32) -> (i32, i32) {
    %c0_i32 = arith.constant 0 : i32
    %c0_i32_0 = arith.constant 0 : i32
    %c0_i32_1 = arith.constant 0 : i32
    return %c0_i32, %c0_i32_0 : i32, i32
  }
  func.func @transform_10(%arg0: i32) -> (i32, i32) {
    %c0_i32 = arith.constant 0 : i32
    %c0_i32_0 = arith.constant 0 : i32
    return %arg0, %c0_i32 : i32, i32
  }
  func.func @transform_11(%arg0: i32) -> (i32, i32) {
    %c0_i32 = arith.constant 0 : i32
    %c0_i32_0 = arith.constant 0 : i32
    return %arg0, %c0_i32 : i32, i32
  }
  func.func @transform_12(%arg0: i32) -> (i32, i32) {
    %c0_i32 = arith.constant 0 : i32
    %c0_i32_0 = arith.constant 0 : i32
    return %arg0, %c0_i32 : i32, i32
  }
}

</mosaic_0001>

<llo_original>
// kernel: imgnet_forward.1
$region0: #{imgnet_forward.1}
  #allocation0 [shape = 'u32[]', space=smem, size = 0x4, offset = 0x4, fixed_abs, tag = 'smem constant byte address 0x4 - core index']
  #allocation1 [shape = 'u32[144,128]{1,0:T(1,128)}', space=vmem, size = 0x12000, scoped, tag = 'internal scratch']
  #allocation2 [shape = 'f32[1]{0:T(128)S(6)}', space=smem, size = 0x200, scoped, tag = 'scoped memory for imgnet_forward.1']
  %s0 = inlined_call_operand.<no memory space> [shape: f32[1], index: 0, kind: input, shape index: {}]
  %s1 = inlined_call_operand.vmem [shape: f32[8,3072], index: 1, kind: input, shape index: {}]
  %s2 = inlined_call_operand.hbm [shape: bf16[3072,512], index: 2, kind: input, shape index: {}]
  %s3 = inlined_call_operand.hbm [shape: f32[1,512], index: 3, kind: input, shape index: {}]
  %s4 = inlined_call_operand.hbm [shape: bf16[512,1024], index: 4, kind: input, shape index: {}]
  %s5 = inlined_call_operand.hbm [shape: f32[1,1024], index: 5, kind: input, shape index: {}]
  %s6 = inlined_call_operand.hbm [shape: bf16[1024,128], index: 6, kind: input, shape index: {}]
  %s7 = inlined_call_operand.hbm [shape: f32[1,128], index: 7, kind: input, shape index: {}]
  %s8 = inlined_call_operand.hbm [shape: bf16[128,128], index: 8, kind: input, shape index: {}]
  %s9 = inlined_call_operand.hbm [shape: f32[1,128], index: 9, kind: input, shape index: {}]
  %s10 = inlined_call_operand.hbm [shape: f32[8,512], index: 10, kind: output, shape index: {0}]
  %s11 = inlined_call_operand.hbm [shape: f32[8,128], index: 11, kind: output, shape index: {1}]
  %s12 = inlined_call_operand.hbm [shape: f32[8,128], index: 12, kind: output, shape index: {2}]
  %13 = xla_tuple %s10, %s11, %s12
  %s14 = sld [smem:[#allocation0]]
  $region98: #{imgnet_forward.1} parent=0
    _
  %s16 = ssub.s32 1, %s14
  %s17 = scalar_select 0, %s16, %s14
  %18 = sst [smem:[#allocation2]] %s0
  $region1: #{imgnet_forward.1} parent=0
    #allocation3 [shape = 'u8[3145728]{0}', space=vmem, size = 0x300000, scoped, tag = 'input window, operand 2, single buffered']
    #allocation4 [shape = 's32[1]{0}', space=sflag, size = 0x4, scoped, tag = 'scoped memory for imgnet_forward.1']
    #allocation5 [shape = 's32[1]{0}', space=sflag, size = 0x4, scoped, tag = 'scoped memory for imgnet_forward.1']
    #allocation6 [shape = 'u8[2048]{0}', space=vmem, size = 0x800, scoped, tag = 'input window, operand 3, single buffered']
    #allocation7 [shape = 's32[1]{0}', space=sflag, size = 0x4, scoped, tag = 'scoped memory for imgnet_forward.1']
    #allocation8 [shape = 'u8[1048576]{0}', space=vmem, size = 0x100000, scoped, tag = 'input window, operand 4, single buffered']
    #allocation9 [shape = 'u8[4096]{0}', space=vmem, size = 0x1000, scoped, tag = 'input window, operand 5, single buffered']
    #allocation10 [shape = 's32[1]{0}', space=sflag, size = 0x4, scoped, tag = 'scoped memory for imgnet_forward.1']
    #allocation11 [shape = 'u8[262144]{0}', space=vmem, size = 0x40000, scoped, tag = 'input window, operand 6, single buffered']
    #allocation12 [shape = 'u8[512]{0}', space=vmem, size = 0x400, scoped, tag = 'input window, operand 7, single buffered']
    #allocation13 [shape = 's32[1]{0}', space=sflag, size = 0x4, scoped, tag = 'scoped memory for imgnet_forward.1']
    #allocation14 [shape = 'u8[32768]{0}', space=vmem, size = 0x8000, scoped, tag = 'input window, operand 8, single buffered']
    #allocation15 [shape = 'u8[512]{0}', space=vmem, size = 0x400, scoped, tag = 'input window, operand 9, single buffered']
    #allocation16 [shape = 's32[1]{0}', space=sflag, size = 0x4, scoped, tag = 'scoped memory for imgnet_forward.1']
    #allocation17 [shape = 'u8[16384]{0}', space=vmem, size = 0x4000, scoped, tag = 'output window, operand 0, single buffered']
    #allocation18 [shape = 'u8[4096]{0}', space=vmem, size = 0x1000, scoped, tag = 'output window, operand 1, single buffered']
    #allocation19 [shape = 's32[1]{0}', space=sflag, size = 0x4, scoped, tag = 'scoped memory for imgnet_forward.1']
    #allocation20 [shape = 'u8[4096]{0}', space=vmem, size = 0x1000, scoped, tag = 'output window, operand 2, single buffered']
    %19 = vsyncpa [#allocation4], 0
    %20 = vsyncpa [#allocation7], 0
    %21 = vsyncpa [#allocation10], 0
    %22 = vsyncpa [#allocation13], 0
    %23 = vsyncpa [#allocation16], 0
    %24 = vsyncpa [#allocation5], 0
    %25 = vsyncpa [#allocation19], 0
    // Predicated region
    $region2: #{imgnet_forward.1} parent=1 // pred_check
      _
    $region3: #{imgnet_forward.1} parent=1 // pred_check_branch
      %27 = sbr.rel (0) target = $region5
    $region4: #{imgnet_forward.1} parent=1 // pred_region
      _
    $region5: #{imgnet_forward.1} parent=1 // pred_fallthru
      _
    // Predicated region
    $region6: #{imgnet_forward.1} parent=1 // pred_check
      _
    $region7: #{imgnet_forward.1} parent=1 // pred_check_branch
      %29 = sbr.rel (0) target = $region9
    $region8: #{imgnet_forward.1} parent=1 // pred_region
      _
    $region9: #{imgnet_forward.1} parent=1 // pred_fallthru
      _
    // Predicated region
    $region10: #{imgnet_forward.1} parent=1 // pred_check
      _
    $region11: #{imgnet_forward.1} parent=1 // pred_check_branch
      %31 = sbr.rel (0) target = $region13
    $region12: #{imgnet_forward.1} parent=1 // pred_region
      %s33 = ssub.s32 98304, 98304
      %34 = vsyncadd [#allocation4], %s33
      %s35 = sshll.u32 [#allocation3], 4
      %s36 = int_to_ptr.vmem [resolvable:$true] %s35
      %41 = dma.hbm_to_vmem [thread:$0]  %s2, 98304, %s36, [#allocation4], 256, 256, 16
    $region13: #{imgnet_forward.1} parent=1 // pred_fallthru
      _
    // Predicated region
    $region14: #{imgnet_forward.1} parent=1 // pred_check
      _
    $region15: #{imgnet_forward.1} parent=1 // pred_check_branch
      %43 = sbr.rel (0) target = $region17
    $region16: #{imgnet_forward.1} parent=1 // pred_region
      %s45 = ssub.s32 64, 64
      %46 = vsyncadd [#allocation7], %s45
      %s48 = sshll.u32 [#allocation6], 4
      %s49 = int_to_ptr.vmem [resolvable:$true] %s48
      %51 = dma.hbm_to_vmem [thread:$0]  %s3, 64, %s49, [#allocation7]
    $region17: #{imgnet_forward.1} parent=1 // pred_fallthru
      _
    // Predicated region
    $region18: #{imgnet_forward.1} parent=1 // pred_check
      _
    $region19: #{imgnet_forward.1} parent=1 // pred_check_branch
      %53 = sbr.rel (0) target = $region21
    $region20: #{imgnet_forward.1} parent=1 // pred_region
      %s55 = ssub.s32 32768, 32768
      %56 = vsyncadd [#allocation7], %s55
      %s57 = sshll.u32 [#allocation8], 4
      %s58 = int_to_ptr.vmem [resolvable:$true] %s57
      %63 = dma.hbm_to_vmem [thread:$0]  %s4, 32768, %s58, [#allocation7], 512, 512, 32
    $region21: #{imgnet_forward.1} parent=1 // pred_fallthru
      _
    // Predicated region
    $region22: #{imgnet_forward.1} parent=1 // pred_check
      _
    $region23: #{imgnet_forward.1} parent=1 // pred_check_branch
      %65 = sbr.rel (0) target = $region25
    $region24: #{imgnet_forward.1} parent=1 // pred_region
      %s67 = ssub.s32 128, 128
      %68 = vsyncadd [#allocation10], %s67
      %s70 = sshll.u32 [#allocation9], 4
      %s71 = int_to_ptr.vmem [resolvable:$true] %s70
      %73 = dma.hbm_to_vmem [thread:$0]  %s5, 128, %s71, [#allocation10]
    $region25: #{imgnet_forward.1} parent=1 // pred_fallthru
      _
    // Predicated region
    $region26: #{imgnet_forward.1} parent=1 // pred_check
      _
    $region27: #{imgnet_forward.1} parent=1 // pred_check_branch
      %75 = sbr.rel (0) target = $region29
    $region28: #{imgnet_forward.1} parent=1 // pred_region
      %s77 = ssub.s32 8192, 8192
      %78 = vsyncadd [#allocation10], %s77
      %s79 = sshll.u32 [#allocation11], 4
      %s80 = int_to_ptr.vmem [resolvable:$true] %s79
      %85 = dma.hbm_to_vmem [thread:$0]  %s6, 8192, %s80, [#allocation10], 64, 64, 4
    $region29: #{imgnet_forward.1} parent=1 // pred_fallthru
      _
    // Predicated region
    $region30: #{imgnet_forward.1} parent=1 // pred_check
      _
    $region31: #{imgnet_forward.1} parent=1 // pred_check_branch
      %87 = sbr.rel (0) target = $region33
    $region32: #{imgnet_forward.1} parent=1 // pred_region
      %s89 = ssub.s32 16, 16
      %90 = vsyncadd [#allocation13], %s89
      %s92 = sshll.u32 [#allocation12], 4
      %s93 = int_to_ptr.vmem [resolvable:$true] %s92
      %95 = dma.hbm_to_vmem [thread:$0]  %s7, 16, %s93, [#allocation13]
    $region33: #{imgnet_forward.1} parent=1 // pred_fallthru
      _
    // Predicated region
    $region34: #{imgnet_forward.1} parent=1 // pred_check
      _
    $region35: #{imgnet_forward.1} parent=1 // pred_check_branch
      %97 = sbr.rel (0) target = $region37
    $region36: #{imgnet_forward.1} parent=1 // pred_region
      %s99 = ssub.s32 1024, 1024
      %100 = vsyncadd [#allocation13], %s99
      %s101 = sshll.u32 [#allocation14], 4
      %s102 = int_to_ptr.vmem [resolvable:$true] %s101
      %107 = dma.hbm_to_vmem [thread:$0]  %s8, 1024, %s102, [#allocation13], 64, 64, 4
    $region37: #{imgnet_forward.1} parent=1 // pred_fallthru
      _
    // Predicated region
    $region38: #{imgnet_forward.1} parent=1 // pred_check
      _
    $region39: #{imgnet_forward.1} parent=1 // pred_check_branch
      %109 = sbr.rel (0) target = $region41
    $region40: #{imgnet_forward.1} parent=1 // pred_region
      %s111 = ssub.s32 16, 16
      %112 = vsyncadd [#allocation16], %s111
      %s114 = sshll.u32 [#allocation15], 4
      %s115 = int_to_ptr.vmem [resolvable:$true] %s114
      %117 = dma.hbm_to_vmem [thread:$0]  %s9, 16, %s115, [#allocation16]
    $region41: #{imgnet_forward.1} parent=1 // pred_fallthru
      _
    // Predicated region
    $region42: #{imgnet_forward.1} parent=1 // pred_check
      _
    $region43: #{imgnet_forward.1} parent=1 // pred_check_branch
      %119 = sbr.rel (0) target = $region45
    $region44: #{imgnet_forward.1} parent=1 // pred_region
      %120 = dma.done [#allocation4], 98304
    $region45: #{imgnet_forward.1} parent=1 // pred_fallthru
      _
    // Predicated region
    $region46: #{imgnet_forward.1} parent=1 // pred_check
      _
    $region47: #{imgnet_forward.1} parent=1 // pred_check_branch
      %122 = sbr.rel (0) target = $region49
    $region48: #{imgnet_forward.1} parent=1 // pred_region
      %123 = dma.done [#allocation7], 64
    $region49: #{imgnet_forward.1} parent=1 // pred_fallthru
      _
    // Predicated region
    $region50: #{imgnet_forward.1} parent=1 // pred_check
      _
    $region51: #{imgnet_forward.1} parent=1 // pred_check_branch
      %125 = sbr.rel (0) target = $region53
    $region52: #{imgnet_forward.1} parent=1 // pred_region
      %126 = dma.done [#allocation7], 32768
    $region53: #{imgnet_forward.1} parent=1 // pred_fallthru
      _
    // Predicated region
    $region54: #{imgnet_forward.1} parent=1 // pred_check
      _
    $region55: #{imgnet_forward.1} parent=1 // pred_check_branch
      %128 = sbr.rel (0) target = $region57
    $region56: #{imgnet_forward.1} parent=1 // pred_region
      %129 = dma.done [#allocation10], 128
    $region57: #{imgnet_forward.1} parent=1 // pred_fallthru
      _
    // Predicated region
    $region58: #{imgnet_forward.1} parent=1 // pred_check
      _
    $region59: #{imgnet_forward.1} parent=1 // pred_check_branch
      %131 = sbr.rel (0) target = $region61
    $region60: #{imgnet_forward.1} parent=1 // pred_region
      %132 = dma.done [#allocation10], 8192
    $region61: #{imgnet_forward.1} parent=1 // pred_fallthru
      _
    // Predicated region
    $region62: #{imgnet_forward.1} parent=1 // pred_check
      _
    $region63: #{imgnet_forward.1} parent=1 // pred_check_branch
      %134 = sbr.rel (0) target = $region65
    $region64: #{imgnet_forward.1} parent=1 // pred_region
      %135 = dma.done [#allocation13], 16
    $region65: #{imgnet_forward.1} parent=1 // pred_fallthru
      _
    // Predicated region
    $region66: #{imgnet_forward.1} parent=1 // pred_check
      _
    $region67: #{imgnet_forward.1} parent=1 // pred_check_branch
      %137 = sbr.rel (0) target = $region69
    $region68: #{imgnet_forward.1} parent=1 // pred_region
      %138 = dma.done [#allocation13], 1024
    $region69: #{imgnet_forward.1} parent=1 // pred_fallthru
      _
    // Predicated region
    $region70: #{imgnet_forward.1} parent=1 // pred_check
      _
    $region71: #{imgnet_forward.1} parent=1 // pred_check_branch
      %140 = sbr.rel (0) target = $region73
    $region72: #{imgnet_forward.1} parent=1 // pred_region
      %141 = dma.done [#allocation16], 16
    $region73: #{imgnet_forward.1} parent=1 // pred_fallthru
      _
    %v143 = vld [vmem:[%s1] sm:$0xff]
    %v144 = vld [vmem:[%s1 + $0x8] sm:$0xff]
    %v145 = vld [vmem:[%s1 + $0x10] sm:$0xff]
    %v146 = vld [vmem:[%s1 + $0x18] sm:$0xff]
    %v147 = vld [vmem:[%s1 + $0x20] sm:$0xff]
    %v148 = vld [vmem:[%s1 + $0x28] sm:$0xff]
    %v149 = vld [vmem:[%s1 + $0x30] sm:$0xff]
    %v150 = vld [vmem:[%s1 + $0x38] sm:$0xff]
    %v151 = vld [vmem:[%s1 + $0x40] sm:$0xff]
    %v152 = vld [vmem:[%s1 + $0x48] sm:$0xff]
    %v153 = vld [vmem:[%s1 + $0x50] sm:$0xff]
    %v154 = vld [vmem:[%s1 + $0x58] sm:$0xff]
    %v155 = vld [vmem:[%s1 + $0x60] sm:$0xff]
    %v156 = vld [vmem:[%s1 + $0x68] sm:$0xff]
    %v157 = vld [vmem:[%s1 + $0x70] sm:$0xff]
    %v158 = vld [vmem:[%s1 + $0x78] sm:$0xff]
    %v159 = vld [vmem:[%s1 + $0x80] sm:$0xff]
    %v160 = vld [vmem:[%s1 + $0x88] sm:$0xff]
    %v161 = vld [vmem:[%s1 + $0x90] sm:$0xff]
    %v162 = vld [vmem:[%s1 + $0x98] sm:$0xff]
    %v163 = vld [vmem:[%s1 + $0xa0] sm:$0xff]
    %v164 = vld [vmem:[%s1 + $0xa8] sm:$0xff]
    %v165 = vld [vmem:[%s1 + $0xb0] sm:$0xff]
    %v166 = vld [vmem:[%s1 + $0xb8] sm:$0xff]
    %v167 = vpack.c.bf16 %v143, %v143
    %v168 = vpack.c.bf16 %v144, %v144
    %v169 = vpack.c.bf16 %v145, %v145
    %v170 = vpack.c.bf16 %v146, %v146
    %v171 = vpack.c.bf16 %v147, %v147
    %v172 = vpack.c.bf16 %v148, %v148
    %v173 = vpack.c.bf16 %v149, %v149
    %v174 = vpack.c.bf16 %v150, %v150
    %v175 = vpack.c.bf16 %v151, %v151
    %v176 = vpack.c.bf16 %v152, %v152
    %v177 = vpack.c.bf16 %v153, %v153
    %v178 = vpack.c.bf16 %v154, %v154
    %v179 = vpack.c.bf16 %v155, %v155
    %v180 = vpack.c.bf16 %v156, %v156
    %v181 = vpack.c.bf16 %v157, %v157
    %v182 = vpack.c.bf16 %v158, %v158
    %v183 = vpack.c.bf16 %v159, %v159
    %v184 = vpack.c.bf16 %v160, %v160
    %v185 = vpack.c.bf16 %v161, %v161
    %v186 = vpack.c.bf16 %v162, %v162
    %v187 = vpack.c.bf16 %v163, %v163
    %v188 = vpack.c.bf16 %v164, %v164
    %v189 = vpack.c.bf16 %v165, %v165
    %v190 = vpack.c.bf16 %v166, %v166
    %v191 = vld [vmem:[#allocation3] sm:$0xff]
    %v192 = vld [vmem:[#allocation3 + $0x8] sm:$0xff]
    %v193 = vld [vmem:[#allocation3 + $0x10] sm:$0xff]
    %v194 = vld [vmem:[#allocation3 + $0x18] sm:$0xff]
    %v195 = vld [vmem:[#allocation3 + $0x20] sm:$0xff]
    %v196 = vld [vmem:[#allocation3 + $0x28] sm:$0xff]
    %v197 = vld [vmem:[#allocation3 + $0x30] sm:$0xff]
    %v198 = vld [vmem:[#allocation3 + $0x38] sm:$0xff]
    %v199 = vld [vmem:[#allocation3 + $0x40] sm:$0xff]
    %v200 = vld [vmem:[#allocation3 + $0x48] sm:$0xff]
    %v201 = vld [vmem:[#allocation3 + $0x50] sm:$0xff]
    %v202 = vld [vmem:[#allocation3 + $0x58] sm:$0xff]
    %v203 = vld [vmem:[#allocation3 + $0x60] sm:$0xff]
    %v204 = vld [vmem:[#allocation3 + $0x68] sm:$0xff]
    %v205 = vld [vmem:[#allocation3 + $0x70] sm:$0xff]
    %v206 = vld [vmem:[#allocation3 + $0x78] sm:$0xff]
    %v207 = vld [vmem:[#allocation3 + $0x80] sm:$0xff]
    %v208 = vld [vmem:[#allocation3 + $0x88] sm:$0xff]
    %v209 = vld [vmem:[#allocation3 + $0x90] sm:$0xff]
    %v210 = vld [vmem:[#allocation3 + $0x98] sm:$0xff]
    %v211 = vld [vmem:[#allocation3 + $0xa0] sm:$0xff]
    %v212 = vld [vmem:[#allocation3 + $0xa8] sm:$0xff]
    %v213 = vld [vmem:[#allocation3 + $0xb0] sm:$0xff]
    %v214 = vld [vmem:[#allocation3 + $0xb8] sm:$0xff]
    %v215 = vld [vmem:[#allocation3 + $0xc0] sm:$0xff]
    %v216 = vld [vmem:[#allocation3 + $0xc8] sm:$0xff]
    %v217 = vld [vmem:[#allocation3 + $0xd0] sm:$0xff]
    %v218 = vld [vmem:[#allocation3 + $0xd8] sm:$0xff]
    %v219 = vld [vmem:[#allocation3 + $0xe0] sm:$0xff]
    %v220 = vld [vmem:[#allocation3 + $0xe8] sm:$0xff]
    %v221 = vld [vmem:[#allocation3 + $0xf0] sm:$0xff]
    %v222 = vld [vmem:[#allocation3 + $0xf8] sm:$0xff]
    %v223 = vld [vmem:[#allocation3 + $0x100] sm:$0xff]
    %v224 = vld [vmem:[#allocation3 + $0x108] sm:$0xff]
    %v225 = vld [vmem:[#allocation3 + $0x110] sm:$0xff]
    %v226 = vld [vmem:[#allocation3 + $0x118] sm:$0xff]
    %v227 = vld [vmem:[#allocation3 + $0x120] sm:$0xff]
    %v228 = vld [vmem:[#allocation3 + $0x128] sm:$0xff]
    %v229 = vld [vmem:[#allocation3 + $0x130] sm:$0xff]
    %v230 = vld [vmem:[#allocation3 + $0x138] sm:$0xff]
    %v231 = vld [vmem:[#allocation3 + $0x140] sm:$0xff]
    %v232 = vld [vmem:[#allocation3 + $0x148] sm:$0xff]
    %v233 = vld [vmem:[#allocation3 + $0x150] sm:$0xff]
    %v234 = vld [vmem:[#allocation3 + $0x158] sm:$0xff]
    %v235 = vld [vmem:[#allocation3 + $0x160] sm:$0xff]
    %v236 = vld [vmem:[#allocation3 + $0x168] sm:$0xff]
    %v237 = vld [vmem:[#allocation3 + $0x170] sm:$0xff]
    %v238 = vld [vmem:[#allocation3 + $0x178] sm:$0xff]
    %v239 = vld [vmem:[#allocation3 + $0x180] sm:$0xff]
    %v240 = vld [vmem:[#allocation3 + $0x188] sm:$0xff]
    %v241 = vld [vmem:[#allocation3 + $0x190] sm:$0xff]
    %v242 = vld [vmem:[#allocation3 + $0x198] sm:$0xff]
    %v243 = vld [vmem:[#allocation3 + $0x1a0] sm:$0xff]
    %v244 = vld [vmem:[#allocation3 + $0x1a8] sm:$0xff]
    %v245 = vld [vmem:[#allocation3 + $0x1b0] sm:$0xff]
    %v246 = vld [vmem:[#allocation3 + $0x1b8] sm:$0xff]
    %v247 = vld [vmem:[#allocation3 + $0x1c0] sm:$0xff]
    %v248 = vld [vmem:[#allocation3 + $0x1c8] sm:$0xff]
    %v249 = vld [vmem:[#allocation3 + $0x1d0] sm:$0xff]
    %v250 = vld [vmem:[#allocation3 + $0x1d8] sm:$0xff]
    %v251 = vld [vmem:[#allocation3 + $0x1e0] sm:$0xff]
    %v252 = vld [vmem:[#allocation3 + $0x1e8] sm:$0xff]
    %v253 = vld [vmem:[#allocation3 + $0x1f0] sm:$0xff]
    %v254 = vld [vmem:[#allocation3 + $0x1f8] sm:$0xff]
    %v255 = vld [vmem:[#allocation3 + $0x200] sm:$0xff]
    %v256 = vld [vmem:[#allocation3 + $0x208] sm:$0xff]
    %v257 = vld [vmem:[#allocation3 + $0x210] sm:$0xff]
    %v258 = vld [vmem:[#allocation3 + $0x218] sm:$0xff]
    %v259 = vld [vmem:[#allocation3 + $0x220] sm:$0xff]
    %v260 = vld [vmem:[#allocation3 + $0x228] sm:$0xff]
    %v261 = vld [vmem:[#allocation3 + $0x230] sm:$0xff]
    %v262 = vld [vmem:[#allocation3 + $0x238] sm:$0xff]
    %v263 = vld [vmem:[#allocation3 + $0x240] sm:$0xff]
    %v264 = vld [vmem:[#allocation3 + $0x248] sm:$0xff]
    %v265 = vld [vmem:[#allocation3 + $0x250] sm:$0xff]
    %v266 = vld [vmem:[#allocation3 + $0x258] sm:$0xff]
    %v267 = vld [vmem:[#allocation3 + $0x260] sm:$0xff]
    %v268 = vld [vmem:[#allocation3 + $0x268] sm:$0xff]
    %v269 = vld [vmem:[#allocation3 + $0x270] sm:$0xff]
    %v270 = vld [vmem:[#allocation3 + $0x278] sm:$0xff]
    %v271 = vld [vmem:[#allocation3 + $0x280] sm:$0xff]
    %v272 = vld [vmem:[#allocation3 + $0x288] sm:$0xff]
    %v273 = vld [vmem:[#allocation3 + $0x290] sm:$0xff]
    %v274 = vld [vmem:[#allocation3 + $0x298] sm:$0xff]
    %v275 = vld [vmem:[#allocation3 + $0x2a0] sm:$0xff]
    %v276 = vld [vmem:[#allocation3 + $0x2a8] sm:$0xff]
    %v277 = vld [vmem:[#allocation3 + $0x2b0] sm:$0xff]
    %v278 = vld [vmem:[#allocation3 + $0x2b8] sm:$0xff]
    %v279 = vld [vmem:[#allocation3 + $0x2c0] sm:$0xff]
    %v280 = vld [vmem:[#allocation3 + $0x2c8] sm:$0xff]
    %v281 = vld [vmem:[#allocation3 + $0x2d0] sm:$0xff]
    %v282 = vld [vmem:[#allocation3 + $0x2d8] sm:$0xff]
    %v283 = vld [vmem:[#allocation3 + $0x2e0] sm:$0xff]
    %v284 = vld [vmem:[#allocation3 + $0x2e8] sm:$0xff]
    %v285 = vld [vmem:[#allocation3 + $0x2f0] sm:$0xff]
    %v286 = vld [vmem:[#allocation3 + $0x2f8] sm:$0xff]
    %v287 = vld [vmem:[#allocation3 + $0x300] sm:$0xff]
    %v288 = vld [vmem:[#allocation3 + $0x308] sm:$0xff]
    %v289 = vld [vmem:[#allocation3 + $0x310] sm:$0xff]
    %v290 = vld [vmem:[#allocation3 + $0x318] sm:$0xff]
    %v291 = vld [vmem:[#allocation3 + $0x320] sm:$0xff]
    %v292 = vld [vmem:[#allocation3 + $0x328] sm:$0xff]
    %v293 = vld [vmem:[#allocation3 + $0x330] sm:$0xff]
    %v294 = vld [vmem:[#allocation3 + $0x338] sm:$0xff]
    %v295 = vld [vmem:[#allocation3 + $0x340] sm:$0xff]
    %v296 = vld [vmem:[#allocation3 + $0x348] sm:$0xff]
    %v297 = vld [vmem:[#allocation3 + $0x350] sm:$0xff]
    %v298 = vld [vmem:[#allocation3 + $0x358] sm:$0xff]
    %v299 = vld [vmem:[#allocation3 + $0x360] sm:$0xff]
    %v300 = vld [vmem:[#allocation3 + $0x368] sm:$0xff]
    %v301 = vld [vmem:[#allocation3 + $0x370] sm:$0xff]
    %v302 = vld [vmem:[#allocation3 + $0x378] sm:$0xff]
    %v303 = vld [vmem:[#allocation3 + $0x380] sm:$0xff]
    %v304 = vld [vmem:[#allocation3 + $0x388] sm:$0xff]
    %v305 = vld [vmem:[#allocation3 + $0x390] sm:$0xff]
    %v306 = vld [vmem:[#allocation3 + $0x398] sm:$0xff]
    %v307 = vld [vmem:[#allocation3 + $0x3a0] sm:$0xff]
    %v308 = vld [vmem:[#allocation3 + $0x3a8] sm:$0xff]
    %v309 = vld [vmem:[#allocation3 + $0x3b0] sm:$0xff]
    %v310 = vld [vmem:[#allocation3 + $0x3b8] sm:$0xff]
    %v311 = vld [vmem:[#allocation3 + $0x3c0] sm:$0xff]
    %v312 = vld [vmem:[#allocation3 + $0x3c8] sm:$0xff]
    %v313 = vld [vmem:[#allocation3 + $0x3d0] sm:$0xff]
    %v314 = vld [vmem:[#allocation3 + $0x3d8] sm:$0xff]
    %v315 = vld [vmem:[#allocation3 + $0x3e0] sm:$0xff]
    %v316 = vld [vmem:[#allocation3 + $0x3e8] sm:$0xff]
    %v317 = vld [vmem:[#allocation3 + $0x3f0] sm:$0xff]
    %v318 = vld [vmem:[#allocation3 + $0x3f8] sm:$0xff]
    %v319 = vld [vmem:[#allocation3 + $0x400] sm:$0xff]
    %v320 = vld [vmem:[#allocation3 + $0x408] sm:$0xff]
    %v321 = vld [vmem:[#allocation3 + $0x410] sm:$0xff]
    %v322 = vld [vmem:[#allocation3 + $0x418] sm:$0xff]
    %v323 = vld [vmem:[#allocation3 + $0x420] sm:$0xff]
    %v324 = vld [vmem:[#allocation3 + $0x428] sm:$0xff]
    %v325 = vld [vmem:[#allocation3 + $0x430] sm:$0xff]
    %v326 = vld [vmem:[#allocation3 + $0x438] sm:$0xff]
    %v327 = vld [vmem:[#allocation3 + $0x440] sm:$0xff]
    %v328 = vld [vmem:[#allocation3 + $0x448] sm:$0xff]
    %v329 = vld [vmem:[#allocation3 + $0x450] sm:$0xff]
    %v330 = vld [vmem:[#allocation3 + $0x458] sm:$0xff]
    %v331 = vld [vmem:[#allocation3 + $0x460] sm:$0xff]
    %v332 = vld [vmem:[#allocation3 + $0x468] sm:$0xff]
    %v333 = vld [vmem:[#allocation3 + $0x470] sm:$0xff]
    %v334 = vld [vmem:[#allocation3 + $0x478] sm:$0xff]
    %v335 = vld [vmem:[#allocation3 + $0x480] sm:$0xff]
    %v336 = vld [vmem:[#allocation3 + $0x488] sm:$0xff]
    %v337 = vld [vmem:[#allocation3 + $0x490] sm:$0xff]
    %v338 = vld [vmem:[#allocation3 + $0x498] sm:$0xff]
    %v339 = vld [vmem:[#allocation3 + $0x4a0] sm:$0xff]
    %v340 = vld [vmem:[#allocation3 + $0x4a8] sm:$0xff]
    %v341 = vld [vmem:[#allocation3 + $0x4b0] sm:$0xff]
    %v342 = vld [vmem:[#allocation3 + $0x4b8] sm:$0xff]
    %v343 = vld [vmem:[#allocation3 + $0x4c0] sm:$0xff]
    %v344 = vld [vmem:[#allocation3 + $0x4c8] sm:$0xff]
    %v345 = vld [vmem:[#allocation3 + $0x4d0] sm:$0xff]
    %v346 = vld [vmem:[#allocation3 + $0x4d8] sm:$0xff]
    %v347 = vld [vmem:[#allocation3 + $0x4e0] sm:$0xff]
    %v348 = vld [vmem:[#allocation3 + $0x4e8] sm:$0xff]
    %v349 = vld [vmem:[#allocation3 + $0x4f0] sm:$0xff]
    %v350 = vld [vmem:[#allocation3 + $0x4f8] sm:$0xff]
    %v351 = vld [vmem:[#allocation3 + $0x500] sm:$0xff]
    %v352 = vld [vmem:[#allocation3 + $0x508] sm:$0xff]
    %v353 = vld [vmem:[#allocation3 + $0x510] sm:$0xff]
    %v354 = vld [vmem:[#allocation3 + $0x518] sm:$0xff]
    %v355 = vld [vmem:[#allocation3 + $0x520] sm:$0xff]
    %v356 = vld [vmem:[#allocation3 + $0x528] sm:$0xff]
    %v357 = vld [vmem:[#allocation3 + $0x530] sm:$0xff]
    %v358 = vld [vmem:[#allocation3 + $0x538] sm:$0xff]
    %v359 = vld [vmem:[#allocation3 + $0x540] sm:$0xff]
    %v360 = vld [vmem:[#allocation3 + $0x548] sm:$0xff]
    %v361 = vld [vmem:[#allocation3 + $0x550] sm:$0xff]
    %v362 = vld [vmem:[#allocation3 + $0x558] sm:$0xff]
    %v363 = vld [vmem:[#allocation3 + $0x560] sm:$0xff]
    %v364 = vld [vmem:[#allocation3 + $0x568] sm:$0xff]
    %v365 = vld [vmem:[#allocation3 + $0x570] sm:$0xff]
    %v366 = vld [vmem:[#allocation3 + $0x578] sm:$0xff]
    %v367 = vld [vmem:[#allocation3 + $0x580] sm:$0xff]
    %v368 = vld [vmem:[#allocation3 + $0x588] sm:$0xff]
    %v369 = vld [vmem:[#allocation3 + $0x590] sm:$0xff]
    %v370 = vld [vmem:[#allocation3 + $0x598] sm:$0xff]
    %v371 = vld [vmem:[#allocation3 + $0x5a0] sm:$0xff]
    %v372 = vld [vmem:[#allocation3 + $0x5a8] sm:$0xff]
    %v373 = vld [vmem:[#allocation3 + $0x5b0] sm:$0xff]
    %v374 = vld [vmem:[#allocation3 + $0x5b8] sm:$0xff]
    %v375 = vld [vmem:[#allocation3 + $0x5c0] sm:$0xff]
    %v376 = vld [vmem:[#allocation3 + $0x5c8] sm:$0xff]
    %v377 = vld [vmem:[#allocation3 + $0x5d0] sm:$0xff]
    %v378 = vld [vmem:[#allocation3 + $0x5d8] sm:$0xff]
    %v379 = vld [vmem:[#allocation3 + $0x5e0] sm:$0xff]
    %v380 = vld [vmem:[#allocation3 + $0x5e8] sm:$0xff]
    %v381 = vld [vmem:[#allocation3 + $0x5f0] sm:$0xff]
    %v382 = vld [vmem:[#allocation3 + $0x5f8] sm:$0xff]
    %v383 = vld [vmem:[#allocation3 + $0x600] sm:$0xff]
    %v384 = vld [vmem:[#allocation3 + $0x608] sm:$0xff]
    %v385 = vld [vmem:[#allocation3 + $0x610] sm:$0xff]
    %v386 = vld [vmem:[#allocation3 + $0x618] sm:$0xff]
    %v387 = vld [vmem:[#allocation3 + $0x620] sm:$0xff]
    %v388 = vld [vmem:[#allocation3 + $0x628] sm:$0xff]
    %v389 = vld [vmem:[#allocation3 + $0x630] sm:$0xff]
    %v390 = vld [vmem:[#allocation3 + $0x638] sm:$0xff]
    %v391 = vld [vmem:[#allocation3 + $0x640] sm:$0xff]
    %v392 = vld [vmem:[#allocation3 + $0x648] sm:$0xff]
    %v393 = vld [vmem:[#allocation3 + $0x650] sm:$0xff]
    %v394 = vld [vmem:[#allocation3 + $0x658] sm:$0xff]
    %v395 = vld [vmem:[#allocation3 + $0x660] sm:$0xff]
    %v396 = vld [vmem:[#allocation3 + $0x668] sm:$0xff]
    %v397 = vld [vmem:[#allocation3 + $0x670] sm:$0xff]
    %v398 = vld [vmem:[#allocation3 + $0x678] sm:$0xff]
    %v399 = vld [vmem:[#allocation3 + $0x680] sm:$0xff]
    %v400 = vld [vmem:[#allocation3 + $0x688] sm:$0xff]
    %v401 = vld [vmem:[#allocation3 + $0x690] sm:$0xff]
    %v402 = vld [vmem:[#allocation3 + $0x698] sm:$0xff]
    %v403 = vld [vmem:[#allocation3 + $0x6a0] sm:$0xff]
    %v404 = vld [vmem:[#allocation3 + $0x6a8] sm:$0xff]
    %v405 = vld [vmem:[#allocation3 + $0x6b0] sm:$0xff]
    %v406 = vld [vmem:[#allocation3 + $0x6b8] sm:$0xff]
    %v407 = vld [vmem:[#allocation3 + $0x6c0] sm:$0xff]
    %v408 = vld [vmem:[#allocation3 + $0x6c8] sm:$0xff]
    %v409 = vld [vmem:[#allocation3 + $0x6d0] sm:$0xff]
    %v410 = vld [vmem:[#allocation3 + $0x6d8] sm:$0xff]
    %v411 = vld [vmem:[#allocation3 + $0x6e0] sm:$0xff]
    %v412 = vld [vmem:[#allocation3 + $0x6e8] sm:$0xff]
    %v413 = vld [vmem:[#allocation3 + $0x6f0] sm:$0xff]
    %v414 = vld [vmem:[#allocation3 + $0x6f8] sm:$0xff]
    %v415 = vld [vmem:[#allocation3 + $0x700] sm:$0xff]
    %v416 = vld [vmem:[#allocation3 + $0x708] sm:$0xff]
    %v417 = vld [vmem:[#allocation3 + $0x710] sm:$0xff]
    %v418 = vld [vmem:[#allocation3 + $0x718] sm:$0xff]
    %v419 = vld [vmem:[#allocation3 + $0x720] sm:$0xff]
    %v420 = vld [vmem:[#allocation3 + $0x728] sm:$0xff]
    %v421 = vld [vmem:[#allocation3 + $0x730] sm:$0xff]
    %v422 = vld [vmem:[#allocation3 + $0x738] sm:$0xff]
    %v423 = vld [vmem:[#allocation3 + $0x740] sm:$0xff]
    %v424 = vld [vmem:[#allocation3 + $0x748] sm:$0xff]
    %v425 = vld [vmem:[#allocation3 + $0x750] sm:$0xff]
    %v426 = vld [vmem:[#allocation3 + $0x758] sm:$0xff]
    %v427 = vld [vmem:[#allocation3 + $0x760] sm:$0xff]
    %v428 = vld [vmem:[#allocation3 + $0x768] sm:$0xff]
    %v429 = vld [vmem:[#allocation3 + $0x770] sm:$0xff]
    %v430 = vld [vmem:[#allocation3 + $0x778] sm:$0xff]
    %v431 = vld [vmem:[#allocation3 + $0x780] sm:$0xff]
    %v432 = vld [vmem:[#allocation3 + $0x788] sm:$0xff]
    %v433 = vld [vmem:[#allocation3 + $0x790] sm:$0xff]
    %v434 = vld [vmem:[#allocation3 + $0x798] sm:$0xff]
    %v435 = vld [vmem:[#allocation3 + $0x7a0] sm:$0xff]
    %v436 = vld [vmem:[#allocation3 + $0x7a8] sm:$0xff]
    %v437 = vld [vmem:[#allocation3 + $0x7b0] sm:$0xff]
    %v438 = vld [vmem:[#allocation3 + $0x7b8] sm:$0xff]
    %v439 = vld [vmem:[#allocation3 + $0x7c0] sm:$0xff]
    %v440 = vld [vmem:[#allocation3 + $0x7c8] sm:$0xff]
    %v441 = vld [vmem:[#allocation3 + $0x7d0] sm:$0xff]
    %v442 = vld [vmem:[#allocation3 + $0x7d8] sm:$0xff]
    %v443 = vld [vmem:[#allocation3 + $0x7e0] sm:$0xff]
    %v444 = vld [vmem:[#allocation3 + $0x7e8] sm:$0xff]
    %v445 = vld [vmem:[#allocation3 + $0x7f0] sm:$0xff]
    %v446 = vld [vmem:[#allocation3 + $0x7f8] sm:$0xff]
    %v447 = vld [vmem:[#allocation3 + $0x800] sm:$0xff]
    %v448 = vld [vmem:[#allocation3 + $0x808] sm:$0xff]
    %v449 = vld [vmem:[#allocation3 + $0x810] sm:$0xff]
    %v450 = vld [vmem:[#allocation3 + $0x818] sm:$0xff]
    %v451 = vld [vmem:[#allocation3 + $0x820] sm:$0xff]
    %v452 = vld [vmem:[#allocation3 + $0x828] sm:$0xff]
    %v453 = vld [vmem:[#allocation3 + $0x830] sm:$0xff]
    %v454 = vld [vmem:[#allocation3 + $0x838] sm:$0xff]
    %v455 = vld [vmem:[#allocation3 + $0x840] sm:$0xff]
    %v456 = vld [vmem:[#allocation3 + $0x848] sm:$0xff]
    %v457 = vld [vmem:[#allocation3 + $0x850] sm:$0xff]
    %v458 = vld [vmem:[#allocation3 + $0x858] sm:$0xff]
    %v459 = vld [vmem:[#allocation3 + $0x860] sm:$0xff]
    %v460 = vld [vmem:[#allocation3 + $0x868] sm:$0xff]
    %v461 = vld [vmem:[#allocation3 + $0x870] sm:$0xff]
    %v462 = vld [vmem:[#allocation3 + $0x878] sm:$0xff]
    %v463 = vld [vmem:[#allocation3 + $0x880] sm:$0xff]
    %v464 = vld [vmem:[#allocation3 + $0x888] sm:$0xff]
    %v465 = vld [vmem:[#allocation3 + $0x890] sm:$0xff]
    %v466 = vld [vmem:[#allocation3 + $0x898] sm:$0xff]
    %v467 = vld [vmem:[#allocation3 + $0x8a0] sm:$0xff]
    %v468 = vld [vmem:[#allocation3 + $0x8a8] sm:$0xff]
    %v469 = vld [vmem:[#allocation3 + $0x8b0] sm:$0xff]
    %v470 = vld [vmem:[#allocation3 + $0x8b8] sm:$0xff]
    %v471 = vld [vmem:[#allocation3 + $0x8c0] sm:$0xff]
    %v472 = vld [vmem:[#allocation3 + $0x8c8] sm:$0xff]
    %v473 = vld [vmem:[#allocation3 + $0x8d0] sm:$0xff]
    %v474 = vld [vmem:[#allocation3 + $0x8d8] sm:$0xff]
    %v475 = vld [vmem:[#allocation3 + $0x8e0] sm:$0xff]
    %v476 = vld [vmem:[#allocation3 + $0x8e8] sm:$0xff]
    %v477 = vld [vmem:[#allocation3 + $0x8f0] sm:$0xff]
    %v478 = vld [vmem:[#allocation3 + $0x8f8] sm:$0xff]
    %v479 = vld [vmem:[#allocation3 + $0x900] sm:$0xff]
    %v480 = vld [vmem:[#allocation3 + $0x908] sm:$0xff]
    %v481 = vld [vmem:[#allocation3 + $0x910] sm:$0xff]
    %v482 = vld [vmem:[#allocation3 + $0x918] sm:$0xff]
    %v483 = vld [vmem:[#allocation3 + $0x920] sm:$0xff]
    %v484 = vld [vmem:[#allocation3 + $0x928] sm:$0xff]
    %v485 = vld [vmem:[#allocation3 + $0x930] sm:$0xff]
    %v486 = vld [vmem:[#allocation3 + $0x938] sm:$0xff]
    %v487 = vld [vmem:[#allocation3 + $0x940] sm:$0xff]
    %v488 = vld [vmem:[#allocation3 + $0x948] sm:$0xff]
    %v489 = vld [vmem:[#allocation3 + $0x950] sm:$0xff]
    %v490 = vld [vmem:[#allocation3 + $0x958] sm:$0xff]
    %v491 = vld [vmem:[#allocation3 + $0x960] sm:$0xff]
    %v492 = vld [vmem:[#allocation3 + $0x968] sm:$0xff]
    %v493 = vld [vmem:[#allocation3 + $0x970] sm:$0xff]
    %v494 = vld [vmem:[#allocation3 + $0x978] sm:$0xff]
    %v495 = vld [vmem:[#allocation3 + $0x980] sm:$0xff]
    %v496 = vld [vmem:[#allocation3 + $0x988] sm:$0xff]
    %v497 = vld [vmem:[#allocation3 + $0x990] sm:$0xff]
    %v498 = vld [vmem:[#allocation3 + $0x998] sm:$0xff]
    %v499 = vld [vmem:[#allocation3 + $0x9a0] sm:$0xff]
    %v500 = vld [vmem:[#allocation3 + $0x9a8] sm:$0xff]
    %v501 = vld [vmem:[#allocation3 + $0x9b0] sm:$0xff]
    %v502 = vld [vmem:[#allocation3 + $0x9b8] sm:$0xff]
    %v503 = vld [vmem:[#allocation3 + $0x9c0] sm:$0xff]
    %v504 = vld [vmem:[#allocation3 + $0x9c8] sm:$0xff]
    %v505 = vld [vmem:[#allocation3 + $0x9d0] sm:$0xff]
    %v506 = vld [vmem:[#allocation3 + $0x9d8] sm:$0xff]
    %v507 = vld [vmem:[#allocation3 + $0x9e0] sm:$0xff]
    %v508 = vld [vmem:[#allocation3 + $0x9e8] sm:$0xff]
    %v509 = vld [vmem:[#allocation3 + $0x9f0] sm:$0xff]
    %v510 = vld [vmem:[#allocation3 + $0x9f8] sm:$0xff]
    %v511 = vld [vmem:[#allocation3 + $0xa00] sm:$0xff]
    %v512 = vld [vmem:[#allocation3 + $0xa08] sm:$0xff]
    %v513 = vld [vmem:[#allocation3 + $0xa10] sm:$0xff]
    %v514 = vld [vmem:[#allocation3 + $0xa18] sm:$0xff]
    %v515 = vld [vmem:[#allocation3 + $0xa20] sm:$0xff]
    %v516 = vld [vmem:[#allocation3 + $0xa28] sm:$0xff]
    %v517 = vld [vmem:[#allocation3 + $0xa30] sm:$0xff]
    %v518 = vld [vmem:[#allocation3 + $0xa38] sm:$0xff]
    %v519 = vld [vmem:[#allocation3 + $0xa40] sm:$0xff]
    %v520 = vld [vmem:[#allocation3 + $0xa48] sm:$0xff]
    %v521 = vld [vmem:[#allocation3 + $0xa50] sm:$0xff]
    %v522 = vld [vmem:[#allocation3 + $0xa58] sm:$0xff]
    %v523 = vld [vmem:[#allocation3 + $0xa60] sm:$0xff]
    %v524 = vld [vmem:[#allocation3 + $0xa68] sm:$0xff]
    %v525 = vld [vmem:[#allocation3 + $0xa70] sm:$0xff]
    %v526 = vld [vmem:[#allocation3 + $0xa78] sm:$0xff]
    %v527 = vld [vmem:[#allocation3 + $0xa80] sm:$0xff]
    %v528 = vld [vmem:[#allocation3 + $0xa88] sm:$0xff]
    %v529 = vld [vmem:[#allocation3 + $0xa90] sm:$0xff]
    %v530 = vld [vmem:[#allocation3 + $0xa98] sm:$0xff]
    %v531 = vld [vmem:[#allocation3 + $0xaa0] sm:$0xff]
    %v532 = vld [vmem:[#allocation3 + $0xaa8] sm:$0xff]
    %v533 = vld [vmem:[#allocation3 + $0xab0] sm:$0xff]
    %v534 = vld [vmem:[#allocation3 + $0xab8] sm:$0xff]
    %v535 = vld [vmem:[#allocation3 + $0xac0] sm:$0xff]
    %v536 = vld [vmem:[#allocation3 + $0xac8] sm:$0xff]
    %v537 = vld [vmem:[#allocation3 + $0xad0] sm:$0xff]
    %v538 = vld [vmem:[#allocation3 + $0xad8] sm:$0xff]
    %v539 = vld [vmem:[#allocation3 + $0xae0] sm:$0xff]
    %v540 = vld [vmem:[#allocation3 + $0xae8] sm:$0xff]
    %v541 = vld [vmem:[#allocation3 + $0xaf0] sm:$0xff]
    %v542 = vld [vmem:[#allocation3 + $0xaf8] sm:$0xff]
    %v543 = vld [vmem:[#allocation3 + $0xb00] sm:$0xff]
    %v544 = vld [vmem:[#allocation3 + $0xb08] sm:$0xff]
    %v545 = vld [vmem:[#allocation3 + $0xb10] sm:$0xff]
    %v546 = vld [vmem:[#allocation3 + $0xb18] sm:$0xff]
    %v547 = vld [vmem:[#allocation3 + $0xb20] sm:$0xff]
    %v548 = vld [vmem:[#allocation3 + $0xb28] sm:$0xff]
    %v549 = vld [vmem:[#allocation3 + $0xb30] sm:$0xff]
    %v550 = vld [vmem:[#allocation3 + $0xb38] sm:$0xff]
    %v551 = vld [vmem:[#allocation3 + $0xb40] sm:$0xff]
    %v552 = vld [vmem:[#allocation3 + $0xb48] sm:$0xff]
    %v553 = vld [vmem:[#allocation3 + $0xb50] sm:$0xff]
    %v554 = vld [vmem:[#allocation3 + $0xb58] sm:$0xff]
    %v555 = vld [vmem:[#allocation3 + $0xb60] sm:$0xff]
    %v556 = vld [vmem:[#allocation3 + $0xb68] sm:$0xff]
    %v557 = vld [vmem:[#allocation3 + $0xb70] sm:$0xff]
    %v558 = vld [vmem:[#allocation3 + $0xb78] sm:$0xff]
    %v559 = vld [vmem:[#allocation3 + $0xb80] sm:$0xff]
    %v560 = vld [vmem:[#allocation3 + $0xb88] sm:$0xff]
    %v561 = vld [vmem:[#allocation3 + $0xb90] sm:$0xff]
    %v562 = vld [vmem:[#allocation3 + $0xb98] sm:$0xff]
    %v563 = vld [vmem:[#allocation3 + $0xba0] sm:$0xff]
    %v564 = vld [vmem:[#allocation3 + $0xba8] sm:$0xff]
    %v565 = vld [vmem:[#allocation3 + $0xbb0] sm:$0xff]
    %v566 = vld [vmem:[#allocation3 + $0xbb8] sm:$0xff]
    %v567 = vld [vmem:[#allocation3 + $0xbc0] sm:$0xff]
    %v568 = vld [vmem:[#allocation3 + $0xbc8] sm:$0xff]
    %v569 = vld [vmem:[#allocation3 + $0xbd0] sm:$0xff]
    %v570 = vld [vmem:[#allocation3 + $0xbd8] sm:$0xff]
    %v571 = vld [vmem:[#allocation3 + $0xbe0] sm:$0xff]
    %v572 = vld [vmem:[#allocation3 + $0xbe8] sm:$0xff]
    %v573 = vld [vmem:[#allocation3 + $0xbf0] sm:$0xff]
    %v574 = vld [vmem:[#allocation3 + $0xbf8] sm:$0xff]
    %v575 = vld [vmem:[#allocation3 + $0xc00] sm:$0xff]
    %v576 = vld [vmem:[#allocation3 + $0xc08] sm:$0xff]
    %v577 = vld [vmem:[#allocation3 + $0xc10] sm:$0xff]
    %v578 = vld [vmem:[#allocation3 + $0xc18] sm:$0xff]
    %v579 = vld [vmem:[#allocation3 + $0xc20] sm:$0xff]
    %v580 = vld [vmem:[#allocation3 + $0xc28] sm:$0xff]
    %v581 = vld [vmem:[#allocation3 + $0xc30] sm:$0xff]
    %v582 = vld [vmem:[#allocation3 + $0xc38] sm:$0xff]
    %v583 = vld [vmem:[#allocation3 + $0xc40] sm:$0xff]
    %v584 = vld [vmem:[#allocation3 + $0xc48] sm:$0xff]
    %v585 = vld [vmem:[#allocation3 + $0xc50] sm:$0xff]
    %v586 = vld [vmem:[#allocation3 + $0xc58] sm:$0xff]
    %v587 = vld [vmem:[#allocation3 + $0xc60] sm:$0xff]
    %v588 = vld [vmem:[#allocation3 + $0xc68] sm:$0xff]
    %v589 = vld [vmem:[#allocation3 + $0xc70] sm:$0xff]
    %v590 = vld [vmem:[#allocation3 + $0xc78] sm:$0xff]
    %v591 = vld [vmem:[#allocation3 + $0xc80] sm:$0xff]
    %v592 = vld [vmem:[#allocation3 + $0xc88] sm:$0xff]
    %v593 = vld [vmem:[#allocation3 + $0xc90] sm:$0xff]
    %v594 = vld [vmem:[#allocation3 + $0xc98] sm:$0xff]
    %v595 = vld [vmem:[#allocation3 + $0xca0] sm:$0xff]
    %v596 = vld [vmem:[#allocation3 + $0xca8] sm:$0xff]
    %v597 = vld [vmem:[#allocation3 + $0xcb0] sm:$0xff]
    %v598 = vld [vmem:[#allocation3 + $0xcb8] sm:$0xff]
    %v599 = vld [vmem:[#allocation3 + $0xcc0] sm:$0xff]
    %v600 = vld [vmem:[#allocation3 + $0xcc8] sm:$0xff]
    %v601 = vld [vmem:[#allocation3 + $0xcd0] sm:$0xff]
    %v602 = vld [vmem:[#allocation3 + $0xcd8] sm:$0xff]
    %v603 = vld [vmem:[#allocation3 + $0xce0] sm:$0xff]
    %v604 = vld [vmem:[#allocation3 + $0xce8] sm:$0xff]
    %v605 = vld [vmem:[#allocation3 + $0xcf0] sm:$0xff]
    %v606 = vld [vmem:[#allocation3 + $0xcf8] sm:$0xff]
    %v607 = vld [vmem:[#allocation3 + $0xd00] sm:$0xff]
    %v608 = vld [vmem:[#allocation3 + $0xd08] sm:$0xff]
    %v609 = vld [vmem:[#allocation3 + $0xd10] sm:$0xff]
    %v610 = vld [vmem:[#allocation3 + $0xd18] sm:$0xff]
    %v611 = vld [vmem:[#allocation3 + $0xd20] sm:$0xff]
    %v612 = vld [vmem:[#allocation3 + $0xd28] sm:$0xff]
    %v613 = vld [vmem:[#allocation3 + $0xd30] sm:$0xff]
    %v614 = vld [vmem:[#allocation3 + $0xd38] sm:$0xff]
    %v615 = vld [vmem:[#allocation3 + $0xd40] sm:$0xff]
    %v616 = vld [vmem:[#allocation3 + $0xd48] sm:$0xff]
    %v617 = vld [vmem:[#allocation3 + $0xd50] sm:$0xff]
    %v618 = vld [vmem:[#allocation3 + $0xd58] sm:$0xff]
    %v619 = vld [vmem:[#allocation3 + $0xd60] sm:$0xff]
    %v620 = vld [vmem:[#allocation3 + $0xd68] sm:$0xff]
    %v621 = vld [vmem:[#allocation3 + $0xd70] sm:$0xff]
    %v622 = vld [vmem:[#allocation3 + $0xd78] sm:$0xff]
    %v623 = vld [vmem:[#allocation3 + $0xd80] sm:$0xff]
    %v624 = vld [vmem:[#allocation3 + $0xd88] sm:$0xff]
    %v625 = vld [vmem:[#allocation3 + $0xd90] sm:$0xff]
    %v626 = vld [vmem:[#allocation3 + $0xd98] sm:$0xff]
    %v627 = vld [vmem:[#allocation3 + $0xda0] sm:$0xff]
    %v628 = vld [vmem:[#allocation3 + $0xda8] sm:$0xff]
    %v629 = vld [vmem:[#allocation3 + $0xdb0] sm:$0xff]
    %v630 = vld [vmem:[#allocation3 + $0xdb8] sm:$0xff]
    %v631 = vld [vmem:[#allocation3 + $0xdc0] sm:$0xff]
    %v632 = vld [vmem:[#allocation3 + $0xdc8] sm:$0xff]
    %v633 = vld [vmem:[#allocation3 + $0xdd0] sm:$0xff]
    %v634 = vld [vmem:[#allocation3 + $0xdd8] sm:$0xff]
    %v635 = vld [vmem:[#allocation3 + $0xde0] sm:$0xff]
    %v636 = vld [vmem:[#allocation3 + $0xde8] sm:$0xff]
    %v637 = vld [vmem:[#allocation3 + $0xdf0] sm:$0xff]
    %v638 = vld [vmem:[#allocation3 + $0xdf8] sm:$0xff]
    %v639 = vld [vmem:[#allocation3 + $0xe00] sm:$0xff]
    %v640 = vld [vmem:[#allocation3 + $0xe08] sm:$0xff]
    %v641 = vld [vmem:[#allocation3 + $0xe10] sm:$0xff]
    %v642 = vld [vmem:[#allocation3 + $0xe18] sm:$0xff]
    %v643 = vld [vmem:[#allocation3 + $0xe20] sm:$0xff]
    %v644 = vld [vmem:[#allocation3 + $0xe28] sm:$0xff]
    %v645 = vld [vmem:[#allocation3 + $0xe30] sm:$0xff]
    %v646 = vld [vmem:[#allocation3 + $0xe38] sm:$0xff]
    %v647 = vld [vmem:[#allocation3 + $0xe40] sm:$0xff]
    %v648 = vld [vmem:[#allocation3 + $0xe48] sm:$0xff]
    %v649 = vld [vmem:[#allocation3 + $0xe50] sm:$0xff]
    %v650 = vld [vmem:[#allocation3 + $0xe58] sm:$0xff]
    %v651 = vld [vmem:[#allocation3 + $0xe60] sm:$0xff]
    %v652 = vld [vmem:[#allocation3 + $0xe68] sm:$0xff]
    %v653 = vld [vmem:[#allocation3 + $0xe70] sm:$0xff]
    %v654 = vld [vmem:[#allocation3 + $0xe78] sm:$0xff]
    %v655 = vld [vmem:[#allocation3 + $0xe80] sm:$0xff]
    %v656 = vld [vmem:[#allocation3 + $0xe88] sm:$0xff]
    %v657 = vld [vmem:[#allocation3 + $0xe90] sm:$0xff]
    %v658 = vld [vmem:[#allocation3 + $0xe98] sm:$0xff]
    %v659 = vld [vmem:[#allocation3 + $0xea0] sm:$0xff]
    %v660 = vld [vmem:[#allocation3 + $0xea8] sm:$0xff]
    %v661 = vld [vmem:[#allocation3 + $0xeb0] sm:$0xff]
    %v662 = vld [vmem:[#allocation3 + $0xeb8] sm:$0xff]
    %v663 = vld [vmem:[#allocation3 + $0xec0] sm:$0xff]
    %v664 = vld [vmem:[#allocation3 + $0xec8] sm:$0xff]
    %v665 = vld [vmem:[#allocation3 + $0xed0] sm:$0xff]
    %v666 = vld [vmem:[#allocation3 + $0xed8] sm:$0xff]
    %v667 = vld [vmem:[#allocation3 + $0xee0] sm:$0xff]
    %v668 = vld [vmem:[#allocation3 + $0xee8] sm:$0xff]
    %v669 = vld [vmem:[#allocation3 + $0xef0] sm:$0xff]
    %v670 = vld [vmem:[#allocation3 + $0xef8] sm:$0xff]
    %v671 = vld [vmem:[#allocation3 + $0xf00] sm:$0xff]
    %v672 = vld [vmem:[#allocation3 + $0xf08] sm:$0xff]
    %v673 = vld [vmem:[#allocation3 + $0xf10] sm:$0xff]
    %v674 = vld [vmem:[#allocation3 + $0xf18] sm:$0xff]
    %v675 = vld [vmem:[#allocation3 + $0xf20] sm:$0xff]
    %v676 = vld [vmem:[#allocation3 + $0xf28] sm:$0xff]
    %v677 = vld [vmem:[#allocation3 + $0xf30] sm:$0xff]
    %v678 = vld [vmem:[#allocation3 + $0xf38] sm:$0xff]
    %v679 = vld [vmem:[#allocation3 + $0xf40] sm:$0xff]
    %v680 = vld [vmem:[#allocation3 + $0xf48] sm:$0xff]
    %v681 = vld [vmem:[#allocation3 + $0xf50] sm:$0xff]
    %v682 = vld [vmem:[#allocation3 + $0xf58] sm:$0xff]
    %v683 = vld [vmem:[#allocation3 + $0xf60] sm:$0xff]
    %v684 = vld [vmem:[#allocation3 + $0xf68] sm:$0xff]
    %v685 = vld [vmem:[#allocation3 + $0xf70] sm:$0xff]
    %v686 = vld [vmem:[#allocation3 + $0xf78] sm:$0xff]
    %v687 = vld [vmem:[#allocation3 + $0xf80] sm:$0xff]
    %v688 = vld [vmem:[#allocation3 + $0xf88] sm:$0xff]
    %v689 = vld [vmem:[#allocation3 + $0xf90] sm:$0xff]
    %v690 = vld [vmem:[#allocation3 + $0xf98] sm:$0xff]
    %v691 = vld [vmem:[#allocation3 + $0xfa0] sm:$0xff]
    %v692 = vld [vmem:[#allocation3 + $0xfa8] sm:$0xff]
    %v693 = vld [vmem:[#allocation3 + $0xfb0] sm:$0xff]
    %v694 = vld [vmem:[#allocation3 + $0xfb8] sm:$0xff]
    %v695 = vld [vmem:[#allocation3 + $0xfc0] sm:$0xff]
    %v696 = vld [vmem:[#allocation3 + $0xfc8] sm:$0xff]
    %v697 = vld [vmem:[#allocation3 + $0xfd0] sm:$0xff]
    %v698 = vld [vmem:[#allocation3 + $0xfd8] sm:$0xff]
    %v699 = vld [vmem:[#allocation3 + $0xfe0] sm:$0xff]
    %v700 = vld [vmem:[#allocation3 + $0xfe8] sm:$0xff]
    %v701 = vld [vmem:[#allocation3 + $0xff0] sm:$0xff]
    %v702 = vld [vmem:[#allocation3 + $0xff8] sm:$0xff]
    %v703 = vld [vmem:[#allocation3 + $0x1000] sm:$0xff]
    %v704 = vld [vmem:[#allocation3 + $0x1008] sm:$0xff]
    %v705 = vld [vmem:[#allocation3 + $0x1010] sm:$0xff]
    %v706 = vld [vmem:[#allocation3 + $0x1018] sm:$0xff]
    %v707 = vld [vmem:[#allocation3 + $0x1020] sm:$0xff]
    %v708 = vld [vmem:[#allocation3 + $0x1028] sm:$0xff]
    %v709 = vld [vmem:[#allocation3 + $0x1030] sm:$0xff]
    %v710 = vld [vmem:[#allocation3 + $0x1038] sm:$0xff]
    %v711 = vld [vmem:[#allocation3 + $0x1040] sm:$0xff]
    %v712 = vld [vmem:[#allocation3 + $0x1048] sm:$0xff]
    %v713 = vld [vmem:[#allocation3 + $0x1050] sm:$0xff]
    %v714 = vld [vmem:[#allocation3 + $0x1058] sm:$0xff]
    %v715 = vld [vmem:[#allocation3 + $0x1060] sm:$0xff]
    %v716 = vld [vmem:[#allocation3 + $0x1068] sm:$0xff]
    %v717 = vld [vmem:[#allocation3 + $0x1070] sm:$0xff]
    %v718 = vld [vmem:[#allocation3 + $0x1078] sm:$0xff]
    %v719 = vld [vmem:[#allocation3 + $0x1080] sm:$0xff]
    %v720 = vld [vmem:[#allocation3 + $0x1088] sm:$0xff]
    %v721 = vld [vmem:[#allocation3 + $0x1090] sm:$0xff]
    %v722 = vld [vmem:[#allocation3 + $0x1098] sm:$0xff]
    %v723 = vld [vmem:[#allocation3 + $0x10a0] sm:$0xff]
    %v724 = vld [vmem:[#allocation3 + $0x10a8] sm:$0xff]
    %v725 = vld [vmem:[#allocation3 + $0x10b0] sm:$0xff]
    %v726 = vld [vmem:[#allocation3 + $0x10b8] sm:$0xff]
    %v727 = vld [vmem:[#allocation3 + $0x10c0] sm:$0xff]
    %v728 = vld [vmem:[#allocation3 + $0x10c8] sm:$0xff]
    %v729 = vld [vmem:[#allocation3 + $0x10d0] sm:$0xff]
    %v730 = vld [vmem:[#allocation3 + $0x10d8] sm:$0xff]
    %v731 = vld [vmem:[#allocation3 + $0x10e0] sm:$0xff]
    %v732 = vld [vmem:[#allocation3 + $0x10e8] sm:$0xff]
    %v733 = vld [vmem:[#allocation3 + $0x10f0] sm:$0xff]
    %v734 = vld [vmem:[#allocation3 + $0x10f8] sm:$0xff]
    %v735 = vld [vmem:[#allocation3 + $0x1100] sm:$0xff]
    %v736 = vld [vmem:[#allocation3 + $0x1108] sm:$0xff]
    %v737 = vld [vmem:[#allocation3 + $0x1110] sm:$0xff]
    %v738 = vld [vmem:[#allocation3 + $0x1118] sm:$0xff]
    %v739 = vld [vmem:[#allocation3 + $0x1120] sm:$0xff]
    %v740 = vld [vmem:[#allocation3 + $0x1128] sm:$0xff]
    %v741 = vld [vmem:[#allocation3 + $0x1130] sm:$0xff]
    %v742 = vld [vmem:[#allocation3 + $0x1138] sm:$0xff]
    %v743 = vld [vmem:[#allocation3 + $0x1140] sm:$0xff]
    %v744 = vld [vmem:[#allocation3 + $0x1148] sm:$0xff]
    %v745 = vld [vmem:[#allocation3 + $0x1150] sm:$0xff]
    %v746 = vld [vmem:[#allocation3 + $0x1158] sm:$0xff]
    %v747 = vld [vmem:[#allocation3 + $0x1160] sm:$0xff]
    %v748 = vld [vmem:[#allocation3 + $0x1168] sm:$0xff]
    %v749 = vld [vmem:[#allocation3 + $0x1170] sm:$0xff]
    %v750 = vld [vmem:[#allocation3 + $0x1178] sm:$0xff]
    %v751 = vld [vmem:[#allocation3 + $0x1180] sm:$0xff]
    %v752 = vld [vmem:[#allocation3 + $0x1188] sm:$0xff]
    %v753 = vld [vmem:[#allocation3 + $0x1190] sm:$0xff]
    %v754 = vld [vmem:[#allocation3 + $0x1198] sm:$0xff]
    %v755 = vld [vmem:[#allocation3 + $0x11a0] sm:$0xff]
    %v756 = vld [vmem:[#allocation3 + $0x11a8] sm:$0xff]
    %v757 = vld [vmem:[#allocation3 + $0x11b0] sm:$0xff]
    %v758 = vld [vmem:[#allocation3 + $0x11b8] sm:$0xff]
    %v759 = vld [vmem:[#allocation3 + $0x11c0] sm:$0xff]
    %v760 = vld [vmem:[#allocation3 + $0x11c8] sm:$0xff]
    %v761 = vld [vmem:[#allocation3 + $0x11d0] sm:$0xff]
    %v762 = vld [vmem:[#allocation3 + $0x11d8] sm:$0xff]
    %v763 = vld [vmem:[#allocation3 + $0x11e0] sm:$0xff]
    %v764 = vld [vmem:[#allocation3 + $0x11e8] sm:$0xff]
    %v765 = vld [vmem:[#allocation3 + $0x11f0] sm:$0xff]
    %v766 = vld [vmem:[#allocation3 + $0x11f8] sm:$0xff]
    %v767 = vld [vmem:[#allocation3 + $0x1200] sm:$0xff]
    %v768 = vld [vmem:[#allocation3 + $0x1208] sm:$0xff]
    %v769 = vld [vmem:[#allocation3 + $0x1210] sm:$0xff]
    %v770 = vld [vmem:[#allocation3 + $0x1218] sm:$0xff]
    %v771 = vld [vmem:[#allocation3 + $0x1220] sm:$0xff]
    %v772 = vld [vmem:[#allocation3 + $0x1228] sm:$0xff]
    %v773 = vld [vmem:[#allocation3 + $0x1230] sm:$0xff]
    %v774 = vld [vmem:[#allocation3 + $0x1238] sm:$0xff]
    %v775 = vld [vmem:[#allocation3 + $0x1240] sm:$0xff]
    %v776 = vld [vmem:[#allocation3 + $0x1248] sm:$0xff]
    %v777 = vld [vmem:[#allocation3 + $0x1250] sm:$0xff]
    %v778 = vld [vmem:[#allocation3 + $0x1258] sm:$0xff]
    %v779 = vld [vmem:[#allocation3 + $0x1260] sm:$0xff]
    %v780 = vld [vmem:[#allocation3 + $0x1268] sm:$0xff]
    %v781 = vld [vmem:[#allocation3 + $0x1270] sm:$0xff]
    %v782 = vld [vmem:[#allocation3 + $0x1278] sm:$0xff]
    %v783 = vld [vmem:[#allocation3 + $0x1280] sm:$0xff]
    %v784 = vld [vmem:[#allocation3 + $0x1288] sm:$0xff]
    %v785 = vld [vmem:[#allocation3 + $0x1290] sm:$0xff]
    %v786 = vld [vmem:[#allocation3 + $0x1298] sm:$0xff]
    %v787 = vld [vmem:[#allocation3 + $0x12a0] sm:$0xff]
    %v788 = vld [vmem:[#allocation3 + $0x12a8] sm:$0xff]
    %v789 = vld [vmem:[#allocation3 + $0x12b0] sm:$0xff]
    %v790 = vld [vmem:[#allocation3 + $0x12b8] sm:$0xff]
    %v791 = vld [vmem:[#allocation3 + $0x12c0] sm:$0xff]
    %v792 = vld [vmem:[#allocation3 + $0x12c8] sm:$0xff]
    %v793 = vld [vmem:[#allocation3 + $0x12d0] sm:$0xff]
    %v794 = vld [vmem:[#allocation3 + $0x12d8] sm:$0xff]
    %v795 = vld [vmem:[#allocation3 + $0x12e0] sm:$0xff]
    %v796 = vld [vmem:[#allocation3 + $0x12e8] sm:$0xff]
    %v797 = vld [vmem:[#allocation3 + $0x12f0] sm:$0xff]
    %v798 = vld [vmem:[#allocation3 + $0x12f8] sm:$0xff]
    %v799 = vld [vmem:[#allocation3 + $0x1300] sm:$0xff]
    %v800 = vld [vmem:[#allocation3 + $0x1308] sm:$0xff]
    %v801 = vld [vmem:[#allocation3 + $0x1310] sm:$0xff]
    %v802 = vld [vmem:[#allocation3 + $0x1318] sm:$0xff]
    %v803 = vld [vmem:[#allocation3 + $0x1320] sm:$0xff]
    %v804 = vld [vmem:[#allocation3 + $0x1328] sm:$0xff]
    %v805 = vld [vmem:[#allocation3 + $0x1330] sm:$0xff]
    %v806 = vld [vmem:[#allocation3 + $0x1338] sm:$0xff]
    %v807 = vld [vmem:[#allocation3 + $0x1340] sm:$0xff]
    %v808 = vld [vmem:[#allocation3 + $0x1348] sm:$0xff]
    %v809 = vld [vmem:[#allocation3 + $0x1350] sm:$0xff]
    %v810 = vld [vmem:[#allocation3 + $0x1358] sm:$0xff]
    %v811 = vld [vmem:[#allocation3 + $0x1360] sm:$0xff]
    %v812 = vld [vmem:[#allocation3 + $0x1368] sm:$0xff]
    %v813 = vld [vmem:[#allocation3 + $0x1370] sm:$0xff]
    %v814 = vld [vmem:[#allocation3 + $0x1378] sm:$0xff]
    %v815 = vld [vmem:[#allocation3 + $0x1380] sm:$0xff]
    %v816 = vld [vmem:[#allocation3 + $0x1388] sm:$0xff]
    %v817 = vld [vmem:[#allocation3 + $0x1390] sm:$0xff]
    %v818 = vld [vmem:[#allocation3 + $0x1398] sm:$0xff]
    %v819 = vld [vmem:[#allocation3 + $0x13a0] sm:$0xff]
    %v820 = vld [vmem:[#allocation3 + $0x13a8] sm:$0xff]
    %v821 = vld [vmem:[#allocation3 + $0x13b0] sm:$0xff]
    %v822 = vld [vmem:[#allocation3 + $0x13b8] sm:$0xff]
    %v823 = vld [vmem:[#allocation3 + $0x13c0] sm:$0xff]
    %v824 = vld [vmem:[#allocation3 + $0x13c8] sm:$0xff]
    %v825 = vld [vmem:[#allocation3 + $0x13d0] sm:$0xff]
    %v826 = vld [vmem:[#allocation3 + $0x13d8] sm:$0xff]
    %v827 = vld [vmem:[#allocation3 + $0x13e0] sm:$0xff]
    %v828 = vld [vmem:[#allocation3 + $0x13e8] sm:$0xff]
    %v829 = vld [vmem:[#allocation3 + $0x13f0] sm:$0xff]
    %v830 = vld [vmem:[#allocation3 + $0x13f8] sm:$0xff]
    %v831 = vld [vmem:[#allocation3 + $0x1400] sm:$0xff]
    %v832 = vld [vmem:[#allocation3 + $0x1408] sm:$0xff]
    %v833 = vld [vmem:[#allocation3 + $0x1410] sm:$0xff]
    %v834 = vld [vmem:[#allocation3 + $0x1418] sm:$0xff]
    %v835 = vld [vmem:[#allocation3 + $0x1420] sm:$0xff]
    %v836 = vld [vmem:[#allocation3 + $0x1428] sm:$0xff]
    %v837 = vld [vmem:[#allocation3 + $0x1430] sm:$0xff]
    %v838 = vld [vmem:[#allocation3 + $0x1438] sm:$0xff]
    %v839 = vld [vmem:[#allocation3 + $0x1440] sm:$0xff]
    %v840 = vld [vmem:[#allocation3 + $0x1448] sm:$0xff]
    %v841 = vld [vmem:[#allocation3 + $0x1450] sm:$0xff]
    %v842 = vld [vmem:[#allocation3 + $0x1458] sm:$0xff]
    %v843 = vld [vmem:[#allocation3 + $0x1460] sm:$0xff]
    %v844 = vld [vmem:[#allocation3 + $0x1468] sm:$0xff]
    %v845 = vld [vmem:[#allocation3 + $0x1470] sm:$0xff]
    %v846 = vld [vmem:[#allocation3 + $0x1478] sm:$0xff]
    %v847 = vld [vmem:[#allocation3 + $0x1480] sm:$0xff]
    %v848 = vld [vmem:[#allocation3 + $0x1488] sm:$0xff]
    %v849 = vld [vmem:[#allocation3 + $0x1490] sm:$0xff]
    %v850 = vld [vmem:[#allocation3 + $0x1498] sm:$0xff]
    %v851 = vld [vmem:[#allocation3 + $0x14a0] sm:$0xff]
    %v852 = vld [vmem:[#allocation3 + $0x14a8] sm:$0xff]
    %v853 = vld [vmem:[#allocation3 + $0x14b0] sm:$0xff]
    %v854 = vld [vmem:[#allocation3 + $0x14b8] sm:$0xff]
    %v855 = vld [vmem:[#allocation3 + $0x14c0] sm:$0xff]
    %v856 = vld [vmem:[#allocation3 + $0x14c8] sm:$0xff]
    %v857 = vld [vmem:[#allocation3 + $0x14d0] sm:$0xff]
    %v858 = vld [vmem:[#allocation3 + $0x14d8] sm:$0xff]
    %v859 = vld [vmem:[#allocation3 + $0x14e0] sm:$0xff]
    %v860 = vld [vmem:[#allocation3 + $0x14e8] sm:$0xff]
    %v861 = vld [vmem:[#allocation3 + $0x14f0] sm:$0xff]
    %v862 = vld [vmem:[#allocation3 + $0x14f8] sm:$0xff]
    %v863 = vld [vmem:[#allocation3 + $0x1500] sm:$0xff]
    %v864 = vld [vmem:[#allocation3 + $0x1508] sm:$0xff]
    %v865 = vld [vmem:[#allocation3 + $0x1510] sm:$0xff]
    %v866 = vld [vmem:[#allocation3 + $0x1518] sm:$0xff]
    %v867 = vld [vmem:[#allocation3 + $0x1520] sm:$0xff]
    %v868 = vld [vmem:[#allocation3 + $0x1528] sm:$0xff]
    %v869 = vld [vmem:[#allocation3 + $0x1530] sm:$0xff]
    %v870 = vld [vmem:[#allocation3 + $0x1538] sm:$0xff]
    %v871 = vld [vmem:[#allocation3 + $0x1540] sm:$0xff]
    %v872 = vld [vmem:[#allocation3 + $0x1548] sm:$0xff]
    %v873 = vld [vmem:[#allocation3 + $0x1550] sm:$0xff]
    %v874 = vld [vmem:[#allocation3 + $0x1558] sm:$0xff]
    %v875 = vld [vmem:[#allocation3 + $0x1560] sm:$0xff]
    %v876 = vld [vmem:[#allocation3 + $0x1568] sm:$0xff]
    %v877 = vld [vmem:[#allocation3 + $0x1570] sm:$0xff]
    %v878 = vld [vmem:[#allocation3 + $0x1578] sm:$0xff]
    %v879 = vld [vmem:[#allocation3 + $0x1580] sm:$0xff]
    %v880 = vld [vmem:[#allocation3 + $0x1588] sm:$0xff]
    %v881 = vld [vmem:[#allocation3 + $0x1590] sm:$0xff]
    %v882 = vld [vmem:[#allocation3 + $0x1598] sm:$0xff]
    %v883 = vld [vmem:[#allocation3 + $0x15a0] sm:$0xff]
    %v884 = vld [vmem:[#allocation3 + $0x15a8] sm:$0xff]
    %v885 = vld [vmem:[#allocation3 + $0x15b0] sm:$0xff]
    %v886 = vld [vmem:[#allocation3 + $0x15b8] sm:$0xff]
    %v887 = vld [vmem:[#allocation3 + $0x15c0] sm:$0xff]
    %v888 = vld [vmem:[#allocation3 + $0x15c8] sm:$0xff]
    %v889 = vld [vmem:[#allocation3 + $0x15d0] sm:$0xff]
    %v890 = vld [vmem:[#allocation3 + $0x15d8] sm:$0xff]
    %v891 = vld [vmem:[#allocation3 + $0x15e0] sm:$0xff]
    %v892 = vld [vmem:[#allocation3 + $0x15e8] sm:$0xff]
    %v893 = vld [vmem:[#allocation3 + $0x15f0] sm:$0xff]
    %v894 = vld [vmem:[#allocation3 + $0x15f8] sm:$0xff]
    %v895 = vld [vmem:[#allocation3 + $0x1600] sm:$0xff]
    %v896 = vld [vmem:[#allocation3 + $0x1608] sm:$0xff]
    %v897 = vld [vmem:[#allocation3 + $0x1610] sm:$0xff]
    %v898 = vld [vmem:[#allocation3 + $0x1618] sm:$0xff]
    %v899 = vld [vmem:[#allocation3 + $0x1620] sm:$0xff]
    %v900 = vld [vmem:[#allocation3 + $0x1628] sm:$0xff]
    %v901 = vld [vmem:[#allocation3 + $0x1630] sm:$0xff]
    %v902 = vld [vmem:[#allocation3 + $0x1638] sm:$0xff]
    %v903 = vld [vmem:[#allocation3 + $0x1640] sm:$0xff]
    %v904 = vld [vmem:[#allocation3 + $0x1648] sm:$0xff]
    %v905 = vld [vmem:[#allocation3 + $0x1650] sm:$0xff]
    %v906 = vld [vmem:[#allocation3 + $0x1658] sm:$0xff]
    %v907 = vld [vmem:[#allocation3 + $0x1660] sm:$0xff]
    %v908 = vld [vmem:[#allocation3 + $0x1668] sm:$0xff]
    %v909 = vld [vmem:[#allocation3 + $0x1670] sm:$0xff]
    %v910 = vld [vmem:[#allocation3 + $0x1678] sm:$0xff]
    %v911 = vld [vmem:[#allocation3 + $0x1680] sm:$0xff]
    %v912 = vld [vmem:[#allocation3 + $0x1688] sm:$0xff]
    %v913 = vld [vmem:[#allocation3 + $0x1690] sm:$0xff]
    %v914 = vld [vmem:[#allocation3 + $0x1698] sm:$0xff]
    %v915 = vld [vmem:[#allocation3 + $0x16a0] sm:$0xff]
    %v916 = vld [vmem:[#allocation3 + $0x16a8] sm:$0xff]
    %v917 = vld [vmem:[#allocation3 + $0x16b0] sm:$0xff]
    %v918 = vld [vmem:[#allocation3 + $0x16b8] sm:$0xff]
    %v919 = vld [vmem:[#allocation3 + $0x16c0] sm:$0xff]
    %v920 = vld [vmem:[#allocation3 + $0x16c8] sm:$0xff]
    %v921 = vld [vmem:[#allocation3 + $0x16d0] sm:$0xff]
    %v922 = vld [vmem:[#allocation3 + $0x16d8] sm:$0xff]
    %v923 = vld [vmem:[#allocation3 + $0x16e0] sm:$0xff]
    %v924 = vld [vmem:[#allocation3 + $0x16e8] sm:$0xff]
    %v925 = vld [vmem:[#allocation3 + $0x16f0] sm:$0xff]
    %v926 = vld [vmem:[#allocation3 + $0x16f8] sm:$0xff]
    %v927 = vld [vmem:[#allocation3 + $0x1700] sm:$0xff]
    %v928 = vld [vmem:[#allocation3 + $0x1708] sm:$0xff]
    %v929 = vld [vmem:[#allocation3 + $0x1710] sm:$0xff]
    %v930 = vld [vmem:[#allocation3 + $0x1718] sm:$0xff]
    %v931 = vld [vmem:[#allocation3 + $0x1720] sm:$0xff]
    %v932 = vld [vmem:[#allocation3 + $0x1728] sm:$0xff]
    %v933 = vld [vmem:[#allocation3 + $0x1730] sm:$0xff]
    %v934 = vld [vmem:[#allocation3 + $0x1738] sm:$0xff]
    %v935 = vld [vmem:[#allocation3 + $0x1740] sm:$0xff]
    %v936 = vld [vmem:[#allocation3 + $0x1748] sm:$0xff]
    %v937 = vld [vmem:[#allocation3 + $0x1750] sm:$0xff]
    %v938 = vld [vmem:[#allocation3 + $0x1758] sm:$0xff]
    %v939 = vld [vmem:[#allocation3 + $0x1760] sm:$0xff]
    %v940 = vld [vmem:[#allocation3 + $0x1768] sm:$0xff]
    %v941 = vld [vmem:[#allocation3 + $0x1770] sm:$0xff]
    %v942 = vld [vmem:[#allocation3 + $0x1778] sm:$0xff]
    %v943 = vld [vmem:[#allocation3 + $0x1780] sm:$0xff]
    %v944 = vld [vmem:[#allocation3 + $0x1788] sm:$0xff]
    %v945 = vld [vmem:[#allocation3 + $0x1790] sm:$0xff]
    %v946 = vld [vmem:[#allocation3 + $0x1798] sm:$0xff]
    %v947 = vld [vmem:[#allocation3 + $0x17a0] sm:$0xff]
    %v948 = vld [vmem:[#allocation3 + $0x17a8] sm:$0xff]
    %v949 = vld [vmem:[#allocation3 + $0x17b0] sm:$0xff]
    %v950 = vld [vmem:[#allocation3 + $0x17b8] sm:$0xff]
    %v951 = vld [vmem:[#allocation3 + $0x17c0] sm:$0xff]
    %v952 = vld [vmem:[#allocation3 + $0x17c8] sm:$0xff]
    %v953 = vld [vmem:[#allocation3 + $0x17d0] sm:$0xff]
    %v954 = vld [vmem:[#allocation3 + $0x17d8] sm:$0xff]
    %v955 = vld [vmem:[#allocation3 + $0x17e0] sm:$0xff]
    %v956 = vld [vmem:[#allocation3 + $0x17e8] sm:$0xff]
    %v957 = vld [vmem:[#allocation3 + $0x17f0] sm:$0xff]
    %v958 = vld [vmem:[#allocation3 + $0x17f8] sm:$0xff]
    %v959 = vld [vmem:[#allocation6] sm:$0xf]
    %v961 = vlaneseq
    %v962 = vshrl.u32 %v961, 7
    %v963 = vsub.s32 0, %v962
    %v964 = vrot.slane %v959, %v963
    %v965 = vlaneseq
    %v966 = vshrl.u32 %v965, 7
    %v967 = vsub.s32 1, %v966
    %v968 = vrot.slane %v959, %v967
    %v969 = vlaneseq
    %v970 = vshrl.u32 %v969, 7
    %v971 = vsub.s32 2, %v970
    %v972 = vrot.slane %v959, %v971
    %v973 = vlaneseq
    %v974 = vshrl.u32 %v973, 7
    %v975 = vsub.s32 3, %v974
    %v976 = vrot.slane %v959, %v975
    %v1749 = vunpack.c.l.b16 %v191
    %v1750 = vunpack.c.h.b16 %v191
    %v1751 = vunpack.c.l.b16 %v192
    %v1752 = vunpack.c.h.b16 %v192
    %v1753 = vunpack.c.l.b16 %v193
    %v1754 = vunpack.c.h.b16 %v193
    %v1755 = vunpack.c.l.b16 %v194
    %v1756 = vunpack.c.h.b16 %v194
    %v1757 = vunpack.c.l.b16 %v195
    %v1758 = vunpack.c.h.b16 %v195
    %v1759 = vunpack.c.l.b16 %v196
    %v1760 = vunpack.c.h.b16 %v196
    %v1761 = vunpack.c.l.b16 %v197
    %v1762 = vunpack.c.h.b16 %v197
    %v1763 = vunpack.c.l.b16 %v198
    %v1764 = vunpack.c.h.b16 %v198
    %v1765 = vunpack.c.l.b16 %v199
    %v1766 = vunpack.c.h.b16 %v199
    %v1767 = vunpack.c.l.b16 %v200
    %v1768 = vunpack.c.h.b16 %v200
    %v1769 = vunpack.c.l.b16 %v201
    %v1770 = vunpack.c.h.b16 %v201
    %v1771 = vunpack.c.l.b16 %v202
    %v1772 = vunpack.c.h.b16 %v202
    %v1773 = vunpack.c.l.b16 %v203
    %v1774 = vunpack.c.h.b16 %v203
    %v1775 = vunpack.c.l.b16 %v204
    %v1776 = vunpack.c.h.b16 %v204
    %v1777 = vunpack.c.l.b16 %v205
    %v1778 = vunpack.c.h.b16 %v205
    %v1779 = vunpack.c.l.b16 %v206
    %v1780 = vunpack.c.h.b16 %v206
    %v1781 = vunpack.c.l.b16 %v207
    %v1782 = vunpack.c.h.b16 %v207
    %v1783 = vunpack.c.l.b16 %v208
    %v1784 = vunpack.c.h.b16 %v208
    %v1785 = vunpack.c.l.b16 %v209
    %v1786 = vunpack.c.h.b16 %v209
    %v1787 = vunpack.c.l.b16 %v210
    %v1788 = vunpack.c.h.b16 %v210
    %v1789 = vunpack.c.l.b16 %v211
    %v1790 = vunpack.c.h.b16 %v211
    %v1791 = vunpack.c.l.b16 %v212
    %v1792 = vunpack.c.h.b16 %v212
    %v1793 = vunpack.c.l.b16 %v213
    %v1794 = vunpack.c.h.b16 %v213
    %v1795 = vunpack.c.l.b16 %v214
    %v1796 = vunpack.c.h.b16 %v214
    %v1797 = vunpack.c.l.b16 %v215
    %v1798 = vunpack.c.h.b16 %v215
    %v1799 = vunpack.c.l.b16 %v216
    %v1800 = vunpack.c.h.b16 %v216
    %v1801 = vunpack.c.l.b16 %v217
    %v1802 = vunpack.c.h.b16 %v217
    %v1803 = vunpack.c.l.b16 %v218
    %v1804 = vunpack.c.h.b16 %v218
    %v1805 = vunpack.c.l.b16 %v219
    %v1806 = vunpack.c.h.b16 %v219
    %v1807 = vunpack.c.l.b16 %v220
    %v1808 = vunpack.c.h.b16 %v220
    %v1809 = vunpack.c.l.b16 %v221
    %v1810 = vunpack.c.h.b16 %v221
    %v1811 = vunpack.c.l.b16 %v222
    %v1812 = vunpack.c.h.b16 %v222
    %v1813 = vunpack.c.l.b16 %v223
    %v1814 = vunpack.c.h.b16 %v223
    %v1815 = vunpack.c.l.b16 %v224
    %v1816 = vunpack.c.h.b16 %v224
    %v1817 = vunpack.c.l.b16 %v225
    %v1818 = vunpack.c.h.b16 %v225
    %v1819 = vunpack.c.l.b16 %v226
    %v1820 = vunpack.c.h.b16 %v226
    %v1821 = vunpack.c.l.b16 %v227
    %v1822 = vunpack.c.h.b16 %v227
    %v1823 = vunpack.c.l.b16 %v228
    %v1824 = vunpack.c.h.b16 %v228
    %v1825 = vunpack.c.l.b16 %v229
    %v1826 = vunpack.c.h.b16 %v229
    %v1827 = vunpack.c.l.b16 %v230
    %v1828 = vunpack.c.h.b16 %v230
    %v1829 = vunpack.c.l.b16 %v231
    %v1830 = vunpack.c.h.b16 %v231
    %v1831 = vunpack.c.l.b16 %v232
    %v1832 = vunpack.c.h.b16 %v232
    %v1833 = vunpack.c.l.b16 %v233
    %v1834 = vunpack.c.h.b16 %v233
    %v1835 = vunpack.c.l.b16 %v234
    %v1836 = vunpack.c.h.b16 %v234
    %v1837 = vunpack.c.l.b16 %v235
    %v1838 = vunpack.c.h.b16 %v235
    %v1839 = vunpack.c.l.b16 %v236
    %v1840 = vunpack.c.h.b16 %v236
    %v1841 = vunpack.c.l.b16 %v237
    %v1842 = vunpack.c.h.b16 %v237
    %v1843 = vunpack.c.l.b16 %v238
    %v1844 = vunpack.c.h.b16 %v238
    %v1845 = vunpack.c.l.b16 %v239
    %v1846 = vunpack.c.h.b16 %v239
    %v1847 = vunpack.c.l.b16 %v240
    %v1848 = vunpack.c.h.b16 %v240
    %v1849 = vunpack.c.l.b16 %v241
    %v1850 = vunpack.c.h.b16 %v241
    %v1851 = vunpack.c.l.b16 %v242
    %v1852 = vunpack.c.h.b16 %v242
    %v1853 = vunpack.c.l.b16 %v243
    %v1854 = vunpack.c.h.b16 %v243
    %v1855 = vunpack.c.l.b16 %v244
    %v1856 = vunpack.c.h.b16 %v244
    %v1857 = vunpack.c.l.b16 %v245
    %v1858 = vunpack.c.h.b16 %v245
    %v1859 = vunpack.c.l.b16 %v246
    %v1860 = vunpack.c.h.b16 %v246
    %v1861 = vunpack.c.l.b16 %v247
    %v1862 = vunpack.c.h.b16 %v247
    %v1863 = vunpack.c.l.b16 %v248
    %v1864 = vunpack.c.h.b16 %v248
    %v1865 = vunpack.c.l.b16 %v249
    %v1866 = vunpack.c.h.b16 %v249
    %v1867 = vunpack.c.l.b16 %v250
    %v1868 = vunpack.c.h.b16 %v250
    %v1869 = vunpack.c.l.b16 %v251
    %v1870 = vunpack.c.h.b16 %v251
    %v1871 = vunpack.c.l.b16 %v252
    %v1872 = vunpack.c.h.b16 %v252
    %v1873 = vunpack.c.l.b16 %v253
    %v1874 = vunpack.c.h.b16 %v253
    %v1875 = vunpack.c.l.b16 %v254
    %v1876 = vunpack.c.h.b16 %v254
    %v1877 = vunpack.c.l.b16 %v255
    %v1878 = vunpack.c.h.b16 %v255
    %v1879 = vunpack.c.l.b16 %v256
    %v1880 = vunpack.c.h.b16 %v256
    %v1881 = vunpack.c.l.b16 %v257
    %v1882 = vunpack.c.h.b16 %v257
    %v1883 = vunpack.c.l.b16 %v258
    %v1884 = vunpack.c.h.b16 %v258
    %v1885 = vunpack.c.l.b16 %v259
    %v1886 = vunpack.c.h.b16 %v259
    %v1887 = vunpack.c.l.b16 %v260
    %v1888 = vunpack.c.h.b16 %v260
    %v1889 = vunpack.c.l.b16 %v261
    %v1890 = vunpack.c.h.b16 %v261
    %v1891 = vunpack.c.l.b16 %v262
    %v1892 = vunpack.c.h.b16 %v262
    %v1893 = vunpack.c.l.b16 %v263
    %v1894 = vunpack.c.h.b16 %v263
    %v1895 = vunpack.c.l.b16 %v264
    %v1896 = vunpack.c.h.b16 %v264
    %v1897 = vunpack.c.l.b16 %v265
    %v1898 = vunpack.c.h.b16 %v265
    %v1899 = vunpack.c.l.b16 %v266
    %v1900 = vunpack.c.h.b16 %v266
    %v1901 = vunpack.c.l.b16 %v267
    %v1902 = vunpack.c.h.b16 %v267
    %v1903 = vunpack.c.l.b16 %v268
    %v1904 = vunpack.c.h.b16 %v268
    %v1905 = vunpack.c.l.b16 %v269
    %v1906 = vunpack.c.h.b16 %v269
    %v1907 = vunpack.c.l.b16 %v270
    %v1908 = vunpack.c.h.b16 %v270
    %v1909 = vunpack.c.l.b16 %v271
    %v1910 = vunpack.c.h.b16 %v271
    %v1911 = vunpack.c.l.b16 %v272
    %v1912 = vunpack.c.h.b16 %v272
    %v1913 = vunpack.c.l.b16 %v273
    %v1914 = vunpack.c.h.b16 %v273
    %v1915 = vunpack.c.l.b16 %v274
    %v1916 = vunpack.c.h.b16 %v274
    %v1917 = vunpack.c.l.b16 %v275
    %v1918 = vunpack.c.h.b16 %v275
    %v1919 = vunpack.c.l.b16 %v276
    %v1920 = vunpack.c.h.b16 %v276
    %v1921 = vunpack.c.l.b16 %v277
    %v1922 = vunpack.c.h.b16 %v277
    %v1923 = vunpack.c.l.b16 %v278
    %v1924 = vunpack.c.h.b16 %v278
    %v1925 = vunpack.c.l.b16 %v279
    %v1926 = vunpack.c.h.b16 %v279
    %v1927 = vunpack.c.l.b16 %v280
    %v1928 = vunpack.c.h.b16 %v280
    %v1929 = vunpack.c.l.b16 %v281
    %v1930 = vunpack.c.h.b16 %v281
    %v1931 = vunpack.c.l.b16 %v282
    %v1932 = vunpack.c.h.b16 %v282
    %v1933 = vunpack.c.l.b16 %v283
    %v1934 = vunpack.c.h.b16 %v283
    %v1935 = vunpack.c.l.b16 %v284
    %v1936 = vunpack.c.h.b16 %v284
    %v1937 = vunpack.c.l.b16 %v285
    %v1938 = vunpack.c.h.b16 %v285
    %v1939 = vunpack.c.l.b16 %v286
    %v1940 = vunpack.c.h.b16 %v286
    %v1941 = vunpack.c.l.b16 %v287
    %v1942 = vunpack.c.h.b16 %v287
    %v1943 = vunpack.c.l.b16 %v288
    %v1944 = vunpack.c.h.b16 %v288
    %v1945 = vunpack.c.l.b16 %v289
    %v1946 = vunpack.c.h.b16 %v289
    %v1947 = vunpack.c.l.b16 %v290
    %v1948 = vunpack.c.h.b16 %v290
    %v1949 = vunpack.c.l.b16 %v291
    %v1950 = vunpack.c.h.b16 %v291
    %v1951 = vunpack.c.l.b16 %v292
    %v1952 = vunpack.c.h.b16 %v292
    %v1953 = vunpack.c.l.b16 %v293
    %v1954 = vunpack.c.h.b16 %v293
    %v1955 = vunpack.c.l.b16 %v294
    %v1956 = vunpack.c.h.b16 %v294
    %v1957 = vunpack.c.l.b16 %v295
    %v1958 = vunpack.c.h.b16 %v295
    %v1959 = vunpack.c.l.b16 %v296
    %v1960 = vunpack.c.h.b16 %v296
    %v1961 = vunpack.c.l.b16 %v297
    %v1962 = vunpack.c.h.b16 %v297
    %v1963 = vunpack.c.l.b16 %v298
    %v1964 = vunpack.c.h.b16 %v298
    %v1965 = vunpack.c.l.b16 %v299
    %v1966 = vunpack.c.h.b16 %v299
    %v1967 = vunpack.c.l.b16 %v300
    %v1968 = vunpack.c.h.b16 %v300
    %v1969 = vunpack.c.l.b16 %v301
    %v1970 = vunpack.c.h.b16 %v301
    %v1971 = vunpack.c.l.b16 %v302
    %v1972 = vunpack.c.h.b16 %v302
    %v1973 = vunpack.c.l.b16 %v303
    %v1974 = vunpack.c.h.b16 %v303
    %v1975 = vunpack.c.l.b16 %v304
    %v1976 = vunpack.c.h.b16 %v304
    %v1977 = vunpack.c.l.b16 %v305
    %v1978 = vunpack.c.h.b16 %v305
    %v1979 = vunpack.c.l.b16 %v306
    %v1980 = vunpack.c.h.b16 %v306
    %v1981 = vunpack.c.l.b16 %v307
    %v1982 = vunpack.c.h.b16 %v307
    %v1983 = vunpack.c.l.b16 %v308
    %v1984 = vunpack.c.h.b16 %v308
    %v1985 = vunpack.c.l.b16 %v309
    %v1986 = vunpack.c.h.b16 %v309
    %v1987 = vunpack.c.l.b16 %v310
    %v1988 = vunpack.c.h.b16 %v310
    %v1989 = vunpack.c.l.b16 %v311
    %v1990 = vunpack.c.h.b16 %v311
    %v1991 = vunpack.c.l.b16 %v312
    %v1992 = vunpack.c.h.b16 %v312
    %v1993 = vunpack.c.l.b16 %v313
    %v1994 = vunpack.c.h.b16 %v313
    %v1995 = vunpack.c.l.b16 %v314
    %v1996 = vunpack.c.h.b16 %v314
    %v1997 = vunpack.c.l.b16 %v315
    %v1998 = vunpack.c.h.b16 %v315
    %v1999 = vunpack.c.l.b16 %v316
    %v2000 = vunpack.c.h.b16 %v316
    %v2001 = vunpack.c.l.b16 %v317
    %v2002 = vunpack.c.h.b16 %v317
    %v2003 = vunpack.c.l.b16 %v318
    %v2004 = vunpack.c.h.b16 %v318
    %v2005 = vunpack.c.l.b16 %v319
    %v2006 = vunpack.c.h.b16 %v319
    %v2007 = vunpack.c.l.b16 %v320
    %v2008 = vunpack.c.h.b16 %v320
    %v2009 = vunpack.c.l.b16 %v321
    %v2010 = vunpack.c.h.b16 %v321
    %v2011 = vunpack.c.l.b16 %v322
    %v2012 = vunpack.c.h.b16 %v322
    %v2013 = vunpack.c.l.b16 %v323
    %v2014 = vunpack.c.h.b16 %v323
    %v2015 = vunpack.c.l.b16 %v324
    %v2016 = vunpack.c.h.b16 %v324
    %v2017 = vunpack.c.l.b16 %v325
    %v2018 = vunpack.c.h.b16 %v325
    %v2019 = vunpack.c.l.b16 %v326
    %v2020 = vunpack.c.h.b16 %v326
    %v2021 = vunpack.c.l.b16 %v327
    %v2022 = vunpack.c.h.b16 %v327
    %v2023 = vunpack.c.l.b16 %v328
    %v2024 = vunpack.c.h.b16 %v328
    %v2025 = vunpack.c.l.b16 %v329
    %v2026 = vunpack.c.h.b16 %v329
    %v2027 = vunpack.c.l.b16 %v330
    %v2028 = vunpack.c.h.b16 %v330
    %v2029 = vunpack.c.l.b16 %v331
    %v2030 = vunpack.c.h.b16 %v331
    %v2031 = vunpack.c.l.b16 %v332
    %v2032 = vunpack.c.h.b16 %v332
    %v2033 = vunpack.c.l.b16 %v333
    %v2034 = vunpack.c.h.b16 %v333
    %v2035 = vunpack.c.l.b16 %v334
    %v2036 = vunpack.c.h.b16 %v334
    %v2037 = vunpack.c.l.b16 %v335
    %v2038 = vunpack.c.h.b16 %v335
    %v2039 = vunpack.c.l.b16 %v336
    %v2040 = vunpack.c.h.b16 %v336
    %v2041 = vunpack.c.l.b16 %v337
    %v2042 = vunpack.c.h.b16 %v337
    %v2043 = vunpack.c.l.b16 %v338
    %v2044 = vunpack.c.h.b16 %v338
    %v2045 = vunpack.c.l.b16 %v339
    %v2046 = vunpack.c.h.b16 %v339
    %v2047 = vunpack.c.l.b16 %v340
    %v2048 = vunpack.c.h.b16 %v340
    %v2049 = vunpack.c.l.b16 %v341
    %v2050 = vunpack.c.h.b16 %v341
    %v2051 = vunpack.c.l.b16 %v342
    %v2052 = vunpack.c.h.b16 %v342
    %v2053 = vunpack.c.l.b16 %v343
    %v2054 = vunpack.c.h.b16 %v343
    %v2055 = vunpack.c.l.b16 %v344
    %v2056 = vunpack.c.h.b16 %v344
    %v2057 = vunpack.c.l.b16 %v345
    %v2058 = vunpack.c.h.b16 %v345
    %v2059 = vunpack.c.l.b16 %v346
    %v2060 = vunpack.c.h.b16 %v346
    %v2061 = vunpack.c.l.b16 %v347
    %v2062 = vunpack.c.h.b16 %v347
    %v2063 = vunpack.c.l.b16 %v348
    %v2064 = vunpack.c.h.b16 %v348
    %v2065 = vunpack.c.l.b16 %v349
    %v2066 = vunpack.c.h.b16 %v349
    %v2067 = vunpack.c.l.b16 %v350
    %v2068 = vunpack.c.h.b16 %v350
    %v2069 = vunpack.c.l.b16 %v351
    %v2070 = vunpack.c.h.b16 %v351
    %v2071 = vunpack.c.l.b16 %v352
    %v2072 = vunpack.c.h.b16 %v352
    %v2073 = vunpack.c.l.b16 %v353
    %v2074 = vunpack.c.h.b16 %v353
    %v2075 = vunpack.c.l.b16 %v354
    %v2076 = vunpack.c.h.b16 %v354
    %v2077 = vunpack.c.l.b16 %v355
    %v2078 = vunpack.c.h.b16 %v355
    %v2079 = vunpack.c.l.b16 %v356
    %v2080 = vunpack.c.h.b16 %v356
    %v2081 = vunpack.c.l.b16 %v357
    %v2082 = vunpack.c.h.b16 %v357
    %v2083 = vunpack.c.l.b16 %v358
    %v2084 = vunpack.c.h.b16 %v358
    %v2085 = vunpack.c.l.b16 %v359
    %v2086 = vunpack.c.h.b16 %v359
    %v2087 = vunpack.c.l.b16 %v360
    %v2088 = vunpack.c.h.b16 %v360
    %v2089 = vunpack.c.l.b16 %v361
    %v2090 = vunpack.c.h.b16 %v361
    %v2091 = vunpack.c.l.b16 %v362
    %v2092 = vunpack.c.h.b16 %v362
    %v2093 = vunpack.c.l.b16 %v363
    %v2094 = vunpack.c.h.b16 %v363
    %v2095 = vunpack.c.l.b16 %v364
    %v2096 = vunpack.c.h.b16 %v364
    %v2097 = vunpack.c.l.b16 %v365
    %v2098 = vunpack.c.h.b16 %v365
    %v2099 = vunpack.c.l.b16 %v366
    %v2100 = vunpack.c.h.b16 %v366
    %v2101 = vunpack.c.l.b16 %v367
    %v2102 = vunpack.c.h.b16 %v367
    %v2103 = vunpack.c.l.b16 %v368
    %v2104 = vunpack.c.h.b16 %v368
    %v2105 = vunpack.c.l.b16 %v369
    %v2106 = vunpack.c.h.b16 %v369
    %v2107 = vunpack.c.l.b16 %v370
    %v2108 = vunpack.c.h.b16 %v370
    %v2109 = vunpack.c.l.b16 %v371
    %v2110 = vunpack.c.h.b16 %v371
    %v2111 = vunpack.c.l.b16 %v372
    %v2112 = vunpack.c.h.b16 %v372
    %v2113 = vunpack.c.l.b16 %v373
    %v2114 = vunpack.c.h.b16 %v373
    %v2115 = vunpack.c.l.b16 %v374
    %v2116 = vunpack.c.h.b16 %v374
    %v2117 = vunpack.c.l.b16 %v375
    %v2118 = vunpack.c.h.b16 %v375
    %v2119 = vunpack.c.l.b16 %v376
    %v2120 = vunpack.c.h.b16 %v376
    %v2121 = vunpack.c.l.b16 %v377
    %v2122 = vunpack.c.h.b16 %v377
    %v2123 = vunpack.c.l.b16 %v378
    %v2124 = vunpack.c.h.b16 %v378
    %v2125 = vunpack.c.l.b16 %v379
    %v2126 = vunpack.c.h.b16 %v379
    %v2127 = vunpack.c.l.b16 %v380
    %v2128 = vunpack.c.h.b16 %v380
    %v2129 = vunpack.c.l.b16 %v381
    %v2130 = vunpack.c.h.b16 %v381
    %v2131 = vunpack.c.l.b16 %v382
    %v2132 = vunpack.c.h.b16 %v382
    %v2133 = vunpack.c.l.b16 %v383
    %v2134 = vunpack.c.h.b16 %v383
    %v2135 = vunpack.c.l.b16 %v384
    %v2136 = vunpack.c.h.b16 %v384
    %v2137 = vunpack.c.l.b16 %v385
    %v2138 = vunpack.c.h.b16 %v385
    %v2139 = vunpack.c.l.b16 %v386
    %v2140 = vunpack.c.h.b16 %v386
    %v2141 = vunpack.c.l.b16 %v387
    %v2142 = vunpack.c.h.b16 %v387
    %v2143 = vunpack.c.l.b16 %v388
    %v2144 = vunpack.c.h.b16 %v388
    %v2145 = vunpack.c.l.b16 %v389
    %v2146 = vunpack.c.h.b16 %v389
    %v2147 = vunpack.c.l.b16 %v390
    %v2148 = vunpack.c.h.b16 %v390
    %v2149 = vunpack.c.l.b16 %v391
    %v2150 = vunpack.c.h.b16 %v391
    %v2151 = vunpack.c.l.b16 %v392
    %v2152 = vunpack.c.h.b16 %v392
    %v2153 = vunpack.c.l.b16 %v393
    %v2154 = vunpack.c.h.b16 %v393
    %v2155 = vunpack.c.l.b16 %v394
    %v2156 = vunpack.c.h.b16 %v394
    %v2157 = vunpack.c.l.b16 %v395
    %v2158 = vunpack.c.h.b16 %v395
    %v2159 = vunpack.c.l.b16 %v396
    %v2160 = vunpack.c.h.b16 %v396
    %v2161 = vunpack.c.l.b16 %v397
    %v2162 = vunpack.c.h.b16 %v397
    %v2163 = vunpack.c.l.b16 %v398
    %v2164 = vunpack.c.h.b16 %v398
    %v2165 = vunpack.c.l.b16 %v399
    %v2166 = vunpack.c.h.b16 %v399
    %v2167 = vunpack.c.l.b16 %v400
    %v2168 = vunpack.c.h.b16 %v400
    %v2169 = vunpack.c.l.b16 %v401
    %v2170 = vunpack.c.h.b16 %v401
    %v2171 = vunpack.c.l.b16 %v402
    %v2172 = vunpack.c.h.b16 %v402
    %v2173 = vunpack.c.l.b16 %v403
    %v2174 = vunpack.c.h.b16 %v403
    %v2175 = vunpack.c.l.b16 %v404
    %v2176 = vunpack.c.h.b16 %v404
    %v2177 = vunpack.c.l.b16 %v405
    %v2178 = vunpack.c.h.b16 %v405
    %v2179 = vunpack.c.l.b16 %v406
    %v2180 = vunpack.c.h.b16 %v406
    %v2181 = vunpack.c.l.b16 %v407
    %v2182 = vunpack.c.h.b16 %v407
    %v2183 = vunpack.c.l.b16 %v408
    %v2184 = vunpack.c.h.b16 %v408
    %v2185 = vunpack.c.l.b16 %v409
    %v2186 = vunpack.c.h.b16 %v409
    %v2187 = vunpack.c.l.b16 %v410
    %v2188 = vunpack.c.h.b16 %v410
    %v2189 = vunpack.c.l.b16 %v411
    %v2190 = vunpack.c.h.b16 %v411
    %v2191 = vunpack.c.l.b16 %v412
    %v2192 = vunpack.c.h.b16 %v412
    %v2193 = vunpack.c.l.b16 %v413
    %v2194 = vunpack.c.h.b16 %v413
    %v2195 = vunpack.c.l.b16 %v414
    %v2196 = vunpack.c.h.b16 %v414
    %v2197 = vunpack.c.l.b16 %v415
    %v2198 = vunpack.c.h.b16 %v415
    %v2199 = vunpack.c.l.b16 %v416
    %v2200 = vunpack.c.h.b16 %v416
    %v2201 = vunpack.c.l.b16 %v417
    %v2202 = vunpack.c.h.b16 %v417
    %v2203 = vunpack.c.l.b16 %v418
    %v2204 = vunpack.c.h.b16 %v418
    %v2205 = vunpack.c.l.b16 %v419
    %v2206 = vunpack.c.h.b16 %v419
    %v2207 = vunpack.c.l.b16 %v420
    %v2208 = vunpack.c.h.b16 %v420
    %v2209 = vunpack.c.l.b16 %v421
    %v2210 = vunpack.c.h.b16 %v421
    %v2211 = vunpack.c.l.b16 %v422
    %v2212 = vunpack.c.h.b16 %v422
    %v2213 = vunpack.c.l.b16 %v423
    %v2214 = vunpack.c.h.b16 %v423
    %v2215 = vunpack.c.l.b16 %v424
    %v2216 = vunpack.c.h.b16 %v424
    %v2217 = vunpack.c.l.b16 %v425
    %v2218 = vunpack.c.h.b16 %v425
    %v2219 = vunpack.c.l.b16 %v426
    %v2220 = vunpack.c.h.b16 %v426
    %v2221 = vunpack.c.l.b16 %v427
    %v2222 = vunpack.c.h.b16 %v427
    %v2223 = vunpack.c.l.b16 %v428
    %v2224 = vunpack.c.h.b16 %v428
    %v2225 = vunpack.c.l.b16 %v429
    %v2226 = vunpack.c.h.b16 %v429
    %v2227 = vunpack.c.l.b16 %v430
    %v2228 = vunpack.c.h.b16 %v430
    %v2229 = vunpack.c.l.b16 %v431
    %v2230 = vunpack.c.h.b16 %v431
    %v2231 = vunpack.c.l.b16 %v432
    %v2232 = vunpack.c.h.b16 %v432
    %v2233 = vunpack.c.l.b16 %v433
    %v2234 = vunpack.c.h.b16 %v433
    %v2235 = vunpack.c.l.b16 %v434
    %v2236 = vunpack.c.h.b16 %v434
    %v2237 = vunpack.c.l.b16 %v435
    %v2238 = vunpack.c.h.b16 %v435
    %v2239 = vunpack.c.l.b16 %v436
    %v2240 = vunpack.c.h.b16 %v436
    %v2241 = vunpack.c.l.b16 %v437
    %v2242 = vunpack.c.h.b16 %v437
    %v2243 = vunpack.c.l.b16 %v438
    %v2244 = vunpack.c.h.b16 %v438
    %v2245 = vunpack.c.l.b16 %v439
    %v2246 = vunpack.c.h.b16 %v439
    %v2247 = vunpack.c.l.b16 %v440
    %v2248 = vunpack.c.h.b16 %v440
    %v2249 = vunpack.c.l.b16 %v441
    %v2250 = vunpack.c.h.b16 %v441
    %v2251 = vunpack.c.l.b16 %v442
    %v2252 = vunpack.c.h.b16 %v442
    %v2253 = vunpack.c.l.b16 %v443
    %v2254 = vunpack.c.h.b16 %v443
    %v2255 = vunpack.c.l.b16 %v444
    %v2256 = vunpack.c.h.b16 %v444
    %v2257 = vunpack.c.l.b16 %v445
    %v2258 = vunpack.c.h.b16 %v445
    %v2259 = vunpack.c.l.b16 %v446
    %v2260 = vunpack.c.h.b16 %v446
    %v2261 = vunpack.c.l.b16 %v447
    %v2262 = vunpack.c.h.b16 %v447
    %v2263 = vunpack.c.l.b16 %v448
    %v2264 = vunpack.c.h.b16 %v448
    %v2265 = vunpack.c.l.b16 %v449
    %v2266 = vunpack.c.h.b16 %v449
    %v2267 = vunpack.c.l.b16 %v450
    %v2268 = vunpack.c.h.b16 %v450
    %v2269 = vunpack.c.l.b16 %v451
    %v2270 = vunpack.c.h.b16 %v451
    %v2271 = vunpack.c.l.b16 %v452
    %v2272 = vunpack.c.h.b16 %v452
    %v2273 = vunpack.c.l.b16 %v453
    %v2274 = vunpack.c.h.b16 %v453
    %v2275 = vunpack.c.l.b16 %v454
    %v2276 = vunpack.c.h.b16 %v454
    %v2277 = vunpack.c.l.b16 %v455
    %v2278 = vunpack.c.h.b16 %v455
    %v2279 = vunpack.c.l.b16 %v456
    %v2280 = vunpack.c.h.b16 %v456
    %v2281 = vunpack.c.l.b16 %v457
    %v2282 = vunpack.c.h.b16 %v457
    %v2283 = vunpack.c.l.b16 %v458
    %v2284 = vunpack.c.h.b16 %v458
    %v2285 = vunpack.c.l.b16 %v459
    %v2286 = vunpack.c.h.b16 %v459
    %v2287 = vunpack.c.l.b16 %v460
    %v2288 = vunpack.c.h.b16 %v460
    %v2289 = vunpack.c.l.b16 %v461
    %v2290 = vunpack.c.h.b16 %v461
    %v2291 = vunpack.c.l.b16 %v462
    %v2292 = vunpack.c.h.b16 %v462
    %v2293 = vunpack.c.l.b16 %v463
    %v2294 = vunpack.c.h.b16 %v463
    %v2295 = vunpack.c.l.b16 %v464
    %v2296 = vunpack.c.h.b16 %v464
    %v2297 = vunpack.c.l.b16 %v465
    %v2298 = vunpack.c.h.b16 %v465
    %v2299 = vunpack.c.l.b16 %v466
    %v2300 = vunpack.c.h.b16 %v466
    %v2301 = vunpack.c.l.b16 %v467
    %v2302 = vunpack.c.h.b16 %v467
    %v2303 = vunpack.c.l.b16 %v468
    %v2304 = vunpack.c.h.b16 %v468
    %v2305 = vunpack.c.l.b16 %v469
    %v2306 = vunpack.c.h.b16 %v469
    %v2307 = vunpack.c.l.b16 %v470
    %v2308 = vunpack.c.h.b16 %v470
    %v2309 = vunpack.c.l.b16 %v471
    %v2310 = vunpack.c.h.b16 %v471
    %v2311 = vunpack.c.l.b16 %v472
    %v2312 = vunpack.c.h.b16 %v472
    %v2313 = vunpack.c.l.b16 %v473
    %v2314 = vunpack.c.h.b16 %v473
    %v2315 = vunpack.c.l.b16 %v474
    %v2316 = vunpack.c.h.b16 %v474
    %v2317 = vunpack.c.l.b16 %v475
    %v2318 = vunpack.c.h.b16 %v475
    %v2319 = vunpack.c.l.b16 %v476
    %v2320 = vunpack.c.h.b16 %v476
    %v2321 = vunpack.c.l.b16 %v477
    %v2322 = vunpack.c.h.b16 %v477
    %v2323 = vunpack.c.l.b16 %v478
    %v2324 = vunpack.c.h.b16 %v478
    %v2325 = vunpack.c.l.b16 %v479
    %v2326 = vunpack.c.h.b16 %v479
    %v2327 = vunpack.c.l.b16 %v480
    %v2328 = vunpack.c.h.b16 %v480
    %v2329 = vunpack.c.l.b16 %v481
    %v2330 = vunpack.c.h.b16 %v481
    %v2331 = vunpack.c.l.b16 %v482
    %v2332 = vunpack.c.h.b16 %v482
    %v2333 = vunpack.c.l.b16 %v483
    %v2334 = vunpack.c.h.b16 %v483
    %v2335 = vunpack.c.l.b16 %v484
    %v2336 = vunpack.c.h.b16 %v484
    %v2337 = vunpack.c.l.b16 %v485
    %v2338 = vunpack.c.h.b16 %v485
    %v2339 = vunpack.c.l.b16 %v486
    %v2340 = vunpack.c.h.b16 %v486
    %v2341 = vunpack.c.l.b16 %v487
    %v2342 = vunpack.c.h.b16 %v487
    %v2343 = vunpack.c.l.b16 %v488
    %v2344 = vunpack.c.h.b16 %v488
    %v2345 = vunpack.c.l.b16 %v489
    %v2346 = vunpack.c.h.b16 %v489
    %v2347 = vunpack.c.l.b16 %v490
    %v2348 = vunpack.c.h.b16 %v490
    %v2349 = vunpack.c.l.b16 %v491
    %v2350 = vunpack.c.h.b16 %v491
    %v2351 = vunpack.c.l.b16 %v492
    %v2352 = vunpack.c.h.b16 %v492
    %v2353 = vunpack.c.l.b16 %v493
    %v2354 = vunpack.c.h.b16 %v493
    %v2355 = vunpack.c.l.b16 %v494
    %v2356 = vunpack.c.h.b16 %v494
    %v2357 = vunpack.c.l.b16 %v495
    %v2358 = vunpack.c.h.b16 %v495
    %v2359 = vunpack.c.l.b16 %v496
    %v2360 = vunpack.c.h.b16 %v496
    %v2361 = vunpack.c.l.b16 %v497
    %v2362 = vunpack.c.h.b16 %v497
    %v2363 = vunpack.c.l.b16 %v498
    %v2364 = vunpack.c.h.b16 %v498
    %v2365 = vunpack.c.l.b16 %v499
    %v2366 = vunpack.c.h.b16 %v499
    %v2367 = vunpack.c.l.b16 %v500
    %v2368 = vunpack.c.h.b16 %v500
    %v2369 = vunpack.c.l.b16 %v501
    %v2370 = vunpack.c.h.b16 %v501
    %v2371 = vunpack.c.l.b16 %v502
    %v2372 = vunpack.c.h.b16 %v502
    %v2373 = vunpack.c.l.b16 %v503
    %v2374 = vunpack.c.h.b16 %v503
    %v2375 = vunpack.c.l.b16 %v504
    %v2376 = vunpack.c.h.b16 %v504
    %v2377 = vunpack.c.l.b16 %v505
    %v2378 = vunpack.c.h.b16 %v505
    %v2379 = vunpack.c.l.b16 %v506
    %v2380 = vunpack.c.h.b16 %v506
    %v2381 = vunpack.c.l.b16 %v507
    %v2382 = vunpack.c.h.b16 %v507
    %v2383 = vunpack.c.l.b16 %v508
    %v2384 = vunpack.c.h.b16 %v508
    %v2385 = vunpack.c.l.b16 %v509
    %v2386 = vunpack.c.h.b16 %v509
    %v2387 = vunpack.c.l.b16 %v510
    %v2388 = vunpack.c.h.b16 %v510
    %v2389 = vunpack.c.l.b16 %v511
    %v2390 = vunpack.c.h.b16 %v511
    %v2391 = vunpack.c.l.b16 %v512
    %v2392 = vunpack.c.h.b16 %v512
    %v2393 = vunpack.c.l.b16 %v513
    %v2394 = vunpack.c.h.b16 %v513
    %v2395 = vunpack.c.l.b16 %v514
    %v2396 = vunpack.c.h.b16 %v514
    %v2397 = vunpack.c.l.b16 %v515
    %v2398 = vunpack.c.h.b16 %v515
    %v2399 = vunpack.c.l.b16 %v516
    %v2400 = vunpack.c.h.b16 %v516
    %v2401 = vunpack.c.l.b16 %v517
    %v2402 = vunpack.c.h.b16 %v517
    %v2403 = vunpack.c.l.b16 %v518
    %v2404 = vunpack.c.h.b16 %v518
    %v2405 = vunpack.c.l.b16 %v519
    %v2406 = vunpack.c.h.b16 %v519
    %v2407 = vunpack.c.l.b16 %v520
    %v2408 = vunpack.c.h.b16 %v520
    %v2409 = vunpack.c.l.b16 %v521
    %v2410 = vunpack.c.h.b16 %v521
    %v2411 = vunpack.c.l.b16 %v522
    %v2412 = vunpack.c.h.b16 %v522
    %v2413 = vunpack.c.l.b16 %v523
    %v2414 = vunpack.c.h.b16 %v523
    %v2415 = vunpack.c.l.b16 %v524
    %v2416 = vunpack.c.h.b16 %v524
    %v2417 = vunpack.c.l.b16 %v525
    %v2418 = vunpack.c.h.b16 %v525
    %v2419 = vunpack.c.l.b16 %v526
    %v2420 = vunpack.c.h.b16 %v526
    %v2421 = vunpack.c.l.b16 %v527
    %v2422 = vunpack.c.h.b16 %v527
    %v2423 = vunpack.c.l.b16 %v528
    %v2424 = vunpack.c.h.b16 %v528
    %v2425 = vunpack.c.l.b16 %v529
    %v2426 = vunpack.c.h.b16 %v529
    %v2427 = vunpack.c.l.b16 %v530
    %v2428 = vunpack.c.h.b16 %v530
    %v2429 = vunpack.c.l.b16 %v531
    %v2430 = vunpack.c.h.b16 %v531
    %v2431 = vunpack.c.l.b16 %v532
    %v2432 = vunpack.c.h.b16 %v532
    %v2433 = vunpack.c.l.b16 %v533
    %v2434 = vunpack.c.h.b16 %v533
    %v2435 = vunpack.c.l.b16 %v534
    %v2436 = vunpack.c.h.b16 %v534
    %v2437 = vunpack.c.l.b16 %v535
    %v2438 = vunpack.c.h.b16 %v535
    %v2439 = vunpack.c.l.b16 %v536
    %v2440 = vunpack.c.h.b16 %v536
    %v2441 = vunpack.c.l.b16 %v537
    %v2442 = vunpack.c.h.b16 %v537
    %v2443 = vunpack.c.l.b16 %v538
    %v2444 = vunpack.c.h.b16 %v538
    %v2445 = vunpack.c.l.b16 %v539
    %v2446 = vunpack.c.h.b16 %v539
    %v2447 = vunpack.c.l.b16 %v540
    %v2448 = vunpack.c.h.b16 %v540
    %v2449 = vunpack.c.l.b16 %v541
    %v2450 = vunpack.c.h.b16 %v541
    %v2451 = vunpack.c.l.b16 %v542
    %v2452 = vunpack.c.h.b16 %v542
    %v2453 = vunpack.c.l.b16 %v543
    %v2454 = vunpack.c.h.b16 %v543
    %v2455 = vunpack.c.l.b16 %v544
    %v2456 = vunpack.c.h.b16 %v544
    %v2457 = vunpack.c.l.b16 %v545
    %v2458 = vunpack.c.h.b16 %v545
    %v2459 = vunpack.c.l.b16 %v546
    %v2460 = vunpack.c.h.b16 %v546
    %v2461 = vunpack.c.l.b16 %v547
    %v2462 = vunpack.c.h.b16 %v547
    %v2463 = vunpack.c.l.b16 %v548
    %v2464 = vunpack.c.h.b16 %v548
    %v2465 = vunpack.c.l.b16 %v549
    %v2466 = vunpack.c.h.b16 %v549
    %v2467 = vunpack.c.l.b16 %v550
    %v2468 = vunpack.c.h.b16 %v550
    %v2469 = vunpack.c.l.b16 %v551
    %v2470 = vunpack.c.h.b16 %v551
    %v2471 = vunpack.c.l.b16 %v552
    %v2472 = vunpack.c.h.b16 %v552
    %v2473 = vunpack.c.l.b16 %v553
    %v2474 = vunpack.c.h.b16 %v553
    %v2475 = vunpack.c.l.b16 %v554
    %v2476 = vunpack.c.h.b16 %v554
    %v2477 = vunpack.c.l.b16 %v555
    %v2478 = vunpack.c.h.b16 %v555
    %v2479 = vunpack.c.l.b16 %v556
    %v2480 = vunpack.c.h.b16 %v556
    %v2481 = vunpack.c.l.b16 %v557
    %v2482 = vunpack.c.h.b16 %v557
    %v2483 = vunpack.c.l.b16 %v558
    %v2484 = vunpack.c.h.b16 %v558
    %v2485 = vunpack.c.l.b16 %v559
    %v2486 = vunpack.c.h.b16 %v559
    %v2487 = vunpack.c.l.b16 %v560
    %v2488 = vunpack.c.h.b16 %v560
    %v2489 = vunpack.c.l.b16 %v561
    %v2490 = vunpack.c.h.b16 %v561
    %v2491 = vunpack.c.l.b16 %v562
    %v2492 = vunpack.c.h.b16 %v562
    %v2493 = vunpack.c.l.b16 %v563
    %v2494 = vunpack.c.h.b16 %v563
    %v2495 = vunpack.c.l.b16 %v564
    %v2496 = vunpack.c.h.b16 %v564
    %v2497 = vunpack.c.l.b16 %v565
    %v2498 = vunpack.c.h.b16 %v565
    %v2499 = vunpack.c.l.b16 %v566
    %v2500 = vunpack.c.h.b16 %v566
    %v2501 = vunpack.c.l.b16 %v567
    %v2502 = vunpack.c.h.b16 %v567
    %v2503 = vunpack.c.l.b16 %v568
    %v2504 = vunpack.c.h.b16 %v568
    %v2505 = vunpack.c.l.b16 %v569
    %v2506 = vunpack.c.h.b16 %v569
    %v2507 = vunpack.c.l.b16 %v570
    %v2508 = vunpack.c.h.b16 %v570
    %v2509 = vunpack.c.l.b16 %v571
    %v2510 = vunpack.c.h.b16 %v571
    %v2511 = vunpack.c.l.b16 %v572
    %v2512 = vunpack.c.h.b16 %v572
    %v2513 = vunpack.c.l.b16 %v573
    %v2514 = vunpack.c.h.b16 %v573
    %v2515 = vunpack.c.l.b16 %v574
    %v2516 = vunpack.c.h.b16 %v574
    %v2517 = vunpack.c.l.b16 %v575
    %v2518 = vunpack.c.h.b16 %v575
    %v2519 = vunpack.c.l.b16 %v576
    %v2520 = vunpack.c.h.b16 %v576
    %v2521 = vunpack.c.l.b16 %v577
    %v2522 = vunpack.c.h.b16 %v577
    %v2523 = vunpack.c.l.b16 %v578
    %v2524 = vunpack.c.h.b16 %v578
    %v2525 = vunpack.c.l.b16 %v579
    %v2526 = vunpack.c.h.b16 %v579
    %v2527 = vunpack.c.l.b16 %v580
    %v2528 = vunpack.c.h.b16 %v580
    %v2529 = vunpack.c.l.b16 %v581
    %v2530 = vunpack.c.h.b16 %v581
    %v2531 = vunpack.c.l.b16 %v582
    %v2532 = vunpack.c.h.b16 %v582
    %v2533 = vunpack.c.l.b16 %v583
    %v2534 = vunpack.c.h.b16 %v583
    %v2535 = vunpack.c.l.b16 %v584
    %v2536 = vunpack.c.h.b16 %v584
    %v2537 = vunpack.c.l.b16 %v585
    %v2538 = vunpack.c.h.b16 %v585
    %v2539 = vunpack.c.l.b16 %v586
    %v2540 = vunpack.c.h.b16 %v586
    %v2541 = vunpack.c.l.b16 %v587
    %v2542 = vunpack.c.h.b16 %v587
    %v2543 = vunpack.c.l.b16 %v588
    %v2544 = vunpack.c.h.b16 %v588
    %v2545 = vunpack.c.l.b16 %v589
    %v2546 = vunpack.c.h.b16 %v589
    %v2547 = vunpack.c.l.b16 %v590
    %v2548 = vunpack.c.h.b16 %v590
    %v2549 = vunpack.c.l.b16 %v591
    %v2550 = vunpack.c.h.b16 %v591
    %v2551 = vunpack.c.l.b16 %v592
    %v2552 = vunpack.c.h.b16 %v592
    %v2553 = vunpack.c.l.b16 %v593
    %v2554 = vunpack.c.h.b16 %v593
    %v2555 = vunpack.c.l.b16 %v594
    %v2556 = vunpack.c.h.b16 %v594
    %v2557 = vunpack.c.l.b16 %v595
    %v2558 = vunpack.c.h.b16 %v595
    %v2559 = vunpack.c.l.b16 %v596
    %v2560 = vunpack.c.h.b16 %v596
    %v2561 = vunpack.c.l.b16 %v597
    %v2562 = vunpack.c.h.b16 %v597
    %v2563 = vunpack.c.l.b16 %v598
    %v2564 = vunpack.c.h.b16 %v598
    %v2565 = vunpack.c.l.b16 %v599
    %v2566 = vunpack.c.h.b16 %v599
    %v2567 = vunpack.c.l.b16 %v600
    %v2568 = vunpack.c.h.b16 %v600
    %v2569 = vunpack.c.l.b16 %v601
    %v2570 = vunpack.c.h.b16 %v601
    %v2571 = vunpack.c.l.b16 %v602
    %v2572 = vunpack.c.h.b16 %v602
    %v2573 = vunpack.c.l.b16 %v603
    %v2574 = vunpack.c.h.b16 %v603
    %v2575 = vunpack.c.l.b16 %v604
    %v2576 = vunpack.c.h.b16 %v604
    %v2577 = vunpack.c.l.b16 %v605
    %v2578 = vunpack.c.h.b16 %v605
    %v2579 = vunpack.c.l.b16 %v606
    %v2580 = vunpack.c.h.b16 %v606
    %v2581 = vunpack.c.l.b16 %v607
    %v2582 = vunpack.c.h.b16 %v607
    %v2583 = vunpack.c.l.b16 %v608
    %v2584 = vunpack.c.h.b16 %v608
    %v2585 = vunpack.c.l.b16 %v609
    %v2586 = vunpack.c.h.b16 %v609
    %v2587 = vunpack.c.l.b16 %v610
    %v2588 = vunpack.c.h.b16 %v610
    %v2589 = vunpack.c.l.b16 %v611
    %v2590 = vunpack.c.h.b16 %v611
    %v2591 = vunpack.c.l.b16 %v612
    %v2592 = vunpack.c.h.b16 %v612
    %v2593 = vunpack.c.l.b16 %v613
    %v2594 = vunpack.c.h.b16 %v613
    %v2595 = vunpack.c.l.b16 %v614
    %v2596 = vunpack.c.h.b16 %v614
    %v2597 = vunpack.c.l.b16 %v615
    %v2598 = vunpack.c.h.b16 %v615
    %v2599 = vunpack.c.l.b16 %v616
    %v2600 = vunpack.c.h.b16 %v616
    %v2601 = vunpack.c.l.b16 %v617
    %v2602 = vunpack.c.h.b16 %v617
    %v2603 = vunpack.c.l.b16 %v618
    %v2604 = vunpack.c.h.b16 %v618
    %v2605 = vunpack.c.l.b16 %v619
    %v2606 = vunpack.c.h.b16 %v619
    %v2607 = vunpack.c.l.b16 %v620
    %v2608 = vunpack.c.h.b16 %v620
    %v2609 = vunpack.c.l.b16 %v621
    %v2610 = vunpack.c.h.b16 %v621
    %v2611 = vunpack.c.l.b16 %v622
    %v2612 = vunpack.c.h.b16 %v622
    %v2613 = vunpack.c.l.b16 %v623
    %v2614 = vunpack.c.h.b16 %v623
    %v2615 = vunpack.c.l.b16 %v624
    %v2616 = vunpack.c.h.b16 %v624
    %v2617 = vunpack.c.l.b16 %v625
    %v2618 = vunpack.c.h.b16 %v625
    %v2619 = vunpack.c.l.b16 %v626
    %v2620 = vunpack.c.h.b16 %v626
    %v2621 = vunpack.c.l.b16 %v627
    %v2622 = vunpack.c.h.b16 %v627
    %v2623 = vunpack.c.l.b16 %v628
    %v2624 = vunpack.c.h.b16 %v628
    %v2625 = vunpack.c.l.b16 %v629
    %v2626 = vunpack.c.h.b16 %v629
    %v2627 = vunpack.c.l.b16 %v630
    %v2628 = vunpack.c.h.b16 %v630
    %v2629 = vunpack.c.l.b16 %v631
    %v2630 = vunpack.c.h.b16 %v631
    %v2631 = vunpack.c.l.b16 %v632
    %v2632 = vunpack.c.h.b16 %v632
    %v2633 = vunpack.c.l.b16 %v633
    %v2634 = vunpack.c.h.b16 %v633
    %v2635 = vunpack.c.l.b16 %v634
    %v2636 = vunpack.c.h.b16 %v634
    %v2637 = vunpack.c.l.b16 %v635
    %v2638 = vunpack.c.h.b16 %v635
    %v2639 = vunpack.c.l.b16 %v636
    %v2640 = vunpack.c.h.b16 %v636
    %v2641 = vunpack.c.l.b16 %v637
    %v2642 = vunpack.c.h.b16 %v637
    %v2643 = vunpack.c.l.b16 %v638
    %v2644 = vunpack.c.h.b16 %v638
    %v2645 = vunpack.c.l.b16 %v639
    %v2646 = vunpack.c.h.b16 %v639
    %v2647 = vunpack.c.l.b16 %v640
    %v2648 = vunpack.c.h.b16 %v640
    %v2649 = vunpack.c.l.b16 %v641
    %v2650 = vunpack.c.h.b16 %v641
    %v2651 = vunpack.c.l.b16 %v642
    %v2652 = vunpack.c.h.b16 %v642
    %v2653 = vunpack.c.l.b16 %v643
    %v2654 = vunpack.c.h.b16 %v643
    %v2655 = vunpack.c.l.b16 %v644
    %v2656 = vunpack.c.h.b16 %v644
    %v2657 = vunpack.c.l.b16 %v645
    %v2658 = vunpack.c.h.b16 %v645
    %v2659 = vunpack.c.l.b16 %v646
    %v2660 = vunpack.c.h.b16 %v646
    %v2661 = vunpack.c.l.b16 %v647
    %v2662 = vunpack.c.h.b16 %v647
    %v2663 = vunpack.c.l.b16 %v648
    %v2664 = vunpack.c.h.b16 %v648
    %v2665 = vunpack.c.l.b16 %v649
    %v2666 = vunpack.c.h.b16 %v649
    %v2667 = vunpack.c.l.b16 %v650
    %v2668 = vunpack.c.h.b16 %v650
    %v2669 = vunpack.c.l.b16 %v651
    %v2670 = vunpack.c.h.b16 %v651
    %v2671 = vunpack.c.l.b16 %v652
    %v2672 = vunpack.c.h.b16 %v652
    %v2673 = vunpack.c.l.b16 %v653
    %v2674 = vunpack.c.h.b16 %v653
    %v2675 = vunpack.c.l.b16 %v654
    %v2676 = vunpack.c.h.b16 %v654
    %v2677 = vunpack.c.l.b16 %v655
    %v2678 = vunpack.c.h.b16 %v655
    %v2679 = vunpack.c.l.b16 %v656
    %v2680 = vunpack.c.h.b16 %v656
    %v2681 = vunpack.c.l.b16 %v657
    %v2682 = vunpack.c.h.b16 %v657
    %v2683 = vunpack.c.l.b16 %v658
    %v2684 = vunpack.c.h.b16 %v658
    %v2685 = vunpack.c.l.b16 %v659
    %v2686 = vunpack.c.h.b16 %v659
    %v2687 = vunpack.c.l.b16 %v660
    %v2688 = vunpack.c.h.b16 %v660
    %v2689 = vunpack.c.l.b16 %v661
    %v2690 = vunpack.c.h.b16 %v661
    %v2691 = vunpack.c.l.b16 %v662
    %v2692 = vunpack.c.h.b16 %v662
    %v2693 = vunpack.c.l.b16 %v663
    %v2694 = vunpack.c.h.b16 %v663
    %v2695 = vunpack.c.l.b16 %v664
    %v2696 = vunpack.c.h.b16 %v664
    %v2697 = vunpack.c.l.b16 %v665
    %v2698 = vunpack.c.h.b16 %v665
    %v2699 = vunpack.c.l.b16 %v666
    %v2700 = vunpack.c.h.b16 %v666
    %v2701 = vunpack.c.l.b16 %v667
    %v2702 = vunpack.c.h.b16 %v667
    %v2703 = vunpack.c.l.b16 %v668
    %v2704 = vunpack.c.h.b16 %v668
    %v2705 = vunpack.c.l.b16 %v669
    %v2706 = vunpack.c.h.b16 %v669
    %v2707 = vunpack.c.l.b16 %v670
    %v2708 = vunpack.c.h.b16 %v670
    %v2709 = vunpack.c.l.b16 %v671
    %v2710 = vunpack.c.h.b16 %v671
    %v2711 = vunpack.c.l.b16 %v672
    %v2712 = vunpack.c.h.b16 %v672
    %v2713 = vunpack.c.l.b16 %v673
    %v2714 = vunpack.c.h.b16 %v673
    %v2715 = vunpack.c.l.b16 %v674
    %v2716 = vunpack.c.h.b16 %v674
    %v2717 = vunpack.c.l.b16 %v675
    %v2718 = vunpack.c.h.b16 %v675
    %v2719 = vunpack.c.l.b16 %v676
    %v2720 = vunpack.c.h.b16 %v676
    %v2721 = vunpack.c.l.b16 %v677
    %v2722 = vunpack.c.h.b16 %v677
    %v2723 = vunpack.c.l.b16 %v678
    %v2724 = vunpack.c.h.b16 %v678
    %v2725 = vunpack.c.l.b16 %v679
    %v2726 = vunpack.c.h.b16 %v679
    %v2727 = vunpack.c.l.b16 %v680
    %v2728 = vunpack.c.h.b16 %v680
    %v2729 = vunpack.c.l.b16 %v681
    %v2730 = vunpack.c.h.b16 %v681
    %v2731 = vunpack.c.l.b16 %v682
    %v2732 = vunpack.c.h.b16 %v682
    %v2733 = vunpack.c.l.b16 %v683
    %v2734 = vunpack.c.h.b16 %v683
    %v2735 = vunpack.c.l.b16 %v684
    %v2736 = vunpack.c.h.b16 %v684
    %v2737 = vunpack.c.l.b16 %v685
    %v2738 = vunpack.c.h.b16 %v685
    %v2739 = vunpack.c.l.b16 %v686
    %v2740 = vunpack.c.h.b16 %v686
    %v2741 = vunpack.c.l.b16 %v687
    %v2742 = vunpack.c.h.b16 %v687
    %v2743 = vunpack.c.l.b16 %v688
    %v2744 = vunpack.c.h.b16 %v688
    %v2745 = vunpack.c.l.b16 %v689
    %v2746 = vunpack.c.h.b16 %v689
    %v2747 = vunpack.c.l.b16 %v690
    %v2748 = vunpack.c.h.b16 %v690
    %v2749 = vunpack.c.l.b16 %v691
    %v2750 = vunpack.c.h.b16 %v691
    %v2751 = vunpack.c.l.b16 %v692
    %v2752 = vunpack.c.h.b16 %v692
    %v2753 = vunpack.c.l.b16 %v693
    %v2754 = vunpack.c.h.b16 %v693
    %v2755 = vunpack.c.l.b16 %v694
    %v2756 = vunpack.c.h.b16 %v694
    %v2757 = vunpack.c.l.b16 %v695
    %v2758 = vunpack.c.h.b16 %v695
    %v2759 = vunpack.c.l.b16 %v696
    %v2760 = vunpack.c.h.b16 %v696
    %v2761 = vunpack.c.l.b16 %v697
    %v2762 = vunpack.c.h.b16 %v697
    %v2763 = vunpack.c.l.b16 %v698
    %v2764 = vunpack.c.h.b16 %v698
    %v2765 = vunpack.c.l.b16 %v699
    %v2766 = vunpack.c.h.b16 %v699
    %v2767 = vunpack.c.l.b16 %v700
    %v2768 = vunpack.c.h.b16 %v700
    %v2769 = vunpack.c.l.b16 %v701
    %v2770 = vunpack.c.h.b16 %v701
    %v2771 = vunpack.c.l.b16 %v702
    %v2772 = vunpack.c.h.b16 %v702
    %v2773 = vunpack.c.l.b16 %v703
    %v2774 = vunpack.c.h.b16 %v703
    %v2775 = vunpack.c.l.b16 %v704
    %v2776 = vunpack.c.h.b16 %v704
    %v2777 = vunpack.c.l.b16 %v705
    %v2778 = vunpack.c.h.b16 %v705
    %v2779 = vunpack.c.l.b16 %v706
    %v2780 = vunpack.c.h.b16 %v706
    %v2781 = vunpack.c.l.b16 %v707
    %v2782 = vunpack.c.h.b16 %v707
    %v2783 = vunpack.c.l.b16 %v708
    %v2784 = vunpack.c.h.b16 %v708
    %v2785 = vunpack.c.l.b16 %v709
    %v2786 = vunpack.c.h.b16 %v709
    %v2787 = vunpack.c.l.b16 %v710
    %v2788 = vunpack.c.h.b16 %v710
    %v2789 = vunpack.c.l.b16 %v711
    %v2790 = vunpack.c.h.b16 %v711
    %v2791 = vunpack.c.l.b16 %v712
    %v2792 = vunpack.c.h.b16 %v712
    %v2793 = vunpack.c.l.b16 %v713
    %v2794 = vunpack.c.h.b16 %v713
    %v2795 = vunpack.c.l.b16 %v714
    %v2796 = vunpack.c.h.b16 %v714
    %v2797 = vunpack.c.l.b16 %v715
    %v2798 = vunpack.c.h.b16 %v715
    %v2799 = vunpack.c.l.b16 %v716
    %v2800 = vunpack.c.h.b16 %v716
    %v2801 = vunpack.c.l.b16 %v717
    %v2802 = vunpack.c.h.b16 %v717
    %v2803 = vunpack.c.l.b16 %v718
    %v2804 = vunpack.c.h.b16 %v718
    %v2805 = vunpack.c.l.b16 %v719
    %v2806 = vunpack.c.h.b16 %v719
    %v2807 = vunpack.c.l.b16 %v720
    %v2808 = vunpack.c.h.b16 %v720
    %v2809 = vunpack.c.l.b16 %v721
    %v2810 = vunpack.c.h.b16 %v721
    %v2811 = vunpack.c.l.b16 %v722
    %v2812 = vunpack.c.h.b16 %v722
    %v2813 = vunpack.c.l.b16 %v723
    %v2814 = vunpack.c.h.b16 %v723
    %v2815 = vunpack.c.l.b16 %v724
    %v2816 = vunpack.c.h.b16 %v724
    %v2817 = vunpack.c.l.b16 %v725
    %v2818 = vunpack.c.h.b16 %v725
    %v2819 = vunpack.c.l.b16 %v726
    %v2820 = vunpack.c.h.b16 %v726
    %v2821 = vunpack.c.l.b16 %v727
    %v2822 = vunpack.c.h.b16 %v727
    %v2823 = vunpack.c.l.b16 %v728
    %v2824 = vunpack.c.h.b16 %v728
    %v2825 = vunpack.c.l.b16 %v729
    %v2826 = vunpack.c.h.b16 %v729
    %v2827 = vunpack.c.l.b16 %v730
    %v2828 = vunpack.c.h.b16 %v730
    %v2829 = vunpack.c.l.b16 %v731
    %v2830 = vunpack.c.h.b16 %v731
    %v2831 = vunpack.c.l.b16 %v732
    %v2832 = vunpack.c.h.b16 %v732
    %v2833 = vunpack.c.l.b16 %v733
    %v2834 = vunpack.c.h.b16 %v733
    %v2835 = vunpack.c.l.b16 %v734
    %v2836 = vunpack.c.h.b16 %v734
    %v2837 = vunpack.c.l.b16 %v735
    %v2838 = vunpack.c.h.b16 %v735
    %v2839 = vunpack.c.l.b16 %v736
    %v2840 = vunpack.c.h.b16 %v736
    %v2841 = vunpack.c.l.b16 %v737
    %v2842 = vunpack.c.h.b16 %v737
    %v2843 = vunpack.c.l.b16 %v738
    %v2844 = vunpack.c.h.b16 %v738
    %v2845 = vunpack.c.l.b16 %v739
    %v2846 = vunpack.c.h.b16 %v739
    %v2847 = vunpack.c.l.b16 %v740
    %v2848 = vunpack.c.h.b16 %v740
    %v2849 = vunpack.c.l.b16 %v741
    %v2850 = vunpack.c.h.b16 %v741
    %v2851 = vunpack.c.l.b16 %v742
    %v2852 = vunpack.c.h.b16 %v742
    %v2853 = vunpack.c.l.b16 %v743
    %v2854 = vunpack.c.h.b16 %v743
    %v2855 = vunpack.c.l.b16 %v744
    %v2856 = vunpack.c.h.b16 %v744
    %v2857 = vunpack.c.l.b16 %v745
    %v2858 = vunpack.c.h.b16 %v745
    %v2859 = vunpack.c.l.b16 %v746
    %v2860 = vunpack.c.h.b16 %v746
    %v2861 = vunpack.c.l.b16 %v747
    %v2862 = vunpack.c.h.b16 %v747
    %v2863 = vunpack.c.l.b16 %v748
    %v2864 = vunpack.c.h.b16 %v748
    %v2865 = vunpack.c.l.b16 %v749
    %v2866 = vunpack.c.h.b16 %v749
    %v2867 = vunpack.c.l.b16 %v750
    %v2868 = vunpack.c.h.b16 %v750
    %v2869 = vunpack.c.l.b16 %v751
    %v2870 = vunpack.c.h.b16 %v751
    %v2871 = vunpack.c.l.b16 %v752
    %v2872 = vunpack.c.h.b16 %v752
    %v2873 = vunpack.c.l.b16 %v753
    %v2874 = vunpack.c.h.b16 %v753
    %v2875 = vunpack.c.l.b16 %v754
    %v2876 = vunpack.c.h.b16 %v754
    %v2877 = vunpack.c.l.b16 %v755
    %v2878 = vunpack.c.h.b16 %v755
    %v2879 = vunpack.c.l.b16 %v756
    %v2880 = vunpack.c.h.b16 %v756
    %v2881 = vunpack.c.l.b16 %v757
    %v2882 = vunpack.c.h.b16 %v757
    %v2883 = vunpack.c.l.b16 %v758
    %v2884 = vunpack.c.h.b16 %v758
    %v2885 = vunpack.c.l.b16 %v759
    %v2886 = vunpack.c.h.b16 %v759
    %v2887 = vunpack.c.l.b16 %v760
    %v2888 = vunpack.c.h.b16 %v760
    %v2889 = vunpack.c.l.b16 %v761
    %v2890 = vunpack.c.h.b16 %v761
    %v2891 = vunpack.c.l.b16 %v762
    %v2892 = vunpack.c.h.b16 %v762
    %v2893 = vunpack.c.l.b16 %v763
    %v2894 = vunpack.c.h.b16 %v763
    %v2895 = vunpack.c.l.b16 %v764
    %v2896 = vunpack.c.h.b16 %v764
    %v2897 = vunpack.c.l.b16 %v765
    %v2898 = vunpack.c.h.b16 %v765
    %v2899 = vunpack.c.l.b16 %v766
    %v2900 = vunpack.c.h.b16 %v766
    %v2901 = vunpack.c.l.b16 %v767
    %v2902 = vunpack.c.h.b16 %v767
    %v2903 = vunpack.c.l.b16 %v768
    %v2904 = vunpack.c.h.b16 %v768
    %v2905 = vunpack.c.l.b16 %v769
    %v2906 = vunpack.c.h.b16 %v769
    %v2907 = vunpack.c.l.b16 %v770
    %v2908 = vunpack.c.h.b16 %v770
    %v2909 = vunpack.c.l.b16 %v771
    %v2910 = vunpack.c.h.b16 %v771
    %v2911 = vunpack.c.l.b16 %v772
    %v2912 = vunpack.c.h.b16 %v772
    %v2913 = vunpack.c.l.b16 %v773
    %v2914 = vunpack.c.h.b16 %v773
    %v2915 = vunpack.c.l.b16 %v774
    %v2916 = vunpack.c.h.b16 %v774
    %v2917 = vunpack.c.l.b16 %v775
    %v2918 = vunpack.c.h.b16 %v775
    %v2919 = vunpack.c.l.b16 %v776
    %v2920 = vunpack.c.h.b16 %v776
    %v2921 = vunpack.c.l.b16 %v777
    %v2922 = vunpack.c.h.b16 %v777
    %v2923 = vunpack.c.l.b16 %v778
    %v2924 = vunpack.c.h.b16 %v778
    %v2925 = vunpack.c.l.b16 %v779
    %v2926 = vunpack.c.h.b16 %v779
    %v2927 = vunpack.c.l.b16 %v780
    %v2928 = vunpack.c.h.b16 %v780
    %v2929 = vunpack.c.l.b16 %v781
    %v2930 = vunpack.c.h.b16 %v781
    %v2931 = vunpack.c.l.b16 %v782
    %v2932 = vunpack.c.h.b16 %v782
    %v2933 = vunpack.c.l.b16 %v783
    %v2934 = vunpack.c.h.b16 %v783
    %v2935 = vunpack.c.l.b16 %v784
    %v2936 = vunpack.c.h.b16 %v784
    %v2937 = vunpack.c.l.b16 %v785
    %v2938 = vunpack.c.h.b16 %v785
    %v2939 = vunpack.c.l.b16 %v786
    %v2940 = vunpack.c.h.b16 %v786
    %v2941 = vunpack.c.l.b16 %v787
    %v2942 = vunpack.c.h.b16 %v787
    %v2943 = vunpack.c.l.b16 %v788
    %v2944 = vunpack.c.h.b16 %v788
    %v2945 = vunpack.c.l.b16 %v789
    %v2946 = vunpack.c.h.b16 %v789
    %v2947 = vunpack.c.l.b16 %v790
    %v2948 = vunpack.c.h.b16 %v790
    %v2949 = vunpack.c.l.b16 %v791
    %v2950 = vunpack.c.h.b16 %v791
    %v2951 = vunpack.c.l.b16 %v792
    %v2952 = vunpack.c.h.b16 %v792
    %v2953 = vunpack.c.l.b16 %v793
    %v2954 = vunpack.c.h.b16 %v793
    %v2955 = vunpack.c.l.b16 %v794
    %v2956 = vunpack.c.h.b16 %v794
    %v2957 = vunpack.c.l.b16 %v795
    %v2958 = vunpack.c.h.b16 %v795
    %v2959 = vunpack.c.l.b16 %v796
    %v2960 = vunpack.c.h.b16 %v796
    %v2961 = vunpack.c.l.b16 %v797
    %v2962 = vunpack.c.h.b16 %v797
    %v2963 = vunpack.c.l.b16 %v798
    %v2964 = vunpack.c.h.b16 %v798
    %v2965 = vunpack.c.l.b16 %v799
    %v2966 = vunpack.c.h.b16 %v799
    %v2967 = vunpack.c.l.b16 %v800
    %v2968 = vunpack.c.h.b16 %v800
    %v2969 = vunpack.c.l.b16 %v801
    %v2970 = vunpack.c.h.b16 %v801
    %v2971 = vunpack.c.l.b16 %v802
    %v2972 = vunpack.c.h.b16 %v802
    %v2973 = vunpack.c.l.b16 %v803
    %v2974 = vunpack.c.h.b16 %v803
    %v2975 = vunpack.c.l.b16 %v804
    %v2976 = vunpack.c.h.b16 %v804
    %v2977 = vunpack.c.l.b16 %v805
    %v2978 = vunpack.c.h.b16 %v805
    %v2979 = vunpack.c.l.b16 %v806
    %v2980 = vunpack.c.h.b16 %v806
    %v2981 = vunpack.c.l.b16 %v807
    %v2982 = vunpack.c.h.b16 %v807
    %v2983 = vunpack.c.l.b16 %v808
    %v2984 = vunpack.c.h.b16 %v808
    %v2985 = vunpack.c.l.b16 %v809
    %v2986 = vunpack.c.h.b16 %v809
    %v2987 = vunpack.c.l.b16 %v810
    %v2988 = vunpack.c.h.b16 %v810
    %v2989 = vunpack.c.l.b16 %v811
    %v2990 = vunpack.c.h.b16 %v811
    %v2991 = vunpack.c.l.b16 %v812
    %v2992 = vunpack.c.h.b16 %v812
    %v2993 = vunpack.c.l.b16 %v813
    %v2994 = vunpack.c.h.b16 %v813
    %v2995 = vunpack.c.l.b16 %v814
    %v2996 = vunpack.c.h.b16 %v814
    %v2997 = vunpack.c.l.b16 %v815
    %v2998 = vunpack.c.h.b16 %v815
    %v2999 = vunpack.c.l.b16 %v816
    %v3000 = vunpack.c.h.b16 %v816
    %v3001 = vunpack.c.l.b16 %v817
    %v3002 = vunpack.c.h.b16 %v817
    %v3003 = vunpack.c.l.b16 %v818
    %v3004 = vunpack.c.h.b16 %v818
    %v3005 = vunpack.c.l.b16 %v819
    %v3006 = vunpack.c.h.b16 %v819
    %v3007 = vunpack.c.l.b16 %v820
    %v3008 = vunpack.c.h.b16 %v820
    %v3009 = vunpack.c.l.b16 %v821
    %v3010 = vunpack.c.h.b16 %v821
    %v3011 = vunpack.c.l.b16 %v822
    %v3012 = vunpack.c.h.b16 %v822
    %v3013 = vunpack.c.l.b16 %v823
    %v3014 = vunpack.c.h.b16 %v823
    %v3015 = vunpack.c.l.b16 %v824
    %v3016 = vunpack.c.h.b16 %v824
    %v3017 = vunpack.c.l.b16 %v825
    %v3018 = vunpack.c.h.b16 %v825
    %v3019 = vunpack.c.l.b16 %v826
    %v3020 = vunpack.c.h.b16 %v826
    %v3021 = vunpack.c.l.b16 %v827
    %v3022 = vunpack.c.h.b16 %v827
    %v3023 = vunpack.c.l.b16 %v828
    %v3024 = vunpack.c.h.b16 %v828
    %v3025 = vunpack.c.l.b16 %v829
    %v3026 = vunpack.c.h.b16 %v829
    %v3027 = vunpack.c.l.b16 %v830
    %v3028 = vunpack.c.h.b16 %v830
    %v3029 = vunpack.c.l.b16 %v831
    %v3030 = vunpack.c.h.b16 %v831
    %v3031 = vunpack.c.l.b16 %v832
    %v3032 = vunpack.c.h.b16 %v832
    %v3033 = vunpack.c.l.b16 %v833
    %v3034 = vunpack.c.h.b16 %v833
    %v3035 = vunpack.c.l.b16 %v834
    %v3036 = vunpack.c.h.b16 %v834
    %v3037 = vunpack.c.l.b16 %v835
    %v3038 = vunpack.c.h.b16 %v835
    %v3039 = vunpack.c.l.b16 %v836
    %v3040 = vunpack.c.h.b16 %v836
    %v3041 = vunpack.c.l.b16 %v837
    %v3042 = vunpack.c.h.b16 %v837
    %v3043 = vunpack.c.l.b16 %v838
    %v3044 = vunpack.c.h.b16 %v838
    %v3045 = vunpack.c.l.b16 %v839
    %v3046 = vunpack.c.h.b16 %v839
    %v3047 = vunpack.c.l.b16 %v840
    %v3048 = vunpack.c.h.b16 %v840
    %v3049 = vunpack.c.l.b16 %v841
    %v3050 = vunpack.c.h.b16 %v841
    %v3051 = vunpack.c.l.b16 %v842
    %v3052 = vunpack.c.h.b16 %v842
    %v3053 = vunpack.c.l.b16 %v843
    %v3054 = vunpack.c.h.b16 %v843
    %v3055 = vunpack.c.l.b16 %v844
    %v3056 = vunpack.c.h.b16 %v844
    %v3057 = vunpack.c.l.b16 %v845
    %v3058 = vunpack.c.h.b16 %v845
    %v3059 = vunpack.c.l.b16 %v846
    %v3060 = vunpack.c.h.b16 %v846
    %v3061 = vunpack.c.l.b16 %v847
    %v3062 = vunpack.c.h.b16 %v847
    %v3063 = vunpack.c.l.b16 %v848
    %v3064 = vunpack.c.h.b16 %v848
    %v3065 = vunpack.c.l.b16 %v849
    %v3066 = vunpack.c.h.b16 %v849
    %v3067 = vunpack.c.l.b16 %v850
    %v3068 = vunpack.c.h.b16 %v850
    %v3069 = vunpack.c.l.b16 %v851
    %v3070 = vunpack.c.h.b16 %v851
    %v3071 = vunpack.c.l.b16 %v852
    %v3072 = vunpack.c.h.b16 %v852
    %v3073 = vunpack.c.l.b16 %v853
    %v3074 = vunpack.c.h.b16 %v853
    %v3075 = vunpack.c.l.b16 %v854
    %v3076 = vunpack.c.h.b16 %v854
    %v3077 = vunpack.c.l.b16 %v855
    %v3078 = vunpack.c.h.b16 %v855
    %v3079 = vunpack.c.l.b16 %v856
    %v3080 = vunpack.c.h.b16 %v856
    %v3081 = vunpack.c.l.b16 %v857
    %v3082 = vunpack.c.h.b16 %v857
    %v3083 = vunpack.c.l.b16 %v858
    %v3084 = vunpack.c.h.b16 %v858
    %v3085 = vunpack.c.l.b16 %v859
    %v3086 = vunpack.c.h.b16 %v859
    %v3087 = vunpack.c.l.b16 %v860
    %v3088 = vunpack.c.h.b16 %v860
    %v3089 = vunpack.c.l.b16 %v861
    %v3090 = vunpack.c.h.b16 %v861
    %v3091 = vunpack.c.l.b16 %v862
    %v3092 = vunpack.c.h.b16 %v862
    %v3093 = vunpack.c.l.b16 %v863
    %v3094 = vunpack.c.h.b16 %v863
    %v3095 = vunpack.c.l.b16 %v864
    %v3096 = vunpack.c.h.b16 %v864
    %v3097 = vunpack.c.l.b16 %v865
    %v3098 = vunpack.c.h.b16 %v865
    %v3099 = vunpack.c.l.b16 %v866
    %v3100 = vunpack.c.h.b16 %v866
    %v3101 = vunpack.c.l.b16 %v867
    %v3102 = vunpack.c.h.b16 %v867
    %v3103 = vunpack.c.l.b16 %v868
    %v3104 = vunpack.c.h.b16 %v868
    %v3105 = vunpack.c.l.b16 %v869
    %v3106 = vunpack.c.h.b16 %v869
    %v3107 = vunpack.c.l.b16 %v870
    %v3108 = vunpack.c.h.b16 %v870
    %v3109 = vunpack.c.l.b16 %v871
    %v3110 = vunpack.c.h.b16 %v871
    %v3111 = vunpack.c.l.b16 %v872
    %v3112 = vunpack.c.h.b16 %v872
    %v3113 = vunpack.c.l.b16 %v873
    %v3114 = vunpack.c.h.b16 %v873
    %v3115 = vunpack.c.l.b16 %v874
    %v3116 = vunpack.c.h.b16 %v874
    %v3117 = vunpack.c.l.b16 %v875
    %v3118 = vunpack.c.h.b16 %v875
    %v3119 = vunpack.c.l.b16 %v876
    %v3120 = vunpack.c.h.b16 %v876
    %v3121 = vunpack.c.l.b16 %v877
    %v3122 = vunpack.c.h.b16 %v877
    %v3123 = vunpack.c.l.b16 %v878
    %v3124 = vunpack.c.h.b16 %v878
    %v3125 = vunpack.c.l.b16 %v879
    %v3126 = vunpack.c.h.b16 %v879
    %v3127 = vunpack.c.l.b16 %v880
    %v3128 = vunpack.c.h.b16 %v880
    %v3129 = vunpack.c.l.b16 %v881
    %v3130 = vunpack.c.h.b16 %v881
    %v3131 = vunpack.c.l.b16 %v882
    %v3132 = vunpack.c.h.b16 %v882
    %v3133 = vunpack.c.l.b16 %v883
    %v3134 = vunpack.c.h.b16 %v883
    %v3135 = vunpack.c.l.b16 %v884
    %v3136 = vunpack.c.h.b16 %v884
    %v3137 = vunpack.c.l.b16 %v885
    %v3138 = vunpack.c.h.b16 %v885
    %v3139 = vunpack.c.l.b16 %v886
    %v3140 = vunpack.c.h.b16 %v886
    %v3141 = vunpack.c.l.b16 %v887
    %v3142 = vunpack.c.h.b16 %v887
    %v3143 = vunpack.c.l.b16 %v888
    %v3144 = vunpack.c.h.b16 %v888
    %v3145 = vunpack.c.l.b16 %v889
    %v3146 = vunpack.c.h.b16 %v889
    %v3147 = vunpack.c.l.b16 %v890
    %v3148 = vunpack.c.h.b16 %v890
    %v3149 = vunpack.c.l.b16 %v891
    %v3150 = vunpack.c.h.b16 %v891
    %v3151 = vunpack.c.l.b16 %v892
    %v3152 = vunpack.c.h.b16 %v892
    %v3153 = vunpack.c.l.b16 %v893
    %v3154 = vunpack.c.h.b16 %v893
    %v3155 = vunpack.c.l.b16 %v894
    %v3156 = vunpack.c.h.b16 %v894
    %v3157 = vunpack.c.l.b16 %v895
    %v3158 = vunpack.c.h.b16 %v895
    %v3159 = vunpack.c.l.b16 %v896
    %v3160 = vunpack.c.h.b16 %v896
    %v3161 = vunpack.c.l.b16 %v897
    %v3162 = vunpack.c.h.b16 %v897
    %v3163 = vunpack.c.l.b16 %v898
    %v3164 = vunpack.c.h.b16 %v898
    %v3165 = vunpack.c.l.b16 %v899
    %v3166 = vunpack.c.h.b16 %v899
    %v3167 = vunpack.c.l.b16 %v900
    %v3168 = vunpack.c.h.b16 %v900
    %v3169 = vunpack.c.l.b16 %v901
    %v3170 = vunpack.c.h.b16 %v901
    %v3171 = vunpack.c.l.b16 %v902
    %v3172 = vunpack.c.h.b16 %v902
    %v3173 = vunpack.c.l.b16 %v903
    %v3174 = vunpack.c.h.b16 %v903
    %v3175 = vunpack.c.l.b16 %v904
    %v3176 = vunpack.c.h.b16 %v904
    %v3177 = vunpack.c.l.b16 %v905
    %v3178 = vunpack.c.h.b16 %v905
    %v3179 = vunpack.c.l.b16 %v906
    %v3180 = vunpack.c.h.b16 %v906
    %v3181 = vunpack.c.l.b16 %v907
    %v3182 = vunpack.c.h.b16 %v907
    %v3183 = vunpack.c.l.b16 %v908
    %v3184 = vunpack.c.h.b16 %v908
    %v3185 = vunpack.c.l.b16 %v909
    %v3186 = vunpack.c.h.b16 %v909
    %v3187 = vunpack.c.l.b16 %v910
    %v3188 = vunpack.c.h.b16 %v910
    %v3189 = vunpack.c.l.b16 %v911
    %v3190 = vunpack.c.h.b16 %v911
    %v3191 = vunpack.c.l.b16 %v912
    %v3192 = vunpack.c.h.b16 %v912
    %v3193 = vunpack.c.l.b16 %v913
    %v3194 = vunpack.c.h.b16 %v913
    %v3195 = vunpack.c.l.b16 %v914
    %v3196 = vunpack.c.h.b16 %v914
    %v3197 = vunpack.c.l.b16 %v915
    %v3198 = vunpack.c.h.b16 %v915
    %v3199 = vunpack.c.l.b16 %v916
    %v3200 = vunpack.c.h.b16 %v916
    %v3201 = vunpack.c.l.b16 %v917
    %v3202 = vunpack.c.h.b16 %v917
    %v3203 = vunpack.c.l.b16 %v918
    %v3204 = vunpack.c.h.b16 %v918
    %v3205 = vunpack.c.l.b16 %v919
    %v3206 = vunpack.c.h.b16 %v919
    %v3207 = vunpack.c.l.b16 %v920
    %v3208 = vunpack.c.h.b16 %v920
    %v3209 = vunpack.c.l.b16 %v921
    %v3210 = vunpack.c.h.b16 %v921
    %v3211 = vunpack.c.l.b16 %v922
    %v3212 = vunpack.c.h.b16 %v922
    %v3213 = vunpack.c.l.b16 %v923
    %v3214 = vunpack.c.h.b16 %v923
    %v3215 = vunpack.c.l.b16 %v924
    %v3216 = vunpack.c.h.b16 %v924
    %v3217 = vunpack.c.l.b16 %v925
    %v3218 = vunpack.c.h.b16 %v925
    %v3219 = vunpack.c.l.b16 %v926
    %v3220 = vunpack.c.h.b16 %v926
    %v3221 = vunpack.c.l.b16 %v927
    %v3222 = vunpack.c.h.b16 %v927
    %v3223 = vunpack.c.l.b16 %v928
    %v3224 = vunpack.c.h.b16 %v928
    %v3225 = vunpack.c.l.b16 %v929
    %v3226 = vunpack.c.h.b16 %v929
    %v3227 = vunpack.c.l.b16 %v930
    %v3228 = vunpack.c.h.b16 %v930
    %v3229 = vunpack.c.l.b16 %v931
    %v3230 = vunpack.c.h.b16 %v931
    %v3231 = vunpack.c.l.b16 %v932
    %v3232 = vunpack.c.h.b16 %v932
    %v3233 = vunpack.c.l.b16 %v933
    %v3234 = vunpack.c.h.b16 %v933
    %v3235 = vunpack.c.l.b16 %v934
    %v3236 = vunpack.c.h.b16 %v934
    %v3237 = vunpack.c.l.b16 %v935
    %v3238 = vunpack.c.h.b16 %v935
    %v3239 = vunpack.c.l.b16 %v936
    %v3240 = vunpack.c.h.b16 %v936
    %v3241 = vunpack.c.l.b16 %v937
    %v3242 = vunpack.c.h.b16 %v937
    %v3243 = vunpack.c.l.b16 %v938
    %v3244 = vunpack.c.h.b16 %v938
    %v3245 = vunpack.c.l.b16 %v939
    %v3246 = vunpack.c.h.b16 %v939
    %v3247 = vunpack.c.l.b16 %v940
    %v3248 = vunpack.c.h.b16 %v940
    %v3249 = vunpack.c.l.b16 %v941
    %v3250 = vunpack.c.h.b16 %v941
    %v3251 = vunpack.c.l.b16 %v942
    %v3252 = vunpack.c.h.b16 %v942
    %v3253 = vunpack.c.l.b16 %v943
    %v3254 = vunpack.c.h.b16 %v943
    %v3255 = vunpack.c.l.b16 %v944
    %v3256 = vunpack.c.h.b16 %v944
    %v3257 = vunpack.c.l.b16 %v945
    %v3258 = vunpack.c.h.b16 %v945
    %v3259 = vunpack.c.l.b16 %v946
    %v3260 = vunpack.c.h.b16 %v946
    %v3261 = vunpack.c.l.b16 %v947
    %v3262 = vunpack.c.h.b16 %v947
    %v3263 = vunpack.c.l.b16 %v948
    %v3264 = vunpack.c.h.b16 %v948
    %v3265 = vunpack.c.l.b16 %v949
    %v3266 = vunpack.c.h.b16 %v949
    %v3267 = vunpack.c.l.b16 %v950
    %v3268 = vunpack.c.h.b16 %v950
    %v3269 = vunpack.c.l.b16 %v951
    %v3270 = vunpack.c.h.b16 %v951
    %v3271 = vunpack.c.l.b16 %v952
    %v3272 = vunpack.c.h.b16 %v952
    %v3273 = vunpack.c.l.b16 %v953
    %v3274 = vunpack.c.h.b16 %v953
    %v3275 = vunpack.c.l.b16 %v954
    %v3276 = vunpack.c.h.b16 %v954
    %v3277 = vunpack.c.l.b16 %v955
    %v3278 = vunpack.c.h.b16 %v955
    %v3279 = vunpack.c.l.b16 %v956
    %v3280 = vunpack.c.h.b16 %v956
    %v3281 = vunpack.c.l.b16 %v957
    %v3282 = vunpack.c.h.b16 %v957
    %v3283 = vunpack.c.l.b16 %v958
    %v3284 = vunpack.c.h.b16 %v958
    %v3285 = vpack.c.b16 %v1753, %v1749
    %v3286 = vpack.c.b16 %v1754, %v1750
    %v3287 = vpack.c.b16 %v1755, %v1751
    %v3288 = vpack.c.b16 %v1756, %v1752
    %v3289 = vpack.c.b16 %v1761, %v1757
    %v3290 = vpack.c.b16 %v1762, %v1758
    %v3291 = vpack.c.b16 %v1763, %v1759
    %v3292 = vpack.c.b16 %v1764, %v1760
    %v3293 = vpack.c.b16 %v1769, %v1765
    %v3294 = vpack.c.b16 %v1770, %v1766
    %v3295 = vpack.c.b16 %v1771, %v1767
    %v3296 = vpack.c.b16 %v1772, %v1768
    %v3297 = vpack.c.b16 %v1777, %v1773
    %v3298 = vpack.c.b16 %v1778, %v1774
    %v3299 = vpack.c.b16 %v1779, %v1775
    %v3300 = vpack.c.b16 %v1780, %v1776
    %v3301 = vpack.c.b16 %v1785, %v1781
    %v3302 = vpack.c.b16 %v1786, %v1782
    %v3303 = vpack.c.b16 %v1787, %v1783
    %v3304 = vpack.c.b16 %v1788, %v1784
    %v3305 = vpack.c.b16 %v1793, %v1789
    %v3306 = vpack.c.b16 %v1794, %v1790
    %v3307 = vpack.c.b16 %v1795, %v1791
    %v3308 = vpack.c.b16 %v1796, %v1792
    %v3309 = vpack.c.b16 %v1801, %v1797
    %v3310 = vpack.c.b16 %v1802, %v1798
    %v3311 = vpack.c.b16 %v1803, %v1799
    %v3312 = vpack.c.b16 %v1804, %v1800
    %v3313 = vpack.c.b16 %v1809, %v1805
    %v3314 = vpack.c.b16 %v1810, %v1806
    %v3315 = vpack.c.b16 %v1811, %v1807
    %v3316 = vpack.c.b16 %v1812, %v1808
    %v3317 = vpack.c.b16 %v1817, %v1813
    %v3318 = vpack.c.b16 %v1818, %v1814
    %v3319 = vpack.c.b16 %v1819, %v1815
    %v3320 = vpack.c.b16 %v1820, %v1816
    %v3321 = vpack.c.b16 %v1825, %v1821
    %v3322 = vpack.c.b16 %v1826, %v1822
    %v3323 = vpack.c.b16 %v1827, %v1823
    %v3324 = vpack.c.b16 %v1828, %v1824
    %v3325 = vpack.c.b16 %v1833, %v1829
    %v3326 = vpack.c.b16 %v1834, %v1830
    %v3327 = vpack.c.b16 %v1835, %v1831
    %v3328 = vpack.c.b16 %v1836, %v1832
    %v3329 = vpack.c.b16 %v1841, %v1837
    %v3330 = vpack.c.b16 %v1842, %v1838
    %v3331 = vpack.c.b16 %v1843, %v1839
    %v3332 = vpack.c.b16 %v1844, %v1840
    %v3333 = vpack.c.b16 %v1849, %v1845
    %v3334 = vpack.c.b16 %v1850, %v1846
    %v3335 = vpack.c.b16 %v1851, %v1847
    %v3336 = vpack.c.b16 %v1852, %v1848
    %v3337 = vpack.c.b16 %v1857, %v1853
    %v3338 = vpack.c.b16 %v1858, %v1854
    %v3339 = vpack.c.b16 %v1859, %v1855
    %v3340 = vpack.c.b16 %v1860, %v1856
    %v3341 = vpack.c.b16 %v1865, %v1861
    %v3342 = vpack.c.b16 %v1866, %v1862
    %v3343 = vpack.c.b16 %v1867, %v1863
    %v3344 = vpack.c.b16 %v1868, %v1864
    %v3345 = vpack.c.b16 %v1873, %v1869
    %v3346 = vpack.c.b16 %v1874, %v1870
    %v3347 = vpack.c.b16 %v1875, %v1871
    %v3348 = vpack.c.b16 %v1876, %v1872
    %v3349 = vpack.c.b16 %v1881, %v1877
    %v3350 = vpack.c.b16 %v1882, %v1878
    %v3351 = vpack.c.b16 %v1883, %v1879
    %v3352 = vpack.c.b16 %v1884, %v1880
    %v3353 = vpack.c.b16 %v1889, %v1885
    %v3354 = vpack.c.b16 %v1890, %v1886
    %v3355 = vpack.c.b16 %v1891, %v1887
    %v3356 = vpack.c.b16 %v1892, %v1888
    %v3357 = vpack.c.b16 %v1897, %v1893
    %v3358 = vpack.c.b16 %v1898, %v1894
    %v3359 = vpack.c.b16 %v1899, %v1895
    %v3360 = vpack.c.b16 %v1900, %v1896
    %v3361 = vpack.c.b16 %v1905, %v1901
    %v3362 = vpack.c.b16 %v1906, %v1902
    %v3363 = vpack.c.b16 %v1907, %v1903
    %v3364 = vpack.c.b16 %v1908, %v1904
    %v3365 = vpack.c.b16 %v1913, %v1909
    %v3366 = vpack.c.b16 %v1914, %v1910
    %v3367 = vpack.c.b16 %v1915, %v1911
    %v3368 = vpack.c.b16 %v1916, %v1912
    %v3369 = vpack.c.b16 %v1921, %v1917
    %v3370 = vpack.c.b16 %v1922, %v1918
    %v3371 = vpack.c.b16 %v1923, %v1919
    %v3372 = vpack.c.b16 %v1924, %v1920
    %v3373 = vpack.c.b16 %v1929, %v1925
    %v3374 = vpack.c.b16 %v1930, %v1926
    %v3375 = vpack.c.b16 %v1931, %v1927
    %v3376 = vpack.c.b16 %v1932, %v1928
    %v3377 = vpack.c.b16 %v1937, %v1933
    %v3378 = vpack.c.b16 %v1938, %v1934
    %v3379 = vpack.c.b16 %v1939, %v1935
    %v3380 = vpack.c.b16 %v1940, %v1936
    %v3381 = vpack.c.b16 %v1945, %v1941
    %v3382 = vpack.c.b16 %v1946, %v1942
    %v3383 = vpack.c.b16 %v1947, %v1943
    %v3384 = vpack.c.b16 %v1948, %v1944
    %v3385 = vpack.c.b16 %v1953, %v1949
    %v3386 = vpack.c.b16 %v1954, %v1950
    %v3387 = vpack.c.b16 %v1955, %v1951
    %v3388 = vpack.c.b16 %v1956, %v1952
    %v3389 = vpack.c.b16 %v1961, %v1957
    %v3390 = vpack.c.b16 %v1962, %v1958
    %v3391 = vpack.c.b16 %v1963, %v1959
    %v3392 = vpack.c.b16 %v1964, %v1960
    %v3393 = vpack.c.b16 %v1969, %v1965
    %v3394 = vpack.c.b16 %v1970, %v1966
    %v3395 = vpack.c.b16 %v1971, %v1967
    %v3396 = vpack.c.b16 %v1972, %v1968
    %v3397 = vpack.c.b16 %v1977, %v1973
    %v3398 = vpack.c.b16 %v1978, %v1974
    %v3399 = vpack.c.b16 %v1979, %v1975
    %v3400 = vpack.c.b16 %v1980, %v1976
    %v3401 = vpack.c.b16 %v1985, %v1981
    %v3402 = vpack.c.b16 %v1986, %v1982
    %v3403 = vpack.c.b16 %v1987, %v1983
    %v3404 = vpack.c.b16 %v1988, %v1984
    %v3405 = vpack.c.b16 %v1993, %v1989
    %v3406 = vpack.c.b16 %v1994, %v1990
    %v3407 = vpack.c.b16 %v1995, %v1991
    %v3408 = vpack.c.b16 %v1996, %v1992
    %v3409 = vpack.c.b16 %v2001, %v1997
    %v3410 = vpack.c.b16 %v2002, %v1998
    %v3411 = vpack.c.b16 %v2003, %v1999
    %v3412 = vpack.c.b16 %v2004, %v2000
    %v3413 = vpack.c.b16 %v2009, %v2005
    %v3414 = vpack.c.b16 %v2010, %v2006
    %v3415 = vpack.c.b16 %v2011, %v2007
    %v3416 = vpack.c.b16 %v2012, %v2008
    %v3417 = vpack.c.b16 %v2017, %v2013
    %v3418 = vpack.c.b16 %v2018, %v2014
    %v3419 = vpack.c.b16 %v2019, %v2015
    %v3420 = vpack.c.b16 %v2020, %v2016
    %v3421 = vpack.c.b16 %v2025, %v2021
    %v3422 = vpack.c.b16 %v2026, %v2022
    %v3423 = vpack.c.b16 %v2027, %v2023
    %v3424 = vpack.c.b16 %v2028, %v2024
    %v3425 = vpack.c.b16 %v2033, %v2029
    %v3426 = vpack.c.b16 %v2034, %v2030
    %v3427 = vpack.c.b16 %v2035, %v2031
    %v3428 = vpack.c.b16 %v2036, %v2032
    %v3429 = vpack.c.b16 %v2041, %v2037
    %v3430 = vpack.c.b16 %v2042, %v2038
    %v3431 = vpack.c.b16 %v2043, %v2039
    %v3432 = vpack.c.b16 %v2044, %v2040
    %v3433 = vpack.c.b16 %v2049, %v2045
    %v3434 = vpack.c.b16 %v2050, %v2046
    %v3435 = vpack.c.b16 %v2051, %v2047
    %v3436 = vpack.c.b16 %v2052, %v2048
    %v3437 = vpack.c.b16 %v2057, %v2053
    %v3438 = vpack.c.b16 %v2058, %v2054
    %v3439 = vpack.c.b16 %v2059, %v2055
    %v3440 = vpack.c.b16 %v2060, %v2056
    %v3441 = vpack.c.b16 %v2065, %v2061
    %v3442 = vpack.c.b16 %v2066, %v2062
    %v3443 = vpack.c.b16 %v2067, %v2063
    %v3444 = vpack.c.b16 %v2068, %v2064
    %v3445 = vpack.c.b16 %v2073, %v2069
    %v3446 = vpack.c.b16 %v2074, %v2070
    %v3447 = vpack.c.b16 %v2075, %v2071
    %v3448 = vpack.c.b16 %v2076, %v2072
    %v3449 = vpack.c.b16 %v2081, %v2077
    %v3450 = vpack.c.b16 %v2082, %v2078
    %v3451 = vpack.c.b16 %v2083, %v2079
    %v3452 = vpack.c.b16 %v2084, %v2080
    %v3453 = vpack.c.b16 %v2089, %v2085
    %v3454 = vpack.c.b16 %v2090, %v2086
    %v3455 = vpack.c.b16 %v2091, %v2087
    %v3456 = vpack.c.b16 %v2092, %v2088
    %v3457 = vpack.c.b16 %v2097, %v2093
    %v3458 = vpack.c.b16 %v2098, %v2094
    %v3459 = vpack.c.b16 %v2099, %v2095
    %v3460 = vpack.c.b16 %v2100, %v2096
    %v3461 = vpack.c.b16 %v2105, %v2101
    %v3462 = vpack.c.b16 %v2106, %v2102
    %v3463 = vpack.c.b16 %v2107, %v2103
    %v3464 = vpack.c.b16 %v2108, %v2104
    %v3465 = vpack.c.b16 %v2113, %v2109
    %v3466 = vpack.c.b16 %v2114, %v2110
    %v3467 = vpack.c.b16 %v2115, %v2111
    %v3468 = vpack.c.b16 %v2116, %v2112
    %v3469 = vpack.c.b16 %v2121, %v2117
    %v3470 = vpack.c.b16 %v2122, %v2118
    %v3471 = vpack.c.b16 %v2123, %v2119
    %v3472 = vpack.c.b16 %v2124, %v2120
    %v3473 = vpack.c.b16 %v2129, %v2125
    %v3474 = vpack.c.b16 %v2130, %v2126
    %v3475 = vpack.c.b16 %v2131, %v2127
    %v3476 = vpack.c.b16 %v2132, %v2128
    %v3477 = vpack.c.b16 %v2137, %v2133
    %v3478 = vpack.c.b16 %v2138, %v2134
    %v3479 = vpack.c.b16 %v2139, %v2135
    %v3480 = vpack.c.b16 %v2140, %v2136
    %v3481 = vpack.c.b16 %v2145, %v2141
    %v3482 = vpack.c.b16 %v2146, %v2142
    %v3483 = vpack.c.b16 %v2147, %v2143
    %v3484 = vpack.c.b16 %v2148, %v2144
    %v3485 = vpack.c.b16 %v2153, %v2149
    %v3486 = vpack.c.b16 %v2154, %v2150
    %v3487 = vpack.c.b16 %v2155, %v2151
    %v3488 = vpack.c.b16 %v2156, %v2152
    %v3489 = vpack.c.b16 %v2161, %v2157
    %v3490 = vpack.c.b16 %v2162, %v2158
    %v3491 = vpack.c.b16 %v2163, %v2159
    %v3492 = vpack.c.b16 %v2164, %v2160
    %v3493 = vpack.c.b16 %v2169, %v2165
    %v3494 = vpack.c.b16 %v2170, %v2166
    %v3495 = vpack.c.b16 %v2171, %v2167
    %v3496 = vpack.c.b16 %v2172, %v2168
    %v3497 = vpack.c.b16 %v2177, %v2173
    %v3498 = vpack.c.b16 %v2178, %v2174
    %v3499 = vpack.c.b16 %v2179, %v2175
    %v3500 = vpack.c.b16 %v2180, %v2176
    %v3501 = vpack.c.b16 %v2185, %v2181
    %v3502 = vpack.c.b16 %v2186, %v2182
    %v3503 = vpack.c.b16 %v2187, %v2183
    %v3504 = vpack.c.b16 %v2188, %v2184
    %v3505 = vpack.c.b16 %v2193, %v2189
    %v3506 = vpack.c.b16 %v2194, %v2190
    %v3507 = vpack.c.b16 %v2195, %v2191
    %v3508 = vpack.c.b16 %v2196, %v2192
    %v3509 = vpack.c.b16 %v2201, %v2197
    %v3510 = vpack.c.b16 %v2202, %v2198
    %v3511 = vpack.c.b16 %v2203, %v2199
    %v3512 = vpack.c.b16 %v2204, %v2200
    %v3513 = vpack.c.b16 %v2209, %v2205
    %v3514 = vpack.c.b16 %v2210, %v2206
    %v3515 = vpack.c.b16 %v2211, %v2207
    %v3516 = vpack.c.b16 %v2212, %v2208
    %v3517 = vpack.c.b16 %v2217, %v2213
    %v3518 = vpack.c.b16 %v2218, %v2214
    %v3519 = vpack.c.b16 %v2219, %v2215
    %v3520 = vpack.c.b16 %v2220, %v2216
    %v3521 = vpack.c.b16 %v2225, %v2221
    %v3522 = vpack.c.b16 %v2226, %v2222
    %v3523 = vpack.c.b16 %v2227, %v2223
    %v3524 = vpack.c.b16 %v2228, %v2224
    %v3525 = vpack.c.b16 %v2233, %v2229
    %v3526 = vpack.c.b16 %v2234, %v2230
    %v3527 = vpack.c.b16 %v2235, %v2231
    %v3528 = vpack.c.b16 %v2236, %v2232
    %v3529 = vpack.c.b16 %v2241, %v2237
    %v3530 = vpack.c.b16 %v2242, %v2238
    %v3531 = vpack.c.b16 %v2243, %v2239
    %v3532 = vpack.c.b16 %v2244, %v2240
    %v3533 = vpack.c.b16 %v2249, %v2245
    %v3534 = vpack.c.b16 %v2250, %v2246
    %v3535 = vpack.c.b16 %v2251, %v2247
    %v3536 = vpack.c.b16 %v2252, %v2248
    %v3537 = vpack.c.b16 %v2257, %v2253
    %v3538 = vpack.c.b16 %v2258, %v2254
    %v3539 = vpack.c.b16 %v2259, %v2255
    %v3540 = vpack.c.b16 %v2260, %v2256
    %v3541 = vpack.c.b16 %v2265, %v2261
    %v3542 = vpack.c.b16 %v2266, %v2262
    %v3543 = vpack.c.b16 %v2267, %v2263
    %v3544 = vpack.c.b16 %v2268, %v2264
    %v3545 = vpack.c.b16 %v2273, %v2269
    %v3546 = vpack.c.b16 %v2274, %v2270
    %v3547 = vpack.c.b16 %v2275, %v2271
    %v3548 = vpack.c.b16 %v2276, %v2272
    %v3549 = vpack.c.b16 %v2281, %v2277
    %v3550 = vpack.c.b16 %v2282, %v2278
    %v3551 = vpack.c.b16 %v2283, %v2279
    %v3552 = vpack.c.b16 %v2284, %v2280
    %v3553 = vpack.c.b16 %v2289, %v2285
    %v3554 = vpack.c.b16 %v2290, %v2286
    %v3555 = vpack.c.b16 %v2291, %v2287
    %v3556 = vpack.c.b16 %v2292, %v2288
    %v3557 = vpack.c.b16 %v2297, %v2293
    %v3558 = vpack.c.b16 %v2298, %v2294
    %v3559 = vpack.c.b16 %v2299, %v2295
    %v3560 = vpack.c.b16 %v2300, %v2296
    %v3561 = vpack.c.b16 %v2305, %v2301
    %v3562 = vpack.c.b16 %v2306, %v2302
    %v3563 = vpack.c.b16 %v2307, %v2303
    %v3564 = vpack.c.b16 %v2308, %v2304
    %v3565 = vpack.c.b16 %v2313, %v2309
    %v3566 = vpack.c.b16 %v2314, %v2310
    %v3567 = vpack.c.b16 %v2315, %v2311
    %v3568 = vpack.c.b16 %v2316, %v2312
    %v3569 = vpack.c.b16 %v2321, %v2317
    %v3570 = vpack.c.b16 %v2322, %v2318
    %v3571 = vpack.c.b16 %v2323, %v2319
    %v3572 = vpack.c.b16 %v2324, %v2320
    %v3573 = vpack.c.b16 %v2329, %v2325
    %v3574 = vpack.c.b16 %v2330, %v2326
    %v3575 = vpack.c.b16 %v2331, %v2327
    %v3576 = vpack.c.b16 %v2332, %v2328
    %v3577 = vpack.c.b16 %v2337, %v2333
    %v3578 = vpack.c.b16 %v2338, %v2334
    %v3579 = vpack.c.b16 %v2339, %v2335
    %v3580 = vpack.c.b16 %v2340, %v2336
    %v3581 = vpack.c.b16 %v2345, %v2341
    %v3582 = vpack.c.b16 %v2346, %v2342
    %v3583 = vpack.c.b16 %v2347, %v2343
    %v3584 = vpack.c.b16 %v2348, %v2344
    %v3585 = vpack.c.b16 %v2353, %v2349
    %v3586 = vpack.c.b16 %v2354, %v2350
    %v3587 = vpack.c.b16 %v2355, %v2351
    %v3588 = vpack.c.b16 %v2356, %v2352
    %v3589 = vpack.c.b16 %v2361, %v2357
    %v3590 = vpack.c.b16 %v2362, %v2358
    %v3591 = vpack.c.b16 %v2363, %v2359
    %v3592 = vpack.c.b16 %v2364, %v2360
    %v3593 = vpack.c.b16 %v2369, %v2365
    %v3594 = vpack.c.b16 %v2370, %v2366
    %v3595 = vpack.c.b16 %v2371, %v2367
    %v3596 = vpack.c.b16 %v2372, %v2368
    %v3597 = vpack.c.b16 %v2377, %v2373
    %v3598 = vpack.c.b16 %v2378, %v2374
    %v3599 = vpack.c.b16 %v2379, %v2375
    %v3600 = vpack.c.b16 %v2380, %v2376
    %v3601 = vpack.c.b16 %v2385, %v2381
    %v3602 = vpack.c.b16 %v2386, %v2382
    %v3603 = vpack.c.b16 %v2387, %v2383
    %v3604 = vpack.c.b16 %v2388, %v2384
    %v3605 = vpack.c.b16 %v2393, %v2389
    %v3606 = vpack.c.b16 %v2394, %v2390
    %v3607 = vpack.c.b16 %v2395, %v2391
    %v3608 = vpack.c.b16 %v2396, %v2392
    %v3609 = vpack.c.b16 %v2401, %v2397
    %v3610 = vpack.c.b16 %v2402, %v2398
    %v3611 = vpack.c.b16 %v2403, %v2399
    %v3612 = vpack.c.b16 %v2404, %v2400
    %v3613 = vpack.c.b16 %v2409, %v2405
    %v3614 = vpack.c.b16 %v2410, %v2406
    %v3615 = vpack.c.b16 %v2411, %v2407
    %v3616 = vpack.c.b16 %v2412, %v2408
    %v3617 = vpack.c.b16 %v2417, %v2413
    %v3618 = vpack.c.b16 %v2418, %v2414
    %v3619 = vpack.c.b16 %v2419, %v2415
    %v3620 = vpack.c.b16 %v2420, %v2416
    %v3621 = vpack.c.b16 %v2425, %v2421
    %v3622 = vpack.c.b16 %v2426, %v2422
    %v3623 = vpack.c.b16 %v2427, %v2423
    %v3624 = vpack.c.b16 %v2428, %v2424
    %v3625 = vpack.c.b16 %v2433, %v2429
    %v3626 = vpack.c.b16 %v2434, %v2430
    %v3627 = vpack.c.b16 %v2435, %v2431
    %v3628 = vpack.c.b16 %v2436, %v2432
    %v3629 = vpack.c.b16 %v2441, %v2437
    %v3630 = vpack.c.b16 %v2442, %v2438
    %v3631 = vpack.c.b16 %v2443, %v2439
    %v3632 = vpack.c.b16 %v2444, %v2440
    %v3633 = vpack.c.b16 %v2449, %v2445
    %v3634 = vpack.c.b16 %v2450, %v2446
    %v3635 = vpack.c.b16 %v2451, %v2447
    %v3636 = vpack.c.b16 %v2452, %v2448
    %v3637 = vpack.c.b16 %v2457, %v2453
    %v3638 = vpack.c.b16 %v2458, %v2454
    %v3639 = vpack.c.b16 %v2459, %v2455
    %v3640 = vpack.c.b16 %v2460, %v2456
    %v3641 = vpack.c.b16 %v2465, %v2461
    %v3642 = vpack.c.b16 %v2466, %v2462
    %v3643 = vpack.c.b16 %v2467, %v2463
    %v3644 = vpack.c.b16 %v2468, %v2464
    %v3645 = vpack.c.b16 %v2473, %v2469
    %v3646 = vpack.c.b16 %v2474, %v2470
    %v3647 = vpack.c.b16 %v2475, %v2471
    %v3648 = vpack.c.b16 %v2476, %v2472
    %v3649 = vpack.c.b16 %v2481, %v2477
    %v3650 = vpack.c.b16 %v2482, %v2478
    %v3651 = vpack.c.b16 %v2483, %v2479
    %v3652 = vpack.c.b16 %v2484, %v2480
    %v3653 = vpack.c.b16 %v2489, %v2485
    %v3654 = vpack.c.b16 %v2490, %v2486
    %v3655 = vpack.c.b16 %v2491, %v2487
    %v3656 = vpack.c.b16 %v2492, %v2488
    %v3657 = vpack.c.b16 %v2497, %v2493
    %v3658 = vpack.c.b16 %v2498, %v2494
    %v3659 = vpack.c.b16 %v2499, %v2495
    %v3660 = vpack.c.b16 %v2500, %v2496
    %v3661 = vpack.c.b16 %v2505, %v2501
    %v3662 = vpack.c.b16 %v2506, %v2502
    %v3663 = vpack.c.b16 %v2507, %v2503
    %v3664 = vpack.c.b16 %v2508, %v2504
    %v3665 = vpack.c.b16 %v2513, %v2509
    %v3666 = vpack.c.b16 %v2514, %v2510
    %v3667 = vpack.c.b16 %v2515, %v2511
    %v3668 = vpack.c.b16 %v2516, %v2512
    %v3669 = vpack.c.b16 %v2521, %v2517
    %v3670 = vpack.c.b16 %v2522, %v2518
    %v3671 = vpack.c.b16 %v2523, %v2519
    %v3672 = vpack.c.b16 %v2524, %v2520
    %v3673 = vpack.c.b16 %v2529, %v2525
    %v3674 = vpack.c.b16 %v2530, %v2526
    %v3675 = vpack.c.b16 %v2531, %v2527
    %v3676 = vpack.c.b16 %v2532, %v2528
    %v3677 = vpack.c.b16 %v2537, %v2533
    %v3678 = vpack.c.b16 %v2538, %v2534
    %v3679 = vpack.c.b16 %v2539, %v2535
    %v3680 = vpack.c.b16 %v2540, %v2536
    %v3681 = vpack.c.b16 %v2545, %v2541
    %v3682 = vpack.c.b16 %v2546, %v2542
    %v3683 = vpack.c.b16 %v2547, %v2543
    %v3684 = vpack.c.b16 %v2548, %v2544
    %v3685 = vpack.c.b16 %v2553, %v2549
    %v3686 = vpack.c.b16 %v2554, %v2550
    %v3687 = vpack.c.b16 %v2555, %v2551
    %v3688 = vpack.c.b16 %v2556, %v2552
    %v3689 = vpack.c.b16 %v2561, %v2557
    %v3690 = vpack.c.b16 %v2562, %v2558
    %v3691 = vpack.c.b16 %v2563, %v2559
    %v3692 = vpack.c.b16 %v2564, %v2560
    %v3693 = vpack.c.b16 %v2569, %v2565
    %v3694 = vpack.c.b16 %v2570, %v2566
    %v3695 = vpack.c.b16 %v2571, %v2567
    %v3696 = vpack.c.b16 %v2572, %v2568
    %v3697 = vpack.c.b16 %v2577, %v2573
    %v3698 = vpack.c.b16 %v2578, %v2574
    %v3699 = vpack.c.b16 %v2579, %v2575
    %v3700 = vpack.c.b16 %v2580, %v2576
    %v3701 = vpack.c.b16 %v2585, %v2581
    %v3702 = vpack.c.b16 %v2586, %v2582
    %v3703 = vpack.c.b16 %v2587, %v2583
    %v3704 = vpack.c.b16 %v2588, %v2584
    %v3705 = vpack.c.b16 %v2593, %v2589
    %v3706 = vpack.c.b16 %v2594, %v2590
    %v3707 = vpack.c.b16 %v2595, %v2591
    %v3708 = vpack.c.b16 %v2596, %v2592
    %v3709 = vpack.c.b16 %v2601, %v2597
    %v3710 = vpack.c.b16 %v2602, %v2598
    %v3711 = vpack.c.b16 %v2603, %v2599
    %v3712 = vpack.c.b16 %v2604, %v2600
    %v3713 = vpack.c.b16 %v2609, %v2605
    %v3714 = vpack.c.b16 %v2610, %v2606
    %v3715 = vpack.c.b16 %v2611, %v2607
    %v3716 = vpack.c.b16 %v2612, %v2608
    %v3717 = vpack.c.b16 %v2617, %v2613
    %v3718 = vpack.c.b16 %v2618, %v2614
    %v3719 = vpack.c.b16 %v2619, %v2615
    %v3720 = vpack.c.b16 %v2620, %v2616
    %v3721 = vpack.c.b16 %v2625, %v2621
    %v3722 = vpack.c.b16 %v2626, %v2622
    %v3723 = vpack.c.b16 %v2627, %v2623
    %v3724 = vpack.c.b16 %v2628, %v2624
    %v3725 = vpack.c.b16 %v2633, %v2629
    %v3726 = vpack.c.b16 %v2634, %v2630
    %v3727 = vpack.c.b16 %v2635, %v2631
    %v3728 = vpack.c.b16 %v2636, %v2632
    %v3729 = vpack.c.b16 %v2641, %v2637
    %v3730 = vpack.c.b16 %v2642, %v2638
    %v3731 = vpack.c.b16 %v2643, %v2639
    %v3732 = vpack.c.b16 %v2644, %v2640
    %v3733 = vpack.c.b16 %v2649, %v2645
    %v3734 = vpack.c.b16 %v2650, %v2646
    %v3735 = vpack.c.b16 %v2651, %v2647
    %v3736 = vpack.c.b16 %v2652, %v2648
    %v3737 = vpack.c.b16 %v2657, %v2653
    %v3738 = vpack.c.b16 %v2658, %v2654
    %v3739 = vpack.c.b16 %v2659, %v2655
    %v3740 = vpack.c.b16 %v2660, %v2656
    %v3741 = vpack.c.b16 %v2665, %v2661
    %v3742 = vpack.c.b16 %v2666, %v2662
    %v3743 = vpack.c.b16 %v2667, %v2663
    %v3744 = vpack.c.b16 %v2668, %v2664
    %v3745 = vpack.c.b16 %v2673, %v2669
    %v3746 = vpack.c.b16 %v2674, %v2670
    %v3747 = vpack.c.b16 %v2675, %v2671
    %v3748 = vpack.c.b16 %v2676, %v2672
    %v3749 = vpack.c.b16 %v2681, %v2677
    %v3750 = vpack.c.b16 %v2682, %v2678
    %v3751 = vpack.c.b16 %v2683, %v2679
    %v3752 = vpack.c.b16 %v2684, %v2680
    %v3753 = vpack.c.b16 %v2689, %v2685
    %v3754 = vpack.c.b16 %v2690, %v2686
    %v3755 = vpack.c.b16 %v2691, %v2687
    %v3756 = vpack.c.b16 %v2692, %v2688
    %v3757 = vpack.c.b16 %v2697, %v2693
    %v3758 = vpack.c.b16 %v2698, %v2694
    %v3759 = vpack.c.b16 %v2699, %v2695
    %v3760 = vpack.c.b16 %v2700, %v2696
    %v3761 = vpack.c.b16 %v2705, %v2701
    %v3762 = vpack.c.b16 %v2706, %v2702
    %v3763 = vpack.c.b16 %v2707, %v2703
    %v3764 = vpack.c.b16 %v2708, %v2704
    %v3765 = vpack.c.b16 %v2713, %v2709
    %v3766 = vpack.c.b16 %v2714, %v2710
    %v3767 = vpack.c.b16 %v2715, %v2711
    %v3768 = vpack.c.b16 %v2716, %v2712
    %v3769 = vpack.c.b16 %v2721, %v2717
    %v3770 = vpack.c.b16 %v2722, %v2718
    %v3771 = vpack.c.b16 %v2723, %v2719
    %v3772 = vpack.c.b16 %v2724, %v2720
    %v3773 = vpack.c.b16 %v2729, %v2725
    %v3774 = vpack.c.b16 %v2730, %v2726
    %v3775 = vpack.c.b16 %v2731, %v2727
    %v3776 = vpack.c.b16 %v2732, %v2728
    %v3777 = vpack.c.b16 %v2737, %v2733
    %v3778 = vpack.c.b16 %v2738, %v2734
    %v3779 = vpack.c.b16 %v2739, %v2735
    %v3780 = vpack.c.b16 %v2740, %v2736
    %v3781 = vpack.c.b16 %v2745, %v2741
    %v3782 = vpack.c.b16 %v2746, %v2742
    %v3783 = vpack.c.b16 %v2747, %v2743
    %v3784 = vpack.c.b16 %v2748, %v2744
    %v3785 = vpack.c.b16 %v2753, %v2749
    %v3786 = vpack.c.b16 %v2754, %v2750
    %v3787 = vpack.c.b16 %v2755, %v2751
    %v3788 = vpack.c.b16 %v2756, %v2752
    %v3789 = vpack.c.b16 %v2761, %v2757
    %v3790 = vpack.c.b16 %v2762, %v2758
    %v3791 = vpack.c.b16 %v2763, %v2759
    %v3792 = vpack.c.b16 %v2764, %v2760
    %v3793 = vpack.c.b16 %v2769, %v2765
    %v3794 = vpack.c.b16 %v2770, %v2766
    %v3795 = vpack.c.b16 %v2771, %v2767
    %v3796 = vpack.c.b16 %v2772, %v2768
    %v3797 = vpack.c.b16 %v2777, %v2773
    %v3798 = vpack.c.b16 %v2778, %v2774
    %v3799 = vpack.c.b16 %v2779, %v2775
    %v3800 = vpack.c.b16 %v2780, %v2776
    %v3801 = vpack.c.b16 %v2785, %v2781
    %v3802 = vpack.c.b16 %v2786, %v2782
    %v3803 = vpack.c.b16 %v2787, %v2783
    %v3804 = vpack.c.b16 %v2788, %v2784
    %v3805 = vpack.c.b16 %v2793, %v2789
    %v3806 = vpack.c.b16 %v2794, %v2790
    %v3807 = vpack.c.b16 %v2795, %v2791
    %v3808 = vpack.c.b16 %v2796, %v2792
    %v3809 = vpack.c.b16 %v2801, %v2797
    %v3810 = vpack.c.b16 %v2802, %v2798
    %v3811 = vpack.c.b16 %v2803, %v2799
    %v3812 = vpack.c.b16 %v2804, %v2800
    %v3813 = vpack.c.b16 %v2809, %v2805
    %v3814 = vpack.c.b16 %v2810, %v2806
    %v3815 = vpack.c.b16 %v2811, %v2807
    %v3816 = vpack.c.b16 %v2812, %v2808
    %v3817 = vpack.c.b16 %v2817, %v2813
    %v3818 = vpack.c.b16 %v2818, %v2814
    %v3819 = vpack.c.b16 %v2819, %v2815
    %v3820 = vpack.c.b16 %v2820, %v2816
    %v3821 = vpack.c.b16 %v2825, %v2821
    %v3822 = vpack.c.b16 %v2826, %v2822
    %v3823 = vpack.c.b16 %v2827, %v2823
    %v3824 = vpack.c.b16 %v2828, %v2824
    %v3825 = vpack.c.b16 %v2833, %v2829
    %v3826 = vpack.c.b16 %v2834, %v2830
    %v3827 = vpack.c.b16 %v2835, %v2831
    %v3828 = vpack.c.b16 %v2836, %v2832
    %v3829 = vpack.c.b16 %v2841, %v2837
    %v3830 = vpack.c.b16 %v2842, %v2838
    %v3831 = vpack.c.b16 %v2843, %v2839
    %v3832 = vpack.c.b16 %v2844, %v2840
    %v3833 = vpack.c.b16 %v2849, %v2845
    %v3834 = vpack.c.b16 %v2850, %v2846
    %v3835 = vpack.c.b16 %v2851, %v2847
    %v3836 = vpack.c.b16 %v2852, %v2848
    %v3837 = vpack.c.b16 %v2857, %v2853
    %v3838 = vpack.c.b16 %v2858, %v2854
    %v3839 = vpack.c.b16 %v2859, %v2855
    %v3840 = vpack.c.b16 %v2860, %v2856
    %v3841 = vpack.c.b16 %v2865, %v2861
    %v3842 = vpack.c.b16 %v2866, %v2862
    %v3843 = vpack.c.b16 %v2867, %v2863
    %v3844 = vpack.c.b16 %v2868, %v2864
    %v3845 = vpack.c.b16 %v2873, %v2869
    %v3846 = vpack.c.b16 %v2874, %v2870
    %v3847 = vpack.c.b16 %v2875, %v2871
    %v3848 = vpack.c.b16 %v2876, %v2872
    %v3849 = vpack.c.b16 %v2881, %v2877
    %v3850 = vpack.c.b16 %v2882, %v2878
    %v3851 = vpack.c.b16 %v2883, %v2879
    %v3852 = vpack.c.b16 %v2884, %v2880
    %v3853 = vpack.c.b16 %v2889, %v2885
    %v3854 = vpack.c.b16 %v2890, %v2886
    %v3855 = vpack.c.b16 %v2891, %v2887
    %v3856 = vpack.c.b16 %v2892, %v2888
    %v3857 = vpack.c.b16 %v2897, %v2893
    %v3858 = vpack.c.b16 %v2898, %v2894
    %v3859 = vpack.c.b16 %v2899, %v2895
    %v3860 = vpack.c.b16 %v2900, %v2896
    %v3861 = vpack.c.b16 %v2905, %v2901
    %v3862 = vpack.c.b16 %v2906, %v2902
    %v3863 = vpack.c.b16 %v2907, %v2903
    %v3864 = vpack.c.b16 %v2908, %v2904
    %v3865 = vpack.c.b16 %v2913, %v2909
    %v3866 = vpack.c.b16 %v2914, %v2910
    %v3867 = vpack.c.b16 %v2915, %v2911
    %v3868 = vpack.c.b16 %v2916, %v2912
    %v3869 = vpack.c.b16 %v2921, %v2917
    %v3870 = vpack.c.b16 %v2922, %v2918
    %v3871 = vpack.c.b16 %v2923, %v2919
    %v3872 = vpack.c.b16 %v2924, %v2920
    %v3873 = vpack.c.b16 %v2929, %v2925
    %v3874 = vpack.c.b16 %v2930, %v2926
    %v3875 = vpack.c.b16 %v2931, %v2927
    %v3876 = vpack.c.b16 %v2932, %v2928
    %v3877 = vpack.c.b16 %v2937, %v2933
    %v3878 = vpack.c.b16 %v2938, %v2934
    %v3879 = vpack.c.b16 %v2939, %v2935
    %v3880 = vpack.c.b16 %v2940, %v2936
    %v3881 = vpack.c.b16 %v2945, %v2941
    %v3882 = vpack.c.b16 %v2946, %v2942
    %v3883 = vpack.c.b16 %v2947, %v2943
    %v3884 = vpack.c.b16 %v2948, %v2944
    %v3885 = vpack.c.b16 %v2953, %v2949
    %v3886 = vpack.c.b16 %v2954, %v2950
    %v3887 = vpack.c.b16 %v2955, %v2951
    %v3888 = vpack.c.b16 %v2956, %v2952
    %v3889 = vpack.c.b16 %v2961, %v2957
    %v3890 = vpack.c.b16 %v2962, %v2958
    %v3891 = vpack.c.b16 %v2963, %v2959
    %v3892 = vpack.c.b16 %v2964, %v2960
    %v3893 = vpack.c.b16 %v2969, %v2965
    %v3894 = vpack.c.b16 %v2970, %v2966
    %v3895 = vpack.c.b16 %v2971, %v2967
    %v3896 = vpack.c.b16 %v2972, %v2968
    %v3897 = vpack.c.b16 %v2977, %v2973
    %v3898 = vpack.c.b16 %v2978, %v2974
    %v3899 = vpack.c.b16 %v2979, %v2975
    %v3900 = vpack.c.b16 %v2980, %v2976
    %v3901 = vpack.c.b16 %v2985, %v2981
    %v3902 = vpack.c.b16 %v2986, %v2982
    %v3903 = vpack.c.b16 %v2987, %v2983
    %v3904 = vpack.c.b16 %v2988, %v2984
    %v3905 = vpack.c.b16 %v2993, %v2989
    %v3906 = vpack.c.b16 %v2994, %v2990
    %v3907 = vpack.c.b16 %v2995, %v2991
    %v3908 = vpack.c.b16 %v2996, %v2992
    %v3909 = vpack.c.b16 %v3001, %v2997
    %v3910 = vpack.c.b16 %v3002, %v2998
    %v3911 = vpack.c.b16 %v3003, %v2999
    %v3912 = vpack.c.b16 %v3004, %v3000
    %v3913 = vpack.c.b16 %v3009, %v3005
    %v3914 = vpack.c.b16 %v3010, %v3006
    %v3915 = vpack.c.b16 %v3011, %v3007
    %v3916 = vpack.c.b16 %v3012, %v3008
    %v3917 = vpack.c.b16 %v3017, %v3013
    %v3918 = vpack.c.b16 %v3018, %v3014
    %v3919 = vpack.c.b16 %v3019, %v3015
    %v3920 = vpack.c.b16 %v3020, %v3016
    %v3921 = vpack.c.b16 %v3025, %v3021
    %v3922 = vpack.c.b16 %v3026, %v3022
    %v3923 = vpack.c.b16 %v3027, %v3023
    %v3924 = vpack.c.b16 %v3028, %v3024
    %v3925 = vpack.c.b16 %v3033, %v3029
    %v3926 = vpack.c.b16 %v3034, %v3030
    %v3927 = vpack.c.b16 %v3035, %v3031
    %v3928 = vpack.c.b16 %v3036, %v3032
    %v3929 = vpack.c.b16 %v3041, %v3037
    %v3930 = vpack.c.b16 %v3042, %v3038
    %v3931 = vpack.c.b16 %v3043, %v3039
    %v3932 = vpack.c.b16 %v3044, %v3040
    %v3933 = vpack.c.b16 %v3049, %v3045
    %v3934 = vpack.c.b16 %v3050, %v3046
    %v3935 = vpack.c.b16 %v3051, %v3047
    %v3936 = vpack.c.b16 %v3052, %v3048
    %v3937 = vpack.c.b16 %v3057, %v3053
    %v3938 = vpack.c.b16 %v3058, %v3054
    %v3939 = vpack.c.b16 %v3059, %v3055
    %v3940 = vpack.c.b16 %v3060, %v3056
    %v3941 = vpack.c.b16 %v3065, %v3061
    %v3942 = vpack.c.b16 %v3066, %v3062
    %v3943 = vpack.c.b16 %v3067, %v3063
    %v3944 = vpack.c.b16 %v3068, %v3064
    %v3945 = vpack.c.b16 %v3073, %v3069
    %v3946 = vpack.c.b16 %v3074, %v3070
    %v3947 = vpack.c.b16 %v3075, %v3071
    %v3948 = vpack.c.b16 %v3076, %v3072
    %v3949 = vpack.c.b16 %v3081, %v3077
    %v3950 = vpack.c.b16 %v3082, %v3078
    %v3951 = vpack.c.b16 %v3083, %v3079
    %v3952 = vpack.c.b16 %v3084, %v3080
    %v3953 = vpack.c.b16 %v3089, %v3085
    %v3954 = vpack.c.b16 %v3090, %v3086
    %v3955 = vpack.c.b16 %v3091, %v3087
    %v3956 = vpack.c.b16 %v3092, %v3088
    %v3957 = vpack.c.b16 %v3097, %v3093
    %v3958 = vpack.c.b16 %v3098, %v3094
    %v3959 = vpack.c.b16 %v3099, %v3095
    %v3960 = vpack.c.b16 %v3100, %v3096
    %v3961 = vpack.c.b16 %v3105, %v3101
    %v3962 = vpack.c.b16 %v3106, %v3102
    %v3963 = vpack.c.b16 %v3107, %v3103
    %v3964 = vpack.c.b16 %v3108, %v3104
    %v3965 = vpack.c.b16 %v3113, %v3109
    %v3966 = vpack.c.b16 %v3114, %v3110
    %v3967 = vpack.c.b16 %v3115, %v3111
    %v3968 = vpack.c.b16 %v3116, %v3112
    %v3969 = vpack.c.b16 %v3121, %v3117
    %v3970 = vpack.c.b16 %v3122, %v3118
    %v3971 = vpack.c.b16 %v3123, %v3119
    %v3972 = vpack.c.b16 %v3124, %v3120
    %v3973 = vpack.c.b16 %v3129, %v3125
    %v3974 = vpack.c.b16 %v3130, %v3126
    %v3975 = vpack.c.b16 %v3131, %v3127
    %v3976 = vpack.c.b16 %v3132, %v3128
    %v3977 = vpack.c.b16 %v3137, %v3133
    %v3978 = vpack.c.b16 %v3138, %v3134
    %v3979 = vpack.c.b16 %v3139, %v3135
    %v3980 = vpack.c.b16 %v3140, %v3136
    %v3981 = vpack.c.b16 %v3145, %v3141
    %v3982 = vpack.c.b16 %v3146, %v3142
    %v3983 = vpack.c.b16 %v3147, %v3143
    %v3984 = vpack.c.b16 %v3148, %v3144
    %v3985 = vpack.c.b16 %v3153, %v3149
    %v3986 = vpack.c.b16 %v3154, %v3150
    %v3987 = vpack.c.b16 %v3155, %v3151
    %v3988 = vpack.c.b16 %v3156, %v3152
    %v3989 = vpack.c.b16 %v3161, %v3157
    %v3990 = vpack.c.b16 %v3162, %v3158
    %v3991 = vpack.c.b16 %v3163, %v3159
    %v3992 = vpack.c.b16 %v3164, %v3160
    %v3993 = vpack.c.b16 %v3169, %v3165
    %v3994 = vpack.c.b16 %v3170, %v3166
    %v3995 = vpack.c.b16 %v3171, %v3167
    %v3996 = vpack.c.b16 %v3172, %v3168
    %v3997 = vpack.c.b16 %v3177, %v3173
    %v3998 = vpack.c.b16 %v3178, %v3174
    %v3999 = vpack.c.b16 %v3179, %v3175
    %v4000 = vpack.c.b16 %v3180, %v3176
    %v4001 = vpack.c.b16 %v3185, %v3181
    %v4002 = vpack.c.b16 %v3186, %v3182
    %v4003 = vpack.c.b16 %v3187, %v3183
    %v4004 = vpack.c.b16 %v3188, %v3184
    %v4005 = vpack.c.b16 %v3193, %v3189
    %v4006 = vpack.c.b16 %v3194, %v3190
    %v4007 = vpack.c.b16 %v3195, %v3191
    %v4008 = vpack.c.b16 %v3196, %v3192
    %v4009 = vpack.c.b16 %v3201, %v3197
    %v4010 = vpack.c.b16 %v3202, %v3198
    %v4011 = vpack.c.b16 %v3203, %v3199
    %v4012 = vpack.c.b16 %v3204, %v3200
    %v4013 = vpack.c.b16 %v3209, %v3205
    %v4014 = vpack.c.b16 %v3210, %v3206
    %v4015 = vpack.c.b16 %v3211, %v3207
    %v4016 = vpack.c.b16 %v3212, %v3208
    %v4017 = vpack.c.b16 %v3217, %v3213
    %v4018 = vpack.c.b16 %v3218, %v3214
    %v4019 = vpack.c.b16 %v3219, %v3215
    %v4020 = vpack.c.b16 %v3220, %v3216
    %v4021 = vpack.c.b16 %v3225, %v3221
    %v4022 = vpack.c.b16 %v3226, %v3222
    %v4023 = vpack.c.b16 %v3227, %v3223
    %v4024 = vpack.c.b16 %v3228, %v3224
    %v4025 = vpack.c.b16 %v3233, %v3229
    %v4026 = vpack.c.b16 %v3234, %v3230
    %v4027 = vpack.c.b16 %v3235, %v3231
    %v4028 = vpack.c.b16 %v3236, %v3232
    %v4029 = vpack.c.b16 %v3241, %v3237
    %v4030 = vpack.c.b16 %v3242, %v3238
    %v4031 = vpack.c.b16 %v3243, %v3239
    %v4032 = vpack.c.b16 %v3244, %v3240
    %v4033 = vpack.c.b16 %v3249, %v3245
    %v4034 = vpack.c.b16 %v3250, %v3246
    %v4035 = vpack.c.b16 %v3251, %v3247
    %v4036 = vpack.c.b16 %v3252, %v3248
    %v4037 = vpack.c.b16 %v3257, %v3253
    %v4038 = vpack.c.b16 %v3258, %v3254
    %v4039 = vpack.c.b16 %v3259, %v3255
    %v4040 = vpack.c.b16 %v3260, %v3256
    %v4041 = vpack.c.b16 %v3265, %v3261
    %v4042 = vpack.c.b16 %v3266, %v3262
    %v4043 = vpack.c.b16 %v3267, %v3263
    %v4044 = vpack.c.b16 %v3268, %v3264
    %v4045 = vpack.c.b16 %v3273, %v3269
    %v4046 = vpack.c.b16 %v3274, %v3270
    %v4047 = vpack.c.b16 %v3275, %v3271
    %v4048 = vpack.c.b16 %v3276, %v3272
    %v4049 = vpack.c.b16 %v3281, %v3277
    %v4050 = vpack.c.b16 %v3282, %v3278
    %v4051 = vpack.c.b16 %v3283, %v3279
    %v4052 = vpack.c.b16 %v3284, %v3280
    %4821 = vmatprep.subr.bf16.mxu0 %v3286
    %4822 = vmatpush1.bf16.msra.mxu0 %v3285
    %4823 = vmatprep.subr.bf16.mxu0 %v3290
    %4824 = vmatpush1.bf16.msra.mxu0 %v3289
    %4825 = vmatprep.subr.bf16.mxu0 %v3294
    %4826 = vmatpush1.bf16.msra.mxu0 %v3293
    %4827 = vmatprep.subr.bf16.mxu0 %v3298
    %4828 = vmatpush1.bf16.msra.mxu0 %v3297
    %4829 = vmatprep.subr.bf16.mxu0 %v3302
    %4830 = vmatpush1.bf16.msra.mxu0 %v3301
    %4831 = vmatprep.subr.bf16.mxu0 %v3306
    %4832 = vmatpush1.bf16.msra.mxu0 %v3305
    %4833 = vmatprep.subr.bf16.mxu0 %v3310
    %4834 = vmatpush1.bf16.msra.mxu0 %v3309
    %4835 = vmatprep.subr.bf16.mxu0 %v3314
    %4836 = vmatpush1.bf16.msra.mxu0 %v3313
    %4837 = vmatprep.subr.bf16.mxu0 %v3318
    %4838 = vmatpush1.bf16.msra.mxu0 %v3317
    %4839 = vmatprep.subr.bf16.mxu0 %v3322
    %4840 = vmatpush1.bf16.msra.mxu0 %v3321
    %4841 = vmatprep.subr.bf16.mxu0 %v3326
    %4842 = vmatpush1.bf16.msra.mxu0 %v3325
    %4843 = vmatprep.subr.bf16.mxu0 %v3330
    %4844 = vmatpush1.bf16.msra.mxu0 %v3329
    %4845 = vmatprep.subr.bf16.mxu0 %v3334
    %4846 = vmatpush1.bf16.msra.mxu0 %v3333
    %4847 = vmatprep.subr.bf16.mxu0 %v3338
    %4848 = vmatpush1.bf16.msra.mxu0 %v3337
    %4849 = vmatprep.subr.bf16.mxu0 %v3342
    %4850 = vmatpush1.bf16.msra.mxu0 %v3341
    %4851 = vmatprep.subr.bf16.mxu0 %v3346
    %4852 = vmatpush1.bf16.msra.mxu0 %v3345
    %4853 = vmatprep.mubr.bf16.mxu0 %v168
    %4854 = vmatmul.mubr.bf16.gmra.mrb[0].mxu0 %v167
    %v4855 = vpop.f32.mrb[0].mxu0
    %v4856 = vadd.f32 %v964, %v4855
    %v4857 = vpop.f32.mrb[0].mxu0
    %v4858 = vadd.f32 %v968, %v4857
    %v4859 = vpop.f32.mrb[0].mxu0
    %v4860 = vpop.f32.mrb[0].mxu0
    %4861 = vdwg.mxu0
    %4862 = vmatprep.subr.bf16.mxu0 %v3350
    %4863 = vmatpush1.bf16.msra.mxu0 %v3349
    %4864 = vmatprep.subr.bf16.mxu0 %v3354
    %4865 = vmatpush1.bf16.msra.mxu0 %v3353
    %4866 = vmatprep.subr.bf16.mxu0 %v3358
    %4867 = vmatpush1.bf16.msra.mxu0 %v3357
    %4868 = vmatprep.subr.bf16.mxu0 %v3362
    %4869 = vmatpush1.bf16.msra.mxu0 %v3361
    %4870 = vmatprep.subr.bf16.mxu0 %v3366
    %4871 = vmatpush1.bf16.msra.mxu0 %v3365
    %4872 = vmatprep.subr.bf16.mxu0 %v3370
    %4873 = vmatpush1.bf16.msra.mxu0 %v3369
    %4874 = vmatprep.subr.bf16.mxu0 %v3374
    %4875 = vmatpush1.bf16.msra.mxu0 %v3373
    %4876 = vmatprep.subr.bf16.mxu0 %v3378
    %4877 = vmatpush1.bf16.msra.mxu0 %v3377
    %4878 = vmatprep.subr.bf16.mxu0 %v3382
    %4879 = vmatpush1.bf16.msra.mxu0 %v3381
    %4880 = vmatprep.subr.bf16.mxu0 %v3386
    %4881 = vmatpush1.bf16.msra.mxu0 %v3385
    %4882 = vmatprep.subr.bf16.mxu0 %v3390
    %4883 = vmatpush1.bf16.msra.mxu0 %v3389
    %4884 = vmatprep.subr.bf16.mxu0 %v3394
    %4885 = vmatpush1.bf16.msra.mxu0 %v3393
    %4886 = vmatprep.subr.bf16.mxu0 %v3398
    %4887 = vmatpush1.bf16.msra.mxu0 %v3397
    %4888 = vmatprep.subr.bf16.mxu0 %v3402
    %4889 = vmatpush1.bf16.msra.mxu0 %v3401
    %4890 = vmatprep.subr.bf16.mxu0 %v3406
    %4891 = vmatpush1.bf16.msra.mxu0 %v3405
    %4892 = vmatprep.subr.bf16.mxu0 %v3410
    %4893 = vmatpush1.bf16.msra.mxu0 %v3409
    %4894 = vmatprep.mubr.bf16.mxu0 %v170
    %4895 = vmatmul.mubr.bf16.gmra.mrb[0].mxu0 %v169
    %v4896 = vpop.f32.mrb[0].mxu0
    %v4897 = vadd.f32 %v4856, %v4896
    %v4898 = vpop.f32.mrb[0].mxu0
    %v4899 = vadd.f32 %v4858, %v4898
    %v4900 = vpop.f32.mrb[0].mxu0
    %v4901 = vpop.f32.mrb[0].mxu0
    %4902 = vdwg.mxu0
    %4903 = vmatprep.subr.bf16.mxu0 %v3414
    %4904 = vmatpush1.bf16.msra.mxu0 %v3413
    %4905 = vmatprep.subr.bf16.mxu0 %v3418
    %4906 = vmatpush1.bf16.msra.mxu0 %v3417
    %4907 = vmatprep.subr.bf16.mxu0 %v3422
    %4908 = vmatpush1.bf16.msra.mxu0 %v3421
    %4909 = vmatprep.subr.bf16.mxu0 %v3426
    %4910 = vmatpush1.bf16.msra.mxu0 %v3425
    %4911 = vmatprep.subr.bf16.mxu0 %v3430
    %4912 = vmatpush1.bf16.msra.mxu0 %v3429
    %4913 = vmatprep.subr.bf16.mxu0 %v3434
    %4914 = vmatpush1.bf16.msra.mxu0 %v3433
    %4915 = vmatprep.subr.bf16.mxu0 %v3438
    %4916 = vmatpush1.bf16.msra.mxu0 %v3437
    %4917 = vmatprep.subr.bf16.mxu0 %v3442
    %4918 = vmatpush1.bf16.msra.mxu0 %v3441
    %4919 = vmatprep.subr.bf16.mxu0 %v3446
    %4920 = vmatpush1.bf16.msra.mxu0 %v3445
    %4921 = vmatprep.subr.bf16.mxu0 %v3450
    %4922 = vmatpush1.bf16.msra.mxu0 %v3449
    %4923 = vmatprep.subr.bf16.mxu0 %v3454
    %4924 = vmatpush1.bf16.msra.mxu0 %v3453
    %4925 = vmatprep.subr.bf16.mxu0 %v3458
    %4926 = vmatpush1.bf16.msra.mxu0 %v3457
    %4927 = vmatprep.subr.bf16.mxu0 %v3462
    %4928 = vmatpush1.bf16.msra.mxu0 %v3461
    %4929 = vmatprep.subr.bf16.mxu0 %v3466
    %4930 = vmatpush1.bf16.msra.mxu0 %v3465
    %4931 = vmatprep.subr.bf16.mxu0 %v3470
    %4932 = vmatpush1.bf16.msra.mxu0 %v3469
    %4933 = vmatprep.subr.bf16.mxu0 %v3474
    %4934 = vmatpush1.bf16.msra.mxu0 %v3473
    %4935 = vmatprep.mubr.bf16.mxu0 %v172
    %4936 = vmatmul.mubr.bf16.gmra.mrb[0].mxu0 %v171
    %v4937 = vpop.f32.mrb[0].mxu0
    %v4938 = vadd.f32 %v4897, %v4937
    %v4939 = vpop.f32.mrb[0].mxu0
    %v4940 = vadd.f32 %v4899, %v4939
    %v4941 = vpop.f32.mrb[0].mxu0
    %v4942 = vpop.f32.mrb[0].mxu0
    %4943 = vdwg.mxu0
    %4944 = vmatprep.subr.bf16.mxu0 %v3478
    %4945 = vmatpush1.bf16.msra.mxu0 %v3477
    %4946 = vmatprep.subr.bf16.mxu0 %v3482
    %4947 = vmatpush1.bf16.msra.mxu0 %v3481
    %4948 = vmatprep.subr.bf16.mxu0 %v3486
    %4949 = vmatpush1.bf16.msra.mxu0 %v3485
    %4950 = vmatprep.subr.bf16.mxu0 %v3490
    %4951 = vmatpush1.bf16.msra.mxu0 %v3489
    %4952 = vmatprep.subr.bf16.mxu0 %v3494
    %4953 = vmatpush1.bf16.msra.mxu0 %v3493
    %4954 = vmatprep.subr.bf16.mxu0 %v3498
    %4955 = vmatpush1.bf16.msra.mxu0 %v3497
    %4956 = vmatprep.subr.bf16.mxu0 %v3502
    %4957 = vmatpush1.bf16.msra.mxu0 %v3501
    %4958 = vmatprep.subr.bf16.mxu0 %v3506
    %4959 = vmatpush1.bf16.msra.mxu0 %v3505
    %4960 = vmatprep.subr.bf16.mxu0 %v3510
    %4961 = vmatpush1.bf16.msra.mxu0 %v3509
    %4962 = vmatprep.subr.bf16.mxu0 %v3514
    %4963 = vmatpush1.bf16.msra.mxu0 %v3513
    %4964 = vmatprep.subr.bf16.mxu0 %v3518
    %4965 = vmatpush1.bf16.msra.mxu0 %v3517
    %4966 = vmatprep.subr.bf16.mxu0 %v3522
    %4967 = vmatpush1.bf16.msra.mxu0 %v3521
    %4968 = vmatprep.subr.bf16.mxu0 %v3526
    %4969 = vmatpush1.bf16.msra.mxu0 %v3525
    %4970 = vmatprep.subr.bf16.mxu0 %v3530
    %4971 = vmatpush1.bf16.msra.mxu0 %v3529
    %4972 = vmatprep.subr.bf16.mxu0 %v3534
    %4973 = vmatpush1.bf16.msra.mxu0 %v3533
    %4974 = vmatprep.subr.bf16.mxu0 %v3538
    %4975 = vmatpush1.bf16.msra.mxu0 %v3537
    %4976 = vmatprep.mubr.bf16.mxu0 %v174
    %4977 = vmatmul.mubr.bf16.gmra.mrb[0].mxu0 %v173
    %v4978 = vpop.f32.mrb[0].mxu0
    %v4979 = vadd.f32 %v4938, %v4978
    %v4980 = vpop.f32.mrb[0].mxu0
    %v4981 = vadd.f32 %v4940, %v4980
    %v4982 = vpop.f32.mrb[0].mxu0
    %v4983 = vpop.f32.mrb[0].mxu0
    %4984 = vdwg.mxu0
    %4985 = vmatprep.subr.bf16.mxu0 %v3542
    %4986 = vmatpush1.bf16.msra.mxu0 %v3541
    %4987 = vmatprep.subr.bf16.mxu0 %v3546
    %4988 = vmatpush1.bf16.msra.mxu0 %v3545
    %4989 = vmatprep.subr.bf16.mxu0 %v3550
    %4990 = vmatpush1.bf16.msra.mxu0 %v3549
    %4991 = vmatprep.subr.bf16.mxu0 %v3554
    %4992 = vmatpush1.bf16.msra.mxu0 %v3553
    %4993 = vmatprep.subr.bf16.mxu0 %v3558
    %4994 = vmatpush1.bf16.msra.mxu0 %v3557
    %4995 = vmatprep.subr.bf16.mxu0 %v3562
    %4996 = vmatpush1.bf16.msra.mxu0 %v3561
    %4997 = vmatprep.subr.bf16.mxu0 %v3566
    %4998 = vmatpush1.bf16.msra.mxu0 %v3565
    %4999 = vmatprep.subr.bf16.mxu0 %v3570
    %5000 = vmatpush1.bf16.msra.mxu0 %v3569
    %5001 = vmatprep.subr.bf16.mxu0 %v3574
    %5002 = vmatpush1.bf16.msra.mxu0 %v3573
    %5003 = vmatprep.subr.bf16.mxu0 %v3578
    %5004 = vmatpush1.bf16.msra.mxu0 %v3577
    %5005 = vmatprep.subr.bf16.mxu0 %v3582
    %5006 = vmatpush1.bf16.msra.mxu0 %v3581
    %5007 = vmatprep.subr.bf16.mxu0 %v3586
    %5008 = vmatpush1.bf16.msra.mxu0 %v3585
    %5009 = vmatprep.subr.bf16.mxu0 %v3590
    %5010 = vmatpush1.bf16.msra.mxu0 %v3589
    %5011 = vmatprep.subr.bf16.mxu0 %v3594
    %5012 = vmatpush1.bf16.msra.mxu0 %v3593
    %5013 = vmatprep.subr.bf16.mxu0 %v3598
    %5014 = vmatpush1.bf16.msra.mxu0 %v3597
    %5015 = vmatprep.subr.bf16.mxu0 %v3602
    %5016 = vmatpush1.bf16.msra.mxu0 %v3601
    %5017 = vmatprep.mubr.bf16.mxu0 %v176
    %5018 = vmatmul.mubr.bf16.gmra.mrb[0].mxu0 %v175
    %v5019 = vpop.f32.mrb[0].mxu0
    %v5020 = vadd.f32 %v4979, %v5019
    %v5021 = vpop.f32.mrb[0].mxu0
    %v5022 = vadd.f32 %v4981, %v5021
    %v5023 = vpop.f32.mrb[0].mxu0
    %v5024 = vpop.f32.mrb[0].mxu0
    %5025 = vdwg.mxu0
    %5026 = vmatprep.subr.bf16.mxu0 %v3606
    %5027 = vmatpush1.bf16.msra.mxu0 %v3605
    %5028 = vmatprep.subr.bf16.mxu0 %v3610
    %5029 = vmatpush1.bf16.msra.mxu0 %v3609
    %5030 = vmatprep.subr.bf16.mxu0 %v3614
    %5031 = vmatpush1.bf16.msra.mxu0 %v3613
    %5032 = vmatprep.subr.bf16.mxu0 %v3618
    %5033 = vmatpush1.bf16.msra.mxu0 %v3617
    %5034 = vmatprep.subr.bf16.mxu0 %v3622
    %5035 = vmatpush1.bf16.msra.mxu0 %v3621
    %5036 = vmatprep.subr.bf16.mxu0 %v3626
    %5037 = vmatpush1.bf16.msra.mxu0 %v3625
    %5038 = vmatprep.subr.bf16.mxu0 %v3630
    %5039 = vmatpush1.bf16.msra.mxu0 %v3629
    %5040 = vmatprep.subr.bf16.mxu0 %v3634
    %5041 = vmatpush1.bf16.msra.mxu0 %v3633
    %5042 = vmatprep.subr.bf16.mxu0 %v3638
    %5043 = vmatpush1.bf16.msra.mxu0 %v3637
    %5044 = vmatprep.subr.bf16.mxu0 %v3642
    %5045 = vmatpush1.bf16.msra.mxu0 %v3641
    %5046 = vmatprep.subr.bf16.mxu0 %v3646
    %5047 = vmatpush1.bf16.msra.mxu0 %v3645
    %5048 = vmatprep.subr.bf16.mxu0 %v3650
    %5049 = vmatpush1.bf16.msra.mxu0 %v3649
    %5050 = vmatprep.subr.bf16.mxu0 %v3654
    %5051 = vmatpush1.bf16.msra.mxu0 %v3653
    %5052 = vmatprep.subr.bf16.mxu0 %v3658
    %5053 = vmatpush1.bf16.msra.mxu0 %v3657
    %5054 = vmatprep.subr.bf16.mxu0 %v3662
    %5055 = vmatpush1.bf16.msra.mxu0 %v3661
    %5056 = vmatprep.subr.bf16.mxu0 %v3666
    %5057 = vmatpush1.bf16.msra.mxu0 %v3665
    %5058 = vmatprep.mubr.bf16.mxu0 %v178
    %5059 = vmatmul.mubr.bf16.gmra.mrb[0].mxu0 %v177
    %v5060 = vpop.f32.mrb[0].mxu0
    %v5061 = vadd.f32 %v5020, %v5060
    %v5062 = vpop.f32.mrb[0].mxu0
    %v5063 = vadd.f32 %v5022, %v5062
    %v5064 = vpop.f32.mrb[0].mxu0
    %v5065 = vpop.f32.mrb[0].mxu0
    %5066 = vdwg.mxu0
    %5067 = vmatprep.subr.bf16.mxu0 %v3670
    %5068 = vmatpush1.bf16.msra.mxu0 %v3669
    %5069 = vmatprep.subr.bf16.mxu0 %v3674
    %5070 = vmatpush1.bf16.msra.mxu0 %v3673
    %5071 = vmatprep.subr.bf16.mxu0 %v3678
    %5072 = vmatpush1.bf16.msra.mxu0 %v3677
    %5073 = vmatprep.subr.bf16.mxu0 %v3682
    %5074 = vmatpush1.bf16.msra.mxu0 %v3681
    %5075 = vmatprep.subr.bf16.mxu0 %v3686
    %5076 = vmatpush1.bf16.msra.mxu0 %v3685
    %5077 = vmatprep.subr.bf16.mxu0 %v3690
    %5078 = vmatpush1.bf16.msra.mxu0 %v3689
    %5079 = vmatprep.subr.bf16.mxu0 %v3694
    %5080 = vmatpush1.bf16.msra.mxu0 %v3693
    %5081 = vmatprep.subr.bf16.mxu0 %v3698
    %5082 = vmatpush1.bf16.msra.mxu0 %v3697
    %5083 = vmatprep.subr.bf16.mxu0 %v3702
    %5084 = vmatpush1.bf16.msra.mxu0 %v3701
    %5085 = vmatprep.subr.bf16.mxu0 %v3706
    %5086 = vmatpush1.bf16.msra.mxu0 %v3705
    %5087 = vmatprep.subr.bf16.mxu0 %v3710
    %5088 = vmatpush1.bf16.msra.mxu0 %v3709
    %5089 = vmatprep.subr.bf16.mxu0 %v3714
    %5090 = vmatpush1.bf16.msra.mxu0 %v3713
    %5091 = vmatprep.subr.bf16.mxu0 %v3718
    %5092 = vmatpush1.bf16.msra.mxu0 %v3717
    %5093 = vmatprep.subr.bf16.mxu0 %v3722
    %5094 = vmatpush1.bf16.msra.mxu0 %v3721
    %5095 = vmatprep.subr.bf16.mxu0 %v3726
    %5096 = vmatpush1.bf16.msra.mxu0 %v3725
    %5097 = vmatprep.subr.bf16.mxu0 %v3730
    %5098 = vmatpush1.bf16.msra.mxu0 %v3729
    %5099 = vmatprep.mubr.bf16.mxu0 %v180
    %5100 = vmatmul.mubr.bf16.gmra.mrb[0].mxu0 %v179
    %v5101 = vpop.f32.mrb[0].mxu0
    %v5102 = vadd.f32 %v5061, %v5101
    %v5103 = vpop.f32.mrb[0].mxu0
    %v5104 = vadd.f32 %v5063, %v5103
    %v5105 = vpop.f32.mrb[0].mxu0
    %v5106 = vpop.f32.mrb[0].mxu0
    %5107 = vdwg.mxu0
    %5108 = vmatprep.subr.bf16.mxu0 %v3734
    %5109 = vmatpush1.bf16.msra.mxu0 %v3733
    %5110 = vmatprep.subr.bf16.mxu0 %v3738
    %5111 = vmatpush1.bf16.msra.mxu0 %v3737
    %5112 = vmatprep.subr.bf16.mxu0 %v3742
    %5113 = vmatpush1.bf16.msra.mxu0 %v3741
    %5114 = vmatprep.subr.bf16.mxu0 %v3746
    %5115 = vmatpush1.bf16.msra.mxu0 %v3745
    %5116 = vmatprep.subr.bf16.mxu0 %v3750
    %5117 = vmatpush1.bf16.msra.mxu0 %v3749
    %5118 = vmatprep.subr.bf16.mxu0 %v3754
    %5119 = vmatpush1.bf16.msra.mxu0 %v3753
    %5120 = vmatprep.subr.bf16.mxu0 %v3758
    %5121 = vmatpush1.bf16.msra.mxu0 %v3757
    %5122 = vmatprep.subr.bf16.mxu0 %v3762
    %5123 = vmatpush1.bf16.msra.mxu0 %v3761
    %5124 = vmatprep.subr.bf16.mxu0 %v3766
    %5125 = vmatpush1.bf16.msra.mxu0 %v3765
    %5126 = vmatprep.subr.bf16.mxu0 %v3770
    %5127 = vmatpush1.bf16.msra.mxu0 %v3769
    %5128 = vmatprep.subr.bf16.mxu0 %v3774
    %5129 = vmatpush1.bf16.msra.mxu0 %v3773
    %5130 = vmatprep.subr.bf16.mxu0 %v3778
    %5131 = vmatpush1.bf16.msra.mxu0 %v3777
    %5132 = vmatprep.subr.bf16.mxu0 %v3782
    %5133 = vmatpush1.bf16.msra.mxu0 %v3781
    %5134 = vmatprep.subr.bf16.mxu0 %v3786
    %5135 = vmatpush1.bf16.msra.mxu0 %v3785
    %5136 = vmatprep.subr.bf16.mxu0 %v3790
    %5137 = vmatpush1.bf16.msra.mxu0 %v3789
    %5138 = vmatprep.subr.bf16.mxu0 %v3794
    %5139 = vmatpush1.bf16.msra.mxu0 %v3793
    %5140 = vmatprep.mubr.bf16.mxu0 %v182
    %5141 = vmatmul.mubr.bf16.gmra.mrb[0].mxu0 %v181
    %v5142 = vpop.f32.mrb[0].mxu0
    %v5143 = vadd.f32 %v5102, %v5142
    %v5144 = vpop.f32.mrb[0].mxu0
    %v5145 = vadd.f32 %v5104, %v5144
    %v5146 = vpop.f32.mrb[0].mxu0
    %v5147 = vpop.f32.mrb[0].mxu0
    %5148 = vdwg.mxu0
    %5149 = vmatprep.subr.bf16.mxu0 %v3798
    %5150 = vmatpush1.bf16.msra.mxu0 %v3797
    %5151 = vmatprep.subr.bf16.mxu0 %v3802
    %5152 = vmatpush1.bf16.msra.mxu0 %v3801
    %5153 = vmatprep.subr.bf16.mxu0 %v3806
    %5154 = vmatpush1.bf16.msra.mxu0 %v3805
    %5155 = vmatprep.subr.bf16.mxu0 %v3810
    %5156 = vmatpush1.bf16.msra.mxu0 %v3809
    %5157 = vmatprep.subr.bf16.mxu0 %v3814
    %5158 = vmatpush1.bf16.msra.mxu0 %v3813
    %5159 = vmatprep.subr.bf16.mxu0 %v3818
    %5160 = vmatpush1.bf16.msra.mxu0 %v3817
    %5161 = vmatprep.subr.bf16.mxu0 %v3822
    %5162 = vmatpush1.bf16.msra.mxu0 %v3821
    %5163 = vmatprep.subr.bf16.mxu0 %v3826
    %5164 = vmatpush1.bf16.msra.mxu0 %v3825
    %5165 = vmatprep.subr.bf16.mxu0 %v3830
    %5166 = vmatpush1.bf16.msra.mxu0 %v3829
    %5167 = vmatprep.subr.bf16.mxu0 %v3834
    %5168 = vmatpush1.bf16.msra.mxu0 %v3833
    %5169 = vmatprep.subr.bf16.mxu0 %v3838
    %5170 = vmatpush1.bf16.msra.mxu0 %v3837
    %5171 = vmatprep.subr.bf16.mxu0 %v3842
    %5172 = vmatpush1.bf16.msra.mxu0 %v3841
    %5173 = vmatprep.subr.bf16.mxu0 %v3846
    %5174 = vmatpush1.bf16.msra.mxu0 %v3845
    %5175 = vmatprep.subr.bf16.mxu0 %v3850
    %5176 = vmatpush1.bf16.msra.mxu0 %v3849
    %5177 = vmatprep.subr.bf16.mxu0 %v3854
    %5178 = vmatpush1.bf16.msra.mxu0 %v3853
    %5179 = vmatprep.subr.bf16.mxu0 %v3858
    %5180 = vmatpush1.bf16.msra.mxu0 %v3857
    %5181 = vmatprep.mubr.bf16.mxu0 %v184
    %5182 = vmatmul.mubr.bf16.gmra.mrb[0].mxu0 %v183
    %v5183 = vpop.f32.mrb[0].mxu0
    %v5184 = vadd.f32 %v5143, %v5183
    %v5185 = vpop.f32.mrb[0].mxu0
    %v5186 = vadd.f32 %v5145, %v5185
    %v5187 = vpop.f32.mrb[0].mxu0
    %v5188 = vpop.f32.mrb[0].mxu0
    %5189 = vdwg.mxu0
    %5190 = vmatprep.subr.bf16.mxu0 %v3862
    %5191 = vmatpush1.bf16.msra.mxu0 %v3861
    %5192 = vmatprep.subr.bf16.mxu0 %v3866
    %5193 = vmatpush1.bf16.msra.mxu0 %v3865
    %5194 = vmatprep.subr.bf16.mxu0 %v3870
    %5195 = vmatpush1.bf16.msra.mxu0 %v3869
    %5196 = vmatprep.subr.bf16.mxu0 %v3874
    %5197 = vmatpush1.bf16.msra.mxu0 %v3873
    %5198 = vmatprep.subr.bf16.mxu0 %v3878
    %5199 = vmatpush1.bf16.msra.mxu0 %v3877
    %5200 = vmatprep.subr.bf16.mxu0 %v3882
    %5201 = vmatpush1.bf16.msra.mxu0 %v3881
    %5202 = vmatprep.subr.bf16.mxu0 %v3886
    %5203 = vmatpush1.bf16.msra.mxu0 %v3885
    %5204 = vmatprep.subr.bf16.mxu0 %v3890
    %5205 = vmatpush1.bf16.msra.mxu0 %v3889
    %5206 = vmatprep.subr.bf16.mxu0 %v3894
    %5207 = vmatpush1.bf16.msra.mxu0 %v3893
    %5208 = vmatprep.subr.bf16.mxu0 %v3898
    %5209 = vmatpush1.bf16.msra.mxu0 %v3897
    %5210 = vmatprep.subr.bf16.mxu0 %v3902
    %5211 = vmatpush1.bf16.msra.mxu0 %v3901
    %5212 = vmatprep.subr.bf16.mxu0 %v3906
    %5213 = vmatpush1.bf16.msra.mxu0 %v3905
    %5214 = vmatprep.subr.bf16.mxu0 %v3910
    %5215 = vmatpush1.bf16.msra.mxu0 %v3909
    %5216 = vmatprep.subr.bf16.mxu0 %v3914
    %5217 = vmatpush1.bf16.msra.mxu0 %v3913
    %5218 = vmatprep.subr.bf16.mxu0 %v3918
    %5219 = vmatpush1.bf16.msra.mxu0 %v3917
    %5220 = vmatprep.subr.bf16.mxu0 %v3922
    %5221 = vmatpush1.bf16.msra.mxu0 %v3921
    %5222 = vmatprep.mubr.bf16.mxu0 %v186
    %5223 = vmatmul.mubr.bf16.gmra.mrb[0].mxu0 %v185
    %v5224 = vpop.f32.mrb[0].mxu0
    %v5225 = vadd.f32 %v5184, %v5224
    %v5226 = vpop.f32.mrb[0].mxu0
    %v5227 = vadd.f32 %v5186, %v5226
    %v5228 = vpop.f32.mrb[0].mxu0
    %v5229 = vpop.f32.mrb[0].mxu0
    %5230 = vdwg.mxu0
    %5231 = vmatprep.subr.bf16.mxu0 %v3926
    %5232 = vmatpush1.bf16.msra.mxu0 %v3925
    %5233 = vmatprep.subr.bf16.mxu0 %v3930
    %5234 = vmatpush1.bf16.msra.mxu0 %v3929
    %5235 = vmatprep.subr.bf16.mxu0 %v3934
    %5236 = vmatpush1.bf16.msra.mxu0 %v3933
    %5237 = vmatprep.subr.bf16.mxu0 %v3938
    %5238 = vmatpush1.bf16.msra.mxu0 %v3937
    %5239 = vmatprep.subr.bf16.mxu0 %v3942
    %5240 = vmatpush1.bf16.msra.mxu0 %v3941
    %5241 = vmatprep.subr.bf16.mxu0 %v3946
    %5242 = vmatpush1.bf16.msra.mxu0 %v3945
    %5243 = vmatprep.subr.bf16.mxu0 %v3950
    %5244 = vmatpush1.bf16.msra.mxu0 %v3949
    %5245 = vmatprep.subr.bf16.mxu0 %v3954
    %5246 = vmatpush1.bf16.msra.mxu0 %v3953
    %5247 = vmatprep.subr.bf16.mxu0 %v3958
    %5248 = vmatpush1.bf16.msra.mxu0 %v3957
    %5249 = vmatprep.subr.bf16.mxu0 %v3962
    %5250 = vmatpush1.bf16.msra.mxu0 %v3961
    %5251 = vmatprep.subr.bf16.mxu0 %v3966
    %5252 = vmatpush1.bf16.msra.mxu0 %v3965
    %5253 = vmatprep.subr.bf16.mxu0 %v3970
    %5254 = vmatpush1.bf16.msra.mxu0 %v3969
    %5255 = vmatprep.subr.bf16.mxu0 %v3974
    %5256 = vmatpush1.bf16.msra.mxu0 %v3973
    %5257 = vmatprep.subr.bf16.mxu0 %v3978
    %5258 = vmatpush1.bf16.msra.mxu0 %v3977
    %5259 = vmatprep.subr.bf16.mxu0 %v3982
    %5260 = vmatpush1.bf16.msra.mxu0 %v3981
    %5261 = vmatprep.subr.bf16.mxu0 %v3986
    %5262 = vmatpush1.bf16.msra.mxu0 %v3985
    %5263 = vmatprep.mubr.bf16.mxu0 %v188
    %5264 = vmatmul.mubr.bf16.gmra.mrb[0].mxu0 %v187
    %v5265 = vpop.f32.mrb[0].mxu0
    %v5266 = vadd.f32 %v5225, %v5265
    %v5267 = vpop.f32.mrb[0].mxu0
    %v5268 = vadd.f32 %v5227, %v5267
    %v5269 = vpop.f32.mrb[0].mxu0
    %v5270 = vpop.f32.mrb[0].mxu0
    %5271 = vdwg.mxu0
    %5272 = vmatprep.subr.bf16.mxu0 %v3990
    %5273 = vmatpush1.bf16.msra.mxu0 %v3989
    %5274 = vmatprep.subr.bf16.mxu0 %v3994
    %5275 = vmatpush1.bf16.msra.mxu0 %v3993
    %5276 = vmatprep.subr.bf16.mxu0 %v3998
    %5277 = vmatpush1.bf16.msra.mxu0 %v3997
    %5278 = vmatprep.subr.bf16.mxu0 %v4002
    %5279 = vmatpush1.bf16.msra.mxu0 %v4001
    %5280 = vmatprep.subr.bf16.mxu0 %v4006
    %5281 = vmatpush1.bf16.msra.mxu0 %v4005
    %5282 = vmatprep.subr.bf16.mxu0 %v4010
    %5283 = vmatpush1.bf16.msra.mxu0 %v4009
    %5284 = vmatprep.subr.bf16.mxu0 %v4014
    %5285 = vmatpush1.bf16.msra.mxu0 %v4013
    %5286 = vmatprep.subr.bf16.mxu0 %v4018
    %5287 = vmatpush1.bf16.msra.mxu0 %v4017
    %5288 = vmatprep.subr.bf16.mxu0 %v4022
    %5289 = vmatpush1.bf16.msra.mxu0 %v4021
    %5290 = vmatprep.subr.bf16.mxu0 %v4026
    %5291 = vmatpush1.bf16.msra.mxu0 %v4025
    %5292 = vmatprep.subr.bf16.mxu0 %v4030
    %5293 = vmatpush1.bf16.msra.mxu0 %v4029
    %5294 = vmatprep.subr.bf16.mxu0 %v4034
    %5295 = vmatpush1.bf16.msra.mxu0 %v4033
    %5296 = vmatprep.subr.bf16.mxu0 %v4038
    %5297 = vmatpush1.bf16.msra.mxu0 %v4037
    %5298 = vmatprep.subr.bf16.mxu0 %v4042
    %5299 = vmatpush1.bf16.msra.mxu0 %v4041
    %5300 = vmatprep.subr.bf16.mxu0 %v4046
    %5301 = vmatpush1.bf16.msra.mxu0 %v4045
    %5302 = vmatprep.subr.bf16.mxu0 %v4050
    %5303 = vmatpush1.bf16.msra.mxu0 %v4049
    %5304 = vmatprep.mubr.bf16.mxu0 %v190
    %5305 = vmatmul.mubr.bf16.gmra.mrb[0].mxu0 %v189
    %v5306 = vpop.f32.mrb[0].mxu0
    %v5307 = vadd.f32 %v5266, %v5306
    %v5308 = vpop.f32.mrb[0].mxu0
    %v5309 = vadd.f32 %v5268, %v5308
    %v5310 = vpop.f32.mrb[0].mxu0
    %v5311 = vpop.f32.mrb[0].mxu0
    %5312 = vdwg.mxu0
    %5313 = vmatprep.subr.bf16.mxu0 %v3288
    %5314 = vmatpush1.bf16.msra.mxu0 %v3287
    %5315 = vmatprep.subr.bf16.mxu0 %v3292
    %5316 = vmatpush1.bf16.msra.mxu0 %v3291
    %5317 = vmatprep.subr.bf16.mxu0 %v3296
    %5318 = vmatpush1.bf16.msra.mxu0 %v3295
    %5319 = vmatprep.subr.bf16.mxu0 %v3300
    %5320 = vmatpush1.bf16.msra.mxu0 %v3299
    %5321 = vmatprep.subr.bf16.mxu0 %v3304
    %5322 = vmatpush1.bf16.msra.mxu0 %v3303
    %5323 = vmatprep.subr.bf16.mxu0 %v3308
    %5324 = vmatpush1.bf16.msra.mxu0 %v3307
    %5325 = vmatprep.subr.bf16.mxu0 %v3312
    %5326 = vmatpush1.bf16.msra.mxu0 %v3311
    %5327 = vmatprep.subr.bf16.mxu0 %v3316
    %5328 = vmatpush1.bf16.msra.mxu0 %v3315
    %5329 = vmatprep.subr.bf16.mxu0 %v3320
    %5330 = vmatpush1.bf16.msra.mxu0 %v3319
    %5331 = vmatprep.subr.bf16.mxu0 %v3324
    %5332 = vmatpush1.bf16.msra.mxu0 %v3323
    %5333 = vmatprep.subr.bf16.mxu0 %v3328
    %5334 = vmatpush1.bf16.msra.mxu0 %v3327
    %5335 = vmatprep.subr.bf16.mxu0 %v3332
    %5336 = vmatpush1.bf16.msra.mxu0 %v3331
    %5337 = vmatprep.subr.bf16.mxu0 %v3336
    %5338 = vmatpush1.bf16.msra.mxu0 %v3335
    %5339 = vmatprep.subr.bf16.mxu0 %v3340
    %5340 = vmatpush1.bf16.msra.mxu0 %v3339
    %5341 = vmatprep.subr.bf16.mxu0 %v3344
    %5342 = vmatpush1.bf16.msra.mxu0 %v3343
    %5343 = vmatprep.subr.bf16.mxu0 %v3348
    %5344 = vmatpush1.bf16.msra.mxu0 %v3347
    %5345 = vmatprep.mubr.bf16.mxu0 %v168
    %5346 = vmatmul.mubr.bf16.gmra.mrb[0].mxu0 %v167
    %v5347 = vpop.f32.mrb[0].mxu0
    %v5348 = vadd.f32 %v972, %v5347
    %v5349 = vpop.f32.mrb[0].mxu0
    %v5350 = vadd.f32 %v976, %v5349
    %v5351 = vpop.f32.mrb[0].mxu0
    %v5352 = vpop.f32.mrb[0].mxu0
    %5353 = vdwg.mxu0
    %5354 = vmatprep.subr.bf16.mxu0 %v3352
    %5355 = vmatpush1.bf16.msra.mxu0 %v3351
    %5356 = vmatprep.subr.bf16.mxu0 %v3356
    %5357 = vmatpush1.bf16.msra.mxu0 %v3355
    %5358 = vmatprep.subr.bf16.mxu0 %v3360
    %5359 = vmatpush1.bf16.msra.mxu0 %v3359
    %5360 = vmatprep.subr.bf16.mxu0 %v3364
    %5361 = vmatpush1.bf16.msra.mxu0 %v3363
    %5362 = vmatprep.subr.bf16.mxu0 %v3368
    %5363 = vmatpush1.bf16.msra.mxu0 %v3367
    %5364 = vmatprep.subr.bf16.mxu0 %v3372
    %5365 = vmatpush1.bf16.msra.mxu0 %v3371
    %5366 = vmatprep.subr.bf16.mxu0 %v3376
    %5367 = vmatpush1.bf16.msra.mxu0 %v3375
    %5368 = vmatprep.subr.bf16.mxu0 %v3380
    %5369 = vmatpush1.bf16.msra.mxu0 %v3379
    %5370 = vmatprep.subr.bf16.mxu0 %v3384
    %5371 = vmatpush1.bf16.msra.mxu0 %v3383
    %5372 = vmatprep.subr.bf16.mxu0 %v3388
    %5373 = vmatpush1.bf16.msra.mxu0 %v3387
    %5374 = vmatprep.subr.bf16.mxu0 %v3392
    %5375 = vmatpush1.bf16.msra.mxu0 %v3391
    %5376 = vmatprep.subr.bf16.mxu0 %v3396
    %5377 = vmatpush1.bf16.msra.mxu0 %v3395
    %5378 = vmatprep.subr.bf16.mxu0 %v3400
    %5379 = vmatpush1.bf16.msra.mxu0 %v3399
    %5380 = vmatprep.subr.bf16.mxu0 %v3404
    %5381 = vmatpush1.bf16.msra.mxu0 %v3403
    %5382 = vmatprep.subr.bf16.mxu0 %v3408
    %5383 = vmatpush1.bf16.msra.mxu0 %v3407
    %5384 = vmatprep.subr.bf16.mxu0 %v3412
    %5385 = vmatpush1.bf16.msra.mxu0 %v3411
    %5386 = vmatprep.mubr.bf16.mxu0 %v170
    %5387 = vmatmul.mubr.bf16.gmra.mrb[0].mxu0 %v169
    %v5388 = vpop.f32.mrb[0].mxu0
    %v5389 = vadd.f32 %v5348, %v5388
    %v5390 = vpop.f32.mrb[0].mxu0
    %v5391 = vadd.f32 %v5350, %v5390
    %v5392 = vpop.f32.mrb[0].mxu0
    %v5393 = vpop.f32.mrb[0].mxu0
    %5394 = vdwg.mxu0
    %5395 = vmatprep.subr.bf16.mxu0 %v3416
    %5396 = vmatpush1.bf16.msra.mxu0 %v3415
    %5397 = vmatprep.subr.bf16.mxu0 %v3420
    %5398 = vmatpush1.bf16.msra.mxu0 %v3419
    %5399 = vmatprep.subr.bf16.mxu0 %v3424
    %5400 = vmatpush1.bf16.msra.mxu0 %v3423
    %5401 = vmatprep.subr.bf16.mxu0 %v3428
    %5402 = vmatpush1.bf16.msra.mxu0 %v3427
    %5403 = vmatprep.subr.bf16.mxu0 %v3432
    %5404 = vmatpush1.bf16.msra.mxu0 %v3431
    %5405 = vmatprep.subr.bf16.mxu0 %v3436
    %5406 = vmatpush1.bf16.msra.mxu0 %v3435
    %5407 = vmatprep.subr.bf16.mxu0 %v3440
    %5408 = vmatpush1.bf16.msra.mxu0 %v3439
    %5409 = vmatprep.subr.bf16.mxu0 %v3444
    %5410 = vmatpush1.bf16.msra.mxu0 %v3443
    %5411 = vmatprep.subr.bf16.mxu0 %v3448
    %5412 = vmatpush1.bf16.msra.mxu0 %v3447
    %5413 = vmatprep.subr.bf16.mxu0 %v3452
    %5414 = vmatpush1.bf16.msra.mxu0 %v3451
    %5415 = vmatprep.subr.bf16.mxu0 %v3456
    %5416 = vmatpush1.bf16.msra.mxu0 %v3455
    %5417 = vmatprep.subr.bf16.mxu0 %v3460
    %5418 = vmatpush1.bf16.msra.mxu0 %v3459
    %5419 = vmatprep.subr.bf16.mxu0 %v3464
    %5420 = vmatpush1.bf16.msra.mxu0 %v3463
    %5421 = vmatprep.subr.bf16.mxu0 %v3468
    %5422 = vmatpush1.bf16.msra.mxu0 %v3467
    %5423 = vmatprep.subr.bf16.mxu0 %v3472
    %5424 = vmatpush1.bf16.msra.mxu0 %v3471
    %5425 = vmatprep.subr.bf16.mxu0 %v3476
    %5426 = vmatpush1.bf16.msra.mxu0 %v3475
    %5427 = vmatprep.mubr.bf16.mxu0 %v172
    %5428 = vmatmul.mubr.bf16.gmra.mrb[0].mxu0 %v171
    %v5429 = vpop.f32.mrb[0].mxu0
    %v5430 = vadd.f32 %v5389, %v5429
    %v5431 = vpop.f32.mrb[0].mxu0
    %v5432 = vadd.f32 %v5391, %v5431
    %v5433 = vpop.f32.mrb[0].mxu0
    %v5434 = vpop.f32.mrb[0].mxu0
    %5435 = vdwg.mxu0
    %5436 = vmatprep.subr.bf16.mxu0 %v3480
    %5437 = vmatpush1.bf16.msra.mxu0 %v3479
    %5438 = vmatprep.subr.bf16.mxu0 %v3484
    %5439 = vmatpush1.bf16.msra.mxu0 %v3483
    %5440 = vmatprep.subr.bf16.mxu0 %v3488
    %5441 = vmatpush1.bf16.msra.mxu0 %v3487
    %5442 = vmatprep.subr.bf16.mxu0 %v3492
    %5443 = vmatpush1.bf16.msra.mxu0 %v3491
    %5444 = vmatprep.subr.bf16.mxu0 %v3496
    %5445 = vmatpush1.bf16.msra.mxu0 %v3495
    %5446 = vmatprep.subr.bf16.mxu0 %v3500
    %5447 = vmatpush1.bf16.msra.mxu0 %v3499
    %5448 = vmatprep.subr.bf16.mxu0 %v3504
    %5449 = vmatpush1.bf16.msra.mxu0 %v3503
    %5450 = vmatprep.subr.bf16.mxu0 %v3508
    %5451 = vmatpush1.bf16.msra.mxu0 %v3507
    %5452 = vmatprep.subr.bf16.mxu0 %v3512
    %5453 = vmatpush1.bf16.msra.mxu0 %v3511
    %5454 = vmatprep.subr.bf16.mxu0 %v3516
    %5455 = vmatpush1.bf16.msra.mxu0 %v3515
    %5456 = vmatprep.subr.bf16.mxu0 %v3520
    %5457 = vmatpush1.bf16.msra.mxu0 %v3519
    %5458 = vmatprep.subr.bf16.mxu0 %v3524
    %5459 = vmatpush1.bf16.msra.mxu0 %v3523
    %5460 = vmatprep.subr.bf16.mxu0 %v3528
    %5461 = vmatpush1.bf16.msra.mxu0 %v3527
    %5462 = vmatprep.subr.bf16.mxu0 %v3532
    %5463 = vmatpush1.bf16.msra.mxu0 %v3531
    %5464 = vmatprep.subr.bf16.mxu0 %v3536
    %5465 = vmatpush1.bf16.msra.mxu0 %v3535
    %5466 = vmatprep.subr.bf16.mxu0 %v3540
    %5467 = vmatpush1.bf16.msra.mxu0 %v3539
    %5468 = vmatprep.mubr.bf16.mxu0 %v174
    %5469 = vmatmul.mubr.bf16.gmra.mrb[0].mxu0 %v173
    %v5470 = vpop.f32.mrb[0].mxu0
    %v5471 = vadd.f32 %v5430, %v5470
    %v5472 = vpop.f32.mrb[0].mxu0
    %v5473 = vadd.f32 %v5432, %v5472
    %v5474 = vpop.f32.mrb[0].mxu0
    %v5475 = vpop.f32.mrb[0].mxu0
    %5476 = vdwg.mxu0
    %5477 = vmatprep.subr.bf16.mxu0 %v3544
    %5478 = vmatpush1.bf16.msra.mxu0 %v3543
    %5479 = vmatprep.subr.bf16.mxu0 %v3548
    %5480 = vmatpush1.bf16.msra.mxu0 %v3547
    %5481 = vmatprep.subr.bf16.mxu0 %v3552
    %5482 = vmatpush1.bf16.msra.mxu0 %v3551
    %5483 = vmatprep.subr.bf16.mxu0 %v3556
    %5484 = vmatpush1.bf16.msra.mxu0 %v3555
    %5485 = vmatprep.subr.bf16.mxu0 %v3560
    %5486 = vmatpush1.bf16.msra.mxu0 %v3559
    %5487 = vmatprep.subr.bf16.mxu0 %v3564
    %5488 = vmatpush1.bf16.msra.mxu0 %v3563
    %5489 = vmatprep.subr.bf16.mxu0 %v3568
    %5490 = vmatpush1.bf16.msra.mxu0 %v3567
    %5491 = vmatprep.subr.bf16.mxu0 %v3572
    %5492 = vmatpush1.bf16.msra.mxu0 %v3571
    %5493 = vmatprep.subr.bf16.mxu0 %v3576
    %5494 = vmatpush1.bf16.msra.mxu0 %v3575
    %5495 = vmatprep.subr.bf16.mxu0 %v3580
    %5496 = vmatpush1.bf16.msra.mxu0 %v3579
    %5497 = vmatprep.subr.bf16.mxu0 %v3584
    %5498 = vmatpush1.bf16.msra.mxu0 %v3583
    %5499 = vmatprep.subr.bf16.mxu0 %v3588
    %5500 = vmatpush1.bf16.msra.mxu0 %v3587
    %5501 = vmatprep.subr.bf16.mxu0 %v3592
    %5502 = vmatpush1.bf16.msra.mxu0 %v3591
    %5503 = vmatprep.subr.bf16.mxu0 %v3596
    %5504 = vmatpush1.bf16.msra.mxu0 %v3595
    %5505 = vmatprep.subr.bf16.mxu0 %v3600
    %5506 = vmatpush1.bf16.msra.mxu0 %v3599
    %5507 = vmatprep.subr.bf16.mxu0 %v3604
    %5508 = vmatpush1.bf16.msra.mxu0 %v3603
    %5509 = vmatprep.mubr.bf16.mxu0 %v176
    %5510 = vmatmul.mubr.bf16.gmra.mrb[0].mxu0 %v175
    %v5511 = vpop.f32.mrb[0].mxu0
    %v5512 = vadd.f32 %v5471, %v5511
    %v5513 = vpop.f32.mrb[0].mxu0
    %v5514 = vadd.f32 %v5473, %v5513
    %v5515 = vpop.f32.mrb[0].mxu0
    %v5516 = vpop.f32.mrb[0].mxu0
    %5517 = vdwg.mxu0
    %5518 = vmatprep.subr.bf16.mxu0 %v3608
    %5519 = vmatpush1.bf16.msra.mxu0 %v3607
    %5520 = vmatprep.subr.bf16.mxu0 %v3612
    %5521 = vmatpush1.bf16.msra.mxu0 %v3611
    %5522 = vmatprep.subr.bf16.mxu0 %v3616
    %5523 = vmatpush1.bf16.msra.mxu0 %v3615
    %5524 = vmatprep.subr.bf16.mxu0 %v3620
    %5525 = vmatpush1.bf16.msra.mxu0 %v3619
    %5526 = vmatprep.subr.bf16.mxu0 %v3624
    %5527 = vmatpush1.bf16.msra.mxu0 %v3623
    %5528 = vmatprep.subr.bf16.mxu0 %v3628
    %5529 = vmatpush1.bf16.msra.mxu0 %v3627
    %5530 = vmatprep.subr.bf16.mxu0 %v3632
    %5531 = vmatpush1.bf16.msra.mxu0 %v3631
    %5532 = vmatprep.subr.bf16.mxu0 %v3636
    %5533 = vmatpush1.bf16.msra.mxu0 %v3635
    %5534 = vmatprep.subr.bf16.mxu0 %v3640
    %5535 = vmatpush1.bf16.msra.mxu0 %v3639
    %5536 = vmatprep.subr.bf16.mxu0 %v3644
    %5537 = vmatpush1.bf16.msra.mxu0 %v3643
    %5538 = vmatprep.subr.bf16.mxu0 %v3648
    %5539 = vmatpush1.bf16.msra.mxu0 %v3647
    %5540 = vmatprep.subr.bf16.mxu0 %v3652
    %5541 = vmatpush1.bf16.msra.mxu0 %v3651
    %5542 = vmatprep.subr.bf16.mxu0 %v3656
    %5543 = vmatpush1.bf16.msra.mxu0 %v3655
    %5544 = vmatprep.subr.bf16.mxu0 %v3660
    %5545 = vmatpush1.bf16.msra.mxu0 %v3659
    %5546 = vmatprep.subr.bf16.mxu0 %v3664
    %5547 = vmatpush1.bf16.msra.mxu0 %v3663
    %5548 = vmatprep.subr.bf16.mxu0 %v3668
    %5549 = vmatpush1.bf16.msra.mxu0 %v3667
    %5550 = vmatprep.mubr.bf16.mxu0 %v178
    %5551 = vmatmul.mubr.bf16.gmra.mrb[0].mxu0 %v177
    %v5552 = vpop.f32.mrb[0].mxu0
    %v5553 = vadd.f32 %v5512, %v5552
    %v5554 = vpop.f32.mrb[0].mxu0
    %v5555 = vadd.f32 %v5514, %v5554
    %v5556 = vpop.f32.mrb[0].mxu0
    %v5557 = vpop.f32.mrb[0].mxu0
    %5558 = vdwg.mxu0
    %5559 = vmatprep.subr.bf16.mxu0 %v3672
    %5560 = vmatpush1.bf16.msra.mxu0 %v3671
    %5561 = vmatprep.subr.bf16.mxu0 %v3676
    %5562 = vmatpush1.bf16.msra.mxu0 %v3675
    %5563 = vmatprep.subr.bf16.mxu0 %v3680
    %5564 = vmatpush1.bf16.msra.mxu0 %v3679
    %5565 = vmatprep.subr.bf16.mxu0 %v3684
    %5566 = vmatpush1.bf16.msra.mxu0 %v3683
    %5567 = vmatprep.subr.bf16.mxu0 %v3688
    %5568 = vmatpush1.bf16.msra.mxu0 %v3687
    %5569 = vmatprep.subr.bf16.mxu0 %v3692
    %5570 = vmatpush1.bf16.msra.mxu0 %v3691
    %5571 = vmatprep.subr.bf16.mxu0 %v3696
    %5572 = vmatpush1.bf16.msra.mxu0 %v3695
    %5573 = vmatprep.subr.bf16.mxu0 %v3700
    %5574 = vmatpush1.bf16.msra.mxu0 %v3699
    %5575 = vmatprep.subr.bf16.mxu0 %v3704
    %5576 = vmatpush1.bf16.msra.mxu0 %v3703
    %5577 = vmatprep.subr.bf16.mxu0 %v3708
    %5578 = vmatpush1.bf16.msra.mxu0 %v3707
    %5579 = vmatprep.subr.bf16.mxu0 %v3712
    %5580 = vmatpush1.bf16.msra.mxu0 %v3711
    %5581 = vmatprep.subr.bf16.mxu0 %v3716
    %5582 = vmatpush1.bf16.msra.mxu0 %v3715
    %5583 = vmatprep.subr.bf16.mxu0 %v3720
    %5584 = vmatpush1.bf16.msra.mxu0 %v3719
    %5585 = vmatprep.subr.bf16.mxu0 %v3724
    %5586 = vmatpush1.bf16.msra.mxu0 %v3723
    %5587 = vmatprep.subr.bf16.mxu0 %v3728
    %5588 = vmatpush1.bf16.msra.mxu0 %v3727
    %5589 = vmatprep.subr.bf16.mxu0 %v3732
    %5590 = vmatpush1.bf16.msra.mxu0 %v3731
    %5591 = vmatprep.mubr.bf16.mxu0 %v180
    %5592 = vmatmul.mubr.bf16.gmra.mrb[0].mxu0 %v179
    %v5593 = vpop.f32.mrb[0].mxu0
    %v5594 = vadd.f32 %v5553, %v5593
    %v5595 = vpop.f32.mrb[0].mxu0
    %v5596 = vadd.f32 %v5555, %v5595
    %v5597 = vpop.f32.mrb[0].mxu0
    %v5598 = vpop.f32.mrb[0].mxu0
    %5599 = vdwg.mxu0
    %5600 = vmatprep.subr.bf16.mxu0 %v3736
    %5601 = vmatpush1.bf16.msra.mxu0 %v3735
    %5602 = vmatprep.subr.bf16.mxu0 %v3740
    %5603 = vmatpush1.bf16.msra.mxu0 %v3739
    %5604 = vmatprep.subr.bf16.mxu0 %v3744
    %5605 = vmatpush1.bf16.msra.mxu0 %v3743
    %5606 = vmatprep.subr.bf16.mxu0 %v3748
    %5607 = vmatpush1.bf16.msra.mxu0 %v3747
    %5608 = vmatprep.subr.bf16.mxu0 %v3752
    %5609 = vmatpush1.bf16.msra.mxu0 %v3751
    %5610 = vmatprep.subr.bf16.mxu0 %v3756
    %5611 = vmatpush1.bf16.msra.mxu0 %v3755
    %5612 = vmatprep.subr.bf16.mxu0 %v3760
    %5613 = vmatpush1.bf16.msra.mxu0 %v3759
    %5614 = vmatprep.subr.bf16.mxu0 %v3764
    %5615 = vmatpush1.bf16.msra.mxu0 %v3763
    %5616 = vmatprep.subr.bf16.mxu0 %v3768
    %5617 = vmatpush1.bf16.msra.mxu0 %v3767
    %5618 = vmatprep.subr.bf16.mxu0 %v3772
    %5619 = vmatpush1.bf16.msra.mxu0 %v3771
    %5620 = vmatprep.subr.bf16.mxu0 %v3776
    %5621 = vmatpush1.bf16.msra.mxu0 %v3775
    %5622 = vmatprep.subr.bf16.mxu0 %v3780
    %5623 = vmatpush1.bf16.msra.mxu0 %v3779
    %5624 = vmatprep.subr.bf16.mxu0 %v3784
    %5625 = vmatpush1.bf16.msra.mxu0 %v3783
    %5626 = vmatprep.subr.bf16.mxu0 %v3788
    %5627 = vmatpush1.bf16.msra.mxu0 %v3787
    %5628 = vmatprep.subr.bf16.mxu0 %v3792
    %5629 = vmatpush1.bf16.msra.mxu0 %v3791
    %5630 = vmatprep.subr.bf16.mxu0 %v3796
    %5631 = vmatpush1.bf16.msra.mxu0 %v3795
    %5632 = vmatprep.mubr.bf16.mxu0 %v182
    %5633 = vmatmul.mubr.bf16.gmra.mrb[0].mxu0 %v181
    %v5634 = vpop.f32.mrb[0].mxu0
    %v5635 = vadd.f32 %v5594, %v5634
    %v5636 = vpop.f32.mrb[0].mxu0
    %v5637 = vadd.f32 %v5596, %v5636
    %v5638 = vpop.f32.mrb[0].mxu0
    %v5639 = vpop.f32.mrb[0].mxu0
    %5640 = vdwg.mxu0
    %5641 = vmatprep.subr.bf16.mxu0 %v3800
    %5642 = vmatpush1.bf16.msra.mxu0 %v3799
    %5643 = vmatprep.subr.bf16.mxu0 %v3804
    %5644 = vmatpush1.bf16.msra.mxu0 %v3803
    %5645 = vmatprep.subr.bf16.mxu0 %v3808
    %5646 = vmatpush1.bf16.msra.mxu0 %v3807
    %5647 = vmatprep.subr.bf16.mxu0 %v3812
    %5648 = vmatpush1.bf16.msra.mxu0 %v3811
    %5649 = vmatprep.subr.bf16.mxu0 %v3816
    %5650 = vmatpush1.bf16.msra.mxu0 %v3815
    %5651 = vmatprep.subr.bf16.mxu0 %v3820
    %5652 = vmatpush1.bf16.msra.mxu0 %v3819
    %5653 = vmatprep.subr.bf16.mxu0 %v3824
    %5654 = vmatpush1.bf16.msra.mxu0 %v3823
    %5655 = vmatprep.subr.bf16.mxu0 %v3828
    %5656 = vmatpush1.bf16.msra.mxu0 %v3827
    %5657 = vmatprep.subr.bf16.mxu0 %v3832
    %5658 = vmatpush1.bf16.msra.mxu0 %v3831
    %5659 = vmatprep.subr.bf16.mxu0 %v3836
    %5660 = vmatpush1.bf16.msra.mxu0 %v3835
    %5661 = vmatprep.subr.bf16.mxu0 %v3840
    %5662 = vmatpush1.bf16.msra.mxu0 %v3839
    %5663 = vmatprep.subr.bf16.mxu0 %v3844
    %5664 = vmatpush1.bf16.msra.mxu0 %v3843
    %5665 = vmatprep.subr.bf16.mxu0 %v3848
    %5666 = vmatpush1.bf16.msra.mxu0 %v3847
    %5667 = vmatprep.subr.bf16.mxu0 %v3852
    %5668 = vmatpush1.bf16.msra.mxu0 %v3851
    %5669 = vmatprep.subr.bf16.mxu0 %v3856
    %5670 = vmatpush1.bf16.msra.mxu0 %v3855
    %5671 = vmatprep.subr.bf16.mxu0 %v3860
    %5672 = vmatpush1.bf16.msra.mxu0 %v3859
    %5673 = vmatprep.mubr.bf16.mxu0 %v184
    %5674 = vmatmul.mubr.bf16.gmra.mrb[0].mxu0 %v183
    %v5675 = vpop.f32.mrb[0].mxu0
    %v5676 = vadd.f32 %v5635, %v5675
    %v5677 = vpop.f32.mrb[0].mxu0
    %v5678 = vadd.f32 %v5637, %v5677
    %v5679 = vpop.f32.mrb[0].mxu0
    %v5680 = vpop.f32.mrb[0].mxu0
    %5681 = vdwg.mxu0
    %5682 = vmatprep.subr.bf16.mxu0 %v3864
    %5683 = vmatpush1.bf16.msra.mxu0 %v3863
    %5684 = vmatprep.subr.bf16.mxu0 %v3868
    %5685 = vmatpush1.bf16.msra.mxu0 %v3867
    %5686 = vmatprep.subr.bf16.mxu0 %v3872
    %5687 = vmatpush1.bf16.msra.mxu0 %v3871
    %5688 = vmatprep.subr.bf16.mxu0 %v3876
    %5689 = vmatpush1.bf16.msra.mxu0 %v3875
    %5690 = vmatprep.subr.bf16.mxu0 %v3880
    %5691 = vmatpush1.bf16.msra.mxu0 %v3879
    %5692 = vmatprep.subr.bf16.mxu0 %v3884
    %5693 = vmatpush1.bf16.msra.mxu0 %v3883
    %5694 = vmatprep.subr.bf16.mxu0 %v3888
    %5695 = vmatpush1.bf16.msra.mxu0 %v3887
    %5696 = vmatprep.subr.bf16.mxu0 %v3892
    %5697 = vmatpush1.bf16.msra.mxu0 %v3891
    %5698 = vmatprep.subr.bf16.mxu0 %v3896
    %5699 = vmatpush1.bf16.msra.mxu0 %v3895
    %5700 = vmatprep.subr.bf16.mxu0 %v3900
    %5701 = vmatpush1.bf16.msra.mxu0 %v3899
    %5702 = vmatprep.subr.bf16.mxu0 %v3904
    %5703 = vmatpush1.bf16.msra.mxu0 %v3903
    %5704 = vmatprep.subr.bf16.mxu0 %v3908
    %5705 = vmatpush1.bf16.msra.mxu0 %v3907
    %5706 = vmatprep.subr.bf16.mxu0 %v3912
    %5707 = vmatpush1.bf16.msra.mxu0 %v3911
    %5708 = vmatprep.subr.bf16.mxu0 %v3916
    %5709 = vmatpush1.bf16.msra.mxu0 %v3915
    %5710 = vmatprep.subr.bf16.mxu0 %v3920
    %5711 = vmatpush1.bf16.msra.mxu0 %v3919
    %5712 = vmatprep.subr.bf16.mxu0 %v3924
    %5713 = vmatpush1.bf16.msra.mxu0 %v3923
    %5714 = vmatprep.mubr.bf16.mxu0 %v186
    %5715 = vmatmul.mubr.bf16.gmra.mrb[0].mxu0 %v185
    %v5716 = vpop.f32.mrb[0].mxu0
    %v5717 = vadd.f32 %v5676, %v5716
    %v5718 = vpop.f32.mrb[0].mxu0
    %v5719 = vadd.f32 %v5678, %v5718
    %v5720 = vpop.f32.mrb[0].mxu0
    %v5721 = vpop.f32.mrb[0].mxu0
    %5722 = vdwg.mxu0
    %5723 = vmatprep.subr.bf16.mxu0 %v3928
    %5724 = vmatpush1.bf16.msra.mxu0 %v3927
    %5725 = vmatprep.subr.bf16.mxu0 %v3932
    %5726 = vmatpush1.bf16.msra.mxu0 %v3931
    %5727 = vmatprep.subr.bf16.mxu0 %v3936
    %5728 = vmatpush1.bf16.msra.mxu0 %v3935
    %5729 = vmatprep.subr.bf16.mxu0 %v3940
    %5730 = vmatpush1.bf16.msra.mxu0 %v3939
    %5731 = vmatprep.subr.bf16.mxu0 %v3944
    %5732 = vmatpush1.bf16.msra.mxu0 %v3943
    %5733 = vmatprep.subr.bf16.mxu0 %v3948
    %5734 = vmatpush1.bf16.msra.mxu0 %v3947
    %5735 = vmatprep.subr.bf16.mxu0 %v3952
    %5736 = vmatpush1.bf16.msra.mxu0 %v3951
    %5737 = vmatprep.subr.bf16.mxu0 %v3956
    %5738 = vmatpush1.bf16.msra.mxu0 %v3955
    %5739 = vmatprep.subr.bf16.mxu0 %v3960
    %5740 = vmatpush1.bf16.msra.mxu0 %v3959
    %5741 = vmatprep.subr.bf16.mxu0 %v3964
    %5742 = vmatpush1.bf16.msra.mxu0 %v3963
    %5743 = vmatprep.subr.bf16.mxu0 %v3968
    %5744 = vmatpush1.bf16.msra.mxu0 %v3967
    %5745 = vmatprep.subr.bf16.mxu0 %v3972
    %5746 = vmatpush1.bf16.msra.mxu0 %v3971
    %5747 = vmatprep.subr.bf16.mxu0 %v3976
    %5748 = vmatpush1.bf16.msra.mxu0 %v3975
    %5749 = vmatprep.subr.bf16.mxu0 %v3980
    %5750 = vmatpush1.bf16.msra.mxu0 %v3979
    %5751 = vmatprep.subr.bf16.mxu0 %v3984
    %5752 = vmatpush1.bf16.msra.mxu0 %v3983
    %5753 = vmatprep.subr.bf16.mxu0 %v3988
    %5754 = vmatpush1.bf16.msra.mxu0 %v3987
    %5755 = vmatprep.mubr.bf16.mxu0 %v188
    %5756 = vmatmul.mubr.bf16.gmra.mrb[0].mxu0 %v187
    %v5757 = vpop.f32.mrb[0].mxu0
    %v5758 = vadd.f32 %v5717, %v5757
    %v5759 = vpop.f32.mrb[0].mxu0
    %v5760 = vadd.f32 %v5719, %v5759
    %v5761 = vpop.f32.mrb[0].mxu0
    %v5762 = vpop.f32.mrb[0].mxu0
    %5763 = vdwg.mxu0
    %5764 = vmatprep.subr.bf16.mxu0 %v3992
    %5765 = vmatpush1.bf16.msra.mxu0 %v3991
    %5766 = vmatprep.subr.bf16.mxu0 %v3996
    %5767 = vmatpush1.bf16.msra.mxu0 %v3995
    %5768 = vmatprep.subr.bf16.mxu0 %v4000
    %5769 = vmatpush1.bf16.msra.mxu0 %v3999
    %5770 = vmatprep.subr.bf16.mxu0 %v4004
    %5771 = vmatpush1.bf16.msra.mxu0 %v4003
    %5772 = vmatprep.subr.bf16.mxu0 %v4008
    %5773 = vmatpush1.bf16.msra.mxu0 %v4007
    %5774 = vmatprep.subr.bf16.mxu0 %v4012
    %5775 = vmatpush1.bf16.msra.mxu0 %v4011
    %5776 = vmatprep.subr.bf16.mxu0 %v4016
    %5777 = vmatpush1.bf16.msra.mxu0 %v4015
    %5778 = vmatprep.subr.bf16.mxu0 %v4020
    %5779 = vmatpush1.bf16.msra.mxu0 %v4019
    %5780 = vmatprep.subr.bf16.mxu0 %v4024
    %5781 = vmatpush1.bf16.msra.mxu0 %v4023
    %5782 = vmatprep.subr.bf16.mxu0 %v4028
    %5783 = vmatpush1.bf16.msra.mxu0 %v4027
    %5784 = vmatprep.subr.bf16.mxu0 %v4032
    %5785 = vmatpush1.bf16.msra.mxu0 %v4031
    %5786 = vmatprep.subr.bf16.mxu0 %v4036
    %5787 = vmatpush1.bf16.msra.mxu0 %v4035
    %5788 = vmatprep.subr.bf16.mxu0 %v4040
    %5789 = vmatpush1.bf16.msra.mxu0 %v4039
    %5790 = vmatprep.subr.bf16.mxu0 %v4044
    %5791 = vmatpush1.bf16.msra.mxu0 %v4043
    %5792 = vmatprep.subr.bf16.mxu0 %v4048
    %5793 = vmatpush1.bf16.msra.mxu0 %v4047
    %5794 = vmatprep.subr.bf16.mxu0 %v4052
    %5795 = vmatpush1.bf16.msra.mxu0 %v4051
    %5796 = vmatprep.mubr.bf16.mxu0 %v190
    %5797 = vmatmul.mubr.bf16.gmra.mrb[0].mxu0 %v189
    %v5798 = vpop.f32.mrb[0].mxu0
    %v5799 = vadd.f32 %v5758, %v5798
    %v5800 = vpop.f32.mrb[0].mxu0
    %v5801 = vadd.f32 %v5760, %v5800
    %v5802 = vpop.f32.mrb[0].mxu0
    %v5803 = vpop.f32.mrb[0].mxu0
    %5804 = vdwg.mxu0
    %5805 = vst [vmem:[#allocation17] sm:$0xff] %v5307
    %5806 = vst [vmem:[#allocation17 + $0x8] sm:$0xff] %v5309
    %5807 = vst [vmem:[#allocation17 + $0x10] sm:$0xff] %v5799
    %5808 = vst [vmem:[#allocation17 + $0x18] sm:$0xff] %v5801
    %v5809 = vpack.c.bf16 %v5307, %v5307
    %v5810 = vpack.c.bf16 %v5309, %v5309
    %v5811 = vpack.c.bf16 %v5799, %v5799
    %v5812 = vpack.c.bf16 %v5801, %v5801
    %v5813 = vld [vmem:[#allocation8] sm:$0xff]
    %v5814 = vld [vmem:[#allocation8 + $0x8] sm:$0xff]
    %v5815 = vld [vmem:[#allocation8 + $0x10] sm:$0xff]
    %v5816 = vld [vmem:[#allocation8 + $0x18] sm:$0xff]
    %v5817 = vld [vmem:[#allocation8 + $0x20] sm:$0xff]
    %v5818 = vld [vmem:[#allocation8 + $0x28] sm:$0xff]
    %v5819 = vld [vmem:[#allocation8 + $0x30] sm:$0xff]
    %v5820 = vld [vmem:[#allocation8 + $0x38] sm:$0xff]
    %v5821 = vld [vmem:[#allocation8 + $0x40] sm:$0xff]
    %v5822 = vld [vmem:[#allocation8 + $0x48] sm:$0xff]
    %v5823 = vld [vmem:[#allocation8 + $0x50] sm:$0xff]
    %v5824 = vld [vmem:[#allocation8 + $0x58] sm:$0xff]
    %v5825 = vld [vmem:[#allocation8 + $0x60] sm:$0xff]
    %v5826 = vld [vmem:[#allocation8 + $0x68] sm:$0xff]
    %v5827 = vld [vmem:[#allocation8 + $0x70] sm:$0xff]
    %v5828 = vld [vmem:[#allocation8 + $0x78] sm:$0xff]
    %v5829 = vld [vmem:[#allocation8 + $0x80] sm:$0xff]
    %v5830 = vld [vmem:[#allocation8 + $0x88] sm:$0xff]
    %v5831 = vld [vmem:[#allocation8 + $0x90] sm:$0xff]
    %v5832 = vld [vmem:[#allocation8 + $0x98] sm:$0xff]
    %v5833 = vld [vmem:[#allocation8 + $0xa0] sm:$0xff]
    %v5834 = vld [vmem:[#allocation8 + $0xa8] sm:$0xff]
    %v5835 = vld [vmem:[#allocation8 + $0xb0] sm:$0xff]
    %v5836 = vld [vmem:[#allocation8 + $0xb8] sm:$0xff]
    %v5837 = vld [vmem:[#allocation8 + $0xc0] sm:$0xff]
    %v5838 = vld [vmem:[#allocation8 + $0xc8] sm:$0xff]
    %v5839 = vld [vmem:[#allocation8 + $0xd0] sm:$0xff]
    %v5840 = vld [vmem:[#allocation8 + $0xd8] sm:$0xff]
    %v5841 = vld [vmem:[#allocation8 + $0xe0] sm:$0xff]
    %v5842 = vld [vmem:[#allocation8 + $0xe8] sm:$0xff]
    %v5843 = vld [vmem:[#allocation8 + $0xf0] sm:$0xff]
    %v5844 = vld [vmem:[#allocation8 + $0xf8] sm:$0xff]
    %v5845 = vld [vmem:[#allocation8 + $0x100] sm:$0xff]
    %v5846 = vld [vmem:[#allocation8 + $0x108] sm:$0xff]
    %v5847 = vld [vmem:[#allocation8 + $0x110] sm:$0xff]
    %v5848 = vld [vmem:[#allocation8 + $0x118] sm:$0xff]
    %v5849 = vld [vmem:[#allocation8 + $0x120] sm:$0xff]
    %v5850 = vld [vmem:[#allocation8 + $0x128] sm:$0xff]
    %v5851 = vld [vmem:[#allocation8 + $0x130] sm:$0xff]
    %v5852 = vld [vmem:[#allocation8 + $0x138] sm:$0xff]
    %v5853 = vld [vmem:[#allocation8 + $0x140] sm:$0xff]
    %v5854 = vld [vmem:[#allocation8 + $0x148] sm:$0xff]
    %v5855 = vld [vmem:[#allocation8 + $0x150] sm:$0xff]
    %v5856 = vld [vmem:[#allocation8 + $0x158] sm:$0xff]
    %v5857 = vld [vmem:[#allocation8 + $0x160] sm:$0xff]
    %v5858 = vld [vmem:[#allocation8 + $0x168] sm:$0xff]
    %v5859 = vld [vmem:[#allocation8 + $0x170] sm:$0xff]
    %v5860 = vld [vmem:[#allocation8 + $0x178] sm:$0xff]
    %v5861 = vld [vmem:[#allocation8 + $0x180] sm:$0xff]
    %v5862 = vld [vmem:[#allocation8 + $0x188] sm:$0xff]
    %v5863 = vld [vmem:[#allocation8 + $0x190] sm:$0xff]
    %v5864 = vld [vmem:[#allocation8 + $0x198] sm:$0xff]
    %v5865 = vld [vmem:[#allocation8 + $0x1a0] sm:$0xff]
    %v5866 = vld [vmem:[#allocation8 + $0x1a8] sm:$0xff]
    %v5867 = vld [vmem:[#allocation8 + $0x1b0] sm:$0xff]
    %v5868 = vld [vmem:[#allocation8 + $0x1b8] sm:$0xff]
    %v5869 = vld [vmem:[#allocation8 + $0x1c0] sm:$0xff]
    %v5870 = vld [vmem:[#allocation8 + $0x1c8] sm:$0xff]
    %v5871 = vld [vmem:[#allocation8 + $0x1d0] sm:$0xff]
    %v5872 = vld [vmem:[#allocation8 + $0x1d8] sm:$0xff]
    %v5873 = vld [vmem:[#allocation8 + $0x1e0] sm:$0xff]
    %v5874 = vld [vmem:[#allocation8 + $0x1e8] sm:$0xff]
    %v5875 = vld [vmem:[#allocation8 + $0x1f0] sm:$0xff]
    %v5876 = vld [vmem:[#allocation8 + $0x1f8] sm:$0xff]
    %v5877 = vld [vmem:[#allocation8 + $0x200] sm:$0xff]
    %v5878 = vld [vmem:[#allocation8 + $0x208] sm:$0xff]
    %v5879 = vld [vmem:[#allocation8 + $0x210] sm:$0xff]
    %v5880 = vld [vmem:[#allocation8 + $0x218] sm:$0xff]
    %v5881 = vld [vmem:[#allocation8 + $0x220] sm:$0xff]
    %v5882 = vld [vmem:[#allocation8 + $0x228] sm:$0xff]
    %v5883 = vld [vmem:[#allocation8 + $0x230] sm:$0xff]
    %v5884 = vld [vmem:[#allocation8 + $0x238] sm:$0xff]
    %v5885 = vld [vmem:[#allocation8 + $0x240] sm:$0xff]
    %v5886 = vld [vmem:[#allocation8 + $0x248] sm:$0xff]
    %v5887 = vld [vmem:[#allocation8 + $0x250] sm:$0xff]
    %v5888 = vld [vmem:[#allocation8 + $0x258] sm:$0xff]
    %v5889 = vld [vmem:[#allocation8 + $0x260] sm:$0xff]
    %v5890 = vld [vmem:[#allocation8 + $0x268] sm:$0xff]
    %v5891 = vld [vmem:[#allocation8 + $0x270] sm:$0xff]
    %v5892 = vld [vmem:[#allocation8 + $0x278] sm:$0xff]
    %v5893 = vld [vmem:[#allocation8 + $0x280] sm:$0xff]
    %v5894 = vld [vmem:[#allocation8 + $0x288] sm:$0xff]
    %v5895 = vld [vmem:[#allocation8 + $0x290] sm:$0xff]
    %v5896 = vld [vmem:[#allocation8 + $0x298] sm:$0xff]
    %v5897 = vld [vmem:[#allocation8 + $0x2a0] sm:$0xff]
    %v5898 = vld [vmem:[#allocation8 + $0x2a8] sm:$0xff]
    %v5899 = vld [vmem:[#allocation8 + $0x2b0] sm:$0xff]
    %v5900 = vld [vmem:[#allocation8 + $0x2b8] sm:$0xff]
    %v5901 = vld [vmem:[#allocation8 + $0x2c0] sm:$0xff]
    %v5902 = vld [vmem:[#allocation8 + $0x2c8] sm:$0xff]
    %v5903 = vld [vmem:[#allocation8 + $0x2d0] sm:$0xff]
    %v5904 = vld [vmem:[#allocation8 + $0x2d8] sm:$0xff]
    %v5905 = vld [vmem:[#allocation8 + $0x2e0] sm:$0xff]
    %v5906 = vld [vmem:[#allocation8 + $0x2e8] sm:$0xff]
    %v5907 = vld [vmem:[#allocation8 + $0x2f0] sm:$0xff]
    %v5908 = vld [vmem:[#allocation8 + $0x2f8] sm:$0xff]
    %v5909 = vld [vmem:[#allocation8 + $0x300] sm:$0xff]
    %v5910 = vld [vmem:[#allocation8 + $0x308] sm:$0xff]
    %v5911 = vld [vmem:[#allocation8 + $0x310] sm:$0xff]
    %v5912 = vld [vmem:[#allocation8 + $0x318] sm:$0xff]
    %v5913 = vld [vmem:[#allocation8 + $0x320] sm:$0xff]
    %v5914 = vld [vmem:[#allocation8 + $0x328] sm:$0xff]
    %v5915 = vld [vmem:[#allocation8 + $0x330] sm:$0xff]
    %v5916 = vld [vmem:[#allocation8 + $0x338] sm:$0xff]
    %v5917 = vld [vmem:[#allocation8 + $0x340] sm:$0xff]
    %v5918 = vld [vmem:[#allocation8 + $0x348] sm:$0xff]
    %v5919 = vld [vmem:[#allocation8 + $0x350] sm:$0xff]
    %v5920 = vld [vmem:[#allocation8 + $0x358] sm:$0xff]
    %v5921 = vld [vmem:[#allocation8 + $0x360] sm:$0xff]
    %v5922 = vld [vmem:[#allocation8 + $0x368] sm:$0xff]
    %v5923 = vld [vmem:[#allocation8 + $0x370] sm:$0xff]
    %v5924 = vld [vmem:[#allocation8 + $0x378] sm:$0xff]
    %v5925 = vld [vmem:[#allocation8 + $0x380] sm:$0xff]
    %v5926 = vld [vmem:[#allocation8 + $0x388] sm:$0xff]
    %v5927 = vld [vmem:[#allocation8 + $0x390] sm:$0xff]
    %v5928 = vld [vmem:[#allocation8 + $0x398] sm:$0xff]
    %v5929 = vld [vmem:[#allocation8 + $0x3a0] sm:$0xff]
    %v5930 = vld [vmem:[#allocation8 + $0x3a8] sm:$0xff]
    %v5931 = vld [vmem:[#allocation8 + $0x3b0] sm:$0xff]
    %v5932 = vld [vmem:[#allocation8 + $0x3b8] sm:$0xff]
    %v5933 = vld [vmem:[#allocation8 + $0x3c0] sm:$0xff]
    %v5934 = vld [vmem:[#allocation8 + $0x3c8] sm:$0xff]
    %v5935 = vld [vmem:[#allocation8 + $0x3d0] sm:$0xff]
    %v5936 = vld [vmem:[#allocation8 + $0x3d8] sm:$0xff]
    %v5937 = vld [vmem:[#allocation8 + $0x3e0] sm:$0xff]
    %v5938 = vld [vmem:[#allocation8 + $0x3e8] sm:$0xff]
    %v5939 = vld [vmem:[#allocation8 + $0x3f0] sm:$0xff]
    %v5940 = vld [vmem:[#allocation8 + $0x3f8] sm:$0xff]
    %v5941 = vld [vmem:[#allocation8 + $0x400] sm:$0xff]
    %v5942 = vld [vmem:[#allocation8 + $0x408] sm:$0xff]
    %v5943 = vld [vmem:[#allocation8 + $0x410] sm:$0xff]
    %v5944 = vld [vmem:[#allocation8 + $0x418] sm:$0xff]
    %v5945 = vld [vmem:[#allocation8 + $0x420] sm:$0xff]
    %v5946 = vld [vmem:[#allocation8 + $0x428] sm:$0xff]
    %v5947 = vld [vmem:[#allocation8 + $0x430] sm:$0xff]
    %v5948 = vld [vmem:[#allocation8 + $0x438] sm:$0xff]
    %v5949 = vld [vmem:[#allocation8 + $0x440] sm:$0xff]
    %v5950 = vld [vmem:[#allocation8 + $0x448] sm:$0xff]
    %v5951 = vld [vmem:[#allocation8 + $0x450] sm:$0xff]
    %v5952 = vld [vmem:[#allocation8 + $0x458] sm:$0xff]
    %v5953 = vld [vmem:[#allocation8 + $0x460] sm:$0xff]
    %v5954 = vld [vmem:[#allocation8 + $0x468] sm:$0xff]
    %v5955 = vld [vmem:[#allocation8 + $0x470] sm:$0xff]
    %v5956 = vld [vmem:[#allocation8 + $0x478] sm:$0xff]
    %v5957 = vld [vmem:[#allocation8 + $0x480] sm:$0xff]
    %v5958 = vld [vmem:[#allocation8 + $0x488] sm:$0xff]
    %v5959 = vld [vmem:[#allocation8 + $0x490] sm:$0xff]
    %v5960 = vld [vmem:[#allocation8 + $0x498] sm:$0xff]
    %v5961 = vld [vmem:[#allocation8 + $0x4a0] sm:$0xff]
    %v5962 = vld [vmem:[#allocation8 + $0x4a8] sm:$0xff]
    %v5963 = vld [vmem:[#allocation8 + $0x4b0] sm:$0xff]
    %v5964 = vld [vmem:[#allocation8 + $0x4b8] sm:$0xff]
    %v5965 = vld [vmem:[#allocation8 + $0x4c0] sm:$0xff]
    %v5966 = vld [vmem:[#allocation8 + $0x4c8] sm:$0xff]
    %v5967 = vld [vmem:[#allocation8 + $0x4d0] sm:$0xff]
    %v5968 = vld [vmem:[#allocation8 + $0x4d8] sm:$0xff]
    %v5969 = vld [vmem:[#allocation8 + $0x4e0] sm:$0xff]
    %v5970 = vld [vmem:[#allocation8 + $0x4e8] sm:$0xff]
    %v5971 = vld [vmem:[#allocation8 + $0x4f0] sm:$0xff]
    %v5972 = vld [vmem:[#allocation8 + $0x4f8] sm:$0xff]
    %v5973 = vld [vmem:[#allocation8 + $0x500] sm:$0xff]
    %v5974 = vld [vmem:[#allocation8 + $0x508] sm:$0xff]
    %v5975 = vld [vmem:[#allocation8 + $0x510] sm:$0xff]
    %v5976 = vld [vmem:[#allocation8 + $0x518] sm:$0xff]
    %v5977 = vld [vmem:[#allocation8 + $0x520] sm:$0xff]
    %v5978 = vld [vmem:[#allocation8 + $0x528] sm:$0xff]
    %v5979 = vld [vmem:[#allocation8 + $0x530] sm:$0xff]
    %v5980 = vld [vmem:[#allocation8 + $0x538] sm:$0xff]
    %v5981 = vld [vmem:[#allocation8 + $0x540] sm:$0xff]
    %v5982 = vld [vmem:[#allocation8 + $0x548] sm:$0xff]
    %v5983 = vld [vmem:[#allocation8 + $0x550] sm:$0xff]
    %v5984 = vld [vmem:[#allocation8 + $0x558] sm:$0xff]
    %v5985 = vld [vmem:[#allocation8 + $0x560] sm:$0xff]
    %v5986 = vld [vmem:[#allocation8 + $0x568] sm:$0xff]
    %v5987 = vld [vmem:[#allocation8 + $0x570] sm:$0xff]
    %v5988 = vld [vmem:[#allocation8 + $0x578] sm:$0xff]
    %v5989 = vld [vmem:[#allocation8 + $0x580] sm:$0xff]
    %v5990 = vld [vmem:[#allocation8 + $0x588] sm:$0xff]
    %v5991 = vld [vmem:[#allocation8 + $0x590] sm:$0xff]
    %v5992 = vld [vmem:[#allocation8 + $0x598] sm:$0xff]
    %v5993 = vld [vmem:[#allocation8 + $0x5a0] sm:$0xff]
    %v5994 = vld [vmem:[#allocation8 + $0x5a8] sm:$0xff]
    %v5995 = vld [vmem:[#allocation8 + $0x5b0] sm:$0xff]
    %v5996 = vld [vmem:[#allocation8 + $0x5b8] sm:$0xff]
    %v5997 = vld [vmem:[#allocation8 + $0x5c0] sm:$0xff]
    %v5998 = vld [vmem:[#allocation8 + $0x5c8] sm:$0xff]
    %v5999 = vld [vmem:[#allocation8 + $0x5d0] sm:$0xff]
    %v6000 = vld [vmem:[#allocation8 + $0x5d8] sm:$0xff]
    %v6001 = vld [vmem:[#allocation8 + $0x5e0] sm:$0xff]
    %v6002 = vld [vmem:[#allocation8 + $0x5e8] sm:$0xff]
    %v6003 = vld [vmem:[#allocation8 + $0x5f0] sm:$0xff]
    %v6004 = vld [vmem:[#allocation8 + $0x5f8] sm:$0xff]
    %v6005 = vld [vmem:[#allocation8 + $0x600] sm:$0xff]
    %v6006 = vld [vmem:[#allocation8 + $0x608] sm:$0xff]
    %v6007 = vld [vmem:[#allocation8 + $0x610] sm:$0xff]
    %v6008 = vld [vmem:[#allocation8 + $0x618] sm:$0xff]
    %v6009 = vld [vmem:[#allocation8 + $0x620] sm:$0xff]
    %v6010 = vld [vmem:[#allocation8 + $0x628] sm:$0xff]
    %v6011 = vld [vmem:[#allocation8 + $0x630] sm:$0xff]
    %v6012 = vld [vmem:[#allocation8 + $0x638] sm:$0xff]
    %v6013 = vld [vmem:[#allocation8 + $0x640] sm:$0xff]
    %v6014 = vld [vmem:[#allocation8 + $0x648] sm:$0xff]
    %v6015 = vld [vmem:[#allocation8 + $0x650] sm:$0xff]
    %v6016 = vld [vmem:[#allocation8 + $0x658] sm:$0xff]
    %v6017 = vld [vmem:[#allocation8 + $0x660] sm:$0xff]
    %v6018 = vld [vmem:[#allocation8 + $0x668] sm:$0xff]
    %v6019 = vld [vmem:[#allocation8 + $0x670] sm:$0xff]
    %v6020 = vld [vmem:[#allocation8 + $0x678] sm:$0xff]
    %v6021 = vld [vmem:[#allocation8 + $0x680] sm:$0xff]
    %v6022 = vld [vmem:[#allocation8 + $0x688] sm:$0xff]
    %v6023 = vld [vmem:[#allocation8 + $0x690] sm:$0xff]
    %v6024 = vld [vmem:[#allocation8 + $0x698] sm:$0xff]
    %v6025 = vld [vmem:[#allocation8 + $0x6a0] sm:$0xff]
    %v6026 = vld [vmem:[#allocation8 + $0x6a8] sm:$0xff]
    %v6027 = vld [vmem:[#allocation8 + $0x6b0] sm:$0xff]
    %v6028 = vld [vmem:[#allocation8 + $0x6b8] sm:$0xff]
    %v6029 = vld [vmem:[#allocation8 + $0x6c0] sm:$0xff]
    %v6030 = vld [vmem:[#allocation8 + $0x6c8] sm:$0xff]
    %v6031 = vld [vmem:[#allocation8 + $0x6d0] sm:$0xff]
    %v6032 = vld [vmem:[#allocation8 + $0x6d8] sm:$0xff]
    %v6033 = vld [vmem:[#allocation8 + $0x6e0] sm:$0xff]
    %v6034 = vld [vmem:[#allocation8 + $0x6e8] sm:$0xff]
    %v6035 = vld [vmem:[#allocation8 + $0x6f0] sm:$0xff]
    %v6036 = vld [vmem:[#allocation8 + $0x6f8] sm:$0xff]
    %v6037 = vld [vmem:[#allocation8 + $0x700] sm:$0xff]
    %v6038 = vld [vmem:[#allocation8 + $0x708] sm:$0xff]
    %v6039 = vld [vmem:[#allocation8 + $0x710] sm:$0xff]
    %v6040 = vld [vmem:[#allocation8 + $0x718] sm:$0xff]
    %v6041 = vld [vmem:[#allocation8 + $0x720] sm:$0xff]
    %v6042 = vld [vmem:[#allocation8 + $0x728] sm:$0xff]
    %v6043 = vld [vmem:[#allocation8 + $0x730] sm:$0xff]
    %v6044 = vld [vmem:[#allocation8 + $0x738] sm:$0xff]
    %v6045 = vld [vmem:[#allocation8 + $0x740] sm:$0xff]
    %v6046 = vld [vmem:[#allocation8 + $0x748] sm:$0xff]
    %v6047 = vld [vmem:[#allocation8 + $0x750] sm:$0xff]
    %v6048 = vld [vmem:[#allocation8 + $0x758] sm:$0xff]
    %v6049 = vld [vmem:[#allocation8 + $0x760] sm:$0xff]
    %v6050 = vld [vmem:[#allocation8 + $0x768] sm:$0xff]
    %v6051 = vld [vmem:[#allocation8 + $0x770] sm:$0xff]
    %v6052 = vld [vmem:[#allocation8 + $0x778] sm:$0xff]
    %v6053 = vld [vmem:[#allocation8 + $0x780] sm:$0xff]
    %v6054 = vld [vmem:[#allocation8 + $0x788] sm:$0xff]
    %v6055 = vld [vmem:[#allocation8 + $0x790] sm:$0xff]
    %v6056 = vld [vmem:[#allocation8 + $0x798] sm:$0xff]
    %v6057 = vld [vmem:[#allocation8 + $0x7a0] sm:$0xff]
    %v6058 = vld [vmem:[#allocation8 + $0x7a8] sm:$0xff]
    %v6059 = vld [vmem:[#allocation8 + $0x7b0] sm:$0xff]
    %v6060 = vld [vmem:[#allocation8 + $0x7b8] sm:$0xff]
    %v6061 = vld [vmem:[#allocation8 + $0x7c0] sm:$0xff]
    %v6062 = vld [vmem:[#allocation8 + $0x7c8] sm:$0xff]
    %v6063 = vld [vmem:[#allocation8 + $0x7d0] sm:$0xff]
    %v6064 = vld [vmem:[#allocation8 + $0x7d8] sm:$0xff]
    %v6065 = vld [vmem:[#allocation8 + $0x7e0] sm:$0xff]
    %v6066 = vld [vmem:[#allocation8 + $0x7e8] sm:$0xff]
    %v6067 = vld [vmem:[#allocation8 + $0x7f0] sm:$0xff]
    %v6068 = vld [vmem:[#allocation8 + $0x7f8] sm:$0xff]
    %v6069 = vld [vmem:[#allocation9] sm:$0xff]
    %v6071 = vlaneseq
    %v6072 = vshrl.u32 %v6071, 7
    %v6073 = vsub.s32 0, %v6072
    %v6074 = vrot.slane %v6069, %v6073
    %v6075 = vlaneseq
    %v6076 = vshrl.u32 %v6075, 7
    %v6077 = vsub.s32 1, %v6076
    %v6078 = vrot.slane %v6069, %v6077
    %v6079 = vlaneseq
    %v6080 = vshrl.u32 %v6079, 7
    %v6081 = vsub.s32 2, %v6080
    %v6082 = vrot.slane %v6069, %v6081
    %v6083 = vlaneseq
    %v6084 = vshrl.u32 %v6083, 7
    %v6085 = vsub.s32 3, %v6084
    %v6086 = vrot.slane %v6069, %v6085
    %v6087 = vlaneseq
    %v6088 = vshrl.u32 %v6087, 7
    %v6089 = vsub.s32 4, %v6088
    %v6090 = vrot.slane %v6069, %v6089
    %v6091 = vlaneseq
    %v6092 = vshrl.u32 %v6091, 7
    %v6093 = vsub.s32 5, %v6092
    %v6094 = vrot.slane %v6069, %v6093
    %v6095 = vlaneseq
    %v6096 = vshrl.u32 %v6095, 7
    %v6097 = vsub.s32 6, %v6096
    %v6098 = vrot.slane %v6069, %v6097
    %v6099 = vlaneseq
    %v6100 = vshrl.u32 %v6099, 7
    %v6101 = vsub.s32 7, %v6100
    %v6102 = vrot.slane %v6069, %v6101
    %v6367 = vunpack.c.l.b16 %v5813
    %v6368 = vunpack.c.h.b16 %v5813
    %v6369 = vunpack.c.l.b16 %v5814
    %v6370 = vunpack.c.h.b16 %v5814
    %v6371 = vunpack.c.l.b16 %v5815
    %v6372 = vunpack.c.h.b16 %v5815
    %v6373 = vunpack.c.l.b16 %v5816
    %v6374 = vunpack.c.h.b16 %v5816
    %v6375 = vunpack.c.l.b16 %v5817
    %v6376 = vunpack.c.h.b16 %v5817
    %v6377 = vunpack.c.l.b16 %v5818
    %v6378 = vunpack.c.h.b16 %v5818
    %v6379 = vunpack.c.l.b16 %v5819
    %v6380 = vunpack.c.h.b16 %v5819
    %v6381 = vunpack.c.l.b16 %v5820
    %v6382 = vunpack.c.h.b16 %v5820
    %v6383 = vunpack.c.l.b16 %v5821
    %v6384 = vunpack.c.h.b16 %v5821
    %v6385 = vunpack.c.l.b16 %v5822
    %v6386 = vunpack.c.h.b16 %v5822
    %v6387 = vunpack.c.l.b16 %v5823
    %v6388 = vunpack.c.h.b16 %v5823
    %v6389 = vunpack.c.l.b16 %v5824
    %v6390 = vunpack.c.h.b16 %v5824
    %v6391 = vunpack.c.l.b16 %v5825
    %v6392 = vunpack.c.h.b16 %v5825
    %v6393 = vunpack.c.l.b16 %v5826
    %v6394 = vunpack.c.h.b16 %v5826
    %v6395 = vunpack.c.l.b16 %v5827
    %v6396 = vunpack.c.h.b16 %v5827
    %v6397 = vunpack.c.l.b16 %v5828
    %v6398 = vunpack.c.h.b16 %v5828
    %v6399 = vunpack.c.l.b16 %v5829
    %v6400 = vunpack.c.h.b16 %v5829
    %v6401 = vunpack.c.l.b16 %v5830
    %v6402 = vunpack.c.h.b16 %v5830
    %v6403 = vunpack.c.l.b16 %v5831
    %v6404 = vunpack.c.h.b16 %v5831
    %v6405 = vunpack.c.l.b16 %v5832
    %v6406 = vunpack.c.h.b16 %v5832
    %v6407 = vunpack.c.l.b16 %v5833
    %v6408 = vunpack.c.h.b16 %v5833
    %v6409 = vunpack.c.l.b16 %v5834
    %v6410 = vunpack.c.h.b16 %v5834
    %v6411 = vunpack.c.l.b16 %v5835
    %v6412 = vunpack.c.h.b16 %v5835
    %v6413 = vunpack.c.l.b16 %v5836
    %v6414 = vunpack.c.h.b16 %v5836
    %v6415 = vunpack.c.l.b16 %v5837
    %v6416 = vunpack.c.h.b16 %v5837
    %v6417 = vunpack.c.l.b16 %v5838
    %v6418 = vunpack.c.h.b16 %v5838
    %v6419 = vunpack.c.l.b16 %v5839
    %v6420 = vunpack.c.h.b16 %v5839
    %v6421 = vunpack.c.l.b16 %v5840
    %v6422 = vunpack.c.h.b16 %v5840
    %v6423 = vunpack.c.l.b16 %v5841
    %v6424 = vunpack.c.h.b16 %v5841
    %v6425 = vunpack.c.l.b16 %v5842
    %v6426 = vunpack.c.h.b16 %v5842
    %v6427 = vunpack.c.l.b16 %v5843
    %v6428 = vunpack.c.h.b16 %v5843
    %v6429 = vunpack.c.l.b16 %v5844
    %v6430 = vunpack.c.h.b16 %v5844
    %v6431 = vunpack.c.l.b16 %v5845
    %v6432 = vunpack.c.h.b16 %v5845
    %v6433 = vunpack.c.l.b16 %v5846
    %v6434 = vunpack.c.h.b16 %v5846
    %v6435 = vunpack.c.l.b16 %v5847
    %v6436 = vunpack.c.h.b16 %v5847
    %v6437 = vunpack.c.l.b16 %v5848
    %v6438 = vunpack.c.h.b16 %v5848
    %v6439 = vunpack.c.l.b16 %v5849
    %v6440 = vunpack.c.h.b16 %v5849
    %v6441 = vunpack.c.l.b16 %v5850
    %v6442 = vunpack.c.h.b16 %v5850
    %v6443 = vunpack.c.l.b16 %v5851
    %v6444 = vunpack.c.h.b16 %v5851
    %v6445 = vunpack.c.l.b16 %v5852
    %v6446 = vunpack.c.h.b16 %v5852
    %v6447 = vunpack.c.l.b16 %v5853
    %v6448 = vunpack.c.h.b16 %v5853
    %v6449 = vunpack.c.l.b16 %v5854
    %v6450 = vunpack.c.h.b16 %v5854
    %v6451 = vunpack.c.l.b16 %v5855
    %v6452 = vunpack.c.h.b16 %v5855
    %v6453 = vunpack.c.l.b16 %v5856
    %v6454 = vunpack.c.h.b16 %v5856
    %v6455 = vunpack.c.l.b16 %v5857
    %v6456 = vunpack.c.h.b16 %v5857
    %v6457 = vunpack.c.l.b16 %v5858
    %v6458 = vunpack.c.h.b16 %v5858
    %v6459 = vunpack.c.l.b16 %v5859
    %v6460 = vunpack.c.h.b16 %v5859
    %v6461 = vunpack.c.l.b16 %v5860
    %v6462 = vunpack.c.h.b16 %v5860
    %v6463 = vunpack.c.l.b16 %v5861
    %v6464 = vunpack.c.h.b16 %v5861
    %v6465 = vunpack.c.l.b16 %v5862
    %v6466 = vunpack.c.h.b16 %v5862
    %v6467 = vunpack.c.l.b16 %v5863
    %v6468 = vunpack.c.h.b16 %v5863
    %v6469 = vunpack.c.l.b16 %v5864
    %v6470 = vunpack.c.h.b16 %v5864
    %v6471 = vunpack.c.l.b16 %v5865
    %v6472 = vunpack.c.h.b16 %v5865
    %v6473 = vunpack.c.l.b16 %v5866
    %v6474 = vunpack.c.h.b16 %v5866
    %v6475 = vunpack.c.l.b16 %v5867
    %v6476 = vunpack.c.h.b16 %v5867
    %v6477 = vunpack.c.l.b16 %v5868
    %v6478 = vunpack.c.h.b16 %v5868
    %v6479 = vunpack.c.l.b16 %v5869
    %v6480 = vunpack.c.h.b16 %v5869
    %v6481 = vunpack.c.l.b16 %v5870
    %v6482 = vunpack.c.h.b16 %v5870
    %v6483 = vunpack.c.l.b16 %v5871
    %v6484 = vunpack.c.h.b16 %v5871
    %v6485 = vunpack.c.l.b16 %v5872
    %v6486 = vunpack.c.h.b16 %v5872
    %v6487 = vunpack.c.l.b16 %v5873
    %v6488 = vunpack.c.h.b16 %v5873
    %v6489 = vunpack.c.l.b16 %v5874
    %v6490 = vunpack.c.h.b16 %v5874
    %v6491 = vunpack.c.l.b16 %v5875
    %v6492 = vunpack.c.h.b16 %v5875
    %v6493 = vunpack.c.l.b16 %v5876
    %v6494 = vunpack.c.h.b16 %v5876
    %v6495 = vunpack.c.l.b16 %v5877
    %v6496 = vunpack.c.h.b16 %v5877
    %v6497 = vunpack.c.l.b16 %v5878
    %v6498 = vunpack.c.h.b16 %v5878
    %v6499 = vunpack.c.l.b16 %v5879
    %v6500 = vunpack.c.h.b16 %v5879
    %v6501 = vunpack.c.l.b16 %v5880
    %v6502 = vunpack.c.h.b16 %v5880
    %v6503 = vunpack.c.l.b16 %v5881
    %v6504 = vunpack.c.h.b16 %v5881
    %v6505 = vunpack.c.l.b16 %v5882
    %v6506 = vunpack.c.h.b16 %v5882
    %v6507 = vunpack.c.l.b16 %v5883
    %v6508 = vunpack.c.h.b16 %v5883
    %v6509 = vunpack.c.l.b16 %v5884
    %v6510 = vunpack.c.h.b16 %v5884
    %v6511 = vunpack.c.l.b16 %v5885
    %v6512 = vunpack.c.h.b16 %v5885
    %v6513 = vunpack.c.l.b16 %v5886
    %v6514 = vunpack.c.h.b16 %v5886
    %v6515 = vunpack.c.l.b16 %v5887
    %v6516 = vunpack.c.h.b16 %v5887
    %v6517 = vunpack.c.l.b16 %v5888
    %v6518 = vunpack.c.h.b16 %v5888
    %v6519 = vunpack.c.l.b16 %v5889
    %v6520 = vunpack.c.h.b16 %v5889
    %v6521 = vunpack.c.l.b16 %v5890
    %v6522 = vunpack.c.h.b16 %v5890
    %v6523 = vunpack.c.l.b16 %v5891
    %v6524 = vunpack.c.h.b16 %v5891
    %v6525 = vunpack.c.l.b16 %v5892
    %v6526 = vunpack.c.h.b16 %v5892
    %v6527 = vunpack.c.l.b16 %v5893
    %v6528 = vunpack.c.h.b16 %v5893
    %v6529 = vunpack.c.l.b16 %v5894
    %v6530 = vunpack.c.h.b16 %v5894
    %v6531 = vunpack.c.l.b16 %v5895
    %v6532 = vunpack.c.h.b16 %v5895
    %v6533 = vunpack.c.l.b16 %v5896
    %v6534 = vunpack.c.h.b16 %v5896
    %v6535 = vunpack.c.l.b16 %v5897
    %v6536 = vunpack.c.h.b16 %v5897
    %v6537 = vunpack.c.l.b16 %v5898
    %v6538 = vunpack.c.h.b16 %v5898
    %v6539 = vunpack.c.l.b16 %v5899
    %v6540 = vunpack.c.h.b16 %v5899
    %v6541 = vunpack.c.l.b16 %v5900
    %v6542 = vunpack.c.h.b16 %v5900
    %v6543 = vunpack.c.l.b16 %v5901
    %v6544 = vunpack.c.h.b16 %v5901
    %v6545 = vunpack.c.l.b16 %v5902
    %v6546 = vunpack.c.h.b16 %v5902
    %v6547 = vunpack.c.l.b16 %v5903
    %v6548 = vunpack.c.h.b16 %v5903
    %v6549 = vunpack.c.l.b16 %v5904
    %v6550 = vunpack.c.h.b16 %v5904
    %v6551 = vunpack.c.l.b16 %v5905
    %v6552 = vunpack.c.h.b16 %v5905
    %v6553 = vunpack.c.l.b16 %v5906
    %v6554 = vunpack.c.h.b16 %v5906
    %v6555 = vunpack.c.l.b16 %v5907
    %v6556 = vunpack.c.h.b16 %v5907
    %v6557 = vunpack.c.l.b16 %v5908
    %v6558 = vunpack.c.h.b16 %v5908
    %v6559 = vunpack.c.l.b16 %v5909
    %v6560 = vunpack.c.h.b16 %v5909
    %v6561 = vunpack.c.l.b16 %v5910
    %v6562 = vunpack.c.h.b16 %v5910
    %v6563 = vunpack.c.l.b16 %v5911
    %v6564 = vunpack.c.h.b16 %v5911
    %v6565 = vunpack.c.l.b16 %v5912
    %v6566 = vunpack.c.h.b16 %v5912
    %v6567 = vunpack.c.l.b16 %v5913
    %v6568 = vunpack.c.h.b16 %v5913
    %v6569 = vunpack.c.l.b16 %v5914
    %v6570 = vunpack.c.h.b16 %v5914
    %v6571 = vunpack.c.l.b16 %v5915
    %v6572 = vunpack.c.h.b16 %v5915
    %v6573 = vunpack.c.l.b16 %v5916
    %v6574 = vunpack.c.h.b16 %v5916
    %v6575 = vunpack.c.l.b16 %v5917
    %v6576 = vunpack.c.h.b16 %v5917
    %v6577 = vunpack.c.l.b16 %v5918
    %v6578 = vunpack.c.h.b16 %v5918
    %v6579 = vunpack.c.l.b16 %v5919
    %v6580 = vunpack.c.h.b16 %v5919
    %v6581 = vunpack.c.l.b16 %v5920
    %v6582 = vunpack.c.h.b16 %v5920
    %v6583 = vunpack.c.l.b16 %v5921
    %v6584 = vunpack.c.h.b16 %v5921
    %v6585 = vunpack.c.l.b16 %v5922
    %v6586 = vunpack.c.h.b16 %v5922
    %v6587 = vunpack.c.l.b16 %v5923
    %v6588 = vunpack.c.h.b16 %v5923
    %v6589 = vunpack.c.l.b16 %v5924
    %v6590 = vunpack.c.h.b16 %v5924
    %v6591 = vunpack.c.l.b16 %v5925
    %v6592 = vunpack.c.h.b16 %v5925
    %v6593 = vunpack.c.l.b16 %v5926
    %v6594 = vunpack.c.h.b16 %v5926
    %v6595 = vunpack.c.l.b16 %v5927
    %v6596 = vunpack.c.h.b16 %v5927
    %v6597 = vunpack.c.l.b16 %v5928
    %v6598 = vunpack.c.h.b16 %v5928
    %v6599 = vunpack.c.l.b16 %v5929
    %v6600 = vunpack.c.h.b16 %v5929
    %v6601 = vunpack.c.l.b16 %v5930
    %v6602 = vunpack.c.h.b16 %v5930
    %v6603 = vunpack.c.l.b16 %v5931
    %v6604 = vunpack.c.h.b16 %v5931
    %v6605 = vunpack.c.l.b16 %v5932
    %v6606 = vunpack.c.h.b16 %v5932
    %v6607 = vunpack.c.l.b16 %v5933
    %v6608 = vunpack.c.h.b16 %v5933
    %v6609 = vunpack.c.l.b16 %v5934
    %v6610 = vunpack.c.h.b16 %v5934
    %v6611 = vunpack.c.l.b16 %v5935
    %v6612 = vunpack.c.h.b16 %v5935
    %v6613 = vunpack.c.l.b16 %v5936
    %v6614 = vunpack.c.h.b16 %v5936
    %v6615 = vunpack.c.l.b16 %v5937
    %v6616 = vunpack.c.h.b16 %v5937
    %v6617 = vunpack.c.l.b16 %v5938
    %v6618 = vunpack.c.h.b16 %v5938
    %v6619 = vunpack.c.l.b16 %v5939
    %v6620 = vunpack.c.h.b16 %v5939
    %v6621 = vunpack.c.l.b16 %v5940
    %v6622 = vunpack.c.h.b16 %v5940
    %v6623 = vunpack.c.l.b16 %v5941
    %v6624 = vunpack.c.h.b16 %v5941
    %v6625 = vunpack.c.l.b16 %v5942
    %v6626 = vunpack.c.h.b16 %v5942
    %v6627 = vunpack.c.l.b16 %v5943
    %v6628 = vunpack.c.h.b16 %v5943
    %v6629 = vunpack.c.l.b16 %v5944
    %v6630 = vunpack.c.h.b16 %v5944
    %v6631 = vunpack.c.l.b16 %v5945
    %v6632 = vunpack.c.h.b16 %v5945
    %v6633 = vunpack.c.l.b16 %v5946
    %v6634 = vunpack.c.h.b16 %v5946
    %v6635 = vunpack.c.l.b16 %v5947
    %v6636 = vunpack.c.h.b16 %v5947
    %v6637 = vunpack.c.l.b16 %v5948
    %v6638 = vunpack.c.h.b16 %v5948
    %v6639 = vunpack.c.l.b16 %v5949
    %v6640 = vunpack.c.h.b16 %v5949
    %v6641 = vunpack.c.l.b16 %v5950
    %v6642 = vunpack.c.h.b16 %v5950
    %v6643 = vunpack.c.l.b16 %v5951
    %v6644 = vunpack.c.h.b16 %v5951
    %v6645 = vunpack.c.l.b16 %v5952
    %v6646 = vunpack.c.h.b16 %v5952
    %v6647 = vunpack.c.l.b16 %v5953
    %v6648 = vunpack.c.h.b16 %v5953
    %v6649 = vunpack.c.l.b16 %v5954
    %v6650 = vunpack.c.h.b16 %v5954
    %v6651 = vunpack.c.l.b16 %v5955
    %v6652 = vunpack.c.h.b16 %v5955
    %v6653 = vunpack.c.l.b16 %v5956
    %v6654 = vunpack.c.h.b16 %v5956
    %v6655 = vunpack.c.l.b16 %v5957
    %v6656 = vunpack.c.h.b16 %v5957
    %v6657 = vunpack.c.l.b16 %v5958
    %v6658 = vunpack.c.h.b16 %v5958
    %v6659 = vunpack.c.l.b16 %v5959
    %v6660 = vunpack.c.h.b16 %v5959
    %v6661 = vunpack.c.l.b16 %v5960
    %v6662 = vunpack.c.h.b16 %v5960
    %v6663 = vunpack.c.l.b16 %v5961
    %v6664 = vunpack.c.h.b16 %v5961
    %v6665 = vunpack.c.l.b16 %v5962
    %v6666 = vunpack.c.h.b16 %v5962
    %v6667 = vunpack.c.l.b16 %v5963
    %v6668 = vunpack.c.h.b16 %v5963
    %v6669 = vunpack.c.l.b16 %v5964
    %v6670 = vunpack.c.h.b16 %v5964
    %v6671 = vunpack.c.l.b16 %v5965
    %v6672 = vunpack.c.h.b16 %v5965
    %v6673 = vunpack.c.l.b16 %v5966
    %v6674 = vunpack.c.h.b16 %v5966
    %v6675 = vunpack.c.l.b16 %v5967
    %v6676 = vunpack.c.h.b16 %v5967
    %v6677 = vunpack.c.l.b16 %v5968
    %v6678 = vunpack.c.h.b16 %v5968
    %v6679 = vunpack.c.l.b16 %v5969
    %v6680 = vunpack.c.h.b16 %v5969
    %v6681 = vunpack.c.l.b16 %v5970
    %v6682 = vunpack.c.h.b16 %v5970
    %v6683 = vunpack.c.l.b16 %v5971
    %v6684 = vunpack.c.h.b16 %v5971
    %v6685 = vunpack.c.l.b16 %v5972
    %v6686 = vunpack.c.h.b16 %v5972
    %v6687 = vunpack.c.l.b16 %v5973
    %v6688 = vunpack.c.h.b16 %v5973
    %v6689 = vunpack.c.l.b16 %v5974
    %v6690 = vunpack.c.h.b16 %v5974
    %v6691 = vunpack.c.l.b16 %v5975
    %v6692 = vunpack.c.h.b16 %v5975
    %v6693 = vunpack.c.l.b16 %v5976
    %v6694 = vunpack.c.h.b16 %v5976
    %v6695 = vunpack.c.l.b16 %v5977
    %v6696 = vunpack.c.h.b16 %v5977
    %v6697 = vunpack.c.l.b16 %v5978
    %v6698 = vunpack.c.h.b16 %v5978
    %v6699 = vunpack.c.l.b16 %v5979
    %v6700 = vunpack.c.h.b16 %v5979
    %v6701 = vunpack.c.l.b16 %v5980
    %v6702 = vunpack.c.h.b16 %v5980
    %v6703 = vunpack.c.l.b16 %v5981
    %v6704 = vunpack.c.h.b16 %v5981
    %v6705 = vunpack.c.l.b16 %v5982
    %v6706 = vunpack.c.h.b16 %v5982
    %v6707 = vunpack.c.l.b16 %v5983
    %v6708 = vunpack.c.h.b16 %v5983
    %v6709 = vunpack.c.l.b16 %v5984
    %v6710 = vunpack.c.h.b16 %v5984
    %v6711 = vunpack.c.l.b16 %v5985
    %v6712 = vunpack.c.h.b16 %v5985
    %v6713 = vunpack.c.l.b16 %v5986
    %v6714 = vunpack.c.h.b16 %v5986
    %v6715 = vunpack.c.l.b16 %v5987
    %v6716 = vunpack.c.h.b16 %v5987
    %v6717 = vunpack.c.l.b16 %v5988
    %v6718 = vunpack.c.h.b16 %v5988
    %v6719 = vunpack.c.l.b16 %v5989
    %v6720 = vunpack.c.h.b16 %v5989
    %v6721 = vunpack.c.l.b16 %v5990
    %v6722 = vunpack.c.h.b16 %v5990
    %v6723 = vunpack.c.l.b16 %v5991
    %v6724 = vunpack.c.h.b16 %v5991
    %v6725 = vunpack.c.l.b16 %v5992
    %v6726 = vunpack.c.h.b16 %v5992
    %v6727 = vunpack.c.l.b16 %v5993
    %v6728 = vunpack.c.h.b16 %v5993
    %v6729 = vunpack.c.l.b16 %v5994
    %v6730 = vunpack.c.h.b16 %v5994
    %v6731 = vunpack.c.l.b16 %v5995
    %v6732 = vunpack.c.h.b16 %v5995
    %v6733 = vunpack.c.l.b16 %v5996
    %v6734 = vunpack.c.h.b16 %v5996
    %v6735 = vunpack.c.l.b16 %v5997
    %v6736 = vunpack.c.h.b16 %v5997
    %v6737 = vunpack.c.l.b16 %v5998
    %v6738 = vunpack.c.h.b16 %v5998
    %v6739 = vunpack.c.l.b16 %v5999
    %v6740 = vunpack.c.h.b16 %v5999
    %v6741 = vunpack.c.l.b16 %v6000
    %v6742 = vunpack.c.h.b16 %v6000
    %v6743 = vunpack.c.l.b16 %v6001
    %v6744 = vunpack.c.h.b16 %v6001
    %v6745 = vunpack.c.l.b16 %v6002
    %v6746 = vunpack.c.h.b16 %v6002
    %v6747 = vunpack.c.l.b16 %v6003
    %v6748 = vunpack.c.h.b16 %v6003
    %v6749 = vunpack.c.l.b16 %v6004
    %v6750 = vunpack.c.h.b16 %v6004
    %v6751 = vunpack.c.l.b16 %v6005
    %v6752 = vunpack.c.h.b16 %v6005
    %v6753 = vunpack.c.l.b16 %v6006
    %v6754 = vunpack.c.h.b16 %v6006
    %v6755 = vunpack.c.l.b16 %v6007
    %v6756 = vunpack.c.h.b16 %v6007
    %v6757 = vunpack.c.l.b16 %v6008
    %v6758 = vunpack.c.h.b16 %v6008
    %v6759 = vunpack.c.l.b16 %v6009
    %v6760 = vunpack.c.h.b16 %v6009
    %v6761 = vunpack.c.l.b16 %v6010
    %v6762 = vunpack.c.h.b16 %v6010
    %v6763 = vunpack.c.l.b16 %v6011
    %v6764 = vunpack.c.h.b16 %v6011
    %v6765 = vunpack.c.l.b16 %v6012
    %v6766 = vunpack.c.h.b16 %v6012
    %v6767 = vunpack.c.l.b16 %v6013
    %v6768 = vunpack.c.h.b16 %v6013
    %v6769 = vunpack.c.l.b16 %v6014
    %v6770 = vunpack.c.h.b16 %v6014
    %v6771 = vunpack.c.l.b16 %v6015
    %v6772 = vunpack.c.h.b16 %v6015
    %v6773 = vunpack.c.l.b16 %v6016
    %v6774 = vunpack.c.h.b16 %v6016
    %v6775 = vunpack.c.l.b16 %v6017
    %v6776 = vunpack.c.h.b16 %v6017
    %v6777 = vunpack.c.l.b16 %v6018
    %v6778 = vunpack.c.h.b16 %v6018
    %v6779 = vunpack.c.l.b16 %v6019
    %v6780 = vunpack.c.h.b16 %v6019
    %v6781 = vunpack.c.l.b16 %v6020
    %v6782 = vunpack.c.h.b16 %v6020
    %v6783 = vunpack.c.l.b16 %v6021
    %v6784 = vunpack.c.h.b16 %v6021
    %v6785 = vunpack.c.l.b16 %v6022
    %v6786 = vunpack.c.h.b16 %v6022
    %v6787 = vunpack.c.l.b16 %v6023
    %v6788 = vunpack.c.h.b16 %v6023
    %v6789 = vunpack.c.l.b16 %v6024
    %v6790 = vunpack.c.h.b16 %v6024
    %v6791 = vunpack.c.l.b16 %v6025
    %v6792 = vunpack.c.h.b16 %v6025
    %v6793 = vunpack.c.l.b16 %v6026
    %v6794 = vunpack.c.h.b16 %v6026
    %v6795 = vunpack.c.l.b16 %v6027
    %v6796 = vunpack.c.h.b16 %v6027
    %v6797 = vunpack.c.l.b16 %v6028
    %v6798 = vunpack.c.h.b16 %v6028
    %v6799 = vunpack.c.l.b16 %v6029
    %v6800 = vunpack.c.h.b16 %v6029
    %v6801 = vunpack.c.l.b16 %v6030
    %v6802 = vunpack.c.h.b16 %v6030
    %v6803 = vunpack.c.l.b16 %v6031
    %v6804 = vunpack.c.h.b16 %v6031
    %v6805 = vunpack.c.l.b16 %v6032
    %v6806 = vunpack.c.h.b16 %v6032
    %v6807 = vunpack.c.l.b16 %v6033
    %v6808 = vunpack.c.h.b16 %v6033
    %v6809 = vunpack.c.l.b16 %v6034
    %v6810 = vunpack.c.h.b16 %v6034
    %v6811 = vunpack.c.l.b16 %v6035
    %v6812 = vunpack.c.h.b16 %v6035
    %v6813 = vunpack.c.l.b16 %v6036
    %v6814 = vunpack.c.h.b16 %v6036
    %v6815 = vunpack.c.l.b16 %v6037
    %v6816 = vunpack.c.h.b16 %v6037
    %v6817 = vunpack.c.l.b16 %v6038
    %v6818 = vunpack.c.h.b16 %v6038
    %v6819 = vunpack.c.l.b16 %v6039
    %v6820 = vunpack.c.h.b16 %v6039
    %v6821 = vunpack.c.l.b16 %v6040
    %v6822 = vunpack.c.h.b16 %v6040
    %v6823 = vunpack.c.l.b16 %v6041
    %v6824 = vunpack.c.h.b16 %v6041
    %v6825 = vunpack.c.l.b16 %v6042
    %v6826 = vunpack.c.h.b16 %v6042
    %v6827 = vunpack.c.l.b16 %v6043
    %v6828 = vunpack.c.h.b16 %v6043
    %v6829 = vunpack.c.l.b16 %v6044
    %v6830 = vunpack.c.h.b16 %v6044
    %v6831 = vunpack.c.l.b16 %v6045
    %v6832 = vunpack.c.h.b16 %v6045
    %v6833 = vunpack.c.l.b16 %v6046
    %v6834 = vunpack.c.h.b16 %v6046
    %v6835 = vunpack.c.l.b16 %v6047
    %v6836 = vunpack.c.h.b16 %v6047
    %v6837 = vunpack.c.l.b16 %v6048
    %v6838 = vunpack.c.h.b16 %v6048
    %v6839 = vunpack.c.l.b16 %v6049
    %v6840 = vunpack.c.h.b16 %v6049
    %v6841 = vunpack.c.l.b16 %v6050
    %v6842 = vunpack.c.h.b16 %v6050
    %v6843 = vunpack.c.l.b16 %v6051
    %v6844 = vunpack.c.h.b16 %v6051
    %v6845 = vunpack.c.l.b16 %v6052
    %v6846 = vunpack.c.h.b16 %v6052
    %v6847 = vunpack.c.l.b16 %v6053
    %v6848 = vunpack.c.h.b16 %v6053
    %v6849 = vunpack.c.l.b16 %v6054
    %v6850 = vunpack.c.h.b16 %v6054
    %v6851 = vunpack.c.l.b16 %v6055
    %v6852 = vunpack.c.h.b16 %v6055
    %v6853 = vunpack.c.l.b16 %v6056
    %v6854 = vunpack.c.h.b16 %v6056
    %v6855 = vunpack.c.l.b16 %v6057
    %v6856 = vunpack.c.h.b16 %v6057
    %v6857 = vunpack.c.l.b16 %v6058
    %v6858 = vunpack.c.h.b16 %v6058
    %v6859 = vunpack.c.l.b16 %v6059
    %v6860 = vunpack.c.h.b16 %v6059
    %v6861 = vunpack.c.l.b16 %v6060
    %v6862 = vunpack.c.h.b16 %v6060
    %v6863 = vunpack.c.l.b16 %v6061
    %v6864 = vunpack.c.h.b16 %v6061
    %v6865 = vunpack.c.l.b16 %v6062
    %v6866 = vunpack.c.h.b16 %v6062
    %v6867 = vunpack.c.l.b16 %v6063
    %v6868 = vunpack.c.h.b16 %v6063
    %v6869 = vunpack.c.l.b16 %v6064
    %v6870 = vunpack.c.h.b16 %v6064
    %v6871 = vunpack.c.l.b16 %v6065
    %v6872 = vunpack.c.h.b16 %v6065
    %v6873 = vunpack.c.l.b16 %v6066
    %v6874 = vunpack.c.h.b16 %v6066
    %v6875 = vunpack.c.l.b16 %v6067
    %v6876 = vunpack.c.h.b16 %v6067
    %v6877 = vunpack.c.l.b16 %v6068
    %v6878 = vunpack.c.h.b16 %v6068
    %v6879 = vpack.c.b16 %v6375, %v6367
    %v6880 = vpack.c.b16 %v6376, %v6368
    %v6881 = vpack.c.b16 %v6377, %v6369
    %v6882 = vpack.c.b16 %v6378, %v6370
    %v6883 = vpack.c.b16 %v6379, %v6371
    %v6884 = vpack.c.b16 %v6380, %v6372
    %v6885 = vpack.c.b16 %v6381, %v6373
    %v6886 = vpack.c.b16 %v6382, %v6374
    %v6887 = vpack.c.b16 %v6391, %v6383
    %v6888 = vpack.c.b16 %v6392, %v6384
    %v6889 = vpack.c.b16 %v6393, %v6385
    %v6890 = vpack.c.b16 %v6394, %v6386
    %v6891 = vpack.c.b16 %v6395, %v6387
    %v6892 = vpack.c.b16 %v6396, %v6388
    %v6893 = vpack.c.b16 %v6397, %v6389
    %v6894 = vpack.c.b16 %v6398, %v6390
    %v6895 = vpack.c.b16 %v6407, %v6399
    %v6896 = vpack.c.b16 %v6408, %v6400
    %v6897 = vpack.c.b16 %v6409, %v6401
    %v6898 = vpack.c.b16 %v6410, %v6402
    %v6899 = vpack.c.b16 %v6411, %v6403
    %v6900 = vpack.c.b16 %v6412, %v6404
    %v6901 = vpack.c.b16 %v6413, %v6405
    %v6902 = vpack.c.b16 %v6414, %v6406
    %v6903 = vpack.c.b16 %v6423, %v6415
    %v6904 = vpack.c.b16 %v6424, %v6416
    %v6905 = vpack.c.b16 %v6425, %v6417
    %v6906 = vpack.c.b16 %v6426, %v6418
    %v6907 = vpack.c.b16 %v6427, %v6419
    %v6908 = vpack.c.b16 %v6428, %v6420
    %v6909 = vpack.c.b16 %v6429, %v6421
    %v6910 = vpack.c.b16 %v6430, %v6422
    %v6911 = vpack.c.b16 %v6439, %v6431
    %v6912 = vpack.c.b16 %v6440, %v6432
    %v6913 = vpack.c.b16 %v6441, %v6433
    %v6914 = vpack.c.b16 %v6442, %v6434
    %v6915 = vpack.c.b16 %v6443, %v6435
    %v6916 = vpack.c.b16 %v6444, %v6436
    %v6917 = vpack.c.b16 %v6445, %v6437
    %v6918 = vpack.c.b16 %v6446, %v6438
    %v6919 = vpack.c.b16 %v6455, %v6447
    %v6920 = vpack.c.b16 %v6456, %v6448
    %v6921 = vpack.c.b16 %v6457, %v6449
    %v6922 = vpack.c.b16 %v6458, %v6450
    %v6923 = vpack.c.b16 %v6459, %v6451
    %v6924 = vpack.c.b16 %v6460, %v6452
    %v6925 = vpack.c.b16 %v6461, %v6453
    %v6926 = vpack.c.b16 %v6462, %v6454
    %v6927 = vpack.c.b16 %v6471, %v6463
    %v6928 = vpack.c.b16 %v6472, %v6464
    %v6929 = vpack.c.b16 %v6473, %v6465
    %v6930 = vpack.c.b16 %v6474, %v6466
    %v6931 = vpack.c.b16 %v6475, %v6467
    %v6932 = vpack.c.b16 %v6476, %v6468
    %v6933 = vpack.c.b16 %v6477, %v6469
    %v6934 = vpack.c.b16 %v6478, %v6470
    %v6935 = vpack.c.b16 %v6487, %v6479
    %v6936 = vpack.c.b16 %v6488, %v6480
    %v6937 = vpack.c.b16 %v6489, %v6481
    %v6938 = vpack.c.b16 %v6490, %v6482
    %v6939 = vpack.c.b16 %v6491, %v6483
    %v6940 = vpack.c.b16 %v6492, %v6484
    %v6941 = vpack.c.b16 %v6493, %v6485
    %v6942 = vpack.c.b16 %v6494, %v6486
    %v6943 = vpack.c.b16 %v6503, %v6495
    %v6944 = vpack.c.b16 %v6504, %v6496
    %v6945 = vpack.c.b16 %v6505, %v6497
    %v6946 = vpack.c.b16 %v6506, %v6498
    %v6947 = vpack.c.b16 %v6507, %v6499
    %v6948 = vpack.c.b16 %v6508, %v6500
    %v6949 = vpack.c.b16 %v6509, %v6501
    %v6950 = vpack.c.b16 %v6510, %v6502
    %v6951 = vpack.c.b16 %v6519, %v6511
    %v6952 = vpack.c.b16 %v6520, %v6512
    %v6953 = vpack.c.b16 %v6521, %v6513
    %v6954 = vpack.c.b16 %v6522, %v6514
    %v6955 = vpack.c.b16 %v6523, %v6515
    %v6956 = vpack.c.b16 %v6524, %v6516
    %v6957 = vpack.c.b16 %v6525, %v6517
    %v6958 = vpack.c.b16 %v6526, %v6518
    %v6959 = vpack.c.b16 %v6535, %v6527
    %v6960 = vpack.c.b16 %v6536, %v6528
    %v6961 = vpack.c.b16 %v6537, %v6529
    %v6962 = vpack.c.b16 %v6538, %v6530
    %v6963 = vpack.c.b16 %v6539, %v6531
    %v6964 = vpack.c.b16 %v6540, %v6532
    %v6965 = vpack.c.b16 %v6541, %v6533
    %v6966 = vpack.c.b16 %v6542, %v6534
    %v6967 = vpack.c.b16 %v6551, %v6543
    %v6968 = vpack.c.b16 %v6552, %v6544
    %v6969 = vpack.c.b16 %v6553, %v6545
    %v6970 = vpack.c.b16 %v6554, %v6546
    %v6971 = vpack.c.b16 %v6555, %v6547
    %v6972 = vpack.c.b16 %v6556, %v6548
    %v6973 = vpack.c.b16 %v6557, %v6549
    %v6974 = vpack.c.b16 %v6558, %v6550
    %v6975 = vpack.c.b16 %v6567, %v6559
    %v6976 = vpack.c.b16 %v6568, %v6560
    %v6977 = vpack.c.b16 %v6569, %v6561
    %v6978 = vpack.c.b16 %v6570, %v6562
    %v6979 = vpack.c.b16 %v6571, %v6563
    %v6980 = vpack.c.b16 %v6572, %v6564
    %v6981 = vpack.c.b16 %v6573, %v6565
    %v6982 = vpack.c.b16 %v6574, %v6566
    %v6983 = vpack.c.b16 %v6583, %v6575
    %v6984 = vpack.c.b16 %v6584, %v6576
    %v6985 = vpack.c.b16 %v6585, %v6577
    %v6986 = vpack.c.b16 %v6586, %v6578
    %v6987 = vpack.c.b16 %v6587, %v6579
    %v6988 = vpack.c.b16 %v6588, %v6580
    %v6989 = vpack.c.b16 %v6589, %v6581
    %v6990 = vpack.c.b16 %v6590, %v6582
    %v6991 = vpack.c.b16 %v6599, %v6591
    %v6992 = vpack.c.b16 %v6600, %v6592
    %v6993 = vpack.c.b16 %v6601, %v6593
    %v6994 = vpack.c.b16 %v6602, %v6594
    %v6995 = vpack.c.b16 %v6603, %v6595
    %v6996 = vpack.c.b16 %v6604, %v6596
    %v6997 = vpack.c.b16 %v6605, %v6597
    %v6998 = vpack.c.b16 %v6606, %v6598
    %v6999 = vpack.c.b16 %v6615, %v6607
    %v7000 = vpack.c.b16 %v6616, %v6608
    %v7001 = vpack.c.b16 %v6617, %v6609
    %v7002 = vpack.c.b16 %v6618, %v6610
    %v7003 = vpack.c.b16 %v6619, %v6611
    %v7004 = vpack.c.b16 %v6620, %v6612
    %v7005 = vpack.c.b16 %v6621, %v6613
    %v7006 = vpack.c.b16 %v6622, %v6614
    %v7007 = vpack.c.b16 %v6631, %v6623
    %v7008 = vpack.c.b16 %v6632, %v6624
    %v7009 = vpack.c.b16 %v6633, %v6625
    %v7010 = vpack.c.b16 %v6634, %v6626
    %v7011 = vpack.c.b16 %v6635, %v6627
    %v7012 = vpack.c.b16 %v6636, %v6628
    %v7013 = vpack.c.b16 %v6637, %v6629
    %v7014 = vpack.c.b16 %v6638, %v6630
    %v7015 = vpack.c.b16 %v6647, %v6639
    %v7016 = vpack.c.b16 %v6648, %v6640
    %v7017 = vpack.c.b16 %v6649, %v6641
    %v7018 = vpack.c.b16 %v6650, %v6642
    %v7019 = vpack.c.b16 %v6651, %v6643
    %v7020 = vpack.c.b16 %v6652, %v6644
    %v7021 = vpack.c.b16 %v6653, %v6645
    %v7022 = vpack.c.b16 %v6654, %v6646
    %v7023 = vpack.c.b16 %v6663, %v6655
    %v7024 = vpack.c.b16 %v6664, %v6656
    %v7025 = vpack.c.b16 %v6665, %v6657
    %v7026 = vpack.c.b16 %v6666, %v6658
    %v7027 = vpack.c.b16 %v6667, %v6659
    %v7028 = vpack.c.b16 %v6668, %v6660
    %v7029 = vpack.c.b16 %v6669, %v6661
    %v7030 = vpack.c.b16 %v6670, %v6662
    %v7031 = vpack.c.b16 %v6679, %v6671
    %v7032 = vpack.c.b16 %v6680, %v6672
    %v7033 = vpack.c.b16 %v6681, %v6673
    %v7034 = vpack.c.b16 %v6682, %v6674
    %v7035 = vpack.c.b16 %v6683, %v6675
    %v7036 = vpack.c.b16 %v6684, %v6676
    %v7037 = vpack.c.b16 %v6685, %v6677
    %v7038 = vpack.c.b16 %v6686, %v6678
    %v7039 = vpack.c.b16 %v6695, %v6687
    %v7040 = vpack.c.b16 %v6696, %v6688
    %v7041 = vpack.c.b16 %v6697, %v6689
    %v7042 = vpack.c.b16 %v6698, %v6690
    %v7043 = vpack.c.b16 %v6699, %v6691
    %v7044 = vpack.c.b16 %v6700, %v6692
    %v7045 = vpack.c.b16 %v6701, %v6693
    %v7046 = vpack.c.b16 %v6702, %v6694
    %v7047 = vpack.c.b16 %v6711, %v6703
    %v7048 = vpack.c.b16 %v6712, %v6704
    %v7049 = vpack.c.b16 %v6713, %v6705
    %v7050 = vpack.c.b16 %v6714, %v6706
    %v7051 = vpack.c.b16 %v6715, %v6707
    %v7052 = vpack.c.b16 %v6716, %v6708
    %v7053 = vpack.c.b16 %v6717, %v6709
    %v7054 = vpack.c.b16 %v6718, %v6710
    %v7055 = vpack.c.b16 %v6727, %v6719
    %v7056 = vpack.c.b16 %v6728, %v6720
    %v7057 = vpack.c.b16 %v6729, %v6721
    %v7058 = vpack.c.b16 %v6730, %v6722
    %v7059 = vpack.c.b16 %v6731, %v6723
    %v7060 = vpack.c.b16 %v6732, %v6724
    %v7061 = vpack.c.b16 %v6733, %v6725
    %v7062 = vpack.c.b16 %v6734, %v6726
    %v7063 = vpack.c.b16 %v6743, %v6735
    %v7064 = vpack.c.b16 %v6744, %v6736
    %v7065 = vpack.c.b16 %v6745, %v6737
    %v7066 = vpack.c.b16 %v6746, %v6738
    %v7067 = vpack.c.b16 %v6747, %v6739
    %v7068 = vpack.c.b16 %v6748, %v6740
    %v7069 = vpack.c.b16 %v6749, %v6741
    %v7070 = vpack.c.b16 %v6750, %v6742
    %v7071 = vpack.c.b16 %v6759, %v6751
    %v7072 = vpack.c.b16 %v6760, %v6752
    %v7073 = vpack.c.b16 %v6761, %v6753
    %v7074 = vpack.c.b16 %v6762, %v6754
    %v7075 = vpack.c.b16 %v6763, %v6755
    %v7076 = vpack.c.b16 %v6764, %v6756
    %v7077 = vpack.c.b16 %v6765, %v6757
    %v7078 = vpack.c.b16 %v6766, %v6758
    %v7079 = vpack.c.b16 %v6775, %v6767
    %v7080 = vpack.c.b16 %v6776, %v6768
    %v7081 = vpack.c.b16 %v6777, %v6769
    %v7082 = vpack.c.b16 %v6778, %v6770
    %v7083 = vpack.c.b16 %v6779, %v6771
    %v7084 = vpack.c.b16 %v6780, %v6772
    %v7085 = vpack.c.b16 %v6781, %v6773
    %v7086 = vpack.c.b16 %v6782, %v6774
    %v7087 = vpack.c.b16 %v6791, %v6783
    %v7088 = vpack.c.b16 %v6792, %v6784
    %v7089 = vpack.c.b16 %v6793, %v6785
    %v7090 = vpack.c.b16 %v6794, %v6786
    %v7091 = vpack.c.b16 %v6795, %v6787
    %v7092 = vpack.c.b16 %v6796, %v6788
    %v7093 = vpack.c.b16 %v6797, %v6789
    %v7094 = vpack.c.b16 %v6798, %v6790
    %v7095 = vpack.c.b16 %v6807, %v6799
    %v7096 = vpack.c.b16 %v6808, %v6800
    %v7097 = vpack.c.b16 %v6809, %v6801
    %v7098 = vpack.c.b16 %v6810, %v6802
    %v7099 = vpack.c.b16 %v6811, %v6803
    %v7100 = vpack.c.b16 %v6812, %v6804
    %v7101 = vpack.c.b16 %v6813, %v6805
    %v7102 = vpack.c.b16 %v6814, %v6806
    %v7103 = vpack.c.b16 %v6823, %v6815
    %v7104 = vpack.c.b16 %v6824, %v6816
    %v7105 = vpack.c.b16 %v6825, %v6817
    %v7106 = vpack.c.b16 %v6826, %v6818
    %v7107 = vpack.c.b16 %v6827, %v6819
    %v7108 = vpack.c.b16 %v6828, %v6820
    %v7109 = vpack.c.b16 %v6829, %v6821
    %v7110 = vpack.c.b16 %v6830, %v6822
    %v7111 = vpack.c.b16 %v6839, %v6831
    %v7112 = vpack.c.b16 %v6840, %v6832
    %v7113 = vpack.c.b16 %v6841, %v6833
    %v7114 = vpack.c.b16 %v6842, %v6834
    %v7115 = vpack.c.b16 %v6843, %v6835
    %v7116 = vpack.c.b16 %v6844, %v6836
    %v7117 = vpack.c.b16 %v6845, %v6837
    %v7118 = vpack.c.b16 %v6846, %v6838
    %v7119 = vpack.c.b16 %v6855, %v6847
    %v7120 = vpack.c.b16 %v6856, %v6848
    %v7121 = vpack.c.b16 %v6857, %v6849
    %v7122 = vpack.c.b16 %v6858, %v6850
    %v7123 = vpack.c.b16 %v6859, %v6851
    %v7124 = vpack.c.b16 %v6860, %v6852
    %v7125 = vpack.c.b16 %v6861, %v6853
    %v7126 = vpack.c.b16 %v6862, %v6854
    %v7127 = vpack.c.b16 %v6871, %v6863
    %v7128 = vpack.c.b16 %v6872, %v6864
    %v7129 = vpack.c.b16 %v6873, %v6865
    %v7130 = vpack.c.b16 %v6874, %v6866
    %v7131 = vpack.c.b16 %v6875, %v6867
    %v7132 = vpack.c.b16 %v6876, %v6868
    %v7133 = vpack.c.b16 %v6877, %v6869
    %v7134 = vpack.c.b16 %v6878, %v6870
    %7391 = vmatprep.subr.bf16.mxu0 %v6880
    %7392 = vmatpush1.bf16.msra.mxu0 %v6879
    %7393 = vmatprep.subr.bf16.mxu0 %v6888
    %7394 = vmatpush1.bf16.msra.mxu0 %v6887
    %7395 = vmatprep.subr.bf16.mxu0 %v6896
    %7396 = vmatpush1.bf16.msra.mxu0 %v6895
    %7397 = vmatprep.subr.bf16.mxu0 %v6904
    %7398 = vmatpush1.bf16.msra.mxu0 %v6903
    %7399 = vmatprep.subr.bf16.mxu0 %v6912
    %7400 = vmatpush1.bf16.msra.mxu0 %v6911
    %7401 = vmatprep.subr.bf16.mxu0 %v6920
    %7402 = vmatpush1.bf16.msra.mxu0 %v6919
    %7403 = vmatprep.subr.bf16.mxu0 %v6928
    %7404 = vmatpush1.bf16.msra.mxu0 %v6927
    %7405 = vmatprep.subr.bf16.mxu0 %v6936
    %7406 = vmatpush1.bf16.msra.mxu0 %v6935
    %7407 = vmatprep.subr.bf16.mxu0 %v6944
    %7408 = vmatpush1.bf16.msra.mxu0 %v6943
    %7409 = vmatprep.subr.bf16.mxu0 %v6952
    %7410 = vmatpush1.bf16.msra.mxu0 %v6951
    %7411 = vmatprep.subr.bf16.mxu0 %v6960
    %7412 = vmatpush1.bf16.msra.mxu0 %v6959
    %7413 = vmatprep.subr.bf16.mxu0 %v6968
    %7414 = vmatpush1.bf16.msra.mxu0 %v6967
    %7415 = vmatprep.subr.bf16.mxu0 %v6976
    %7416 = vmatpush1.bf16.msra.mxu0 %v6975
    %7417 = vmatprep.subr.bf16.mxu0 %v6984
    %7418 = vmatpush1.bf16.msra.mxu0 %v6983
    %7419 = vmatprep.subr.bf16.mxu0 %v6992
    %7420 = vmatpush1.bf16.msra.mxu0 %v6991
    %7421 = vmatprep.subr.bf16.mxu0 %v7000
    %7422 = vmatpush1.bf16.msra.mxu0 %v6999
    %7423 = vmatprep.mubr.bf16.mxu0 %v5810
    %7424 = vmatmul.mubr.bf16.gmra.mrb[0].mxu0 %v5809
    %v7425 = vpop.f32.mrb[0].mxu0
    %v7426 = vadd.f32 %v6074, %v7425
    %v7427 = vpop.f32.mrb[0].mxu0
    %v7428 = vadd.f32 %v6078, %v7427
    %v7429 = vpop.f32.mrb[0].mxu0
    %v7430 = vpop.f32.mrb[0].mxu0
    %7431 = vdwg.mxu0
    %7432 = vmatprep.subr.bf16.mxu0 %v7008
    %7433 = vmatpush1.bf16.msra.mxu0 %v7007
    %7434 = vmatprep.subr.bf16.mxu0 %v7016
    %7435 = vmatpush1.bf16.msra.mxu0 %v7015
    %7436 = vmatprep.subr.bf16.mxu0 %v7024
    %7437 = vmatpush1.bf16.msra.mxu0 %v7023
    %7438 = vmatprep.subr.bf16.mxu0 %v7032
    %7439 = vmatpush1.bf16.msra.mxu0 %v7031
    %7440 = vmatprep.subr.bf16.mxu0 %v7040
    %7441 = vmatpush1.bf16.msra.mxu0 %v7039
    %7442 = vmatprep.subr.bf16.mxu0 %v7048
    %7443 = vmatpush1.bf16.msra.mxu0 %v7047
    %7444 = vmatprep.subr.bf16.mxu0 %v7056
    %7445 = vmatpush1.bf16.msra.mxu0 %v7055
    %7446 = vmatprep.subr.bf16.mxu0 %v7064
    %7447 = vmatpush1.bf16.msra.mxu0 %v7063
    %7448 = vmatprep.subr.bf16.mxu0 %v7072
    %7449 = vmatpush1.bf16.msra.mxu0 %v7071
    %7450 = vmatprep.subr.bf16.mxu0 %v7080
    %7451 = vmatpush1.bf16.msra.mxu0 %v7079
    %7452 = vmatprep.subr.bf16.mxu0 %v7088
    %7453 = vmatpush1.bf16.msra.mxu0 %v7087
    %7454 = vmatprep.subr.bf16.mxu0 %v7096
    %7455 = vmatpush1.bf16.msra.mxu0 %v7095
    %7456 = vmatprep.subr.bf16.mxu0 %v7104
    %7457 = vmatpush1.bf16.msra.mxu0 %v7103
    %7458 = vmatprep.subr.bf16.mxu0 %v7112
    %7459 = vmatpush1.bf16.msra.mxu0 %v7111
    %7460 = vmatprep.subr.bf16.mxu0 %v7120
    %7461 = vmatpush1.bf16.msra.mxu0 %v7119
    %7462 = vmatprep.subr.bf16.mxu0 %v7128
    %7463 = vmatpush1.bf16.msra.mxu0 %v7127
    %7464 = vmatprep.mubr.bf16.mxu0 %v5812
    %7465 = vmatmul.mubr.bf16.gmra.mrb[0].mxu0 %v5811
    %v7466 = vpop.f32.mrb[0].mxu0
    %v7467 = vadd.f32 %v7426, %v7466
    %v7468 = vpop.f32.mrb[0].mxu0
    %v7469 = vadd.f32 %v7428, %v7468
    %v7470 = vpop.f32.mrb[0].mxu0
    %v7471 = vpop.f32.mrb[0].mxu0
    %7472 = vdwg.mxu0
    %7473 = vmatprep.subr.bf16.mxu0 %v6882
    %7474 = vmatpush1.bf16.msra.mxu0 %v6881
    %7475 = vmatprep.subr.bf16.mxu0 %v6890
    %7476 = vmatpush1.bf16.msra.mxu0 %v6889
    %7477 = vmatprep.subr.bf16.mxu0 %v6898
    %7478 = vmatpush1.bf16.msra.mxu0 %v6897
    %7479 = vmatprep.subr.bf16.mxu0 %v6906
    %7480 = vmatpush1.bf16.msra.mxu0 %v6905
    %7481 = vmatprep.subr.bf16.mxu0 %v6914
    %7482 = vmatpush1.bf16.msra.mxu0 %v6913
    %7483 = vmatprep.subr.bf16.mxu0 %v6922
    %7484 = vmatpush1.bf16.msra.mxu0 %v6921
    %7485 = vmatprep.subr.bf16.mxu0 %v6930
    %7486 = vmatpush1.bf16.msra.mxu0 %v6929
    %7487 = vmatprep.subr.bf16.mxu0 %v6938
    %7488 = vmatpush1.bf16.msra.mxu0 %v6937
    %7489 = vmatprep.subr.bf16.mxu0 %v6946
    %7490 = vmatpush1.bf16.msra.mxu0 %v6945
    %7491 = vmatprep.subr.bf16.mxu0 %v6954
    %7492 = vmatpush1.bf16.msra.mxu0 %v6953
    %7493 = vmatprep.subr.bf16.mxu0 %v6962
    %7494 = vmatpush1.bf16.msra.mxu0 %v6961
    %7495 = vmatprep.subr.bf16.mxu0 %v6970
    %7496 = vmatpush1.bf16.msra.mxu0 %v6969
    %7497 = vmatprep.subr.bf16.mxu0 %v6978
    %7498 = vmatpush1.bf16.msra.mxu0 %v6977
    %7499 = vmatprep.subr.bf16.mxu0 %v6986
    %7500 = vmatpush1.bf16.msra.mxu0 %v6985
    %7501 = vmatprep.subr.bf16.mxu0 %v6994
    %7502 = vmatpush1.bf16.msra.mxu0 %v6993
    %7503 = vmatprep.subr.bf16.mxu0 %v7002
    %7504 = vmatpush1.bf16.msra.mxu0 %v7001
    %7505 = vmatprep.mubr.bf16.mxu0 %v5810
    %7506 = vmatmul.mubr.bf16.gmra.mrb[0].mxu0 %v5809
    %v7507 = vpop.f32.mrb[0].mxu0
    %v7508 = vadd.f32 %v6082, %v7507
    %v7509 = vpop.f32.mrb[0].mxu0
    %v7510 = vadd.f32 %v6086, %v7509
    %v7511 = vpop.f32.mrb[0].mxu0
    %v7512 = vpop.f32.mrb[0].mxu0
    %7513 = vdwg.mxu0
    %7514 = vmatprep.subr.bf16.mxu0 %v7010
    %7515 = vmatpush1.bf16.msra.mxu0 %v7009
    %7516 = vmatprep.subr.bf16.mxu0 %v7018
    %7517 = vmatpush1.bf16.msra.mxu0 %v7017
    %7518 = vmatprep.subr.bf16.mxu0 %v7026
    %7519 = vmatpush1.bf16.msra.mxu0 %v7025
    %7520 = vmatprep.subr.bf16.mxu0 %v7034
    %7521 = vmatpush1.bf16.msra.mxu0 %v7033
    %7522 = vmatprep.subr.bf16.mxu0 %v7042
    %7523 = vmatpush1.bf16.msra.mxu0 %v7041
    %7524 = vmatprep.subr.bf16.mxu0 %v7050
    %7525 = vmatpush1.bf16.msra.mxu0 %v7049
    %7526 = vmatprep.subr.bf16.mxu0 %v7058
    %7527 = vmatpush1.bf16.msra.mxu0 %v7057
    %7528 = vmatprep.subr.bf16.mxu0 %v7066
    %7529 = vmatpush1.bf16.msra.mxu0 %v7065
    %7530 = vmatprep.subr.bf16.mxu0 %v7074
    %7531 = vmatpush1.bf16.msra.mxu0 %v7073
    %7532 = vmatprep.subr.bf16.mxu0 %v7082
    %7533 = vmatpush1.bf16.msra.mxu0 %v7081
    %7534 = vmatprep.subr.bf16.mxu0 %v7090
    %7535 = vmatpush1.bf16.msra.mxu0 %v7089
    %7536 = vmatprep.subr.bf16.mxu0 %v7098
    %7537 = vmatpush1.bf16.msra.mxu0 %v7097
    %7538 = vmatprep.subr.bf16.mxu0 %v7106
    %7539 = vmatpush1.bf16.msra.mxu0 %v7105
    %7540 = vmatprep.subr.bf16.mxu0 %v7114
    %7541 = vmatpush1.bf16.msra.mxu0 %v7113
    %7542 = vmatprep.subr.bf16.mxu0 %v7122
    %7543 = vmatpush1.bf16.msra.mxu0 %v7121
    %7544 = vmatprep.subr.bf16.mxu0 %v7130
    %7545 = vmatpush1.bf16.msra.mxu0 %v7129
    %7546 = vmatprep.mubr.bf16.mxu0 %v5812
    %7547 = vmatmul.mubr.bf16.gmra.mrb[0].mxu0 %v5811
    %v7548 = vpop.f32.mrb[0].mxu0
    %v7549 = vadd.f32 %v7508, %v7548
    %v7550 = vpop.f32.mrb[0].mxu0
    %v7551 = vadd.f32 %v7510, %v7550
    %v7552 = vpop.f32.mrb[0].mxu0
    %v7553 = vpop.f32.mrb[0].mxu0
    %7554 = vdwg.mxu0
    %7555 = vmatprep.subr.bf16.mxu0 %v6884
    %7556 = vmatpush1.bf16.msra.mxu0 %v6883
    %7557 = vmatprep.subr.bf16.mxu0 %v6892
    %7558 = vmatpush1.bf16.msra.mxu0 %v6891
    %7559 = vmatprep.subr.bf16.mxu0 %v6900
    %7560 = vmatpush1.bf16.msra.mxu0 %v6899
    %7561 = vmatprep.subr.bf16.mxu0 %v6908
    %7562 = vmatpush1.bf16.msra.mxu0 %v6907
    %7563 = vmatprep.subr.bf16.mxu0 %v6916
    %7564 = vmatpush1.bf16.msra.mxu0 %v6915
    %7565 = vmatprep.subr.bf16.mxu0 %v6924
    %7566 = vmatpush1.bf16.msra.mxu0 %v6923
    %7567 = vmatprep.subr.bf16.mxu0 %v6932
    %7568 = vmatpush1.bf16.msra.mxu0 %v6931
    %7569 = vmatprep.subr.bf16.mxu0 %v6940
    %7570 = vmatpush1.bf16.msra.mxu0 %v6939
    %7571 = vmatprep.subr.bf16.mxu0 %v6948
    %7572 = vmatpush1.bf16.msra.mxu0 %v6947
    %7573 = vmatprep.subr.bf16.mxu0 %v6956
    %7574 = vmatpush1.bf16.msra.mxu0 %v6955
    %7575 = vmatprep.subr.bf16.mxu0 %v6964
    %7576 = vmatpush1.bf16.msra.mxu0 %v6963
    %7577 = vmatprep.subr.bf16.mxu0 %v6972
    %7578 = vmatpush1.bf16.msra.mxu0 %v6971
    %7579 = vmatprep.subr.bf16.mxu0 %v6980
    %7580 = vmatpush1.bf16.msra.mxu0 %v6979
    %7581 = vmatprep.subr.bf16.mxu0 %v6988
    %7582 = vmatpush1.bf16.msra.mxu0 %v6987
    %7583 = vmatprep.subr.bf16.mxu0 %v6996
    %7584 = vmatpush1.bf16.msra.mxu0 %v6995
    %7585 = vmatprep.subr.bf16.mxu0 %v7004
    %7586 = vmatpush1.bf16.msra.mxu0 %v7003
    %7587 = vmatprep.mubr.bf16.mxu0 %v5810
    %7588 = vmatmul.mubr.bf16.gmra.mrb[0].mxu0 %v5809
    %v7589 = vpop.f32.mrb[0].mxu0
    %v7590 = vadd.f32 %v6090, %v7589
    %v7591 = vpop.f32.mrb[0].mxu0
    %v7592 = vadd.f32 %v6094, %v7591
    %v7593 = vpop.f32.mrb[0].mxu0
    %v7594 = vpop.f32.mrb[0].mxu0
    %7595 = vdwg.mxu0
    %7596 = vmatprep.subr.bf16.mxu0 %v7012
    %7597 = vmatpush1.bf16.msra.mxu0 %v7011
    %7598 = vmatprep.subr.bf16.mxu0 %v7020
    %7599 = vmatpush1.bf16.msra.mxu0 %v7019
    %7600 = vmatprep.subr.bf16.mxu0 %v7028
    %7601 = vmatpush1.bf16.msra.mxu0 %v7027
    %7602 = vmatprep.subr.bf16.mxu0 %v7036
    %7603 = vmatpush1.bf16.msra.mxu0 %v7035
    %7604 = vmatprep.subr.bf16.mxu0 %v7044
    %7605 = vmatpush1.bf16.msra.mxu0 %v7043
    %7606 = vmatprep.subr.bf16.mxu0 %v7052
    %7607 = vmatpush1.bf16.msra.mxu0 %v7051
    %7608 = vmatprep.subr.bf16.mxu0 %v7060
    %7609 = vmatpush1.bf16.msra.mxu0 %v7059
    %7610 = vmatprep.subr.bf16.mxu0 %v7068
    %7611 = vmatpush1.bf16.msra.mxu0 %v7067
    %7612 = vmatprep.subr.bf16.mxu0 %v7076
    %7613 = vmatpush1.bf16.msra.mxu0 %v7075
    %7614 = vmatprep.subr.bf16.mxu0 %v7084
    %7615 = vmatpush1.bf16.msra.mxu0 %v7083
    %7616 = vmatprep.subr.bf16.mxu0 %v7092
    %7617 = vmatpush1.bf16.msra.mxu0 %v7091
    %7618 = vmatprep.subr.bf16.mxu0 %v7100
    %7619 = vmatpush1.bf16.msra.mxu0 %v7099
    %7620 = vmatprep.subr.bf16.mxu0 %v7108
    %7621 = vmatpush1.bf16.msra.mxu0 %v7107
    %7622 = vmatprep.subr.bf16.mxu0 %v7116
    %7623 = vmatpush1.bf16.msra.mxu0 %v7115
    %7624 = vmatprep.subr.bf16.mxu0 %v7124
    %7625 = vmatpush1.bf16.msra.mxu0 %v7123
    %7626 = vmatprep.subr.bf16.mxu0 %v7132
    %7627 = vmatpush1.bf16.msra.mxu0 %v7131
    %7628 = vmatprep.mubr.bf16.mxu0 %v5812
    %7629 = vmatmul.mubr.bf16.gmra.mrb[0].mxu0 %v5811
    %v7630 = vpop.f32.mrb[0].mxu0
    %v7631 = vadd.f32 %v7590, %v7630
    %v7632 = vpop.f32.mrb[0].mxu0
    %v7633 = vadd.f32 %v7592, %v7632
    %v7634 = vpop.f32.mrb[0].mxu0
    %v7635 = vpop.f32.mrb[0].mxu0
    %7636 = vdwg.mxu0
    %7637 = vmatprep.subr.bf16.mxu0 %v6886
    %7638 = vmatpush1.bf16.msra.mxu0 %v6885
    %7639 = vmatprep.subr.bf16.mxu0 %v6894
    %7640 = vmatpush1.bf16.msra.mxu0 %v6893
    %7641 = vmatprep.subr.bf16.mxu0 %v6902
    %7642 = vmatpush1.bf16.msra.mxu0 %v6901
    %7643 = vmatprep.subr.bf16.mxu0 %v6910
    %7644 = vmatpush1.bf16.msra.mxu0 %v6909
    %7645 = vmatprep.subr.bf16.mxu0 %v6918
    %7646 = vmatpush1.bf16.msra.mxu0 %v6917
    %7647 = vmatprep.subr.bf16.mxu0 %v6926
    %7648 = vmatpush1.bf16.msra.mxu0 %v6925
    %7649 = vmatprep.subr.bf16.mxu0 %v6934
    %7650 = vmatpush1.bf16.msra.mxu0 %v6933
    %7651 = vmatprep.subr.bf16.mxu0 %v6942
    %7652 = vmatpush1.bf16.msra.mxu0 %v6941
    %7653 = vmatprep.subr.bf16.mxu0 %v6950
    %7654 = vmatpush1.bf16.msra.mxu0 %v6949
    %7655 = vmatprep.subr.bf16.mxu0 %v6958
    %7656 = vmatpush1.bf16.msra.mxu0 %v6957
    %7657 = vmatprep.subr.bf16.mxu0 %v6966
    %7658 = vmatpush1.bf16.msra.mxu0 %v6965
    %7659 = vmatprep.subr.bf16.mxu0 %v6974
    %7660 = vmatpush1.bf16.msra.mxu0 %v6973
    %7661 = vmatprep.subr.bf16.mxu0 %v6982
    %7662 = vmatpush1.bf16.msra.mxu0 %v6981
    %7663 = vmatprep.subr.bf16.mxu0 %v6990
    %7664 = vmatpush1.bf16.msra.mxu0 %v6989
    %7665 = vmatprep.subr.bf16.mxu0 %v6998
    %7666 = vmatpush1.bf16.msra.mxu0 %v6997
    %7667 = vmatprep.subr.bf16.mxu0 %v7006
    %7668 = vmatpush1.bf16.msra.mxu0 %v7005
    %7669 = vmatprep.mubr.bf16.mxu0 %v5810
    %7670 = vmatmul.mubr.bf16.gmra.mrb[0].mxu0 %v5809
    %v7671 = vpop.f32.mrb[0].mxu0
    %v7672 = vadd.f32 %v6098, %v7671
    %v7673 = vpop.f32.mrb[0].mxu0
    %v7674 = vadd.f32 %v6102, %v7673
    %v7675 = vpop.f32.mrb[0].mxu0
    %v7676 = vpop.f32.mrb[0].mxu0
    %7677 = vdwg.mxu0
    %7678 = vmatprep.subr.bf16.mxu0 %v7014
    %7679 = vmatpush1.bf16.msra.mxu0 %v7013
    %7680 = vmatprep.subr.bf16.mxu0 %v7022
    %7681 = vmatpush1.bf16.msra.mxu0 %v7021
    %7682 = vmatprep.subr.bf16.mxu0 %v7030
    %7683 = vmatpush1.bf16.msra.mxu0 %v7029
    %7684 = vmatprep.subr.bf16.mxu0 %v7038
    %7685 = vmatpush1.bf16.msra.mxu0 %v7037
    %7686 = vmatprep.subr.bf16.mxu0 %v7046
    %7687 = vmatpush1.bf16.msra.mxu0 %v7045
    %7688 = vmatprep.subr.bf16.mxu0 %v7054
    %7689 = vmatpush1.bf16.msra.mxu0 %v7053
    %7690 = vmatprep.subr.bf16.mxu0 %v7062
    %7691 = vmatpush1.bf16.msra.mxu0 %v7061
    %7692 = vmatprep.subr.bf16.mxu0 %v7070
    %7693 = vmatpush1.bf16.msra.mxu0 %v7069
    %7694 = vmatprep.subr.bf16.mxu0 %v7078
    %7695 = vmatpush1.bf16.msra.mxu0 %v7077
    %7696 = vmatprep.subr.bf16.mxu0 %v7086
    %7697 = vmatpush1.bf16.msra.mxu0 %v7085
    %7698 = vmatprep.subr.bf16.mxu0 %v7094
    %7699 = vmatpush1.bf16.msra.mxu0 %v7093
    %7700 = vmatprep.subr.bf16.mxu0 %v7102
    %7701 = vmatpush1.bf16.msra.mxu0 %v7101
    %7702 = vmatprep.subr.bf16.mxu0 %v7110
    %7703 = vmatpush1.bf16.msra.mxu0 %v7109
    %7704 = vmatprep.subr.bf16.mxu0 %v7118
    %7705 = vmatpush1.bf16.msra.mxu0 %v7117
    %7706 = vmatprep.subr.bf16.mxu0 %v7126
    %7707 = vmatpush1.bf16.msra.mxu0 %v7125
    %7708 = vmatprep.subr.bf16.mxu0 %v7134
    %7709 = vmatpush1.bf16.msra.mxu0 %v7133
    %7710 = vmatprep.mubr.bf16.mxu0 %v5812
    %7711 = vmatmul.mubr.bf16.gmra.mrb[0].mxu0 %v5811
    %v7712 = vpop.f32.mrb[0].mxu0
    %v7713 = vadd.f32 %v7672, %v7712
    %v7714 = vpop.f32.mrb[0].mxu0
    %v7715 = vadd.f32 %v7674, %v7714
    %v7716 = vpop.f32.mrb[0].mxu0
    %v7717 = vpop.f32.mrb[0].mxu0
    %7718 = vdwg.mxu0
    %v7719 = vmax.f32 %v7467, 0.0
    %v7720 = vmax.f32 %v7469, 0.0
    %v7721 = vmax.f32 %v7549, 0.0
    %v7722 = vmax.f32 %v7551, 0.0
    %v7723 = vmax.f32 %v7631, 0.0
    %v7724 = vmax.f32 %v7633, 0.0
    %v7725 = vmax.f32 %v7713, 0.0
    %v7726 = vmax.f32 %v7715, 0.0
    %v7727 = vpack.c.bf16 %v7719, %v7719
    %v7728 = vpack.c.bf16 %v7720, %v7720
    %v7729 = vpack.c.bf16 %v7721, %v7721
    %v7730 = vpack.c.bf16 %v7722, %v7722
    %v7731 = vpack.c.bf16 %v7723, %v7723
    %v7732 = vpack.c.bf16 %v7724, %v7724
    %v7733 = vpack.c.bf16 %v7725, %v7725
    %v7734 = vpack.c.bf16 %v7726, %v7726
    %v7735 = vld [vmem:[#allocation11] sm:$0xf]
    %v7736 = vld [vmem:[#allocation11 + $0x4] sm:$0xf]
    %v7737 = vld [vmem:[#allocation11 + $0x8] sm:$0xf]
    %v7738 = vld [vmem:[#allocation11 + $0xc] sm:$0xf]
    %v7739 = vld [vmem:[#allocation11 + $0x10] sm:$0xf]
    %v7740 = vld [vmem:[#allocation11 + $0x14] sm:$0xf]
    %v7741 = vld [vmem:[#allocation11 + $0x18] sm:$0xf]
    %v7742 = vld [vmem:[#allocation11 + $0x1c] sm:$0xf]
    %v7743 = vld [vmem:[#allocation11 + $0x20] sm:$0xf]
    %v7744 = vld [vmem:[#allocation11 + $0x24] sm:$0xf]
    %v7745 = vld [vmem:[#allocation11 + $0x28] sm:$0xf]
    %v7746 = vld [vmem:[#allocation11 + $0x2c] sm:$0xf]
    %v7747 = vld [vmem:[#allocation11 + $0x30] sm:$0xf]
    %v7748 = vld [vmem:[#allocation11 + $0x34] sm:$0xf]
    %v7749 = vld [vmem:[#allocation11 + $0x38] sm:$0xf]
    %v7750 = vld [vmem:[#allocation11 + $0x3c] sm:$0xf]
    %v7751 = vld [vmem:[#allocation11 + $0x40] sm:$0xf]
    %v7752 = vld [vmem:[#allocation11 + $0x44] sm:$0xf]
    %v7753 = vld [vmem:[#allocation11 + $0x48] sm:$0xf]
    %v7754 = vld [vmem:[#allocation11 + $0x4c] sm:$0xf]
    %v7755 = vld [vmem:[#allocation11 + $0x50] sm:$0xf]
    %v7756 = vld [vmem:[#allocation11 + $0x54] sm:$0xf]
    %v7757 = vld [vmem:[#allocation11 + $0x58] sm:$0xf]
    %v7758 = vld [vmem:[#allocation11 + $0x5c] sm:$0xf]
    %v7759 = vld [vmem:[#allocation11 + $0x60] sm:$0xf]
    %v7760 = vld [vmem:[#allocation11 + $0x64] sm:$0xf]
    %v7761 = vld [vmem:[#allocation11 + $0x68] sm:$0xf]
    %v7762 = vld [vmem:[#allocation11 + $0x6c] sm:$0xf]
    %v7763 = vld [vmem:[#allocation11 + $0x70] sm:$0xf]
    %v7764 = vld [vmem:[#allocation11 + $0x74] sm:$0xf]
    %v7765 = vld [vmem:[#allocation11 + $0x78] sm:$0xf]
    %v7766 = vld [vmem:[#allocation11 + $0x7c] sm:$0xf]
    %v7767 = vld [vmem:[#allocation11 + $0x80] sm:$0xf]
    %v7768 = vld [vmem:[#allocation11 + $0x84] sm:$0xf]
    %v7769 = vld [vmem:[#allocation11 + $0x88] sm:$0xf]
    %v7770 = vld [vmem:[#allocation11 + $0x8c] sm:$0xf]
    %v7771 = vld [vmem:[#allocation11 + $0x90] sm:$0xf]
    %v7772 = vld [vmem:[#allocation11 + $0x94] sm:$0xf]
    %v7773 = vld [vmem:[#allocation11 + $0x98] sm:$0xf]
    %v7774 = vld [vmem:[#allocation11 + $0x9c] sm:$0xf]
    %v7775 = vld [vmem:[#allocation11 + $0xa0] sm:$0xf]
    %v7776 = vld [vmem:[#allocation11 + $0xa4] sm:$0xf]
    %v7777 = vld [vmem:[#allocation11 + $0xa8] sm:$0xf]
    %v7778 = vld [vmem:[#allocation11 + $0xac] sm:$0xf]
    %v7779 = vld [vmem:[#allocation11 + $0xb0] sm:$0xf]
    %v7780 = vld [vmem:[#allocation11 + $0xb4] sm:$0xf]
    %v7781 = vld [vmem:[#allocation11 + $0xb8] sm:$0xf]
    %v7782 = vld [vmem:[#allocation11 + $0xbc] sm:$0xf]
    %v7783 = vld [vmem:[#allocation11 + $0xc0] sm:$0xf]
    %v7784 = vld [vmem:[#allocation11 + $0xc4] sm:$0xf]
    %v7785 = vld [vmem:[#allocation11 + $0xc8] sm:$0xf]
    %v7786 = vld [vmem:[#allocation11 + $0xcc] sm:$0xf]
    %v7787 = vld [vmem:[#allocation11 + $0xd0] sm:$0xf]
    %v7788 = vld [vmem:[#allocation11 + $0xd4] sm:$0xf]
    %v7789 = vld [vmem:[#allocation11 + $0xd8] sm:$0xf]
    %v7790 = vld [vmem:[#allocation11 + $0xdc] sm:$0xf]
    %v7791 = vld [vmem:[#allocation11 + $0xe0] sm:$0xf]
    %v7792 = vld [vmem:[#allocation11 + $0xe4] sm:$0xf]
    %v7793 = vld [vmem:[#allocation11 + $0xe8] sm:$0xf]
    %v7794 = vld [vmem:[#allocation11 + $0xec] sm:$0xf]
    %v7795 = vld [vmem:[#allocation11 + $0xf0] sm:$0xf]
    %v7796 = vld [vmem:[#allocation11 + $0xf4] sm:$0xf]
    %v7797 = vld [vmem:[#allocation11 + $0xf8] sm:$0xf]
    %v7798 = vld [vmem:[#allocation11 + $0xfc] sm:$0xf]
    %v7799 = vld [vmem:[#allocation11 + $0x100] sm:$0xf]
    %v7800 = vld [vmem:[#allocation11 + $0x104] sm:$0xf]
    %v7801 = vld [vmem:[#allocation11 + $0x108] sm:$0xf]
    %v7802 = vld [vmem:[#allocation11 + $0x10c] sm:$0xf]
    %v7803 = vld [vmem:[#allocation11 + $0x110] sm:$0xf]
    %v7804 = vld [vmem:[#allocation11 + $0x114] sm:$0xf]
    %v7805 = vld [vmem:[#allocation11 + $0x118] sm:$0xf]
    %v7806 = vld [vmem:[#allocation11 + $0x11c] sm:$0xf]
    %v7807 = vld [vmem:[#allocation11 + $0x120] sm:$0xf]
    %v7808 = vld [vmem:[#allocation11 + $0x124] sm:$0xf]
    %v7809 = vld [vmem:[#allocation11 + $0x128] sm:$0xf]
    %v7810 = vld [vmem:[#allocation11 + $0x12c] sm:$0xf]
    %v7811 = vld [vmem:[#allocation11 + $0x130] sm:$0xf]
    %v7812 = vld [vmem:[#allocation11 + $0x134] sm:$0xf]
    %v7813 = vld [vmem:[#allocation11 + $0x138] sm:$0xf]
    %v7814 = vld [vmem:[#allocation11 + $0x13c] sm:$0xf]
    %v7815 = vld [vmem:[#allocation11 + $0x140] sm:$0xf]
    %v7816 = vld [vmem:[#allocation11 + $0x144] sm:$0xf]
    %v7817 = vld [vmem:[#allocation11 + $0x148] sm:$0xf]
    %v7818 = vld [vmem:[#allocation11 + $0x14c] sm:$0xf]
    %v7819 = vld [vmem:[#allocation11 + $0x150] sm:$0xf]
    %v7820 = vld [vmem:[#allocation11 + $0x154] sm:$0xf]
    %v7821 = vld [vmem:[#allocation11 + $0x158] sm:$0xf]
    %v7822 = vld [vmem:[#allocation11 + $0x15c] sm:$0xf]
    %v7823 = vld [vmem:[#allocation11 + $0x160] sm:$0xf]
    %v7824 = vld [vmem:[#allocation11 + $0x164] sm:$0xf]
    %v7825 = vld [vmem:[#allocation11 + $0x168] sm:$0xf]
    %v7826 = vld [vmem:[#allocation11 + $0x16c] sm:$0xf]
    %v7827 = vld [vmem:[#allocation11 + $0x170] sm:$0xf]
    %v7828 = vld [vmem:[#allocation11 + $0x174] sm:$0xf]
    %v7829 = vld [vmem:[#allocation11 + $0x178] sm:$0xf]
    %v7830 = vld [vmem:[#allocation11 + $0x17c] sm:$0xf]
    %v7831 = vld [vmem:[#allocation11 + $0x180] sm:$0xf]
    %v7832 = vld [vmem:[#allocation11 + $0x184] sm:$0xf]
    %v7833 = vld [vmem:[#allocation11 + $0x188] sm:$0xf]
    %v7834 = vld [vmem:[#allocation11 + $0x18c] sm:$0xf]
    %v7835 = vld [vmem:[#allocation11 + $0x190] sm:$0xf]
    %v7836 = vld [vmem:[#allocation11 + $0x194] sm:$0xf]
    %v7837 = vld [vmem:[#allocation11 + $0x198] sm:$0xf]
    %v7838 = vld [vmem:[#allocation11 + $0x19c] sm:$0xf]
    %v7839 = vld [vmem:[#allocation11 + $0x1a0] sm:$0xf]
    %v7840 = vld [vmem:[#allocation11 + $0x1a4] sm:$0xf]
    %v7841 = vld [vmem:[#allocation11 + $0x1a8] sm:$0xf]
    %v7842 = vld [vmem:[#allocation11 + $0x1ac] sm:$0xf]
    %v7843 = vld [vmem:[#allocation11 + $0x1b0] sm:$0xf]
    %v7844 = vld [vmem:[#allocation11 + $0x1b4] sm:$0xf]
    %v7845 = vld [vmem:[#allocation11 + $0x1b8] sm:$0xf]
    %v7846 = vld [vmem:[#allocation11 + $0x1bc] sm:$0xf]
    %v7847 = vld [vmem:[#allocation11 + $0x1c0] sm:$0xf]
    %v7848 = vld [vmem:[#allocation11 + $0x1c4] sm:$0xf]
    %v7849 = vld [vmem:[#allocation11 + $0x1c8] sm:$0xf]
    %v7850 = vld [vmem:[#allocation11 + $0x1cc] sm:$0xf]
    %v7851 = vld [vmem:[#allocation11 + $0x1d0] sm:$0xf]
    %v7852 = vld [vmem:[#allocation11 + $0x1d4] sm:$0xf]
    %v7853 = vld [vmem:[#allocation11 + $0x1d8] sm:$0xf]
    %v7854 = vld [vmem:[#allocation11 + $0x1dc] sm:$0xf]
    %v7855 = vld [vmem:[#allocation11 + $0x1e0] sm:$0xf]
    %v7856 = vld [vmem:[#allocation11 + $0x1e4] sm:$0xf]
    %v7857 = vld [vmem:[#allocation11 + $0x1e8] sm:$0xf]
    %v7858 = vld [vmem:[#allocation11 + $0x1ec] sm:$0xf]
    %v7859 = vld [vmem:[#allocation11 + $0x1f0] sm:$0xf]
    %v7860 = vld [vmem:[#allocation11 + $0x1f4] sm:$0xf]
    %v7861 = vld [vmem:[#allocation11 + $0x1f8] sm:$0xf]
    %v7862 = vld [vmem:[#allocation11 + $0x1fc] sm:$0xf]
    %v7863 = vld [vmem:[#allocation12] sm:$0x1]
    %v7865 = vlaneseq
    %v7866 = vshrl.u32 %v7865, 7
    %v7867 = vsub.s32 0, %v7866
    %v7868 = vrot.slane %v7863, %v7867
    %v7998 = vunpack.c.l.b16 %v7735
    %v7999 = vunpack.c.l.b16 %v7736
    %v8000 = vunpack.c.l.b16 %v7737
    %v8001 = vunpack.c.l.b16 %v7738
    %v8002 = vunpack.c.l.b16 %v7739
    %v8003 = vunpack.c.l.b16 %v7740
    %v8004 = vunpack.c.l.b16 %v7741
    %v8005 = vunpack.c.l.b16 %v7742
    %v8006 = vunpack.c.l.b16 %v7743
    %v8007 = vunpack.c.l.b16 %v7744
    %v8008 = vunpack.c.l.b16 %v7745
    %v8009 = vunpack.c.l.b16 %v7746
    %v8010 = vunpack.c.l.b16 %v7747
    %v8011 = vunpack.c.l.b16 %v7748
    %v8012 = vunpack.c.l.b16 %v7749
    %v8013 = vunpack.c.l.b16 %v7750
    %v8014 = vunpack.c.l.b16 %v7751
    %v8015 = vunpack.c.l.b16 %v7752
    %v8016 = vunpack.c.l.b16 %v7753
    %v8017 = vunpack.c.l.b16 %v7754
    %v8018 = vunpack.c.l.b16 %v7755
    %v8019 = vunpack.c.l.b16 %v7756
    %v8020 = vunpack.c.l.b16 %v7757
    %v8021 = vunpack.c.l.b16 %v7758
    %v8022 = vunpack.c.l.b16 %v7759
    %v8023 = vunpack.c.l.b16 %v7760
    %v8024 = vunpack.c.l.b16 %v7761
    %v8025 = vunpack.c.l.b16 %v7762
    %v8026 = vunpack.c.l.b16 %v7763
    %v8027 = vunpack.c.l.b16 %v7764
    %v8028 = vunpack.c.l.b16 %v7765
    %v8029 = vunpack.c.l.b16 %v7766
    %v8030 = vunpack.c.l.b16 %v7767
    %v8031 = vunpack.c.l.b16 %v7768
    %v8032 = vunpack.c.l.b16 %v7769
    %v8033 = vunpack.c.l.b16 %v7770
    %v8034 = vunpack.c.l.b16 %v7771
    %v8035 = vunpack.c.l.b16 %v7772
    %v8036 = vunpack.c.l.b16 %v7773
    %v8037 = vunpack.c.l.b16 %v7774
    %v8038 = vunpack.c.l.b16 %v7775
    %v8039 = vunpack.c.l.b16 %v7776
    %v8040 = vunpack.c.l.b16 %v7777
    %v8041 = vunpack.c.l.b16 %v7778
    %v8042 = vunpack.c.l.b16 %v7779
    %v8043 = vunpack.c.l.b16 %v7780
    %v8044 = vunpack.c.l.b16 %v7781
    %v8045 = vunpack.c.l.b16 %v7782
    %v8046 = vunpack.c.l.b16 %v7783
    %v8047 = vunpack.c.l.b16 %v7784
    %v8048 = vunpack.c.l.b16 %v7785
    %v8049 = vunpack.c.l.b16 %v7786
    %v8050 = vunpack.c.l.b16 %v7787
    %v8051 = vunpack.c.l.b16 %v7788
    %v8052 = vunpack.c.l.b16 %v7789
    %v8053 = vunpack.c.l.b16 %v7790
    %v8054 = vunpack.c.l.b16 %v7791
    %v8055 = vunpack.c.l.b16 %v7792
    %v8056 = vunpack.c.l.b16 %v7793
    %v8057 = vunpack.c.l.b16 %v7794
    %v8058 = vunpack.c.l.b16 %v7795
    %v8059 = vunpack.c.l.b16 %v7796
    %v8060 = vunpack.c.l.b16 %v7797
    %v8061 = vunpack.c.l.b16 %v7798
    %v8062 = vunpack.c.l.b16 %v7799
    %v8063 = vunpack.c.l.b16 %v7800
    %v8064 = vunpack.c.l.b16 %v7801
    %v8065 = vunpack.c.l.b16 %v7802
    %v8066 = vunpack.c.l.b16 %v7803
    %v8067 = vunpack.c.l.b16 %v7804
    %v8068 = vunpack.c.l.b16 %v7805
    %v8069 = vunpack.c.l.b16 %v7806
    %v8070 = vunpack.c.l.b16 %v7807
    %v8071 = vunpack.c.l.b16 %v7808
    %v8072 = vunpack.c.l.b16 %v7809
    %v8073 = vunpack.c.l.b16 %v7810
    %v8074 = vunpack.c.l.b16 %v7811
    %v8075 = vunpack.c.l.b16 %v7812
    %v8076 = vunpack.c.l.b16 %v7813
    %v8077 = vunpack.c.l.b16 %v7814
    %v8078 = vunpack.c.l.b16 %v7815
    %v8079 = vunpack.c.l.b16 %v7816
    %v8080 = vunpack.c.l.b16 %v7817
    %v8081 = vunpack.c.l.b16 %v7818
    %v8082 = vunpack.c.l.b16 %v7819
    %v8083 = vunpack.c.l.b16 %v7820
    %v8084 = vunpack.c.l.b16 %v7821
    %v8085 = vunpack.c.l.b16 %v7822
    %v8086 = vunpack.c.l.b16 %v7823
    %v8087 = vunpack.c.l.b16 %v7824
    %v8088 = vunpack.c.l.b16 %v7825
    %v8089 = vunpack.c.l.b16 %v7826
    %v8090 = vunpack.c.l.b16 %v7827
    %v8091 = vunpack.c.l.b16 %v7828
    %v8092 = vunpack.c.l.b16 %v7829
    %v8093 = vunpack.c.l.b16 %v7830
    %v8094 = vunpack.c.l.b16 %v7831
    %v8095 = vunpack.c.l.b16 %v7832
    %v8096 = vunpack.c.l.b16 %v7833
    %v8097 = vunpack.c.l.b16 %v7834
    %v8098 = vunpack.c.l.b16 %v7835
    %v8099 = vunpack.c.l.b16 %v7836
    %v8100 = vunpack.c.l.b16 %v7837
    %v8101 = vunpack.c.l.b16 %v7838
    %v8102 = vunpack.c.l.b16 %v7839
    %v8103 = vunpack.c.l.b16 %v7840
    %v8104 = vunpack.c.l.b16 %v7841
    %v8105 = vunpack.c.l.b16 %v7842
    %v8106 = vunpack.c.l.b16 %v7843
    %v8107 = vunpack.c.l.b16 %v7844
    %v8108 = vunpack.c.l.b16 %v7845
    %v8109 = vunpack.c.l.b16 %v7846
    %v8110 = vunpack.c.l.b16 %v7847
    %v8111 = vunpack.c.l.b16 %v7848
    %v8112 = vunpack.c.l.b16 %v7849
    %v8113 = vunpack.c.l.b16 %v7850
    %v8114 = vunpack.c.l.b16 %v7851
    %v8115 = vunpack.c.l.b16 %v7852
    %v8116 = vunpack.c.l.b16 %v7853
    %v8117 = vunpack.c.l.b16 %v7854
    %v8118 = vunpack.c.l.b16 %v7855
    %v8119 = vunpack.c.l.b16 %v7856
    %v8120 = vunpack.c.l.b16 %v7857
    %v8121 = vunpack.c.l.b16 %v7858
    %v8122 = vunpack.c.l.b16 %v7859
    %v8123 = vunpack.c.l.b16 %v7860
    %v8124 = vunpack.c.l.b16 %v7861
    %v8125 = vunpack.c.l.b16 %v7862
    %v8126 = vpack.c.b16 %v7999, %v7998
    %v8127 = vpack.c.b16 %v8001, %v8000
    %v8128 = vpack.c.b16 %v8003, %v8002
    %v8129 = vpack.c.b16 %v8005, %v8004
    %v8130 = vpack.c.b16 %v8007, %v8006
    %v8131 = vpack.c.b16 %v8009, %v8008
    %v8132 = vpack.c.b16 %v8011, %v8010
    %v8133 = vpack.c.b16 %v8013, %v8012
    %v8134 = vpack.c.b16 %v8015, %v8014
    %v8135 = vpack.c.b16 %v8017, %v8016
    %v8136 = vpack.c.b16 %v8019, %v8018
    %v8137 = vpack.c.b16 %v8021, %v8020
    %v8138 = vpack.c.b16 %v8023, %v8022
    %v8139 = vpack.c.b16 %v8025, %v8024
    %v8140 = vpack.c.b16 %v8027, %v8026
    %v8141 = vpack.c.b16 %v8029, %v8028
    %v8142 = vpack.c.b16 %v8031, %v8030
    %v8143 = vpack.c.b16 %v8033, %v8032
    %v8144 = vpack.c.b16 %v8035, %v8034
    %v8145 = vpack.c.b16 %v8037, %v8036
    %v8146 = vpack.c.b16 %v8039, %v8038
    %v8147 = vpack.c.b16 %v8041, %v8040
    %v8148 = vpack.c.b16 %v8043, %v8042
    %v8149 = vpack.c.b16 %v8045, %v8044
    %v8150 = vpack.c.b16 %v8047, %v8046
    %v8151 = vpack.c.b16 %v8049, %v8048
    %v8152 = vpack.c.b16 %v8051, %v8050
    %v8153 = vpack.c.b16 %v8053, %v8052
    %v8154 = vpack.c.b16 %v8055, %v8054
    %v8155 = vpack.c.b16 %v8057, %v8056
    %v8156 = vpack.c.b16 %v8059, %v8058
    %v8157 = vpack.c.b16 %v8061, %v8060
    %v8158 = vpack.c.b16 %v8063, %v8062
    %v8159 = vpack.c.b16 %v8065, %v8064
    %v8160 = vpack.c.b16 %v8067, %v8066
    %v8161 = vpack.c.b16 %v8069, %v8068
    %v8162 = vpack.c.b16 %v8071, %v8070
    %v8163 = vpack.c.b16 %v8073, %v8072
    %v8164 = vpack.c.b16 %v8075, %v8074
    %v8165 = vpack.c.b16 %v8077, %v8076
    %v8166 = vpack.c.b16 %v8079, %v8078
    %v8167 = vpack.c.b16 %v8081, %v8080
    %v8168 = vpack.c.b16 %v8083, %v8082
    %v8169 = vpack.c.b16 %v8085, %v8084
    %v8170 = vpack.c.b16 %v8087, %v8086
    %v8171 = vpack.c.b16 %v8089, %v8088
    %v8172 = vpack.c.b16 %v8091, %v8090
    %v8173 = vpack.c.b16 %v8093, %v8092
    %v8174 = vpack.c.b16 %v8095, %v8094
    %v8175 = vpack.c.b16 %v8097, %v8096
    %v8176 = vpack.c.b16 %v8099, %v8098
    %v8177 = vpack.c.b16 %v8101, %v8100
    %v8178 = vpack.c.b16 %v8103, %v8102
    %v8179 = vpack.c.b16 %v8105, %v8104
    %v8180 = vpack.c.b16 %v8107, %v8106
    %v8181 = vpack.c.b16 %v8109, %v8108
    %v8182 = vpack.c.b16 %v8111, %v8110
    %v8183 = vpack.c.b16 %v8113, %v8112
    %v8184 = vpack.c.b16 %v8115, %v8114
    %v8185 = vpack.c.b16 %v8117, %v8116
    %v8186 = vpack.c.b16 %v8119, %v8118
    %v8187 = vpack.c.b16 %v8121, %v8120
    %v8188 = vpack.c.b16 %v8123, %v8122
    %v8189 = vpack.c.b16 %v8125, %v8124
    %8254 = vmatprep.subr.bf16.mxu0 0
    %8255 = vmatpush1.bf16.msra.mxu0 %v8126
    %8256 = vmatprep.subr.bf16.mxu0 0
    %8257 = vmatpush1.bf16.msra.mxu0 %v8127
    %8258 = vmatprep.subr.bf16.mxu0 0
    %8259 = vmatpush1.bf16.msra.mxu0 %v8128
    %8260 = vmatprep.subr.bf16.mxu0 0
    %8261 = vmatpush1.bf16.msra.mxu0 %v8129
    %8262 = vmatprep.subr.bf16.mxu0 0
    %8263 = vmatpush1.bf16.msra.mxu0 %v8130
    %8264 = vmatprep.subr.bf16.mxu0 0
    %8265 = vmatpush1.bf16.msra.mxu0 %v8131
    %8266 = vmatprep.subr.bf16.mxu0 0
    %8267 = vmatpush1.bf16.msra.mxu0 %v8132
    %8268 = vmatprep.subr.bf16.mxu0 0
    %8269 = vmatpush1.bf16.msra.mxu0 %v8133
    %8270 = vmatprep.subr.bf16.mxu0 0
    %8271 = vmatpush1.bf16.msra.mxu0 %v8134
    %8272 = vmatprep.subr.bf16.mxu0 0
    %8273 = vmatpush1.bf16.msra.mxu0 %v8135
    %8274 = vmatprep.subr.bf16.mxu0 0
    %8275 = vmatpush1.bf16.msra.mxu0 %v8136
    %8276 = vmatprep.subr.bf16.mxu0 0
    %8277 = vmatpush1.bf16.msra.mxu0 %v8137
    %8278 = vmatprep.subr.bf16.mxu0 0
    %8279 = vmatpush1.bf16.msra.mxu0 %v8138
    %8280 = vmatprep.subr.bf16.mxu0 0
    %8281 = vmatpush1.bf16.msra.mxu0 %v8139
    %8282 = vmatprep.subr.bf16.mxu0 0
    %8283 = vmatpush1.bf16.msra.mxu0 %v8140
    %8284 = vmatprep.subr.bf16.mxu0 0
    %8285 = vmatpush1.bf16.msra.mxu0 %v8141
    %8286 = vmatprep.mubr.bf16.mxu0 %v7728
    %8287 = vmatmul.mubr.bf16.gmra.mrb[0].mxu0 %v7727
    %v8288 = vpop.f32.mrb[0].mxu0
    %v8289 = vadd.f32 %v7868, %v8288
    %v8290 = vpop.f32.mrb[0].mxu0
    %v8291 = vpop.f32.mrb[0].mxu0
    %v8292 = vpop.f32.mrb[0].mxu0
    %8293 = vdwg.mxu0
    %8294 = vmatprep.subr.bf16.mxu0 0
    %8295 = vmatpush1.bf16.msra.mxu0 %v8142
    %8296 = vmatprep.subr.bf16.mxu0 0
    %8297 = vmatpush1.bf16.msra.mxu0 %v8143
    %8298 = vmatprep.subr.bf16.mxu0 0
    %8299 = vmatpush1.bf16.msra.mxu0 %v8144
    %8300 = vmatprep.subr.bf16.mxu0 0
    %8301 = vmatpush1.bf16.msra.mxu0 %v8145
    %8302 = vmatprep.subr.bf16.mxu0 0
    %8303 = vmatpush1.bf16.msra.mxu0 %v8146
    %8304 = vmatprep.subr.bf16.mxu0 0
    %8305 = vmatpush1.bf16.msra.mxu0 %v8147
    %8306 = vmatprep.subr.bf16.mxu0 0
    %8307 = vmatpush1.bf16.msra.mxu0 %v8148
    %8308 = vmatprep.subr.bf16.mxu0 0
    %8309 = vmatpush1.bf16.msra.mxu0 %v8149
    %8310 = vmatprep.subr.bf16.mxu0 0
    %8311 = vmatpush1.bf16.msra.mxu0 %v8150
    %8312 = vmatprep.subr.bf16.mxu0 0
    %8313 = vmatpush1.bf16.msra.mxu0 %v8151
    %8314 = vmatprep.subr.bf16.mxu0 0
    %8315 = vmatpush1.bf16.msra.mxu0 %v8152
    %8316 = vmatprep.subr.bf16.mxu0 0
    %8317 = vmatpush1.bf16.msra.mxu0 %v8153
    %8318 = vmatprep.subr.bf16.mxu0 0
    %8319 = vmatpush1.bf16.msra.mxu0 %v8154
    %8320 = vmatprep.subr.bf16.mxu0 0
    %8321 = vmatpush1.bf16.msra.mxu0 %v8155
    %8322 = vmatprep.subr.bf16.mxu0 0
    %8323 = vmatpush1.bf16.msra.mxu0 %v8156
    %8324 = vmatprep.subr.bf16.mxu0 0
    %8325 = vmatpush1.bf16.msra.mxu0 %v8157
    %8326 = vmatprep.mubr.bf16.mxu0 %v7730
    %8327 = vmatmul.mubr.bf16.gmra.mrb[0].mxu0 %v7729
    %v8328 = vpop.f32.mrb[0].mxu0
    %v8329 = vadd.f32 %v8289, %v8328
    %v8330 = vpop.f32.mrb[0].mxu0
    %v8331 = vpop.f32.mrb[0].mxu0
    %v8332 = vpop.f32.mrb[0].mxu0
    %8333 = vdwg.mxu0
    %8334 = vmatprep.subr.bf16.mxu0 0
    %8335 = vmatpush1.bf16.msra.mxu0 %v8158
    %8336 = vmatprep.subr.bf16.mxu0 0
    %8337 = vmatpush1.bf16.msra.mxu0 %v8159
    %8338 = vmatprep.subr.bf16.mxu0 0
    %8339 = vmatpush1.bf16.msra.mxu0 %v8160
    %8340 = vmatprep.subr.bf16.mxu0 0
    %8341 = vmatpush1.bf16.msra.mxu0 %v8161
    %8342 = vmatprep.subr.bf16.mxu0 0
    %8343 = vmatpush1.bf16.msra.mxu0 %v8162
    %8344 = vmatprep.subr.bf16.mxu0 0
    %8345 = vmatpush1.bf16.msra.mxu0 %v8163
    %8346 = vmatprep.subr.bf16.mxu0 0
    %8347 = vmatpush1.bf16.msra.mxu0 %v8164
    %8348 = vmatprep.subr.bf16.mxu0 0
    %8349 = vmatpush1.bf16.msra.mxu0 %v8165
    %8350 = vmatprep.subr.bf16.mxu0 0
    %8351 = vmatpush1.bf16.msra.mxu0 %v8166
    %8352 = vmatprep.subr.bf16.mxu0 0
    %8353 = vmatpush1.bf16.msra.mxu0 %v8167
    %8354 = vmatprep.subr.bf16.mxu0 0
    %8355 = vmatpush1.bf16.msra.mxu0 %v8168
    %8356 = vmatprep.subr.bf16.mxu0 0
    %8357 = vmatpush1.bf16.msra.mxu0 %v8169
    %8358 = vmatprep.subr.bf16.mxu0 0
    %8359 = vmatpush1.bf16.msra.mxu0 %v8170
    %8360 = vmatprep.subr.bf16.mxu0 0
    %8361 = vmatpush1.bf16.msra.mxu0 %v8171
    %8362 = vmatprep.subr.bf16.mxu0 0
    %8363 = vmatpush1.bf16.msra.mxu0 %v8172
    %8364 = vmatprep.subr.bf16.mxu0 0
    %8365 = vmatpush1.bf16.msra.mxu0 %v8173
    %8366 = vmatprep.mubr.bf16.mxu0 %v7732
    %8367 = vmatmul.mubr.bf16.gmra.mrb[0].mxu0 %v7731
    %v8368 = vpop.f32.mrb[0].mxu0
    %v8369 = vadd.f32 %v8329, %v8368
    %v8370 = vpop.f32.mrb[0].mxu0
    %v8371 = vpop.f32.mrb[0].mxu0
    %v8372 = vpop.f32.mrb[0].mxu0
    %8373 = vdwg.mxu0
    %8374 = vmatprep.subr.bf16.mxu0 0
    %8375 = vmatpush1.bf16.msra.mxu0 %v8174
    %8376 = vmatprep.subr.bf16.mxu0 0
    %8377 = vmatpush1.bf16.msra.mxu0 %v8175
    %8378 = vmatprep.subr.bf16.mxu0 0
    %8379 = vmatpush1.bf16.msra.mxu0 %v8176
    %8380 = vmatprep.subr.bf16.mxu0 0
    %8381 = vmatpush1.bf16.msra.mxu0 %v8177
    %8382 = vmatprep.subr.bf16.mxu0 0
    %8383 = vmatpush1.bf16.msra.mxu0 %v8178
    %8384 = vmatprep.subr.bf16.mxu0 0
    %8385 = vmatpush1.bf16.msra.mxu0 %v8179
    %8386 = vmatprep.subr.bf16.mxu0 0
    %8387 = vmatpush1.bf16.msra.mxu0 %v8180
    %8388 = vmatprep.subr.bf16.mxu0 0
    %8389 = vmatpush1.bf16.msra.mxu0 %v8181
    %8390 = vmatprep.subr.bf16.mxu0 0
    %8391 = vmatpush1.bf16.msra.mxu0 %v8182
    %8392 = vmatprep.subr.bf16.mxu0 0
    %8393 = vmatpush1.bf16.msra.mxu0 %v8183
    %8394 = vmatprep.subr.bf16.mxu0 0
    %8395 = vmatpush1.bf16.msra.mxu0 %v8184
    %8396 = vmatprep.subr.bf16.mxu0 0
    %8397 = vmatpush1.bf16.msra.mxu0 %v8185
    %8398 = vmatprep.subr.bf16.mxu0 0
    %8399 = vmatpush1.bf16.msra.mxu0 %v8186
    %8400 = vmatprep.subr.bf16.mxu0 0
    %8401 = vmatpush1.bf16.msra.mxu0 %v8187
    %8402 = vmatprep.subr.bf16.mxu0 0
    %8403 = vmatpush1.bf16.msra.mxu0 %v8188
    %8404 = vmatprep.subr.bf16.mxu0 0
    %8405 = vmatpush1.bf16.msra.mxu0 %v8189
    %8406 = vmatprep.mubr.bf16.mxu0 %v7734
    %8407 = vmatmul.mubr.bf16.gmra.mrb[0].mxu0 %v7733
    %v8408 = vpop.f32.mrb[0].mxu0
    %v8409 = vadd.f32 %v8369, %v8408
    %v8410 = vpop.f32.mrb[0].mxu0
    %v8411 = vpop.f32.mrb[0].mxu0
    %v8412 = vpop.f32.mrb[0].mxu0
    %8413 = vdwg.mxu0
    %s8414 = sld [smem:[#allocation2]]
    %v8415 = vstv %s8414
    %v8416 = vmul.f32 %v8415, %v8409
    %v8417 = vtanh.pop %v8416
    %8418 = vst [vmem:[#allocation18] sm:$0xff] %v8417
    %v8419 = vpack.c.bf16 %v8417, %v8417
    %v8420 = vld [vmem:[#allocation14] sm:$0xf]
    %v8421 = vld [vmem:[#allocation14 + $0x4] sm:$0xf]
    %v8422 = vld [vmem:[#allocation14 + $0x8] sm:$0xf]
    %v8423 = vld [vmem:[#allocation14 + $0xc] sm:$0xf]
    %v8424 = vld [vmem:[#allocation14 + $0x10] sm:$0xf]
    %v8425 = vld [vmem:[#allocation14 + $0x14] sm:$0xf]
    %v8426 = vld [vmem:[#allocation14 + $0x18] sm:$0xf]
    %v8427 = vld [vmem:[#allocation14 + $0x1c] sm:$0xf]
    %v8428 = vld [vmem:[#allocation14 + $0x20] sm:$0xf]
    %v8429 = vld [vmem:[#allocation14 + $0x24] sm:$0xf]
    %v8430 = vld [vmem:[#allocation14 + $0x28] sm:$0xf]
    %v8431 = vld [vmem:[#allocation14 + $0x2c] sm:$0xf]
    %v8432 = vld [vmem:[#allocation14 + $0x30] sm:$0xf]
    %v8433 = vld [vmem:[#allocation14 + $0x34] sm:$0xf]
    %v8434 = vld [vmem:[#allocation14 + $0x38] sm:$0xf]
    %v8435 = vld [vmem:[#allocation14 + $0x3c] sm:$0xf]
    %v8436 = vld [vmem:[#allocation15] sm:$0x1]
    %v8438 = vlaneseq
    %v8439 = vshrl.u32 %v8438, 7
    %v8440 = vsub.s32 0, %v8439
    %v8441 = vrot.slane %v8436, %v8440
    %v8459 = vunpack.c.l.b16 %v8420
    %v8460 = vunpack.c.l.b16 %v8421
    %v8461 = vunpack.c.l.b16 %v8422
    %v8462 = vunpack.c.l.b16 %v8423
    %v8463 = vunpack.c.l.b16 %v8424
    %v8464 = vunpack.c.l.b16 %v8425
    %v8465 = vunpack.c.l.b16 %v8426
    %v8466 = vunpack.c.l.b16 %v8427
    %v8467 = vunpack.c.l.b16 %v8428
    %v8468 = vunpack.c.l.b16 %v8429
    %v8469 = vunpack.c.l.b16 %v8430
    %v8470 = vunpack.c.l.b16 %v8431
    %v8471 = vunpack.c.l.b16 %v8432
    %v8472 = vunpack.c.l.b16 %v8433
    %v8473 = vunpack.c.l.b16 %v8434
    %v8474 = vunpack.c.l.b16 %v8435
    %v8475 = vpack.c.b16 %v8460, %v8459
    %v8476 = vpack.c.b16 %v8462, %v8461
    %v8477 = vpack.c.b16 %v8464, %v8463
    %v8478 = vpack.c.b16 %v8466, %v8465
    %v8479 = vpack.c.b16 %v8468, %v8467
    %v8480 = vpack.c.b16 %v8470, %v8469
    %v8481 = vpack.c.b16 %v8472, %v8471
    %v8482 = vpack.c.b16 %v8474, %v8473
    %8491 = vmatprep.subr.bf16.mxu0 0
    %8492 = vmatpush1.bf16.msra.mxu0 %v8475
    %8493 = vmatprep.subr.bf16.mxu0 0
    %8494 = vmatpush1.bf16.msra.mxu0 %v8476
    %8495 = vmatprep.subr.bf16.mxu0 0
    %8496 = vmatpush1.bf16.msra.mxu0 %v8477
    %8497 = vmatprep.subr.bf16.mxu0 0
    %8498 = vmatpush1.bf16.msra.mxu0 %v8478
    %8499 = vmatprep.subr.bf16.mxu0 0
    %8500 = vmatpush1.bf16.msra.mxu0 %v8479
    %8501 = vmatprep.subr.bf16.mxu0 0
    %8502 = vmatpush1.bf16.msra.mxu0 %v8480
    %8503 = vmatprep.subr.bf16.mxu0 0
    %8504 = vmatpush1.bf16.msra.mxu0 %v8481
    %8505 = vmatprep.subr.bf16.mxu0 0
    %8506 = vmatpush1.bf16.msra.mxu0 %v8482
    %8507 = vmatprep.subr.bf16.mxu0 0
    %8508 = vmatpush1.bf16.msra.mxu0 0
    %8509 = vmatprep.subr.bf16.mxu0 0
    %8510 = vmatpush1.bf16.msra.mxu0 0
    %8511 = vmatprep.subr.bf16.mxu0 0
    %8512 = vmatpush1.bf16.msra.mxu0 0
    %8513 = vmatprep.subr.bf16.mxu0 0
    %8514 = vmatpush1.bf16.msra.mxu0 0
    %8515 = vmatprep.subr.bf16.mxu0 0
    %8516 = vmatpush1.bf16.msra.mxu0 0
    %8517 = vmatprep.subr.bf16.mxu0 0
    %8518 = vmatpush1.bf16.msra.mxu0 0
    %8519 = vmatprep.subr.bf16.mxu0 0
    %8520 = vmatpush1.bf16.msra.mxu0 0
    %8521 = vmatprep.subr.bf16.mxu0 0
    %8522 = vmatpush1.bf16.msra.mxu0 0
    %8523 = vmatprep.mubr.bf16.mxu0 0
    %8524 = vmatmul.mubr.bf16.gmra.mrb[0].mxu0 %v8419
    %v8525 = vpop.f32.mrb[0].mxu0
    %v8526 = vadd.f32 %v8441, %v8525
    %v8527 = vpop.f32.mrb[0].mxu0
    %v8528 = vpop.f32.mrb[0].mxu0
    %v8529 = vpop.f32.mrb[0].mxu0
    %8530 = vdwg.mxu0
    %v8531 = vxor.u32 %v8526, 2147483648
    %v8532 = vmul.f32 %v8531, 1.442695
    %v8533 = vpow.pop %v8532
    %v8534 = vadd.f32 %v8533, 1.0
    %v8535 = vrcp.pop %v8534
    %v8536 = vmul.f32 1.0, %v8535
    %8537 = vst [vmem:[#allocation20] sm:$0xff] %v8536
    // Predicated region
    $region74: #{imgnet_forward.1} parent=1 // pred_check
      _
    $region75: #{imgnet_forward.1} parent=1 // pred_check_branch
      %8539 = sbr.rel (0) target = $region77
    $region76: #{imgnet_forward.1} parent=1 // pred_region
      %s8541 = ssub.s32 512, 512
      %8542 = vsyncadd [#allocation5], %s8541
      %s8544 = sshll.u32 [#allocation17], 4
      %s8545 = int_to_ptr.vmem [resolvable:$true] %s8544
      %8547 = dma.vmem_to_hbm [thread:$0]  %s8545, 512, %s10, [#allocation5]
    $region77: #{imgnet_forward.1} parent=1 // pred_fallthru
      _
    // Predicated region
    $region78: #{imgnet_forward.1} parent=1 // pred_check
      _
    $region79: #{imgnet_forward.1} parent=1 // pred_check_branch
      %8549 = sbr.rel (0) target = $region81
    $region80: #{imgnet_forward.1} parent=1 // pred_region
      %s8551 = ssub.s32 128, 128
      %8552 = vsyncadd [#allocation19], %s8551
      %s8554 = sshll.u32 [#allocation18], 4
      %s8555 = int_to_ptr.vmem [resolvable:$true] %s8554
      %8557 = dma.vmem_to_hbm [thread:$0]  %s8555, 128, %s11, [#allocation19]
    $region81: #{imgnet_forward.1} parent=1 // pred_fallthru
      _
    // Predicated region
    $region82: #{imgnet_forward.1} parent=1 // pred_check
      _
    $region83: #{imgnet_forward.1} parent=1 // pred_check_branch
      %8559 = sbr.rel (0) target = $region85
    $region84: #{imgnet_forward.1} parent=1 // pred_region
      %s8561 = ssub.s32 128, 128
      %8562 = vsyncadd [#allocation19], %s8561
      %s8564 = sshll.u32 [#allocation20], 4
      %s8565 = int_to_ptr.vmem [resolvable:$true] %s8564
      %8567 = dma.vmem_to_hbm [thread:$0]  %s8565, 128, %s12, [#allocation19]
    $region85: #{imgnet_forward.1} parent=1 // pred_fallthru
      _
    // Predicated region
    $region86: #{imgnet_forward.1} parent=1 // pred_check
      _
    $region87: #{imgnet_forward.1} parent=1 // pred_check_branch
      %8569 = sbr.rel (0) target = $region89
    $region88: #{imgnet_forward.1} parent=1 // pred_region
      %8570 = dma.done [#allocation5], 512
    $region89: #{imgnet_forward.1} parent=1 // pred_fallthru
      _
    // Predicated region
    $region90: #{imgnet_forward.1} parent=1 // pred_check
      _
    $region91: #{imgnet_forward.1} parent=1 // pred_check_branch
      %8572 = sbr.rel (0) target = $region93
    $region92: #{imgnet_forward.1} parent=1 // pred_region
      %8573 = dma.done [#allocation19], 128
    $region93: #{imgnet_forward.1} parent=1 // pred_fallthru
      _
    // Predicated region
    $region94: #{imgnet_forward.1} parent=1 // pred_check
      _
    $region95: #{imgnet_forward.1} parent=1 // pred_check_branch
      %8575 = sbr.rel (0) target = $region97
    $region96: #{imgnet_forward.1} parent=1 // pred_region
      %8576 = dma.done [#allocation19], 128
    $region97: #{imgnet_forward.1} parent=1 // pred_fallthru
      _
    %8577 = vsyncpa [#allocation4], 1
    %8578 = vsyncpa [#allocation7], 1
    %8579 = vsyncpa [#allocation10], 1
    %8580 = vsyncpa [#allocation13], 1
    %8581 = vsyncpa [#allocation16], 1
    %8582 = vsyncpa [#allocation5], 1
    %8583 = vsyncpa [#allocation19], 1

</llo_original>
